<compile_context>
chip_gen: v6e
topology: v6e:2x2x1
jax: 0.10.0
libtpu: 0.0.40
codegen_flags: <defaults>
</compile_context>

<pallas_src>
import jax
import jax.numpy as jnp
from jax.experimental import pallas as pl
from jax.experimental.pallas import tpu as pltpu


def _refine_fused_kernel(x_ref, w1_ref, b1_ref, w2_ref, b2_ref, w3_ref, b3_ref,
                         o_ref, xpad_ref, h1pad_ref, h2pad_ref):
    """Fused Refine forward.

    x_ref    : (N, H, W, 24)       NHWC input, VMEM
    w1_ref   : (9*24, 32)          layer-1 weights, rows ordered (dy, dx, cin)
    b1_ref   : (1, 32)
    w2_ref   : (9*32, 32)
    b2_ref   : (1, 32)
    w3_ref   : (9, 32)             layer-3 weights, row k = dy*3+dx, lanes = cin
    b3_ref   : (1, 1)
    o_ref    : (N*H*W, 1)          sigmoid output (free reshape to N,1,H,W)
    xpad_ref : (N, H+2, W+2, 24)   VMEM scratch (zero border = SAME padding)
    h1pad_ref: (N, H+2, W+2, 32)   VMEM scratch
    h2pad_ref: (N, H+2, W+2, 32)   VMEM scratch
    """
    N, H, W, _ = x_ref.shape
    C_MID = h1pad_ref.shape[-1]
    NHW = N * H * W

    def pad_into(pad_ref, val_nhwc):
        # Zero border + interior copy: SAME padding entirely inside VMEM.
        pad_ref[...] = jnp.zeros_like(pad_ref)
        pad_ref[:, 1:H + 1, 1:W + 1, :] = val_nhwc

    def im2col(pad_ref):
        # Build the (N*H*W, 9*Cin) patch matrix so each layer is a single
        # big-K MXU matmul instead of nine small-K ones.
        cin = pad_ref.shape[-1]
        cols = []
        for dy in range(3):
            for dx in range(3):
                cols.append(
                    pad_ref[:, dy:dy + H, dx:dx + W, :].reshape(NHW, cin))
        return jnp.concatenate(cols, axis=-1)

    # ---- layer 1: 24 -> 32, ReLU -------------------------------------------
    pad_into(xpad_ref, x_ref[...])
    h1 = jnp.dot(im2col(xpad_ref), w1_ref[...],
                 preferred_element_type=jnp.float32)
    h1 = jnp.maximum(h1 + b1_ref[...], 0.0)                       # (NHW, 32)

    # ---- layer 2: 32 -> 32, ReLU -------------------------------------------
    pad_into(h1pad_ref, h1.reshape(N, H, W, C_MID))
    h2 = jnp.dot(im2col(h1pad_ref), w2_ref[...],
                 preferred_element_type=jnp.float32)
    h2 = jnp.maximum(h2 + b2_ref[...], 0.0)                       # (NHW, 32)

    # ---- layer 3: 32 -> 1, Sigmoid (VPU only; no 1-column MXU matmul) -------
    pad_into(h2pad_ref, h2.reshape(N, H, W, C_MID))
    acc = jnp.zeros((NHW, C_MID), jnp.float32)
    for dy in range(3):
        for dx in range(3):
            k = dy * 3 + dx
            window = h2pad_ref[:, dy:dy + H, dx:dx + W, :].reshape(NHW, C_MID)
            acc = acc + window * w3_ref[k:k + 1, :]                # broadcast
    out = jnp.sum(acc, axis=-1, keepdims=True) + b3_ref[...]      # (NHW, 1)
    # Output is only 2 KiB total, so the narrow final store is immaterial here.
    o_ref[...] = jax.nn.sigmoid(out).astype(o_ref.dtype)


def refine_pallas(x_nhwc, w1, b1, w2, b2, w3, b3):
    N, H, W, C_IN = x_nhwc.shape
    C_MID = w1.shape[-1]
    return pl.pallas_call(
        _refine_fused_kernel,
        out_shape=jax.ShapeDtypeStruct((N * H * W, 1), jnp.float32),
        in_specs=[pl.BlockSpec(memory_space=pltpu.MemorySpace.VMEM)] * 7,
        out_specs=pl.BlockSpec(memory_space=pltpu.MemorySpace.VMEM),
        scratch_shapes=[
            pltpu.VMEM((N, H + 2, W + 2, C_IN), jnp.float32),
            pltpu.VMEM((N, H + 2, W + 2, C_MID), jnp.float32),
            pltpu.VMEM((N, H + 2, W + 2, C_MID), jnp.float32),
        ],
        compiler_params=pltpu.CompilerParams(
            vmem_limit_bytes=32 * 1024 * 1024),
    )(x_nhwc, w1, b1, w2, b2, w3, b3)


def init_refine_params(key):
    """Deterministic synthetic params matching nn.Conv2d shapes (HWIO layout)."""
    k1, k2, k3, k4, k5, k6 = jax.random.split(key, 6)
    return {
        "w1": jax.random.normal(k1, (3, 3, 24, 32), jnp.float32) * 0.05,
        "b1": jax.random.normal(k4, (32,), jnp.float32) * 0.05,
        "w2": jax.random.normal(k2, (3, 3, 32, 32), jnp.float32) * 0.05,
        "b2": jax.random.normal(k5, (32,), jnp.float32) * 0.05,
        "w3": jax.random.normal(k3, (3, 3, 32, 1), jnp.float32) * 0.05,
        "b3": jax.random.normal(k6, (1,), jnp.float32) * 0.05,
    }


@jax.jit
def refine_forward(x_nchw, params):
    N, _, H, W = x_nchw.shape
    # Single small NCHW -> NHWC transpose (channels onto the lane axis).
    x = jnp.transpose(x_nchw, (0, 2, 3, 1))
    # Flatten weights so each layer is one (K, Cout) matmul; rows ordered
    # (dy, dx, cin) to match the in-kernel im2col column order.
    w1 = params["w1"].reshape(3 * 3 * 24, 32)
    w2 = params["w2"].reshape(3 * 3 * 32, 32)
    w3 = params["w3"].reshape(3 * 3, 32)            # Cout==1 dim dropped
    b1 = params["b1"].reshape(1, 32)
    b2 = params["b2"].reshape(1, 32)
    b3 = params["b3"].reshape(1, 1)
    out_flat = refine_pallas(x, w1, b1, w2, b2, w3, b3)
    # (N*H*W, 1) -> (N, 1, H, W): identical row-major data order, free reshape.
    return out_flat.reshape(N, 1, H, W)


def refine_reference(x_nchw, params):
    """Pure-JAX reference (lax conv) for correctness check."""
    def conv(x, w_hwio, b):
        w_oihw = jnp.transpose(w_hwio, (3, 2, 0, 1))
        y = jax.lax.conv_general_dilated(
            x, w_oihw, window_strides=(1, 1), padding=((1, 1), (1, 1)),
            dimension_numbers=("NCHW", "OIHW", "NCHW"))
        return y + b.reshape(1, -1, 1, 1)

    h1 = jax.nn.relu(conv(x_nchw, params["w1"], params["b1"]))
    h2 = jax.nn.relu(conv(h1, params["w2"], params["b2"]))
    return jax.nn.sigmoid(conv(h2, params["w3"], params["b3"]))


if __name__ == "__main__":
    key = jax.random.PRNGKey(0)
    kx, kp = jax.random.split(key)
    # Input: batch=2, channels=24 (hardcoded by the module), spatial 16x16, NCHW.
    x = jax.random.normal(kx, (2, 24, 16, 16), jnp.float32)
    params = init_refine_params(kp)

    out = jax.block_until_ready(refine_forward(x, params))

    ref = refine_reference(x, params)
    assert out.shape == (2, 1, 16, 16), out.shape
    assert jnp.allclose(out, ref, atol=1e-4, rtol=1e-4), float(
        jnp.max(jnp.abs(out - ref)))

    print("KERNEL_OK")
</pallas_src>

<mosaic_0001>
module attributes {stable_mosaic.version = 11 : i64} {
  func.func @_refine_fused_kernel(%arg0: memref<2x16x16x24xf32, #tpu.memory_space<vmem>>, %arg1: memref<216x32xf32, #tpu.memory_space<vmem>>, %arg2: memref<1x32xf32, #tpu.memory_space<vmem>>, %arg3: memref<288x32xf32, #tpu.memory_space<vmem>>, %arg4: memref<1x32xf32, #tpu.memory_space<vmem>>, %arg5: memref<9x32xf32, #tpu.memory_space<vmem>>, %arg6: memref<1x1xf32, #tpu.memory_space<vmem>>, %arg7: memref<512x1xf32, #tpu.memory_space<vmem>>, %arg8: memref<2x18x18x24xf32, #tpu.memory_space<vmem>>, %arg9: memref<2x18x18x32xf32, #tpu.memory_space<vmem>>, %arg10: memref<2x18x18x32xf32, #tpu.memory_space<vmem>>) attributes {dimension_semantics = [], scalar_prefetch = 0 : i64, scratch_operands = 3 : i64, tpu.core_type = #tpu.core_type<tc>} {
    %c0 = arith.constant 0 : index
    %c0_0 = arith.constant 0 : index
    %c0_1 = arith.constant 0 : index
    %c0_2 = arith.constant 0 : index
    %0 = vector.load %arg0[%c0, %c0_0, %c0_1, %c0_2] : memref<2x16x16x24xf32, #tpu.memory_space<vmem>>, vector<2x16x16x24xf32>
    %cst = arith.constant 0.000000e+00 : f32
    %1 = vector.broadcast %cst : f32 to vector<2x18x18x24xf32>
    %c0_3 = arith.constant 0 : index
    %c0_4 = arith.constant 0 : index
    %c0_5 = arith.constant 0 : index
    %c0_6 = arith.constant 0 : index
    %2 = vector.load %arg8[%c0_3, %c0_4, %c0_5, %c0_6] : memref<2x18x18x24xf32, #tpu.memory_space<vmem>>, vector<2x18x18x24xf32>
    tpu.vector_store %arg8[%c0_3, %c0_4, %c0_5, %c0_6], %1 {strides = array<i32>} : memref<2x18x18x24xf32, #tpu.memory_space<vmem>>, vector<2x18x18x24xf32>,
    %c0_7 = arith.constant 0 : index
    %c1 = arith.constant 1 : index
    %c1_8 = arith.constant 1 : index
    %c0_9 = arith.constant 0 : index
    %3 = vector.load %arg8[%c0_7, %c1, %c1_8, %c0_9] : memref<2x18x18x24xf32, #tpu.memory_space<vmem>>, vector<2x16x16x24xf32>
    tpu.vector_store %arg8[%c0_7, %c1, %c1_8, %c0_9], %0 {strides = array<i32>} : memref<2x18x18x24xf32, #tpu.memory_space<vmem>>, vector<2x16x16x24xf32>,
    %c0_10 = arith.constant 0 : index
    %c0_11 = arith.constant 0 : index
    %c0_12 = arith.constant 0 : index
    %c0_13 = arith.constant 0 : index
    %4 = vector.load %arg8[%c0_10, %c0_11, %c0_12, %c0_13] : memref<2x18x18x24xf32, #tpu.memory_space<vmem>>, vector<2x16x16x24xf32>
    %5 = vector.shape_cast %4 : vector<2x16x16x24xf32> to vector<512x24xf32>
    %c0_14 = arith.constant 0 : index
    %c0_15 = arith.constant 0 : index
    %c1_16 = arith.constant 1 : index
    %c0_17 = arith.constant 0 : index
    %6 = vector.load %arg8[%c0_14, %c0_15, %c1_16, %c0_17] : memref<2x18x18x24xf32, #tpu.memory_space<vmem>>, vector<2x16x16x24xf32>
    %7 = vector.shape_cast %6 : vector<2x16x16x24xf32> to vector<512x24xf32>
    %c0_18 = arith.constant 0 : index
    %c0_19 = arith.constant 0 : index
    %c2 = arith.constant 2 : index
    %c0_20 = arith.constant 0 : index
    %8 = vector.load %arg8[%c0_18, %c0_19, %c2, %c0_20] : memref<2x18x18x24xf32, #tpu.memory_space<vmem>>, vector<2x16x16x24xf32>
    %9 = vector.shape_cast %8 : vector<2x16x16x24xf32> to vector<512x24xf32>
    %c0_21 = arith.constant 0 : index
    %c1_22 = arith.constant 1 : index
    %c0_23 = arith.constant 0 : index
    %c0_24 = arith.constant 0 : index
    %10 = vector.load %arg8[%c0_21, %c1_22, %c0_23, %c0_24] : memref<2x18x18x24xf32, #tpu.memory_space<vmem>>, vector<2x16x16x24xf32>
    %11 = vector.shape_cast %10 : vector<2x16x16x24xf32> to vector<512x24xf32>
    %c0_25 = arith.constant 0 : index
    %c1_26 = arith.constant 1 : index
    %c1_27 = arith.constant 1 : index
    %c0_28 = arith.constant 0 : index
    %12 = vector.load %arg8[%c0_25, %c1_26, %c1_27, %c0_28] : memref<2x18x18x24xf32, #tpu.memory_space<vmem>>, vector<2x16x16x24xf32>
    %13 = vector.shape_cast %12 : vector<2x16x16x24xf32> to vector<512x24xf32>
    %c0_29 = arith.constant 0 : index
    %c1_30 = arith.constant 1 : index
    %c2_31 = arith.constant 2 : index
    %c0_32 = arith.constant 0 : index
    %14 = vector.load %arg8[%c0_29, %c1_30, %c2_31, %c0_32] : memref<2x18x18x24xf32, #tpu.memory_space<vmem>>, vector<2x16x16x24xf32>
    %15 = vector.shape_cast %14 : vector<2x16x16x24xf32> to vector<512x24xf32>
    %c0_33 = arith.constant 0 : index
    %c2_34 = arith.constant 2 : index
    %c0_35 = arith.constant 0 : index
    %c0_36 = arith.constant 0 : index
    %16 = vector.load %arg8[%c0_33, %c2_34, %c0_35, %c0_36] : memref<2x18x18x24xf32, #tpu.memory_space<vmem>>, vector<2x16x16x24xf32>
    %17 = vector.shape_cast %16 : vector<2x16x16x24xf32> to vector<512x24xf32>
    %c0_37 = arith.constant 0 : index
    %c2_38 = arith.constant 2 : index
    %c1_39 = arith.constant 1 : index
    %c0_40 = arith.constant 0 : index
    %18 = vector.load %arg8[%c0_37, %c2_38, %c1_39, %c0_40] : memref<2x18x18x24xf32, #tpu.memory_space<vmem>>, vector<2x16x16x24xf32>
    %19 = vector.shape_cast %18 : vector<2x16x16x24xf32> to vector<512x24xf32>
    %c0_41 = arith.constant 0 : index
    %c2_42 = arith.constant 2 : index
    %c2_43 = arith.constant 2 : index
    %c0_44 = arith.constant 0 : index
    %20 = vector.load %arg8[%c0_41, %c2_42, %c2_43, %c0_44] : memref<2x18x18x24xf32, #tpu.memory_space<vmem>>, vector<2x16x16x24xf32>
    %21 = vector.shape_cast %20 : vector<2x16x16x24xf32> to vector<512x24xf32>
    %22 = tpu.concatenate %5, %7, %9, %11, %13, %15, %17, %19, %21 in 1 : vector<512x24xf32>, vector<512x24xf32>, vector<512x24xf32>, vector<512x24xf32>, vector<512x24xf32>, vector<512x24xf32>, vector<512x24xf32>, vector<512x24xf32>, vector<512x24xf32> -> vector<512x216xf32>
    %c0_45 = arith.constant 0 : index
    %c0_46 = arith.constant 0 : index
    %23 = vector.load %arg1[%c0_45, %c0_46] : memref<216x32xf32, #tpu.memory_space<vmem>>, vector<216x32xf32>
    %cst_47 = arith.constant dense<0.000000e+00> : vector<512x32xf32>
    %24 = tpu.matmul %22, %23, %cst_47 {dimension_numbers = #tpu.dot_dimension_numbers<[1], [0], [0], [1], [0, 0, 1, 1], [], []>} : vector<512x216xf32>, vector<216x32xf32>, vector<512x32xf32> -> vector<512x32xf32>
    %c0_48 = arith.constant 0 : index
    %c0_49 = arith.constant 0 : index
    %25 = vector.load %arg2[%c0_48, %c0_49] : memref<1x32xf32, #tpu.memory_space<vmem>>, vector<1x32xf32>
    %26 = vector.broadcast %25 : vector<1x32xf32> to vector<512x32xf32>
    %27 = arith.addf %24, %26 : vector<512x32xf32>
    %cst_50 = arith.constant 0.000000e+00 : f32
    %28 = vector.broadcast %cst_50 : f32 to vector<512x32xf32>
    %29 = arith.maximumf %27, %28 : vector<512x32xf32>
    %30 = vector.shape_cast %29 : vector<512x32xf32> to vector<2x16x16x32xf32>
    %cst_51 = arith.constant 0.000000e+00 : f32
    %31 = vector.broadcast %cst_51 : f32 to vector<2x18x18x32xf32>
    %c0_52 = arith.constant 0 : index
    %c0_53 = arith.constant 0 : index
    %c0_54 = arith.constant 0 : index
    %c0_55 = arith.constant 0 : index
    %32 = vector.load %arg9[%c0_52, %c0_53, %c0_54, %c0_55] : memref<2x18x18x32xf32, #tpu.memory_space<vmem>>, vector<2x18x18x32xf32>
    tpu.vector_store %arg9[%c0_52, %c0_53, %c0_54, %c0_55], %31 {strides = array<i32>} : memref<2x18x18x32xf32, #tpu.memory_space<vmem>>, vector<2x18x18x32xf32>,
    %c0_56 = arith.constant 0 : index
    %c1_57 = arith.constant 1 : index
    %c1_58 = arith.constant 1 : index
    %c0_59 = arith.constant 0 : index
    %33 = vector.load %arg9[%c0_56, %c1_57, %c1_58, %c0_59] : memref<2x18x18x32xf32, #tpu.memory_space<vmem>>, vector<2x16x16x32xf32>
    tpu.vector_store %arg9[%c0_56, %c1_57, %c1_58, %c0_59], %30 {strides = array<i32>} : memref<2x18x18x32xf32, #tpu.memory_space<vmem>>, vector<2x16x16x32xf32>,
    %c0_60 = arith.constant 0 : index
    %c0_61 = arith.constant 0 : index
    %c0_62 = arith.constant 0 : index
    %c0_63 = arith.constant 0 : index
    %34 = vector.load %arg9[%c0_60, %c0_61, %c0_62, %c0_63] : memref<2x18x18x32xf32, #tpu.memory_space<vmem>>, vector<2x16x16x32xf32>
    %35 = vector.shape_cast %34 : vector<2x16x16x32xf32> to vector<512x32xf32>
    %c0_64 = arith.constant 0 : index
    %c0_65 = arith.constant 0 : index
    %c1_66 = arith.constant 1 : index
    %c0_67 = arith.constant 0 : index
    %36 = vector.load %arg9[%c0_64, %c0_65, %c1_66, %c0_67] : memref<2x18x18x32xf32, #tpu.memory_space<vmem>>, vector<2x16x16x32xf32>
    %37 = vector.shape_cast %36 : vector<2x16x16x32xf32> to vector<512x32xf32>
    %c0_68 = arith.constant 0 : index
    %c0_69 = arith.constant 0 : index
    %c2_70 = arith.constant 2 : index
    %c0_71 = arith.constant 0 : index
    %38 = vector.load %arg9[%c0_68, %c0_69, %c2_70, %c0_71] : memref<2x18x18x32xf32, #tpu.memory_space<vmem>>, vector<2x16x16x32xf32>
    %39 = vector.shape_cast %38 : vector<2x16x16x32xf32> to vector<512x32xf32>
    %c0_72 = arith.constant 0 : index
    %c1_73 = arith.constant 1 : index
    %c0_74 = arith.constant 0 : index
    %c0_75 = arith.constant 0 : index
    %40 = vector.load %arg9[%c0_72, %c1_73, %c0_74, %c0_75] : memref<2x18x18x32xf32, #tpu.memory_space<vmem>>, vector<2x16x16x32xf32>
    %41 = vector.shape_cast %40 : vector<2x16x16x32xf32> to vector<512x32xf32>
    %c0_76 = arith.constant 0 : index
    %c1_77 = arith.constant 1 : index
    %c1_78 = arith.constant 1 : index
    %c0_79 = arith.constant 0 : index
    %42 = vector.load %arg9[%c0_76, %c1_77, %c1_78, %c0_79] : memref<2x18x18x32xf32, #tpu.memory_space<vmem>>, vector<2x16x16x32xf32>
    %43 = vector.shape_cast %42 : vector<2x16x16x32xf32> to vector<512x32xf32>
    %c0_80 = arith.constant 0 : index
    %c1_81 = arith.constant 1 : index
    %c2_82 = arith.constant 2 : index
    %c0_83 = arith.constant 0 : index
    %44 = vector.load %arg9[%c0_80, %c1_81, %c2_82, %c0_83] : memref<2x18x18x32xf32, #tpu.memory_space<vmem>>, vector<2x16x16x32xf32>
    %45 = vector.shape_cast %44 : vector<2x16x16x32xf32> to vector<512x32xf32>
    %c0_84 = arith.constant 0 : index
    %c2_85 = arith.constant 2 : index
    %c0_86 = arith.constant 0 : index
    %c0_87 = arith.constant 0 : index
    %46 = vector.load %arg9[%c0_84, %c2_85, %c0_86, %c0_87] : memref<2x18x18x32xf32, #tpu.memory_space<vmem>>, vector<2x16x16x32xf32>
    %47 = vector.shape_cast %46 : vector<2x16x16x32xf32> to vector<512x32xf32>
    %c0_88 = arith.constant 0 : index
    %c2_89 = arith.constant 2 : index
    %c1_90 = arith.constant 1 : index
    %c0_91 = arith.constant 0 : index
    %48 = vector.load %arg9[%c0_88, %c2_89, %c1_90, %c0_91] : memref<2x18x18x32xf32, #tpu.memory_space<vmem>>, vector<2x16x16x32xf32>
    %49 = vector.shape_cast %48 : vector<2x16x16x32xf32> to vector<512x32xf32>
    %c0_92 = arith.constant 0 : index
    %c2_93 = arith.constant 2 : index
    %c2_94 = arith.constant 2 : index
    %c0_95 = arith.constant 0 : index
    %50 = vector.load %arg9[%c0_92, %c2_93, %c2_94, %c0_95] : memref<2x18x18x32xf32, #tpu.memory_space<vmem>>, vector<2x16x16x32xf32>
    %51 = vector.shape_cast %50 : vector<2x16x16x32xf32> to vector<512x32xf32>
    %52 = tpu.concatenate %35, %37, %39, %41, %43, %45, %47, %49, %51 in 1 : vector<512x32xf32>, vector<512x32xf32>, vector<512x32xf32>, vector<512x32xf32>, vector<512x32xf32>, vector<512x32xf32>, vector<512x32xf32>, vector<512x32xf32>, vector<512x32xf32> -> vector<512x288xf32>
    %c0_96 = arith.constant 0 : index
    %c0_97 = arith.constant 0 : index
    %53 = vector.load %arg3[%c0_96, %c0_97] : memref<288x32xf32, #tpu.memory_space<vmem>>, vector<288x32xf32>
    %cst_98 = arith.constant dense<0.000000e+00> : vector<512x32xf32>
    %54 = tpu.matmul %52, %53, %cst_98 {dimension_numbers = #tpu.dot_dimension_numbers<[1], [0], [0], [1], [0, 0, 1, 1], [], []>} : vector<512x288xf32>, vector<288x32xf32>, vector<512x32xf32> -> vector<512x32xf32>
    %c0_99 = arith.constant 0 : index
    %c0_100 = arith.constant 0 : index
    %55 = vector.load %arg4[%c0_99, %c0_100] : memref<1x32xf32, #tpu.memory_space<vmem>>, vector<1x32xf32>
    %56 = vector.broadcast %55 : vector<1x32xf32> to vector<512x32xf32>
    %57 = arith.addf %54, %56 : vector<512x32xf32>
    %cst_101 = arith.constant 0.000000e+00 : f32
    %58 = vector.broadcast %cst_101 : f32 to vector<512x32xf32>
    %59 = arith.maximumf %57, %58 : vector<512x32xf32>
    %60 = vector.shape_cast %59 : vector<512x32xf32> to vector<2x16x16x32xf32>
    %cst_102 = arith.constant 0.000000e+00 : f32
    %61 = vector.broadcast %cst_102 : f32 to vector<2x18x18x32xf32>
    %c0_103 = arith.constant 0 : index
    %c0_104 = arith.constant 0 : index
    %c0_105 = arith.constant 0 : index
    %c0_106 = arith.constant 0 : index
    %62 = vector.load %arg10[%c0_103, %c0_104, %c0_105, %c0_106] : memref<2x18x18x32xf32, #tpu.memory_space<vmem>>, vector<2x18x18x32xf32>
    tpu.vector_store %arg10[%c0_103, %c0_104, %c0_105, %c0_106], %61 {strides = array<i32>} : memref<2x18x18x32xf32, #tpu.memory_space<vmem>>, vector<2x18x18x32xf32>,
    %c0_107 = arith.constant 0 : index
    %c1_108 = arith.constant 1 : index
    %c1_109 = arith.constant 1 : index
    %c0_110 = arith.constant 0 : index
    %63 = vector.load %arg10[%c0_107, %c1_108, %c1_109, %c0_110] : memref<2x18x18x32xf32, #tpu.memory_space<vmem>>, vector<2x16x16x32xf32>
    tpu.vector_store %arg10[%c0_107, %c1_108, %c1_109, %c0_110], %60 {strides = array<i32>} : memref<2x18x18x32xf32, #tpu.memory_space<vmem>>, vector<2x16x16x32xf32>,
    %cst_111 = arith.constant 0.000000e+00 : f32
    %64 = vector.broadcast %cst_111 : f32 to vector<512x32xf32>
    %c0_112 = arith.constant 0 : index
    %c0_113 = arith.constant 0 : index
    %c0_114 = arith.constant 0 : index
    %c0_115 = arith.constant 0 : index
    %65 = vector.load %arg10[%c0_112, %c0_113, %c0_114, %c0_115] : memref<2x18x18x32xf32, #tpu.memory_space<vmem>>, vector<2x16x16x32xf32>
    %66 = vector.shape_cast %65 : vector<2x16x16x32xf32> to vector<512x32xf32>
    %c0_116 = arith.constant 0 : index
    %c0_117 = arith.constant 0 : index
    %67 = vector.load %arg5[%c0_116, %c0_117] : memref<9x32xf32, #tpu.memory_space<vmem>>, vector<1x32xf32>
    %68 = vector.broadcast %67 : vector<1x32xf32> to vector<512x32xf32>
    %69 = arith.mulf %66, %68 : vector<512x32xf32>
    %70 = arith.addf %64, %69 : vector<512x32xf32>
    %c0_118 = arith.constant 0 : index
    %c0_119 = arith.constant 0 : index
    %c1_120 = arith.constant 1 : index
    %c0_121 = arith.constant 0 : index
    %71 = vector.load %arg10[%c0_118, %c0_119, %c1_120, %c0_121] : memref<2x18x18x32xf32, #tpu.memory_space<vmem>>, vector<2x16x16x32xf32>
    %72 = vector.shape_cast %71 : vector<2x16x16x32xf32> to vector<512x32xf32>
    %c1_122 = arith.constant 1 : index
    %c0_123 = arith.constant 0 : index
    %73 = vector.load %arg5[%c1_122, %c0_123] : memref<9x32xf32, #tpu.memory_space<vmem>>, vector<1x32xf32>
    %74 = vector.broadcast %73 : vector<1x32xf32> to vector<512x32xf32>
    %75 = arith.mulf %72, %74 : vector<512x32xf32>
    %76 = arith.addf %70, %75 : vector<512x32xf32>
    %c0_124 = arith.constant 0 : index
    %c0_125 = arith.constant 0 : index
    %c2_126 = arith.constant 2 : index
    %c0_127 = arith.constant 0 : index
    %77 = vector.load %arg10[%c0_124, %c0_125, %c2_126, %c0_127] : memref<2x18x18x32xf32, #tpu.memory_space<vmem>>, vector<2x16x16x32xf32>
    %78 = vector.shape_cast %77 : vector<2x16x16x32xf32> to vector<512x32xf32>
    %c2_128 = arith.constant 2 : index
    %c0_129 = arith.constant 0 : index
    %79 = vector.load %arg5[%c2_128, %c0_129] : memref<9x32xf32, #tpu.memory_space<vmem>>, vector<1x32xf32>
    %80 = vector.broadcast %79 : vector<1x32xf32> to vector<512x32xf32>
    %81 = arith.mulf %78, %80 : vector<512x32xf32>
    %82 = arith.addf %76, %81 : vector<512x32xf32>
    %c0_130 = arith.constant 0 : index
    %c1_131 = arith.constant 1 : index
    %c0_132 = arith.constant 0 : index
    %c0_133 = arith.constant 0 : index
    %83 = vector.load %arg10[%c0_130, %c1_131, %c0_132, %c0_133] : memref<2x18x18x32xf32, #tpu.memory_space<vmem>>, vector<2x16x16x32xf32>
    %84 = vector.shape_cast %83 : vector<2x16x16x32xf32> to vector<512x32xf32>
    %c3 = arith.constant 3 : index
    %c0_134 = arith.constant 0 : index
    %85 = vector.load %arg5[%c3, %c0_134] : memref<9x32xf32, #tpu.memory_space<vmem>>, vector<1x32xf32>
    %86 = vector.broadcast %85 : vector<1x32xf32> to vector<512x32xf32>
    %87 = arith.mulf %84, %86 : vector<512x32xf32>
    %88 = arith.addf %82, %87 : vector<512x32xf32>
    %c0_135 = arith.constant 0 : index
    %c1_136 = arith.constant 1 : index
    %c1_137 = arith.constant 1 : index
    %c0_138 = arith.constant 0 : index
    %89 = vector.load %arg10[%c0_135, %c1_136, %c1_137, %c0_138] : memref<2x18x18x32xf32, #tpu.memory_space<vmem>>, vector<2x16x16x32xf32>
    %90 = vector.shape_cast %89 : vector<2x16x16x32xf32> to vector<512x32xf32>
    %c4 = arith.constant 4 : index
    %c0_139 = arith.constant 0 : index
    %91 = vector.load %arg5[%c4, %c0_139] : memref<9x32xf32, #tpu.memory_space<vmem>>, vector<1x32xf32>
    %92 = vector.broadcast %91 : vector<1x32xf32> to vector<512x32xf32>
    %93 = arith.mulf %90, %92 : vector<512x32xf32>
    %94 = arith.addf %88, %93 : vector<512x32xf32>
    %c0_140 = arith.constant 0 : index
    %c1_141 = arith.constant 1 : index
    %c2_142 = arith.constant 2 : index
    %c0_143 = arith.constant 0 : index
    %95 = vector.load %arg10[%c0_140, %c1_141, %c2_142, %c0_143] : memref<2x18x18x32xf32, #tpu.memory_space<vmem>>, vector<2x16x16x32xf32>
    %96 = vector.shape_cast %95 : vector<2x16x16x32xf32> to vector<512x32xf32>
    %c5 = arith.constant 5 : index
    %c0_144 = arith.constant 0 : index
    %97 = vector.load %arg5[%c5, %c0_144] : memref<9x32xf32, #tpu.memory_space<vmem>>, vector<1x32xf32>
    %98 = vector.broadcast %97 : vector<1x32xf32> to vector<512x32xf32>
    %99 = arith.mulf %96, %98 : vector<512x32xf32>
    %100 = arith.addf %94, %99 : vector<512x32xf32>
    %c0_145 = arith.constant 0 : index
    %c2_146 = arith.constant 2 : index
    %c0_147 = arith.constant 0 : index
    %c0_148 = arith.constant 0 : index
    %101 = vector.load %arg10[%c0_145, %c2_146, %c0_147, %c0_148] : memref<2x18x18x32xf32, #tpu.memory_space<vmem>>, vector<2x16x16x32xf32>
    %102 = vector.shape_cast %101 : vector<2x16x16x32xf32> to vector<512x32xf32>
    %c6 = arith.constant 6 : index
    %c0_149 = arith.constant 0 : index
    %103 = vector.load %arg5[%c6, %c0_149] : memref<9x32xf32, #tpu.memory_space<vmem>>, vector<1x32xf32>
    %104 = vector.broadcast %103 : vector<1x32xf32> to vector<512x32xf32>
    %105 = arith.mulf %102, %104 : vector<512x32xf32>
    %106 = arith.addf %100, %105 : vector<512x32xf32>
    %c0_150 = arith.constant 0 : index
    %c2_151 = arith.constant 2 : index
    %c1_152 = arith.constant 1 : index
    %c0_153 = arith.constant 0 : index
    %107 = vector.load %arg10[%c0_150, %c2_151, %c1_152, %c0_153] : memref<2x18x18x32xf32, #tpu.memory_space<vmem>>, vector<2x16x16x32xf32>
    %108 = vector.shape_cast %107 : vector<2x16x16x32xf32> to vector<512x32xf32>
    %c7 = arith.constant 7 : index
    %c0_154 = arith.constant 0 : index
    %109 = vector.load %arg5[%c7, %c0_154] : memref<9x32xf32, #tpu.memory_space<vmem>>, vector<1x32xf32>
    %110 = vector.broadcast %109 : vector<1x32xf32> to vector<512x32xf32>
    %111 = arith.mulf %108, %110 : vector<512x32xf32>
    %112 = arith.addf %106, %111 : vector<512x32xf32>
    %c0_155 = arith.constant 0 : index
    %c2_156 = arith.constant 2 : index
    %c2_157 = arith.constant 2 : index
    %c0_158 = arith.constant 0 : index
    %113 = vector.load %arg10[%c0_155, %c2_156, %c2_157, %c0_158] : memref<2x18x18x32xf32, #tpu.memory_space<vmem>>, vector<2x16x16x32xf32>
    %114 = vector.shape_cast %113 : vector<2x16x16x32xf32> to vector<512x32xf32>
    %c8 = arith.constant 8 : index
    %c0_159 = arith.constant 0 : index
    %115 = vector.load %arg5[%c8, %c0_159] : memref<9x32xf32, #tpu.memory_space<vmem>>, vector<1x32xf32>
    %116 = vector.broadcast %115 : vector<1x32xf32> to vector<512x32xf32>
    %117 = arith.mulf %114, %116 : vector<512x32xf32>
    %118 = arith.addf %112, %117 : vector<512x32xf32>
    %cst_160 = arith.constant dense<0.000000e+00> : vector<512xf32>
    %119 = vector.multi_reduction <add>, %118, %cst_160 [1] : vector<512x32xf32> to vector<512xf32>
    %120 = vector.shape_cast %119 : vector<512xf32> to vector<512x1xf32>
    %c0_161 = arith.constant 0 : index
    %c0_162 = arith.constant 0 : index
    %121 = vector.load %arg6[%c0_161, %c0_162] : memref<1x1xf32, #tpu.memory_space<vmem>>, vector<1x1xf32>
    %122 = vector.broadcast %121 : vector<1x1xf32> to vector<512x1xf32>
    %123 = arith.addf %120, %122 : vector<512x1xf32>
    %124 = arith.negf %123 : vector<512x1xf32>
    %125 = math.exp %124 : vector<512x1xf32>
    %cst_163 = arith.constant 1.000000e+00 : f32
    %126 = vector.broadcast %cst_163 : f32 to vector<512x1xf32>
    %127 = arith.addf %126, %125 : vector<512x1xf32>
    %128 = arith.divf %126, %127 : vector<512x1xf32>
    %c0_164 = arith.constant 0 : index
    %c0_165 = arith.constant 0 : index
    %129 = vector.load %arg7[%c0_164, %c0_165] : memref<512x1xf32, #tpu.memory_space<vmem>>, vector<512x1xf32>
    tpu.vector_store %arg7[%c0_164, %c0_165], %128 {strides = array<i32>} : memref<512x1xf32, #tpu.memory_space<vmem>>, vector<512x1xf32>,
    return
  }
}

</mosaic_0001>

<llo_original>
// kernel: refine_forward.1
$region0: #{refine_forward.1}
  #allocation0 [shape = 'u32[]', space=smem, size = 0x4, offset = 0x4, fixed_abs, tag = 'smem constant byte address 0x4 - core index']
  #allocation1 [shape = 'u32[144,128]{1,0:T(1,128)}', space=vmem, size = 0x12000, scoped, tag = 'internal scratch']
  #allocation2 [shape = 'f32[2,18,18,24]{3,2,1,0:T(8,128)}', space=vmem, size = 0x6c000, scoped, tag = 'scratch operand']
  #allocation3 [shape = 'f32[2,18,18,32]{3,2,1,0:T(8,128)}', space=vmem, size = 0x6c000, scoped, tag = 'scratch operand']
  #allocation4 [shape = 'f32[2,18,18,32]{3,2,1,0:T(8,128)}', space=vmem, size = 0x6c000, scoped, tag = 'scratch operand']
  #allocation5 [shape = 'f32[1,1]{1,0:T(1,128)S(1)}', space=vmem, size = 0x200, scoped, tag = 'scoped memory for refine_forward.1']
  %s0 = inlined_call_operand.hbm [shape: f32[2,16,16,24], index: 0, kind: input, shape index: {}]
  %s1 = inlined_call_operand.hbm [shape: f32[216,32], index: 1, kind: input, shape index: {}]
  %s2 = inlined_call_operand.vmem [shape: f32[1,32], index: 2, kind: input, shape index: {}]
  %s3 = inlined_call_operand.hbm [shape: f32[288,32], index: 3, kind: input, shape index: {}]
  %s4 = inlined_call_operand.vmem [shape: f32[1,32], index: 4, kind: input, shape index: {}]
  %s5 = inlined_call_operand.vmem [shape: f32[9,32], index: 5, kind: input, shape index: {}]
  %s6 = inlined_call_operand.<no memory space> [shape: f32[1,1], index: 6, kind: input, shape index: {}]
  %s7 = inlined_call_operand.vmem [shape: f32[512,1], index: 7, kind: output, shape index: {}]
  %s8 = sld [smem:[#allocation0]]
  $region50: #{refine_forward.1} parent=0
    _
  %s10 = ssub.s32 1, %s8
  %s11 = scalar_select 0, %s10, %s8
  %v12 = vstv %s6
  %13 = vst [vmem:[#allocation5] sm:$0x1] %v12
  $region1: #{refine_forward.1} parent=0
    #allocation6 [shape = 'u8[262144]{0}', space=vmem, size = 0x40000, scoped, tag = 'input window, operand 0, single buffered']
    #allocation7 [shape = 's32[1]{0}', space=sflag, size = 0x4, scoped, tag = 'scoped memory for refine_forward.1']
    #allocation8 [shape = 'u8[110592]{0}', space=vmem, size = 0x1b000, scoped, tag = 'input window, operand 1, single buffered']
    #allocation9 [shape = 's32[1]{0}', space=sflag, size = 0x4, scoped, tag = 'scoped memory for refine_forward.1']
    #allocation10 [shape = 'u8[147456]{0}', space=vmem, size = 0x24000, scoped, tag = 'input window, operand 3, single buffered']
    %14 = vsyncpa [#allocation7], 0
    %15 = vsyncpa [#allocation9], 0
    // Predicated region
    $region2: #{refine_forward.1} parent=1 // pred_check
      _
    $region3: #{refine_forward.1} parent=1 // pred_check_branch
      %17 = sbr.rel (0) target = $region5
    $region4: #{refine_forward.1} parent=1 // pred_region
      %s19 = ssub.s32 8192, 8192
      %20 = vsyncadd [#allocation7], %s19
      %s21 = sshll.u32 [#allocation6], 4
      %s22 = int_to_ptr.vmem [resolvable:$true] %s21
      %27 = dma.hbm_to_vmem [thread:$0]  %s0, 8192, %s22, [#allocation7], 128, 128, 8
    $region5: #{refine_forward.1} parent=1 // pred_fallthru
      _
    // Predicated region
    $region6: #{refine_forward.1} parent=1 // pred_check
      _
    $region7: #{refine_forward.1} parent=1 // pred_check_branch
      %29 = sbr.rel (0) target = $region9
    $region8: #{refine_forward.1} parent=1 // pred_region
      %s31 = ssub.s32 3456, 3456
      %32 = vsyncadd [#allocation9], %s31
      %s33 = sshll.u32 [#allocation8], 4
      %s34 = int_to_ptr.vmem [resolvable:$true] %s33
      %39 = dma.hbm_to_vmem [thread:$0]  %s1, 3456, %s34, [#allocation9], 128, 128, 8
    $region9: #{refine_forward.1} parent=1 // pred_fallthru
      _
    // Predicated region
    $region10: #{refine_forward.1} parent=1 // pred_check
      _
    $region11: #{refine_forward.1} parent=1 // pred_check_branch
      %41 = sbr.rel (0) target = $region13
    $region12: #{refine_forward.1} parent=1 // pred_region
      _
    $region13: #{refine_forward.1} parent=1 // pred_fallthru
      _
    // Predicated region
    $region14: #{refine_forward.1} parent=1 // pred_check
      _
    $region15: #{refine_forward.1} parent=1 // pred_check_branch
      %43 = sbr.rel (0) target = $region17
    $region16: #{refine_forward.1} parent=1 // pred_region
      %s45 = ssub.s32 4608, 4608
      %46 = vsyncadd [#allocation9], %s45
      %s47 = sshll.u32 [#allocation10], 4
      %s48 = int_to_ptr.vmem [resolvable:$true] %s47
      %53 = dma.hbm_to_vmem [thread:$0]  %s3, 4608, %s48, [#allocation9], 128, 128, 8
    $region17: #{refine_forward.1} parent=1 // pred_fallthru
      _
    // Predicated region
    $region18: #{refine_forward.1} parent=1 // pred_check
      _
    $region19: #{refine_forward.1} parent=1 // pred_check_branch
      %55 = sbr.rel (0) target = $region21
    $region20: #{refine_forward.1} parent=1 // pred_region
      _
    $region21: #{refine_forward.1} parent=1 // pred_fallthru
      _
    // Predicated region
    $region22: #{refine_forward.1} parent=1 // pred_check
      _
    $region23: #{refine_forward.1} parent=1 // pred_check_branch
      %57 = sbr.rel (0) target = $region25
    $region24: #{refine_forward.1} parent=1 // pred_region
      _
    $region25: #{refine_forward.1} parent=1 // pred_fallthru
      _
    // Predicated region
    $region26: #{refine_forward.1} parent=1 // pred_check
      _
    $region27: #{refine_forward.1} parent=1 // pred_check_branch
      %59 = sbr.rel (0) target = $region29
    $region28: #{refine_forward.1} parent=1 // pred_region
      _
    $region29: #{refine_forward.1} parent=1 // pred_fallthru
      _
    // Predicated region
    $region30: #{refine_forward.1} parent=1 // pred_check
      _
    $region31: #{refine_forward.1} parent=1 // pred_check_branch
      %61 = sbr.rel (0) target = $region33
    $region32: #{refine_forward.1} parent=1 // pred_region
      %62 = dma.done [#allocation7], 8192
    $region33: #{refine_forward.1} parent=1 // pred_fallthru
      _
    // Predicated region
    $region34: #{refine_forward.1} parent=1 // pred_check
      _
    $region35: #{refine_forward.1} parent=1 // pred_check_branch
      %64 = sbr.rel (0) target = $region37
    $region36: #{refine_forward.1} parent=1 // pred_region
      %65 = dma.done [#allocation9], 3456
    $region37: #{refine_forward.1} parent=1 // pred_fallthru
      _
    // Predicated region
    $region38: #{refine_forward.1} parent=1 // pred_check
      _
    $region39: #{refine_forward.1} parent=1 // pred_check_branch
      %67 = sbr.rel (0) target = $region41
    $region40: #{refine_forward.1} parent=1 // pred_region
      %68 = dma.done [#allocation9], 4608
    $region41: #{refine_forward.1} parent=1 // pred_fallthru
      _
    %v69 = vld [vmem:[#allocation6] sm:$0xff]
    %v70 = vld [vmem:[#allocation6 + $0x8] sm:$0xff]
    %v71 = vld [vmem:[#allocation6 + $0x10] sm:$0xff]
    %v72 = vld [vmem:[#allocation6 + $0x18] sm:$0xff]
    %v73 = vld [vmem:[#allocation6 + $0x20] sm:$0xff]
    %v74 = vld [vmem:[#allocation6 + $0x28] sm:$0xff]
    %v75 = vld [vmem:[#allocation6 + $0x30] sm:$0xff]
    %v76 = vld [vmem:[#allocation6 + $0x38] sm:$0xff]
    %v77 = vld [vmem:[#allocation6 + $0x40] sm:$0xff]
    %v78 = vld [vmem:[#allocation6 + $0x48] sm:$0xff]
    %v79 = vld [vmem:[#allocation6 + $0x50] sm:$0xff]
    %v80 = vld [vmem:[#allocation6 + $0x58] sm:$0xff]
    %v81 = vld [vmem:[#allocation6 + $0x60] sm:$0xff]
    %v82 = vld [vmem:[#allocation6 + $0x68] sm:$0xff]
    %v83 = vld [vmem:[#allocation6 + $0x70] sm:$0xff]
    %v84 = vld [vmem:[#allocation6 + $0x78] sm:$0xff]
    %v85 = vld [vmem:[#allocation6 + $0x80] sm:$0xff]
    %v86 = vld [vmem:[#allocation6 + $0x88] sm:$0xff]
    %v87 = vld [vmem:[#allocation6 + $0x90] sm:$0xff]
    %v88 = vld [vmem:[#allocation6 + $0x98] sm:$0xff]
    %v89 = vld [vmem:[#allocation6 + $0xa0] sm:$0xff]
    %v90 = vld [vmem:[#allocation6 + $0xa8] sm:$0xff]
    %v91 = vld [vmem:[#allocation6 + $0xb0] sm:$0xff]
    %v92 = vld [vmem:[#allocation6 + $0xb8] sm:$0xff]
    %v93 = vld [vmem:[#allocation6 + $0xc0] sm:$0xff]
    %v94 = vld [vmem:[#allocation6 + $0xc8] sm:$0xff]
    %v95 = vld [vmem:[#allocation6 + $0xd0] sm:$0xff]
    %v96 = vld [vmem:[#allocation6 + $0xd8] sm:$0xff]
    %v97 = vld [vmem:[#allocation6 + $0xe0] sm:$0xff]
    %v98 = vld [vmem:[#allocation6 + $0xe8] sm:$0xff]
    %v99 = vld [vmem:[#allocation6 + $0xf0] sm:$0xff]
    %v100 = vld [vmem:[#allocation6 + $0xf8] sm:$0xff]
    %v101 = vld [vmem:[#allocation6 + $0x100] sm:$0xff]
    %v102 = vld [vmem:[#allocation6 + $0x108] sm:$0xff]
    %v103 = vld [vmem:[#allocation6 + $0x110] sm:$0xff]
    %v104 = vld [vmem:[#allocation6 + $0x118] sm:$0xff]
    %v105 = vld [vmem:[#allocation6 + $0x120] sm:$0xff]
    %v106 = vld [vmem:[#allocation6 + $0x128] sm:$0xff]
    %v107 = vld [vmem:[#allocation6 + $0x130] sm:$0xff]
    %v108 = vld [vmem:[#allocation6 + $0x138] sm:$0xff]
    %v109 = vld [vmem:[#allocation6 + $0x140] sm:$0xff]
    %v110 = vld [vmem:[#allocation6 + $0x148] sm:$0xff]
    %v111 = vld [vmem:[#allocation6 + $0x150] sm:$0xff]
    %v112 = vld [vmem:[#allocation6 + $0x158] sm:$0xff]
    %v113 = vld [vmem:[#allocation6 + $0x160] sm:$0xff]
    %v114 = vld [vmem:[#allocation6 + $0x168] sm:$0xff]
    %v115 = vld [vmem:[#allocation6 + $0x170] sm:$0xff]
    %v116 = vld [vmem:[#allocation6 + $0x178] sm:$0xff]
    %v117 = vld [vmem:[#allocation6 + $0x180] sm:$0xff]
    %v118 = vld [vmem:[#allocation6 + $0x188] sm:$0xff]
    %v119 = vld [vmem:[#allocation6 + $0x190] sm:$0xff]
    %v120 = vld [vmem:[#allocation6 + $0x198] sm:$0xff]
    %v121 = vld [vmem:[#allocation6 + $0x1a0] sm:$0xff]
    %v122 = vld [vmem:[#allocation6 + $0x1a8] sm:$0xff]
    %v123 = vld [vmem:[#allocation6 + $0x1b0] sm:$0xff]
    %v124 = vld [vmem:[#allocation6 + $0x1b8] sm:$0xff]
    %v125 = vld [vmem:[#allocation6 + $0x1c0] sm:$0xff]
    %v126 = vld [vmem:[#allocation6 + $0x1c8] sm:$0xff]
    %v127 = vld [vmem:[#allocation6 + $0x1d0] sm:$0xff]
    %v128 = vld [vmem:[#allocation6 + $0x1d8] sm:$0xff]
    %v129 = vld [vmem:[#allocation6 + $0x1e0] sm:$0xff]
    %v130 = vld [vmem:[#allocation6 + $0x1e8] sm:$0xff]
    %v131 = vld [vmem:[#allocation6 + $0x1f0] sm:$0xff]
    %v132 = vld [vmem:[#allocation6 + $0x1f8] sm:$0xff]
    %vm133 = vcmask 195584
    %134 = vst.msk [vmem:[#allocation2] sm:$0xff] %vm133, 0.0
    %135 = vst.msk [vmem:[#allocation2 + $0x8] sm:$0xff] %vm133, 0.0
    %vm136 = vcmask 189440
    %137 = vst.msk [vmem:[#allocation2 + $0x10] sm:$0x3] %vm136, 0.0
    %138 = vst.msk [vmem:[#allocation2 + $0x18] sm:$0xff] %vm133, 0.0
    %139 = vst.msk [vmem:[#allocation2 + $0x20] sm:$0xff] %vm133, 0.0
    %140 = vst.msk [vmem:[#allocation2 + $0x28] sm:$0x3] %vm136, 0.0
    %141 = vst.msk [vmem:[#allocation2 + $0x30] sm:$0xff] %vm133, 0.0
    %142 = vst.msk [vmem:[#allocation2 + $0x38] sm:$0xff] %vm133, 0.0
    %143 = vst.msk [vmem:[#allocation2 + $0x40] sm:$0x3] %vm136, 0.0
    %144 = vst.msk [vmem:[#allocation2 + $0x48] sm:$0xff] %vm133, 0.0
    %145 = vst.msk [vmem:[#allocation2 + $0x50] sm:$0xff] %vm133, 0.0
    %146 = vst.msk [vmem:[#allocation2 + $0x58] sm:$0x3] %vm136, 0.0
    %147 = vst.msk [vmem:[#allocation2 + $0x60] sm:$0xff] %vm133, 0.0
    %148 = vst.msk [vmem:[#allocation2 + $0x68] sm:$0xff] %vm133, 0.0
    %149 = vst.msk [vmem:[#allocation2 + $0x70] sm:$0x3] %vm136, 0.0
    %150 = vst.msk [vmem:[#allocation2 + $0x78] sm:$0xff] %vm133, 0.0
    %151 = vst.msk [vmem:[#allocation2 + $0x80] sm:$0xff] %vm133, 0.0
    %152 = vst.msk [vmem:[#allocation2 + $0x88] sm:$0x3] %vm136, 0.0
    %153 = vst.msk [vmem:[#allocation2 + $0x90] sm:$0xff] %vm133, 0.0
    %154 = vst.msk [vmem:[#allocation2 + $0x98] sm:$0xff] %vm133, 0.0
    %155 = vst.msk [vmem:[#allocation2 + $0xa0] sm:$0x3] %vm136, 0.0
    %156 = vst.msk [vmem:[#allocation2 + $0xa8] sm:$0xff] %vm133, 0.0
    %157 = vst.msk [vmem:[#allocation2 + $0xb0] sm:$0xff] %vm133, 0.0
    %158 = vst.msk [vmem:[#allocation2 + $0xb8] sm:$0x3] %vm136, 0.0
    %159 = vst.msk [vmem:[#allocation2 + $0xc0] sm:$0xff] %vm133, 0.0
    %160 = vst.msk [vmem:[#allocation2 + $0xc8] sm:$0xff] %vm133, 0.0
    %161 = vst.msk [vmem:[#allocation2 + $0xd0] sm:$0x3] %vm136, 0.0
    %162 = vst.msk [vmem:[#allocation2 + $0xd8] sm:$0xff] %vm133, 0.0
    %163 = vst.msk [vmem:[#allocation2 + $0xe0] sm:$0xff] %vm133, 0.0
    %164 = vst.msk [vmem:[#allocation2 + $0xe8] sm:$0x3] %vm136, 0.0
    %165 = vst.msk [vmem:[#allocation2 + $0xf0] sm:$0xff] %vm133, 0.0
    %166 = vst.msk [vmem:[#allocation2 + $0xf8] sm:$0xff] %vm133, 0.0
    %167 = vst.msk [vmem:[#allocation2 + $0x100] sm:$0x3] %vm136, 0.0
    %168 = vst.msk [vmem:[#allocation2 + $0x108] sm:$0xff] %vm133, 0.0
    %169 = vst.msk [vmem:[#allocation2 + $0x110] sm:$0xff] %vm133, 0.0
    %170 = vst.msk [vmem:[#allocation2 + $0x118] sm:$0x3] %vm136, 0.0
    %171 = vst.msk [vmem:[#allocation2 + $0x120] sm:$0xff] %vm133, 0.0
    %172 = vst.msk [vmem:[#allocation2 + $0x128] sm:$0xff] %vm133, 0.0
    %173 = vst.msk [vmem:[#allocation2 + $0x130] sm:$0x3] %vm136, 0.0
    %174 = vst.msk [vmem:[#allocation2 + $0x138] sm:$0xff] %vm133, 0.0
    %175 = vst.msk [vmem:[#allocation2 + $0x140] sm:$0xff] %vm133, 0.0
    %176 = vst.msk [vmem:[#allocation2 + $0x148] sm:$0x3] %vm136, 0.0
    %177 = vst.msk [vmem:[#allocation2 + $0x150] sm:$0xff] %vm133, 0.0
    %178 = vst.msk [vmem:[#allocation2 + $0x158] sm:$0xff] %vm133, 0.0
    %179 = vst.msk [vmem:[#allocation2 + $0x160] sm:$0x3] %vm136, 0.0
    %180 = vst.msk [vmem:[#allocation2 + $0x168] sm:$0xff] %vm133, 0.0
    %181 = vst.msk [vmem:[#allocation2 + $0x170] sm:$0xff] %vm133, 0.0
    %182 = vst.msk [vmem:[#allocation2 + $0x178] sm:$0x3] %vm136, 0.0
    %183 = vst.msk [vmem:[#allocation2 + $0x180] sm:$0xff] %vm133, 0.0
    %184 = vst.msk [vmem:[#allocation2 + $0x188] sm:$0xff] %vm133, 0.0
    %185 = vst.msk [vmem:[#allocation2 + $0x190] sm:$0x3] %vm136, 0.0
    %186 = vst.msk [vmem:[#allocation2 + $0x198] sm:$0xff] %vm133, 0.0
    %187 = vst.msk [vmem:[#allocation2 + $0x1a0] sm:$0xff] %vm133, 0.0
    %188 = vst.msk [vmem:[#allocation2 + $0x1a8] sm:$0x3] %vm136, 0.0
    %189 = vst.msk [vmem:[#allocation2 + $0x1b0] sm:$0xff] %vm133, 0.0
    %190 = vst.msk [vmem:[#allocation2 + $0x1b8] sm:$0xff] %vm133, 0.0
    %191 = vst.msk [vmem:[#allocation2 + $0x1c0] sm:$0x3] %vm136, 0.0
    %192 = vst.msk [vmem:[#allocation2 + $0x1c8] sm:$0xff] %vm133, 0.0
    %193 = vst.msk [vmem:[#allocation2 + $0x1d0] sm:$0xff] %vm133, 0.0
    %194 = vst.msk [vmem:[#allocation2 + $0x1d8] sm:$0x3] %vm136, 0.0
    %195 = vst.msk [vmem:[#allocation2 + $0x1e0] sm:$0xff] %vm133, 0.0
    %196 = vst.msk [vmem:[#allocation2 + $0x1e8] sm:$0xff] %vm133, 0.0
    %197 = vst.msk [vmem:[#allocation2 + $0x1f0] sm:$0x3] %vm136, 0.0
    %198 = vst.msk [vmem:[#allocation2 + $0x1f8] sm:$0xff] %vm133, 0.0
    %199 = vst.msk [vmem:[#allocation2 + $0x200] sm:$0xff] %vm133, 0.0
    %200 = vst.msk [vmem:[#allocation2 + $0x208] sm:$0x3] %vm136, 0.0
    %201 = vst.msk [vmem:[#allocation2 + $0x210] sm:$0xff] %vm133, 0.0
    %202 = vst.msk [vmem:[#allocation2 + $0x218] sm:$0xff] %vm133, 0.0
    %203 = vst.msk [vmem:[#allocation2 + $0x220] sm:$0x3] %vm136, 0.0
    %204 = vst.msk [vmem:[#allocation2 + $0x228] sm:$0xff] %vm133, 0.0
    %205 = vst.msk [vmem:[#allocation2 + $0x230] sm:$0xff] %vm133, 0.0
    %206 = vst.msk [vmem:[#allocation2 + $0x238] sm:$0x3] %vm136, 0.0
    %207 = vst.msk [vmem:[#allocation2 + $0x240] sm:$0xff] %vm133, 0.0
    %208 = vst.msk [vmem:[#allocation2 + $0x248] sm:$0xff] %vm133, 0.0
    %209 = vst.msk [vmem:[#allocation2 + $0x250] sm:$0x3] %vm136, 0.0
    %210 = vst.msk [vmem:[#allocation2 + $0x258] sm:$0xff] %vm133, 0.0
    %211 = vst.msk [vmem:[#allocation2 + $0x260] sm:$0xff] %vm133, 0.0
    %212 = vst.msk [vmem:[#allocation2 + $0x268] sm:$0x3] %vm136, 0.0
    %213 = vst.msk [vmem:[#allocation2 + $0x270] sm:$0xff] %vm133, 0.0
    %214 = vst.msk [vmem:[#allocation2 + $0x278] sm:$0xff] %vm133, 0.0
    %215 = vst.msk [vmem:[#allocation2 + $0x280] sm:$0x3] %vm136, 0.0
    %216 = vst.msk [vmem:[#allocation2 + $0x288] sm:$0xff] %vm133, 0.0
    %217 = vst.msk [vmem:[#allocation2 + $0x290] sm:$0xff] %vm133, 0.0
    %218 = vst.msk [vmem:[#allocation2 + $0x298] sm:$0x3] %vm136, 0.0
    %219 = vst.msk [vmem:[#allocation2 + $0x2a0] sm:$0xff] %vm133, 0.0
    %220 = vst.msk [vmem:[#allocation2 + $0x2a8] sm:$0xff] %vm133, 0.0
    %221 = vst.msk [vmem:[#allocation2 + $0x2b0] sm:$0x3] %vm136, 0.0
    %222 = vst.msk [vmem:[#allocation2 + $0x2b8] sm:$0xff] %vm133, 0.0
    %223 = vst.msk [vmem:[#allocation2 + $0x2c0] sm:$0xff] %vm133, 0.0
    %224 = vst.msk [vmem:[#allocation2 + $0x2c8] sm:$0x3] %vm136, 0.0
    %225 = vst.msk [vmem:[#allocation2 + $0x2d0] sm:$0xff] %vm133, 0.0
    %226 = vst.msk [vmem:[#allocation2 + $0x2d8] sm:$0xff] %vm133, 0.0
    %227 = vst.msk [vmem:[#allocation2 + $0x2e0] sm:$0x3] %vm136, 0.0
    %228 = vst.msk [vmem:[#allocation2 + $0x2e8] sm:$0xff] %vm133, 0.0
    %229 = vst.msk [vmem:[#allocation2 + $0x2f0] sm:$0xff] %vm133, 0.0
    %230 = vst.msk [vmem:[#allocation2 + $0x2f8] sm:$0x3] %vm136, 0.0
    %231 = vst.msk [vmem:[#allocation2 + $0x300] sm:$0xff] %vm133, 0.0
    %232 = vst.msk [vmem:[#allocation2 + $0x308] sm:$0xff] %vm133, 0.0
    %233 = vst.msk [vmem:[#allocation2 + $0x310] sm:$0x3] %vm136, 0.0
    %234 = vst.msk [vmem:[#allocation2 + $0x318] sm:$0xff] %vm133, 0.0
    %235 = vst.msk [vmem:[#allocation2 + $0x320] sm:$0xff] %vm133, 0.0
    %236 = vst.msk [vmem:[#allocation2 + $0x328] sm:$0x3] %vm136, 0.0
    %237 = vst.msk [vmem:[#allocation2 + $0x330] sm:$0xff] %vm133, 0.0
    %238 = vst.msk [vmem:[#allocation2 + $0x338] sm:$0xff] %vm133, 0.0
    %239 = vst.msk [vmem:[#allocation2 + $0x340] sm:$0x3] %vm136, 0.0
    %240 = vst.msk [vmem:[#allocation2 + $0x348] sm:$0xff] %vm133, 0.0
    %241 = vst.msk [vmem:[#allocation2 + $0x350] sm:$0xff] %vm133, 0.0
    %242 = vst.msk [vmem:[#allocation2 + $0x358] sm:$0x3] %vm136, 0.0
    %s243 = scalar_lea.vmem [#allocation2], 24
    %244 = vst.msk [vmem:[%s243 + $0x1] sm:$0xff] %vm133, %v69
    %245 = vst.msk [vmem:[%s243 + $0x9] sm:$0xff] %vm133, %v70
    %246 = vst.msk [vmem:[%s243 + $0x19] sm:$0xff] %vm133, %v71
    %247 = vst.msk [vmem:[%s243 + $0x21] sm:$0xff] %vm133, %v72
    %248 = vst.msk [vmem:[%s243 + $0x31] sm:$0xff] %vm133, %v73
    %249 = vst.msk [vmem:[%s243 + $0x39] sm:$0xff] %vm133, %v74
    %250 = vst.msk [vmem:[%s243 + $0x49] sm:$0xff] %vm133, %v75
    %251 = vst.msk [vmem:[%s243 + $0x51] sm:$0xff] %vm133, %v76
    %252 = vst.msk [vmem:[%s243 + $0x61] sm:$0xff] %vm133, %v77
    %253 = vst.msk [vmem:[%s243 + $0x69] sm:$0xff] %vm133, %v78
    %254 = vst.msk [vmem:[%s243 + $0x79] sm:$0xff] %vm133, %v79
    %255 = vst.msk [vmem:[%s243 + $0x81] sm:$0xff] %vm133, %v80
    %256 = vst.msk [vmem:[%s243 + $0x91] sm:$0xff] %vm133, %v81
    %257 = vst.msk [vmem:[%s243 + $0x99] sm:$0xff] %vm133, %v82
    %258 = vst.msk [vmem:[%s243 + $0xa9] sm:$0xff] %vm133, %v83
    %259 = vst.msk [vmem:[%s243 + $0xb1] sm:$0xff] %vm133, %v84
    %260 = vst.msk [vmem:[%s243 + $0xc1] sm:$0xff] %vm133, %v85
    %261 = vst.msk [vmem:[%s243 + $0xc9] sm:$0xff] %vm133, %v86
    %262 = vst.msk [vmem:[%s243 + $0xd9] sm:$0xff] %vm133, %v87
    %263 = vst.msk [vmem:[%s243 + $0xe1] sm:$0xff] %vm133, %v88
    %264 = vst.msk [vmem:[%s243 + $0xf1] sm:$0xff] %vm133, %v89
    %265 = vst.msk [vmem:[%s243 + $0xf9] sm:$0xff] %vm133, %v90
    %266 = vst.msk [vmem:[%s243 + $0x109] sm:$0xff] %vm133, %v91
    %267 = vst.msk [vmem:[%s243 + $0x111] sm:$0xff] %vm133, %v92
    %268 = vst.msk [vmem:[%s243 + $0x121] sm:$0xff] %vm133, %v93
    %269 = vst.msk [vmem:[%s243 + $0x129] sm:$0xff] %vm133, %v94
    %270 = vst.msk [vmem:[%s243 + $0x139] sm:$0xff] %vm133, %v95
    %271 = vst.msk [vmem:[%s243 + $0x141] sm:$0xff] %vm133, %v96
    %272 = vst.msk [vmem:[%s243 + $0x151] sm:$0xff] %vm133, %v97
    %273 = vst.msk [vmem:[%s243 + $0x159] sm:$0xff] %vm133, %v98
    %274 = vst.msk [vmem:[%s243 + $0x169] sm:$0xff] %vm133, %v99
    %275 = vst.msk [vmem:[%s243 + $0x171] sm:$0xff] %vm133, %v100
    %276 = vst.msk [vmem:[%s243 + $0x1b1] sm:$0xff] %vm133, %v101
    %277 = vst.msk [vmem:[%s243 + $0x1b9] sm:$0xff] %vm133, %v102
    %278 = vst.msk [vmem:[%s243 + $0x1c9] sm:$0xff] %vm133, %v103
    %279 = vst.msk [vmem:[%s243 + $0x1d1] sm:$0xff] %vm133, %v104
    %280 = vst.msk [vmem:[%s243 + $0x1e1] sm:$0xff] %vm133, %v105
    %281 = vst.msk [vmem:[%s243 + $0x1e9] sm:$0xff] %vm133, %v106
    %282 = vst.msk [vmem:[%s243 + $0x1f9] sm:$0xff] %vm133, %v107
    %283 = vst.msk [vmem:[%s243 + $0x201] sm:$0xff] %vm133, %v108
    %284 = vst.msk [vmem:[%s243 + $0x211] sm:$0xff] %vm133, %v109
    %285 = vst.msk [vmem:[%s243 + $0x219] sm:$0xff] %vm133, %v110
    %286 = vst.msk [vmem:[%s243 + $0x229] sm:$0xff] %vm133, %v111
    %287 = vst.msk [vmem:[%s243 + $0x231] sm:$0xff] %vm133, %v112
    %288 = vst.msk [vmem:[%s243 + $0x241] sm:$0xff] %vm133, %v113
    %289 = vst.msk [vmem:[%s243 + $0x249] sm:$0xff] %vm133, %v114
    %290 = vst.msk [vmem:[%s243 + $0x259] sm:$0xff] %vm133, %v115
    %291 = vst.msk [vmem:[%s243 + $0x261] sm:$0xff] %vm133, %v116
    %292 = vst.msk [vmem:[%s243 + $0x271] sm:$0xff] %vm133, %v117
    %293 = vst.msk [vmem:[%s243 + $0x279] sm:$0xff] %vm133, %v118
    %294 = vst.msk [vmem:[%s243 + $0x289] sm:$0xff] %vm133, %v119
    %295 = vst.msk [vmem:[%s243 + $0x291] sm:$0xff] %vm133, %v120
    %296 = vst.msk [vmem:[%s243 + $0x2a1] sm:$0xff] %vm133, %v121
    %297 = vst.msk [vmem:[%s243 + $0x2a9] sm:$0xff] %vm133, %v122
    %298 = vst.msk [vmem:[%s243 + $0x2b9] sm:$0xff] %vm133, %v123
    %299 = vst.msk [vmem:[%s243 + $0x2c1] sm:$0xff] %vm133, %v124
    %300 = vst.msk [vmem:[%s243 + $0x2d1] sm:$0xff] %vm133, %v125
    %301 = vst.msk [vmem:[%s243 + $0x2d9] sm:$0xff] %vm133, %v126
    %302 = vst.msk [vmem:[%s243 + $0x2e9] sm:$0xff] %vm133, %v127
    %303 = vst.msk [vmem:[%s243 + $0x2f1] sm:$0xff] %vm133, %v128
    %304 = vst.msk [vmem:[%s243 + $0x301] sm:$0xff] %vm133, %v129
    %305 = vst.msk [vmem:[%s243 + $0x309] sm:$0xff] %vm133, %v130
    %306 = vst.msk [vmem:[%s243 + $0x319] sm:$0xff] %vm133, %v131
    %307 = vst.msk [vmem:[%s243 + $0x321] sm:$0xff] %vm133, %v132
    %v308 = vld [vmem:[#allocation2] sm:$0xff]
    %v309 = vld [vmem:[#allocation2 + $0x8] sm:$0xff]
    %v310 = vld [vmem:[#allocation2 + $0x18] sm:$0xff]
    %v311 = vld [vmem:[#allocation2 + $0x20] sm:$0xff]
    %v312 = vld [vmem:[#allocation2 + $0x30] sm:$0xff]
    %v313 = vld [vmem:[#allocation2 + $0x38] sm:$0xff]
    %v314 = vld [vmem:[#allocation2 + $0x48] sm:$0xff]
    %v315 = vld [vmem:[#allocation2 + $0x50] sm:$0xff]
    %v316 = vld [vmem:[#allocation2 + $0x60] sm:$0xff]
    %v317 = vld [vmem:[#allocation2 + $0x68] sm:$0xff]
    %v318 = vld [vmem:[#allocation2 + $0x78] sm:$0xff]
    %v319 = vld [vmem:[#allocation2 + $0x80] sm:$0xff]
    %v320 = vld [vmem:[#allocation2 + $0x90] sm:$0xff]
    %v321 = vld [vmem:[#allocation2 + $0x98] sm:$0xff]
    %v322 = vld [vmem:[#allocation2 + $0xa8] sm:$0xff]
    %v323 = vld [vmem:[#allocation2 + $0xb0] sm:$0xff]
    %v324 = vld [vmem:[#allocation2 + $0xc0] sm:$0xff]
    %v325 = vld [vmem:[#allocation2 + $0xc8] sm:$0xff]
    %v326 = vld [vmem:[#allocation2 + $0xd8] sm:$0xff]
    %v327 = vld [vmem:[#allocation2 + $0xe0] sm:$0xff]
    %v328 = vld [vmem:[#allocation2 + $0xf0] sm:$0xff]
    %v329 = vld [vmem:[#allocation2 + $0xf8] sm:$0xff]
    %v330 = vld [vmem:[#allocation2 + $0x108] sm:$0xff]
    %v331 = vld [vmem:[#allocation2 + $0x110] sm:$0xff]
    %v332 = vld [vmem:[#allocation2 + $0x120] sm:$0xff]
    %v333 = vld [vmem:[#allocation2 + $0x128] sm:$0xff]
    %v334 = vld [vmem:[#allocation2 + $0x138] sm:$0xff]
    %v335 = vld [vmem:[#allocation2 + $0x140] sm:$0xff]
    %v336 = vld [vmem:[#allocation2 + $0x150] sm:$0xff]
    %v337 = vld [vmem:[#allocation2 + $0x158] sm:$0xff]
    %v338 = vld [vmem:[#allocation2 + $0x168] sm:$0xff]
    %v339 = vld [vmem:[#allocation2 + $0x170] sm:$0xff]
    %v340 = vld [vmem:[#allocation2 + $0x1b0] sm:$0xff]
    %v341 = vld [vmem:[#allocation2 + $0x1b8] sm:$0xff]
    %v342 = vld [vmem:[#allocation2 + $0x1c8] sm:$0xff]
    %v343 = vld [vmem:[#allocation2 + $0x1d0] sm:$0xff]
    %v344 = vld [vmem:[#allocation2 + $0x1e0] sm:$0xff]
    %v345 = vld [vmem:[#allocation2 + $0x1e8] sm:$0xff]
    %v346 = vld [vmem:[#allocation2 + $0x1f8] sm:$0xff]
    %v347 = vld [vmem:[#allocation2 + $0x200] sm:$0xff]
    %v348 = vld [vmem:[#allocation2 + $0x210] sm:$0xff]
    %v349 = vld [vmem:[#allocation2 + $0x218] sm:$0xff]
    %v350 = vld [vmem:[#allocation2 + $0x228] sm:$0xff]
    %v351 = vld [vmem:[#allocation2 + $0x230] sm:$0xff]
    %v352 = vld [vmem:[#allocation2 + $0x240] sm:$0xff]
    %v353 = vld [vmem:[#allocation2 + $0x248] sm:$0xff]
    %v354 = vld [vmem:[#allocation2 + $0x258] sm:$0xff]
    %v355 = vld [vmem:[#allocation2 + $0x260] sm:$0xff]
    %v356 = vld [vmem:[#allocation2 + $0x270] sm:$0xff]
    %v357 = vld [vmem:[#allocation2 + $0x278] sm:$0xff]
    %v358 = vld [vmem:[#allocation2 + $0x288] sm:$0xff]
    %v359 = vld [vmem:[#allocation2 + $0x290] sm:$0xff]
    %v360 = vld [vmem:[#allocation2 + $0x2a0] sm:$0xff]
    %v361 = vld [vmem:[#allocation2 + $0x2a8] sm:$0xff]
    %v362 = vld [vmem:[#allocation2 + $0x2b8] sm:$0xff]
    %v363 = vld [vmem:[#allocation2 + $0x2c0] sm:$0xff]
    %v364 = vld [vmem:[#allocation2 + $0x2d0] sm:$0xff]
    %v365 = vld [vmem:[#allocation2 + $0x2d8] sm:$0xff]
    %v366 = vld [vmem:[#allocation2 + $0x2e8] sm:$0xff]
    %v367 = vld [vmem:[#allocation2 + $0x2f0] sm:$0xff]
    %v368 = vld [vmem:[#allocation2 + $0x300] sm:$0xff]
    %v369 = vld [vmem:[#allocation2 + $0x308] sm:$0xff]
    %v370 = vld [vmem:[#allocation2 + $0x318] sm:$0xff]
    %v371 = vld [vmem:[#allocation2 + $0x320] sm:$0xff]
    %v372 = vld [vmem:[#allocation2 + $0x1] sm:$0xff]
    %v373 = vld [vmem:[#allocation2 + $0x9] sm:$0xff]
    %v374 = vld [vmem:[#allocation2 + $0x19] sm:$0xff]
    %v375 = vld [vmem:[#allocation2 + $0x21] sm:$0xff]
    %v376 = vld [vmem:[#allocation2 + $0x31] sm:$0xff]
    %v377 = vld [vmem:[#allocation2 + $0x39] sm:$0xff]
    %v378 = vld [vmem:[#allocation2 + $0x49] sm:$0xff]
    %v379 = vld [vmem:[#allocation2 + $0x51] sm:$0xff]
    %v380 = vld [vmem:[#allocation2 + $0x61] sm:$0xff]
    %v381 = vld [vmem:[#allocation2 + $0x69] sm:$0xff]
    %v382 = vld [vmem:[#allocation2 + $0x79] sm:$0xff]
    %v383 = vld [vmem:[#allocation2 + $0x81] sm:$0xff]
    %v384 = vld [vmem:[#allocation2 + $0x91] sm:$0xff]
    %v385 = vld [vmem:[#allocation2 + $0x99] sm:$0xff]
    %v386 = vld [vmem:[#allocation2 + $0xa9] sm:$0xff]
    %v387 = vld [vmem:[#allocation2 + $0xb1] sm:$0xff]
    %v388 = vld [vmem:[#allocation2 + $0xc1] sm:$0xff]
    %v389 = vld [vmem:[#allocation2 + $0xc9] sm:$0xff]
    %v390 = vld [vmem:[#allocation2 + $0xd9] sm:$0xff]
    %v391 = vld [vmem:[#allocation2 + $0xe1] sm:$0xff]
    %v392 = vld [vmem:[#allocation2 + $0xf1] sm:$0xff]
    %v393 = vld [vmem:[#allocation2 + $0xf9] sm:$0xff]
    %v394 = vld [vmem:[#allocation2 + $0x109] sm:$0xff]
    %v395 = vld [vmem:[#allocation2 + $0x111] sm:$0xff]
    %v396 = vld [vmem:[#allocation2 + $0x121] sm:$0xff]
    %v397 = vld [vmem:[#allocation2 + $0x129] sm:$0xff]
    %v398 = vld [vmem:[#allocation2 + $0x139] sm:$0xff]
    %v399 = vld [vmem:[#allocation2 + $0x141] sm:$0xff]
    %v400 = vld [vmem:[#allocation2 + $0x151] sm:$0xff]
    %v401 = vld [vmem:[#allocation2 + $0x159] sm:$0xff]
    %v402 = vld [vmem:[#allocation2 + $0x169] sm:$0xff]
    %v403 = vld [vmem:[#allocation2 + $0x171] sm:$0xff]
    %v404 = vld [vmem:[#allocation2 + $0x1b1] sm:$0xff]
    %v405 = vld [vmem:[#allocation2 + $0x1b9] sm:$0xff]
    %v406 = vld [vmem:[#allocation2 + $0x1c9] sm:$0xff]
    %v407 = vld [vmem:[#allocation2 + $0x1d1] sm:$0xff]
    %v408 = vld [vmem:[#allocation2 + $0x1e1] sm:$0xff]
    %v409 = vld [vmem:[#allocation2 + $0x1e9] sm:$0xff]
    %v410 = vld [vmem:[#allocation2 + $0x1f9] sm:$0xff]
    %v411 = vld [vmem:[#allocation2 + $0x201] sm:$0xff]
    %v412 = vld [vmem:[#allocation2 + $0x211] sm:$0xff]
    %v413 = vld [vmem:[#allocation2 + $0x219] sm:$0xff]
    %v414 = vld [vmem:[#allocation2 + $0x229] sm:$0xff]
    %v415 = vld [vmem:[#allocation2 + $0x231] sm:$0xff]
    %v416 = vld [vmem:[#allocation2 + $0x241] sm:$0xff]
    %v417 = vld [vmem:[#allocation2 + $0x249] sm:$0xff]
    %v418 = vld [vmem:[#allocation2 + $0x259] sm:$0xff]
    %v419 = vld [vmem:[#allocation2 + $0x261] sm:$0xff]
    %v420 = vld [vmem:[#allocation2 + $0x271] sm:$0xff]
    %v421 = vld [vmem:[#allocation2 + $0x279] sm:$0xff]
    %v422 = vld [vmem:[#allocation2 + $0x289] sm:$0xff]
    %v423 = vld [vmem:[#allocation2 + $0x291] sm:$0xff]
    %v424 = vld [vmem:[#allocation2 + $0x2a1] sm:$0xff]
    %v425 = vld [vmem:[#allocation2 + $0x2a9] sm:$0xff]
    %v426 = vld [vmem:[#allocation2 + $0x2b9] sm:$0xff]
    %v427 = vld [vmem:[#allocation2 + $0x2c1] sm:$0xff]
    %v428 = vld [vmem:[#allocation2 + $0x2d1] sm:$0xff]
    %v429 = vld [vmem:[#allocation2 + $0x2d9] sm:$0xff]
    %v430 = vld [vmem:[#allocation2 + $0x2e9] sm:$0xff]
    %v431 = vld [vmem:[#allocation2 + $0x2f1] sm:$0xff]
    %v432 = vld [vmem:[#allocation2 + $0x301] sm:$0xff]
    %v433 = vld [vmem:[#allocation2 + $0x309] sm:$0xff]
    %v434 = vld [vmem:[#allocation2 + $0x319] sm:$0xff]
    %v435 = vld [vmem:[#allocation2 + $0x321] sm:$0xff]
    %v436 = vld [vmem:[#allocation2 + $0x2] sm:$0xff]
    %v437 = vld [vmem:[#allocation2 + $0xa] sm:$0xff]
    %v438 = vld [vmem:[#allocation2 + $0x1a] sm:$0xff]
    %v439 = vld [vmem:[#allocation2 + $0x22] sm:$0xff]
    %v440 = vld [vmem:[#allocation2 + $0x32] sm:$0xff]
    %v441 = vld [vmem:[#allocation2 + $0x3a] sm:$0xff]
    %v442 = vld [vmem:[#allocation2 + $0x4a] sm:$0xff]
    %v443 = vld [vmem:[#allocation2 + $0x52] sm:$0xff]
    %v444 = vld [vmem:[#allocation2 + $0x62] sm:$0xff]
    %v445 = vld [vmem:[#allocation2 + $0x6a] sm:$0xff]
    %v446 = vld [vmem:[#allocation2 + $0x7a] sm:$0xff]
    %v447 = vld [vmem:[#allocation2 + $0x82] sm:$0xff]
    %v448 = vld [vmem:[#allocation2 + $0x92] sm:$0xff]
    %v449 = vld [vmem:[#allocation2 + $0x9a] sm:$0xff]
    %v450 = vld [vmem:[#allocation2 + $0xaa] sm:$0xff]
    %v451 = vld [vmem:[#allocation2 + $0xb2] sm:$0xff]
    %v452 = vld [vmem:[#allocation2 + $0xc2] sm:$0xff]
    %v453 = vld [vmem:[#allocation2 + $0xca] sm:$0xff]
    %v454 = vld [vmem:[#allocation2 + $0xda] sm:$0xff]
    %v455 = vld [vmem:[#allocation2 + $0xe2] sm:$0xff]
    %v456 = vld [vmem:[#allocation2 + $0xf2] sm:$0xff]
    %v457 = vld [vmem:[#allocation2 + $0xfa] sm:$0xff]
    %v458 = vld [vmem:[#allocation2 + $0x10a] sm:$0xff]
    %v459 = vld [vmem:[#allocation2 + $0x112] sm:$0xff]
    %v460 = vld [vmem:[#allocation2 + $0x122] sm:$0xff]
    %v461 = vld [vmem:[#allocation2 + $0x12a] sm:$0xff]
    %v462 = vld [vmem:[#allocation2 + $0x13a] sm:$0xff]
    %v463 = vld [vmem:[#allocation2 + $0x142] sm:$0xff]
    %v464 = vld [vmem:[#allocation2 + $0x152] sm:$0xff]
    %v465 = vld [vmem:[#allocation2 + $0x15a] sm:$0xff]
    %v466 = vld [vmem:[#allocation2 + $0x16a] sm:$0xff]
    %v467 = vld [vmem:[#allocation2 + $0x172] sm:$0xff]
    %v468 = vld [vmem:[#allocation2 + $0x1b2] sm:$0xff]
    %v469 = vld [vmem:[#allocation2 + $0x1ba] sm:$0xff]
    %v470 = vld [vmem:[#allocation2 + $0x1ca] sm:$0xff]
    %v471 = vld [vmem:[#allocation2 + $0x1d2] sm:$0xff]
    %v472 = vld [vmem:[#allocation2 + $0x1e2] sm:$0xff]
    %v473 = vld [vmem:[#allocation2 + $0x1ea] sm:$0xff]
    %v474 = vld [vmem:[#allocation2 + $0x1fa] sm:$0xff]
    %v475 = vld [vmem:[#allocation2 + $0x202] sm:$0xff]
    %v476 = vld [vmem:[#allocation2 + $0x212] sm:$0xff]
    %v477 = vld [vmem:[#allocation2 + $0x21a] sm:$0xff]
    %v478 = vld [vmem:[#allocation2 + $0x22a] sm:$0xff]
    %v479 = vld [vmem:[#allocation2 + $0x232] sm:$0xff]
    %v480 = vld [vmem:[#allocation2 + $0x242] sm:$0xff]
    %v481 = vld [vmem:[#allocation2 + $0x24a] sm:$0xff]
    %v482 = vld [vmem:[#allocation2 + $0x25a] sm:$0xff]
    %v483 = vld [vmem:[#allocation2 + $0x262] sm:$0xff]
    %v484 = vld [vmem:[#allocation2 + $0x272] sm:$0xff]
    %v485 = vld [vmem:[#allocation2 + $0x27a] sm:$0xff]
    %v486 = vld [vmem:[#allocation2 + $0x28a] sm:$0xff]
    %v487 = vld [vmem:[#allocation2 + $0x292] sm:$0xff]
    %v488 = vld [vmem:[#allocation2 + $0x2a2] sm:$0xff]
    %v489 = vld [vmem:[#allocation2 + $0x2aa] sm:$0xff]
    %v490 = vld [vmem:[#allocation2 + $0x2ba] sm:$0xff]
    %v491 = vld [vmem:[#allocation2 + $0x2c2] sm:$0xff]
    %v492 = vld [vmem:[#allocation2 + $0x2d2] sm:$0xff]
    %v493 = vld [vmem:[#allocation2 + $0x2da] sm:$0xff]
    %v494 = vld [vmem:[#allocation2 + $0x2ea] sm:$0xff]
    %v495 = vld [vmem:[#allocation2 + $0x2f2] sm:$0xff]
    %v496 = vld [vmem:[#allocation2 + $0x302] sm:$0xff]
    %v497 = vld [vmem:[#allocation2 + $0x30a] sm:$0xff]
    %v498 = vld [vmem:[#allocation2 + $0x31a] sm:$0xff]
    %v499 = vld [vmem:[#allocation2 + $0x322] sm:$0xff]
    %v500 = vld [vmem:[%s243] sm:$0xff]
    %v501 = vld [vmem:[%s243 + $0x8] sm:$0xff]
    %v502 = vld [vmem:[%s243 + $0x18] sm:$0xff]
    %v503 = vld [vmem:[%s243 + $0x20] sm:$0xff]
    %v504 = vld [vmem:[%s243 + $0x30] sm:$0xff]
    %v505 = vld [vmem:[%s243 + $0x38] sm:$0xff]
    %v506 = vld [vmem:[%s243 + $0x48] sm:$0xff]
    %v507 = vld [vmem:[%s243 + $0x50] sm:$0xff]
    %v508 = vld [vmem:[%s243 + $0x60] sm:$0xff]
    %v509 = vld [vmem:[%s243 + $0x68] sm:$0xff]
    %v510 = vld [vmem:[%s243 + $0x78] sm:$0xff]
    %v511 = vld [vmem:[%s243 + $0x80] sm:$0xff]
    %v512 = vld [vmem:[%s243 + $0x90] sm:$0xff]
    %v513 = vld [vmem:[%s243 + $0x98] sm:$0xff]
    %v514 = vld [vmem:[%s243 + $0xa8] sm:$0xff]
    %v515 = vld [vmem:[%s243 + $0xb0] sm:$0xff]
    %v516 = vld [vmem:[%s243 + $0xc0] sm:$0xff]
    %v517 = vld [vmem:[%s243 + $0xc8] sm:$0xff]
    %v518 = vld [vmem:[%s243 + $0xd8] sm:$0xff]
    %v519 = vld [vmem:[%s243 + $0xe0] sm:$0xff]
    %v520 = vld [vmem:[%s243 + $0xf0] sm:$0xff]
    %v521 = vld [vmem:[%s243 + $0xf8] sm:$0xff]
    %v522 = vld [vmem:[%s243 + $0x108] sm:$0xff]
    %v523 = vld [vmem:[%s243 + $0x110] sm:$0xff]
    %v524 = vld [vmem:[%s243 + $0x120] sm:$0xff]
    %v525 = vld [vmem:[%s243 + $0x128] sm:$0xff]
    %v526 = vld [vmem:[%s243 + $0x138] sm:$0xff]
    %v527 = vld [vmem:[%s243 + $0x140] sm:$0xff]
    %v528 = vld [vmem:[%s243 + $0x150] sm:$0xff]
    %v529 = vld [vmem:[%s243 + $0x158] sm:$0xff]
    %v530 = vld [vmem:[%s243 + $0x168] sm:$0xff]
    %v531 = vld [vmem:[%s243 + $0x170] sm:$0xff]
    %v532 = vld [vmem:[%s243 + $0x1b0] sm:$0xff]
    %v533 = vld [vmem:[%s243 + $0x1b8] sm:$0xff]
    %v534 = vld [vmem:[%s243 + $0x1c8] sm:$0xff]
    %v535 = vld [vmem:[%s243 + $0x1d0] sm:$0xff]
    %v536 = vld [vmem:[%s243 + $0x1e0] sm:$0xff]
    %v537 = vld [vmem:[%s243 + $0x1e8] sm:$0xff]
    %v538 = vld [vmem:[%s243 + $0x1f8] sm:$0xff]
    %v539 = vld [vmem:[%s243 + $0x200] sm:$0xff]
    %v540 = vld [vmem:[%s243 + $0x210] sm:$0xff]
    %v541 = vld [vmem:[%s243 + $0x218] sm:$0xff]
    %v542 = vld [vmem:[%s243 + $0x228] sm:$0xff]
    %v543 = vld [vmem:[%s243 + $0x230] sm:$0xff]
    %v544 = vld [vmem:[%s243 + $0x240] sm:$0xff]
    %v545 = vld [vmem:[%s243 + $0x248] sm:$0xff]
    %v546 = vld [vmem:[%s243 + $0x258] sm:$0xff]
    %v547 = vld [vmem:[%s243 + $0x260] sm:$0xff]
    %v548 = vld [vmem:[%s243 + $0x270] sm:$0xff]
    %v549 = vld [vmem:[%s243 + $0x278] sm:$0xff]
    %v550 = vld [vmem:[%s243 + $0x288] sm:$0xff]
    %v551 = vld [vmem:[%s243 + $0x290] sm:$0xff]
    %v552 = vld [vmem:[%s243 + $0x2a0] sm:$0xff]
    %v553 = vld [vmem:[%s243 + $0x2a8] sm:$0xff]
    %v554 = vld [vmem:[%s243 + $0x2b8] sm:$0xff]
    %v555 = vld [vmem:[%s243 + $0x2c0] sm:$0xff]
    %v556 = vld [vmem:[%s243 + $0x2d0] sm:$0xff]
    %v557 = vld [vmem:[%s243 + $0x2d8] sm:$0xff]
    %v558 = vld [vmem:[%s243 + $0x2e8] sm:$0xff]
    %v559 = vld [vmem:[%s243 + $0x2f0] sm:$0xff]
    %v560 = vld [vmem:[%s243 + $0x300] sm:$0xff]
    %v561 = vld [vmem:[%s243 + $0x308] sm:$0xff]
    %v562 = vld [vmem:[%s243 + $0x318] sm:$0xff]
    %v563 = vld [vmem:[%s243 + $0x320] sm:$0xff]
    %v564 = vld [vmem:[%s243 + $0x1] sm:$0xff]
    %v565 = vld [vmem:[%s243 + $0x9] sm:$0xff]
    %v566 = vld [vmem:[%s243 + $0x19] sm:$0xff]
    %v567 = vld [vmem:[%s243 + $0x21] sm:$0xff]
    %v568 = vld [vmem:[%s243 + $0x31] sm:$0xff]
    %v569 = vld [vmem:[%s243 + $0x39] sm:$0xff]
    %v570 = vld [vmem:[%s243 + $0x49] sm:$0xff]
    %v571 = vld [vmem:[%s243 + $0x51] sm:$0xff]
    %v572 = vld [vmem:[%s243 + $0x61] sm:$0xff]
    %v573 = vld [vmem:[%s243 + $0x69] sm:$0xff]
    %v574 = vld [vmem:[%s243 + $0x79] sm:$0xff]
    %v575 = vld [vmem:[%s243 + $0x81] sm:$0xff]
    %v576 = vld [vmem:[%s243 + $0x91] sm:$0xff]
    %v577 = vld [vmem:[%s243 + $0x99] sm:$0xff]
    %v578 = vld [vmem:[%s243 + $0xa9] sm:$0xff]
    %v579 = vld [vmem:[%s243 + $0xb1] sm:$0xff]
    %v580 = vld [vmem:[%s243 + $0xc1] sm:$0xff]
    %v581 = vld [vmem:[%s243 + $0xc9] sm:$0xff]
    %v582 = vld [vmem:[%s243 + $0xd9] sm:$0xff]
    %v583 = vld [vmem:[%s243 + $0xe1] sm:$0xff]
    %v584 = vld [vmem:[%s243 + $0xf1] sm:$0xff]
    %v585 = vld [vmem:[%s243 + $0xf9] sm:$0xff]
    %v586 = vld [vmem:[%s243 + $0x109] sm:$0xff]
    %v587 = vld [vmem:[%s243 + $0x111] sm:$0xff]
    %v588 = vld [vmem:[%s243 + $0x121] sm:$0xff]
    %v589 = vld [vmem:[%s243 + $0x129] sm:$0xff]
    %v590 = vld [vmem:[%s243 + $0x139] sm:$0xff]
    %v591 = vld [vmem:[%s243 + $0x141] sm:$0xff]
    %v592 = vld [vmem:[%s243 + $0x151] sm:$0xff]
    %v593 = vld [vmem:[%s243 + $0x159] sm:$0xff]
    %v594 = vld [vmem:[%s243 + $0x169] sm:$0xff]
    %v595 = vld [vmem:[%s243 + $0x171] sm:$0xff]
    %v596 = vld [vmem:[%s243 + $0x1b1] sm:$0xff]
    %v597 = vld [vmem:[%s243 + $0x1b9] sm:$0xff]
    %v598 = vld [vmem:[%s243 + $0x1c9] sm:$0xff]
    %v599 = vld [vmem:[%s243 + $0x1d1] sm:$0xff]
    %v600 = vld [vmem:[%s243 + $0x1e1] sm:$0xff]
    %v601 = vld [vmem:[%s243 + $0x1e9] sm:$0xff]
    %v602 = vld [vmem:[%s243 + $0x1f9] sm:$0xff]
    %v603 = vld [vmem:[%s243 + $0x201] sm:$0xff]
    %v604 = vld [vmem:[%s243 + $0x211] sm:$0xff]
    %v605 = vld [vmem:[%s243 + $0x219] sm:$0xff]
    %v606 = vld [vmem:[%s243 + $0x229] sm:$0xff]
    %v607 = vld [vmem:[%s243 + $0x231] sm:$0xff]
    %v608 = vld [vmem:[%s243 + $0x241] sm:$0xff]
    %v609 = vld [vmem:[%s243 + $0x249] sm:$0xff]
    %v610 = vld [vmem:[%s243 + $0x259] sm:$0xff]
    %v611 = vld [vmem:[%s243 + $0x261] sm:$0xff]
    %v612 = vld [vmem:[%s243 + $0x271] sm:$0xff]
    %v613 = vld [vmem:[%s243 + $0x279] sm:$0xff]
    %v614 = vld [vmem:[%s243 + $0x289] sm:$0xff]
    %v615 = vld [vmem:[%s243 + $0x291] sm:$0xff]
    %v616 = vld [vmem:[%s243 + $0x2a1] sm:$0xff]
    %v617 = vld [vmem:[%s243 + $0x2a9] sm:$0xff]
    %v618 = vld [vmem:[%s243 + $0x2b9] sm:$0xff]
    %v619 = vld [vmem:[%s243 + $0x2c1] sm:$0xff]
    %v620 = vld [vmem:[%s243 + $0x2d1] sm:$0xff]
    %v621 = vld [vmem:[%s243 + $0x2d9] sm:$0xff]
    %v622 = vld [vmem:[%s243 + $0x2e9] sm:$0xff]
    %v623 = vld [vmem:[%s243 + $0x2f1] sm:$0xff]
    %v624 = vld [vmem:[%s243 + $0x301] sm:$0xff]
    %v625 = vld [vmem:[%s243 + $0x309] sm:$0xff]
    %v626 = vld [vmem:[%s243 + $0x319] sm:$0xff]
    %v627 = vld [vmem:[%s243 + $0x321] sm:$0xff]
    %v628 = vld [vmem:[%s243 + $0x2] sm:$0xff]
    %v629 = vld [vmem:[%s243 + $0xa] sm:$0xff]
    %v630 = vld [vmem:[%s243 + $0x1a] sm:$0xff]
    %v631 = vld [vmem:[%s243 + $0x22] sm:$0xff]
    %v632 = vld [vmem:[%s243 + $0x32] sm:$0xff]
    %v633 = vld [vmem:[%s243 + $0x3a] sm:$0xff]
    %v634 = vld [vmem:[%s243 + $0x4a] sm:$0xff]
    %v635 = vld [vmem:[%s243 + $0x52] sm:$0xff]
    %v636 = vld [vmem:[%s243 + $0x62] sm:$0xff]
    %v637 = vld [vmem:[%s243 + $0x6a] sm:$0xff]
    %v638 = vld [vmem:[%s243 + $0x7a] sm:$0xff]
    %v639 = vld [vmem:[%s243 + $0x82] sm:$0xff]
    %v640 = vld [vmem:[%s243 + $0x92] sm:$0xff]
    %v641 = vld [vmem:[%s243 + $0x9a] sm:$0xff]
    %v642 = vld [vmem:[%s243 + $0xaa] sm:$0xff]
    %v643 = vld [vmem:[%s243 + $0xb2] sm:$0xff]
    %v644 = vld [vmem:[%s243 + $0xc2] sm:$0xff]
    %v645 = vld [vmem:[%s243 + $0xca] sm:$0xff]
    %v646 = vld [vmem:[%s243 + $0xda] sm:$0xff]
    %v647 = vld [vmem:[%s243 + $0xe2] sm:$0xff]
    %v648 = vld [vmem:[%s243 + $0xf2] sm:$0xff]
    %v649 = vld [vmem:[%s243 + $0xfa] sm:$0xff]
    %v650 = vld [vmem:[%s243 + $0x10a] sm:$0xff]
    %v651 = vld [vmem:[%s243 + $0x112] sm:$0xff]
    %v652 = vld [vmem:[%s243 + $0x122] sm:$0xff]
    %v653 = vld [vmem:[%s243 + $0x12a] sm:$0xff]
    %v654 = vld [vmem:[%s243 + $0x13a] sm:$0xff]
    %v655 = vld [vmem:[%s243 + $0x142] sm:$0xff]
    %v656 = vld [vmem:[%s243 + $0x152] sm:$0xff]
    %v657 = vld [vmem:[%s243 + $0x15a] sm:$0xff]
    %v658 = vld [vmem:[%s243 + $0x16a] sm:$0xff]
    %v659 = vld [vmem:[%s243 + $0x172] sm:$0xff]
    %v660 = vld [vmem:[%s243 + $0x1b2] sm:$0xff]
    %v661 = vld [vmem:[%s243 + $0x1ba] sm:$0xff]
    %v662 = vld [vmem:[%s243 + $0x1ca] sm:$0xff]
    %v663 = vld [vmem:[%s243 + $0x1d2] sm:$0xff]
    %v664 = vld [vmem:[%s243 + $0x1e2] sm:$0xff]
    %v665 = vld [vmem:[%s243 + $0x1ea] sm:$0xff]
    %v666 = vld [vmem:[%s243 + $0x1fa] sm:$0xff]
    %v667 = vld [vmem:[%s243 + $0x202] sm:$0xff]
    %v668 = vld [vmem:[%s243 + $0x212] sm:$0xff]
    %v669 = vld [vmem:[%s243 + $0x21a] sm:$0xff]
    %v670 = vld [vmem:[%s243 + $0x22a] sm:$0xff]
    %v671 = vld [vmem:[%s243 + $0x232] sm:$0xff]
    %v672 = vld [vmem:[%s243 + $0x242] sm:$0xff]
    %v673 = vld [vmem:[%s243 + $0x24a] sm:$0xff]
    %v674 = vld [vmem:[%s243 + $0x25a] sm:$0xff]
    %v675 = vld [vmem:[%s243 + $0x262] sm:$0xff]
    %v676 = vld [vmem:[%s243 + $0x272] sm:$0xff]
    %v677 = vld [vmem:[%s243 + $0x27a] sm:$0xff]
    %v678 = vld [vmem:[%s243 + $0x28a] sm:$0xff]
    %v679 = vld [vmem:[%s243 + $0x292] sm:$0xff]
    %v680 = vld [vmem:[%s243 + $0x2a2] sm:$0xff]
    %v681 = vld [vmem:[%s243 + $0x2aa] sm:$0xff]
    %v682 = vld [vmem:[%s243 + $0x2ba] sm:$0xff]
    %v683 = vld [vmem:[%s243 + $0x2c2] sm:$0xff]
    %v684 = vld [vmem:[%s243 + $0x2d2] sm:$0xff]
    %v685 = vld [vmem:[%s243 + $0x2da] sm:$0xff]
    %v686 = vld [vmem:[%s243 + $0x2ea] sm:$0xff]
    %v687 = vld [vmem:[%s243 + $0x2f2] sm:$0xff]
    %v688 = vld [vmem:[%s243 + $0x302] sm:$0xff]
    %v689 = vld [vmem:[%s243 + $0x30a] sm:$0xff]
    %v690 = vld [vmem:[%s243 + $0x31a] sm:$0xff]
    %v691 = vld [vmem:[%s243 + $0x322] sm:$0xff]
    %s692 = scalar_lea.vmem [#allocation2], 48
    %v693 = vld [vmem:[%s692] sm:$0xff]
    %v694 = vld [vmem:[%s692 + $0x8] sm:$0xff]
    %v695 = vld [vmem:[%s692 + $0x18] sm:$0xff]
    %v696 = vld [vmem:[%s692 + $0x20] sm:$0xff]
    %v697 = vld [vmem:[%s692 + $0x30] sm:$0xff]
    %v698 = vld [vmem:[%s692 + $0x38] sm:$0xff]
    %v699 = vld [vmem:[%s692 + $0x48] sm:$0xff]
    %v700 = vld [vmem:[%s692 + $0x50] sm:$0xff]
    %v701 = vld [vmem:[%s692 + $0x60] sm:$0xff]
    %v702 = vld [vmem:[%s692 + $0x68] sm:$0xff]
    %v703 = vld [vmem:[%s692 + $0x78] sm:$0xff]
    %v704 = vld [vmem:[%s692 + $0x80] sm:$0xff]
    %v705 = vld [vmem:[%s692 + $0x90] sm:$0xff]
    %v706 = vld [vmem:[%s692 + $0x98] sm:$0xff]
    %v707 = vld [vmem:[%s692 + $0xa8] sm:$0xff]
    %v708 = vld [vmem:[%s692 + $0xb0] sm:$0xff]
    %v709 = vld [vmem:[%s692 + $0xc0] sm:$0xff]
    %v710 = vld [vmem:[%s692 + $0xc8] sm:$0xff]
    %v711 = vld [vmem:[%s692 + $0xd8] sm:$0xff]
    %v712 = vld [vmem:[%s692 + $0xe0] sm:$0xff]
    %v713 = vld [vmem:[%s692 + $0xf0] sm:$0xff]
    %v714 = vld [vmem:[%s692 + $0xf8] sm:$0xff]
    %v715 = vld [vmem:[%s692 + $0x108] sm:$0xff]
    %v716 = vld [vmem:[%s692 + $0x110] sm:$0xff]
    %v717 = vld [vmem:[%s692 + $0x120] sm:$0xff]
    %v718 = vld [vmem:[%s692 + $0x128] sm:$0xff]
    %v719 = vld [vmem:[%s692 + $0x138] sm:$0xff]
    %v720 = vld [vmem:[%s692 + $0x140] sm:$0xff]
    %v721 = vld [vmem:[%s692 + $0x150] sm:$0xff]
    %v722 = vld [vmem:[%s692 + $0x158] sm:$0xff]
    %v723 = vld [vmem:[%s692 + $0x168] sm:$0xff]
    %v724 = vld [vmem:[%s692 + $0x170] sm:$0xff]
    %v725 = vld [vmem:[%s692 + $0x1b0] sm:$0xff]
    %v726 = vld [vmem:[%s692 + $0x1b8] sm:$0xff]
    %v727 = vld [vmem:[%s692 + $0x1c8] sm:$0xff]
    %v728 = vld [vmem:[%s692 + $0x1d0] sm:$0xff]
    %v729 = vld [vmem:[%s692 + $0x1e0] sm:$0xff]
    %v730 = vld [vmem:[%s692 + $0x1e8] sm:$0xff]
    %v731 = vld [vmem:[%s692 + $0x1f8] sm:$0xff]
    %v732 = vld [vmem:[%s692 + $0x200] sm:$0xff]
    %v733 = vld [vmem:[%s692 + $0x210] sm:$0xff]
    %v734 = vld [vmem:[%s692 + $0x218] sm:$0xff]
    %v735 = vld [vmem:[%s692 + $0x228] sm:$0xff]
    %v736 = vld [vmem:[%s692 + $0x230] sm:$0xff]
    %v737 = vld [vmem:[%s692 + $0x240] sm:$0xff]
    %v738 = vld [vmem:[%s692 + $0x248] sm:$0xff]
    %v739 = vld [vmem:[%s692 + $0x258] sm:$0xff]
    %v740 = vld [vmem:[%s692 + $0x260] sm:$0xff]
    %v741 = vld [vmem:[%s692 + $0x270] sm:$0xff]
    %v742 = vld [vmem:[%s692 + $0x278] sm:$0xff]
    %v743 = vld [vmem:[%s692 + $0x288] sm:$0xff]
    %v744 = vld [vmem:[%s692 + $0x290] sm:$0xff]
    %v745 = vld [vmem:[%s692 + $0x2a0] sm:$0xff]
    %v746 = vld [vmem:[%s692 + $0x2a8] sm:$0xff]
    %v747 = vld [vmem:[%s692 + $0x2b8] sm:$0xff]
    %v748 = vld [vmem:[%s692 + $0x2c0] sm:$0xff]
    %v749 = vld [vmem:[%s692 + $0x2d0] sm:$0xff]
    %v750 = vld [vmem:[%s692 + $0x2d8] sm:$0xff]
    %v751 = vld [vmem:[%s692 + $0x2e8] sm:$0xff]
    %v752 = vld [vmem:[%s692 + $0x2f0] sm:$0xff]
    %v753 = vld [vmem:[%s692 + $0x300] sm:$0xff]
    %v754 = vld [vmem:[%s692 + $0x308] sm:$0xff]
    %v755 = vld [vmem:[%s692 + $0x318] sm:$0xff]
    %v756 = vld [vmem:[%s692 + $0x320] sm:$0xff]
    %v757 = vld [vmem:[%s692 + $0x1] sm:$0xff]
    %v758 = vld [vmem:[%s692 + $0x9] sm:$0xff]
    %v759 = vld [vmem:[%s692 + $0x19] sm:$0xff]
    %v760 = vld [vmem:[%s692 + $0x21] sm:$0xff]
    %v761 = vld [vmem:[%s692 + $0x31] sm:$0xff]
    %v762 = vld [vmem:[%s692 + $0x39] sm:$0xff]
    %v763 = vld [vmem:[%s692 + $0x49] sm:$0xff]
    %v764 = vld [vmem:[%s692 + $0x51] sm:$0xff]
    %v765 = vld [vmem:[%s692 + $0x61] sm:$0xff]
    %v766 = vld [vmem:[%s692 + $0x69] sm:$0xff]
    %v767 = vld [vmem:[%s692 + $0x79] sm:$0xff]
    %v768 = vld [vmem:[%s692 + $0x81] sm:$0xff]
    %v769 = vld [vmem:[%s692 + $0x91] sm:$0xff]
    %v770 = vld [vmem:[%s692 + $0x99] sm:$0xff]
    %v771 = vld [vmem:[%s692 + $0xa9] sm:$0xff]
    %v772 = vld [vmem:[%s692 + $0xb1] sm:$0xff]
    %v773 = vld [vmem:[%s692 + $0xc1] sm:$0xff]
    %v774 = vld [vmem:[%s692 + $0xc9] sm:$0xff]
    %v775 = vld [vmem:[%s692 + $0xd9] sm:$0xff]
    %v776 = vld [vmem:[%s692 + $0xe1] sm:$0xff]
    %v777 = vld [vmem:[%s692 + $0xf1] sm:$0xff]
    %v778 = vld [vmem:[%s692 + $0xf9] sm:$0xff]
    %v779 = vld [vmem:[%s692 + $0x109] sm:$0xff]
    %v780 = vld [vmem:[%s692 + $0x111] sm:$0xff]
    %v781 = vld [vmem:[%s692 + $0x121] sm:$0xff]
    %v782 = vld [vmem:[%s692 + $0x129] sm:$0xff]
    %v783 = vld [vmem:[%s692 + $0x139] sm:$0xff]
    %v784 = vld [vmem:[%s692 + $0x141] sm:$0xff]
    %v785 = vld [vmem:[%s692 + $0x151] sm:$0xff]
    %v786 = vld [vmem:[%s692 + $0x159] sm:$0xff]
    %v787 = vld [vmem:[%s692 + $0x169] sm:$0xff]
    %v788 = vld [vmem:[%s692 + $0x171] sm:$0xff]
    %v789 = vld [vmem:[%s692 + $0x1b1] sm:$0xff]
    %v790 = vld [vmem:[%s692 + $0x1b9] sm:$0xff]
    %v791 = vld [vmem:[%s692 + $0x1c9] sm:$0xff]
    %v792 = vld [vmem:[%s692 + $0x1d1] sm:$0xff]
    %v793 = vld [vmem:[%s692 + $0x1e1] sm:$0xff]
    %v794 = vld [vmem:[%s692 + $0x1e9] sm:$0xff]
    %v795 = vld [vmem:[%s692 + $0x1f9] sm:$0xff]
    %v796 = vld [vmem:[%s692 + $0x201] sm:$0xff]
    %v797 = vld [vmem:[%s692 + $0x211] sm:$0xff]
    %v798 = vld [vmem:[%s692 + $0x219] sm:$0xff]
    %v799 = vld [vmem:[%s692 + $0x229] sm:$0xff]
    %v800 = vld [vmem:[%s692 + $0x231] sm:$0xff]
    %v801 = vld [vmem:[%s692 + $0x241] sm:$0xff]
    %v802 = vld [vmem:[%s692 + $0x249] sm:$0xff]
    %v803 = vld [vmem:[%s692 + $0x259] sm:$0xff]
    %v804 = vld [vmem:[%s692 + $0x261] sm:$0xff]
    %v805 = vld [vmem:[%s692 + $0x271] sm:$0xff]
    %v806 = vld [vmem:[%s692 + $0x279] sm:$0xff]
    %v807 = vld [vmem:[%s692 + $0x289] sm:$0xff]
    %v808 = vld [vmem:[%s692 + $0x291] sm:$0xff]
    %v809 = vld [vmem:[%s692 + $0x2a1] sm:$0xff]
    %v810 = vld [vmem:[%s692 + $0x2a9] sm:$0xff]
    %v811 = vld [vmem:[%s692 + $0x2b9] sm:$0xff]
    %v812 = vld [vmem:[%s692 + $0x2c1] sm:$0xff]
    %v813 = vld [vmem:[%s692 + $0x2d1] sm:$0xff]
    %v814 = vld [vmem:[%s692 + $0x2d9] sm:$0xff]
    %v815 = vld [vmem:[%s692 + $0x2e9] sm:$0xff]
    %v816 = vld [vmem:[%s692 + $0x2f1] sm:$0xff]
    %v817 = vld [vmem:[%s692 + $0x301] sm:$0xff]
    %v818 = vld [vmem:[%s692 + $0x309] sm:$0xff]
    %v819 = vld [vmem:[%s692 + $0x319] sm:$0xff]
    %v820 = vld [vmem:[%s692 + $0x321] sm:$0xff]
    %v821 = vld [vmem:[%s692 + $0x2] sm:$0xff]
    %v822 = vld [vmem:[%s692 + $0xa] sm:$0xff]
    %v823 = vld [vmem:[%s692 + $0x1a] sm:$0xff]
    %v824 = vld [vmem:[%s692 + $0x22] sm:$0xff]
    %v825 = vld [vmem:[%s692 + $0x32] sm:$0xff]
    %v826 = vld [vmem:[%s692 + $0x3a] sm:$0xff]
    %v827 = vld [vmem:[%s692 + $0x4a] sm:$0xff]
    %v828 = vld [vmem:[%s692 + $0x52] sm:$0xff]
    %v829 = vld [vmem:[%s692 + $0x62] sm:$0xff]
    %v830 = vld [vmem:[%s692 + $0x6a] sm:$0xff]
    %v831 = vld [vmem:[%s692 + $0x7a] sm:$0xff]
    %v832 = vld [vmem:[%s692 + $0x82] sm:$0xff]
    %v833 = vld [vmem:[%s692 + $0x92] sm:$0xff]
    %v834 = vld [vmem:[%s692 + $0x9a] sm:$0xff]
    %v835 = vld [vmem:[%s692 + $0xaa] sm:$0xff]
    %v836 = vld [vmem:[%s692 + $0xb2] sm:$0xff]
    %v837 = vld [vmem:[%s692 + $0xc2] sm:$0xff]
    %v838 = vld [vmem:[%s692 + $0xca] sm:$0xff]
    %v839 = vld [vmem:[%s692 + $0xda] sm:$0xff]
    %v840 = vld [vmem:[%s692 + $0xe2] sm:$0xff]
    %v841 = vld [vmem:[%s692 + $0xf2] sm:$0xff]
    %v842 = vld [vmem:[%s692 + $0xfa] sm:$0xff]
    %v843 = vld [vmem:[%s692 + $0x10a] sm:$0xff]
    %v844 = vld [vmem:[%s692 + $0x112] sm:$0xff]
    %v845 = vld [vmem:[%s692 + $0x122] sm:$0xff]
    %v846 = vld [vmem:[%s692 + $0x12a] sm:$0xff]
    %v847 = vld [vmem:[%s692 + $0x13a] sm:$0xff]
    %v848 = vld [vmem:[%s692 + $0x142] sm:$0xff]
    %v849 = vld [vmem:[%s692 + $0x152] sm:$0xff]
    %v850 = vld [vmem:[%s692 + $0x15a] sm:$0xff]
    %v851 = vld [vmem:[%s692 + $0x16a] sm:$0xff]
    %v852 = vld [vmem:[%s692 + $0x172] sm:$0xff]
    %v853 = vld [vmem:[%s692 + $0x1b2] sm:$0xff]
    %v854 = vld [vmem:[%s692 + $0x1ba] sm:$0xff]
    %v855 = vld [vmem:[%s692 + $0x1ca] sm:$0xff]
    %v856 = vld [vmem:[%s692 + $0x1d2] sm:$0xff]
    %v857 = vld [vmem:[%s692 + $0x1e2] sm:$0xff]
    %v858 = vld [vmem:[%s692 + $0x1ea] sm:$0xff]
    %v859 = vld [vmem:[%s692 + $0x1fa] sm:$0xff]
    %v860 = vld [vmem:[%s692 + $0x202] sm:$0xff]
    %v861 = vld [vmem:[%s692 + $0x212] sm:$0xff]
    %v862 = vld [vmem:[%s692 + $0x21a] sm:$0xff]
    %v863 = vld [vmem:[%s692 + $0x22a] sm:$0xff]
    %v864 = vld [vmem:[%s692 + $0x232] sm:$0xff]
    %v865 = vld [vmem:[%s692 + $0x242] sm:$0xff]
    %v866 = vld [vmem:[%s692 + $0x24a] sm:$0xff]
    %v867 = vld [vmem:[%s692 + $0x25a] sm:$0xff]
    %v868 = vld [vmem:[%s692 + $0x262] sm:$0xff]
    %v869 = vld [vmem:[%s692 + $0x272] sm:$0xff]
    %v870 = vld [vmem:[%s692 + $0x27a] sm:$0xff]
    %v871 = vld [vmem:[%s692 + $0x28a] sm:$0xff]
    %v872 = vld [vmem:[%s692 + $0x292] sm:$0xff]
    %v873 = vld [vmem:[%s692 + $0x2a2] sm:$0xff]
    %v874 = vld [vmem:[%s692 + $0x2aa] sm:$0xff]
    %v875 = vld [vmem:[%s692 + $0x2ba] sm:$0xff]
    %v876 = vld [vmem:[%s692 + $0x2c2] sm:$0xff]
    %v877 = vld [vmem:[%s692 + $0x2d2] sm:$0xff]
    %v878 = vld [vmem:[%s692 + $0x2da] sm:$0xff]
    %v879 = vld [vmem:[%s692 + $0x2ea] sm:$0xff]
    %v880 = vld [vmem:[%s692 + $0x2f2] sm:$0xff]
    %v881 = vld [vmem:[%s692 + $0x302] sm:$0xff]
    %v882 = vld [vmem:[%s692 + $0x30a] sm:$0xff]
    %v883 = vld [vmem:[%s692 + $0x31a] sm:$0xff]
    %v884 = vld [vmem:[%s692 + $0x322] sm:$0xff]
    %949 = vrot.lane.b32.xlu0 %v372, 24
    %v950 = vpop.permute.xlu0 %949
    %951 = vrot.lane.b32.xlu0 %v373, 24
    %v952 = vpop.permute.xlu0 %951
    %953 = vrot.lane.b32.xlu0 %v374, 24
    %v954 = vpop.permute.xlu0 %953
    %955 = vrot.lane.b32.xlu0 %v375, 24
    %v956 = vpop.permute.xlu0 %955
    %957 = vrot.lane.b32.xlu0 %v376, 24
    %v958 = vpop.permute.xlu0 %957
    %959 = vrot.lane.b32.xlu0 %v377, 24
    %v960 = vpop.permute.xlu0 %959
    %961 = vrot.lane.b32.xlu0 %v378, 24
    %v962 = vpop.permute.xlu0 %961
    %963 = vrot.lane.b32.xlu0 %v379, 24
    %v964 = vpop.permute.xlu0 %963
    %965 = vrot.lane.b32.xlu0 %v380, 24
    %v966 = vpop.permute.xlu0 %965
    %967 = vrot.lane.b32.xlu0 %v381, 24
    %v968 = vpop.permute.xlu0 %967
    %969 = vrot.lane.b32.xlu0 %v382, 24
    %v970 = vpop.permute.xlu0 %969
    %971 = vrot.lane.b32.xlu0 %v383, 24
    %v972 = vpop.permute.xlu0 %971
    %973 = vrot.lane.b32.xlu0 %v384, 24
    %v974 = vpop.permute.xlu0 %973
    %975 = vrot.lane.b32.xlu0 %v385, 24
    %v976 = vpop.permute.xlu0 %975
    %977 = vrot.lane.b32.xlu0 %v386, 24
    %v978 = vpop.permute.xlu0 %977
    %979 = vrot.lane.b32.xlu0 %v387, 24
    %v980 = vpop.permute.xlu0 %979
    %981 = vrot.lane.b32.xlu0 %v388, 24
    %v982 = vpop.permute.xlu0 %981
    %983 = vrot.lane.b32.xlu0 %v389, 24
    %v984 = vpop.permute.xlu0 %983
    %985 = vrot.lane.b32.xlu0 %v390, 24
    %v986 = vpop.permute.xlu0 %985
    %987 = vrot.lane.b32.xlu0 %v391, 24
    %v988 = vpop.permute.xlu0 %987
    %989 = vrot.lane.b32.xlu0 %v392, 24
    %v990 = vpop.permute.xlu0 %989
    %991 = vrot.lane.b32.xlu0 %v393, 24
    %v992 = vpop.permute.xlu0 %991
    %993 = vrot.lane.b32.xlu0 %v394, 24
    %v994 = vpop.permute.xlu0 %993
    %995 = vrot.lane.b32.xlu0 %v395, 24
    %v996 = vpop.permute.xlu0 %995
    %997 = vrot.lane.b32.xlu0 %v396, 24
    %v998 = vpop.permute.xlu0 %997
    %999 = vrot.lane.b32.xlu0 %v397, 24
    %v1000 = vpop.permute.xlu0 %999
    %1001 = vrot.lane.b32.xlu0 %v398, 24
    %v1002 = vpop.permute.xlu0 %1001
    %1003 = vrot.lane.b32.xlu0 %v399, 24
    %v1004 = vpop.permute.xlu0 %1003
    %1005 = vrot.lane.b32.xlu0 %v400, 24
    %v1006 = vpop.permute.xlu0 %1005
    %1007 = vrot.lane.b32.xlu0 %v401, 24
    %v1008 = vpop.permute.xlu0 %1007
    %1009 = vrot.lane.b32.xlu0 %v402, 24
    %v1010 = vpop.permute.xlu0 %1009
    %1011 = vrot.lane.b32.xlu0 %v403, 24
    %v1012 = vpop.permute.xlu0 %1011
    %1013 = vrot.lane.b32.xlu0 %v404, 24
    %v1014 = vpop.permute.xlu0 %1013
    %1015 = vrot.lane.b32.xlu0 %v405, 24
    %v1016 = vpop.permute.xlu0 %1015
    %1017 = vrot.lane.b32.xlu0 %v406, 24
    %v1018 = vpop.permute.xlu0 %1017
    %1019 = vrot.lane.b32.xlu0 %v407, 24
    %v1020 = vpop.permute.xlu0 %1019
    %1021 = vrot.lane.b32.xlu0 %v408, 24
    %v1022 = vpop.permute.xlu0 %1021
    %1023 = vrot.lane.b32.xlu0 %v409, 24
    %v1024 = vpop.permute.xlu0 %1023
    %1025 = vrot.lane.b32.xlu0 %v410, 24
    %v1026 = vpop.permute.xlu0 %1025
    %1027 = vrot.lane.b32.xlu0 %v411, 24
    %v1028 = vpop.permute.xlu0 %1027
    %1029 = vrot.lane.b32.xlu0 %v412, 24
    %v1030 = vpop.permute.xlu0 %1029
    %1031 = vrot.lane.b32.xlu0 %v413, 24
    %v1032 = vpop.permute.xlu0 %1031
    %1033 = vrot.lane.b32.xlu0 %v414, 24
    %v1034 = vpop.permute.xlu0 %1033
    %1035 = vrot.lane.b32.xlu0 %v415, 24
    %v1036 = vpop.permute.xlu0 %1035
    %1037 = vrot.lane.b32.xlu0 %v416, 24
    %v1038 = vpop.permute.xlu0 %1037
    %1039 = vrot.lane.b32.xlu0 %v417, 24
    %v1040 = vpop.permute.xlu0 %1039
    %1041 = vrot.lane.b32.xlu0 %v418, 24
    %v1042 = vpop.permute.xlu0 %1041
    %1043 = vrot.lane.b32.xlu0 %v419, 24
    %v1044 = vpop.permute.xlu0 %1043
    %1045 = vrot.lane.b32.xlu0 %v420, 24
    %v1046 = vpop.permute.xlu0 %1045
    %1047 = vrot.lane.b32.xlu0 %v421, 24
    %v1048 = vpop.permute.xlu0 %1047
    %1049 = vrot.lane.b32.xlu0 %v422, 24
    %v1050 = vpop.permute.xlu0 %1049
    %1051 = vrot.lane.b32.xlu0 %v423, 24
    %v1052 = vpop.permute.xlu0 %1051
    %1053 = vrot.lane.b32.xlu0 %v424, 24
    %v1054 = vpop.permute.xlu0 %1053
    %1055 = vrot.lane.b32.xlu0 %v425, 24
    %v1056 = vpop.permute.xlu0 %1055
    %1057 = vrot.lane.b32.xlu0 %v426, 24
    %v1058 = vpop.permute.xlu0 %1057
    %1059 = vrot.lane.b32.xlu0 %v427, 24
    %v1060 = vpop.permute.xlu0 %1059
    %1061 = vrot.lane.b32.xlu0 %v428, 24
    %v1062 = vpop.permute.xlu0 %1061
    %1063 = vrot.lane.b32.xlu0 %v429, 24
    %v1064 = vpop.permute.xlu0 %1063
    %1065 = vrot.lane.b32.xlu0 %v430, 24
    %v1066 = vpop.permute.xlu0 %1065
    %1067 = vrot.lane.b32.xlu0 %v431, 24
    %v1068 = vpop.permute.xlu0 %1067
    %1069 = vrot.lane.b32.xlu0 %v432, 24
    %v1070 = vpop.permute.xlu0 %1069
    %1071 = vrot.lane.b32.xlu0 %v433, 24
    %v1072 = vpop.permute.xlu0 %1071
    %1073 = vrot.lane.b32.xlu0 %v434, 24
    %v1074 = vpop.permute.xlu0 %1073
    %1075 = vrot.lane.b32.xlu0 %v435, 24
    %v1076 = vpop.permute.xlu0 %1075
    %1205 = vrot.lane.b32.xlu0 %v436, 48
    %v1206 = vpop.permute.xlu0 %1205
    %1207 = vrot.lane.b32.xlu0 %v437, 48
    %v1208 = vpop.permute.xlu0 %1207
    %1209 = vrot.lane.b32.xlu0 %v438, 48
    %v1210 = vpop.permute.xlu0 %1209
    %1211 = vrot.lane.b32.xlu0 %v439, 48
    %v1212 = vpop.permute.xlu0 %1211
    %1213 = vrot.lane.b32.xlu0 %v440, 48
    %v1214 = vpop.permute.xlu0 %1213
    %1215 = vrot.lane.b32.xlu0 %v441, 48
    %v1216 = vpop.permute.xlu0 %1215
    %1217 = vrot.lane.b32.xlu0 %v442, 48
    %v1218 = vpop.permute.xlu0 %1217
    %1219 = vrot.lane.b32.xlu0 %v443, 48
    %v1220 = vpop.permute.xlu0 %1219
    %1221 = vrot.lane.b32.xlu0 %v444, 48
    %v1222 = vpop.permute.xlu0 %1221
    %1223 = vrot.lane.b32.xlu0 %v445, 48
    %v1224 = vpop.permute.xlu0 %1223
    %1225 = vrot.lane.b32.xlu0 %v446, 48
    %v1226 = vpop.permute.xlu0 %1225
    %1227 = vrot.lane.b32.xlu0 %v447, 48
    %v1228 = vpop.permute.xlu0 %1227
    %1229 = vrot.lane.b32.xlu0 %v448, 48
    %v1230 = vpop.permute.xlu0 %1229
    %1231 = vrot.lane.b32.xlu0 %v449, 48
    %v1232 = vpop.permute.xlu0 %1231
    %1233 = vrot.lane.b32.xlu0 %v450, 48
    %v1234 = vpop.permute.xlu0 %1233
    %1235 = vrot.lane.b32.xlu0 %v451, 48
    %v1236 = vpop.permute.xlu0 %1235
    %1237 = vrot.lane.b32.xlu0 %v452, 48
    %v1238 = vpop.permute.xlu0 %1237
    %1239 = vrot.lane.b32.xlu0 %v453, 48
    %v1240 = vpop.permute.xlu0 %1239
    %1241 = vrot.lane.b32.xlu0 %v454, 48
    %v1242 = vpop.permute.xlu0 %1241
    %1243 = vrot.lane.b32.xlu0 %v455, 48
    %v1244 = vpop.permute.xlu0 %1243
    %1245 = vrot.lane.b32.xlu0 %v456, 48
    %v1246 = vpop.permute.xlu0 %1245
    %1247 = vrot.lane.b32.xlu0 %v457, 48
    %v1248 = vpop.permute.xlu0 %1247
    %1249 = vrot.lane.b32.xlu0 %v458, 48
    %v1250 = vpop.permute.xlu0 %1249
    %1251 = vrot.lane.b32.xlu0 %v459, 48
    %v1252 = vpop.permute.xlu0 %1251
    %1253 = vrot.lane.b32.xlu0 %v460, 48
    %v1254 = vpop.permute.xlu0 %1253
    %1255 = vrot.lane.b32.xlu0 %v461, 48
    %v1256 = vpop.permute.xlu0 %1255
    %1257 = vrot.lane.b32.xlu0 %v462, 48
    %v1258 = vpop.permute.xlu0 %1257
    %1259 = vrot.lane.b32.xlu0 %v463, 48
    %v1260 = vpop.permute.xlu0 %1259
    %1261 = vrot.lane.b32.xlu0 %v464, 48
    %v1262 = vpop.permute.xlu0 %1261
    %1263 = vrot.lane.b32.xlu0 %v465, 48
    %v1264 = vpop.permute.xlu0 %1263
    %1265 = vrot.lane.b32.xlu0 %v466, 48
    %v1266 = vpop.permute.xlu0 %1265
    %1267 = vrot.lane.b32.xlu0 %v467, 48
    %v1268 = vpop.permute.xlu0 %1267
    %1269 = vrot.lane.b32.xlu0 %v468, 48
    %v1270 = vpop.permute.xlu0 %1269
    %1271 = vrot.lane.b32.xlu0 %v469, 48
    %v1272 = vpop.permute.xlu0 %1271
    %1273 = vrot.lane.b32.xlu0 %v470, 48
    %v1274 = vpop.permute.xlu0 %1273
    %1275 = vrot.lane.b32.xlu0 %v471, 48
    %v1276 = vpop.permute.xlu0 %1275
    %1277 = vrot.lane.b32.xlu0 %v472, 48
    %v1278 = vpop.permute.xlu0 %1277
    %1279 = vrot.lane.b32.xlu0 %v473, 48
    %v1280 = vpop.permute.xlu0 %1279
    %1281 = vrot.lane.b32.xlu0 %v474, 48
    %v1282 = vpop.permute.xlu0 %1281
    %1283 = vrot.lane.b32.xlu0 %v475, 48
    %v1284 = vpop.permute.xlu0 %1283
    %1285 = vrot.lane.b32.xlu0 %v476, 48
    %v1286 = vpop.permute.xlu0 %1285
    %1287 = vrot.lane.b32.xlu0 %v477, 48
    %v1288 = vpop.permute.xlu0 %1287
    %1289 = vrot.lane.b32.xlu0 %v478, 48
    %v1290 = vpop.permute.xlu0 %1289
    %1291 = vrot.lane.b32.xlu0 %v479, 48
    %v1292 = vpop.permute.xlu0 %1291
    %1293 = vrot.lane.b32.xlu0 %v480, 48
    %v1294 = vpop.permute.xlu0 %1293
    %1295 = vrot.lane.b32.xlu0 %v481, 48
    %v1296 = vpop.permute.xlu0 %1295
    %1297 = vrot.lane.b32.xlu0 %v482, 48
    %v1298 = vpop.permute.xlu0 %1297
    %1299 = vrot.lane.b32.xlu0 %v483, 48
    %v1300 = vpop.permute.xlu0 %1299
    %1301 = vrot.lane.b32.xlu0 %v484, 48
    %v1302 = vpop.permute.xlu0 %1301
    %1303 = vrot.lane.b32.xlu0 %v485, 48
    %v1304 = vpop.permute.xlu0 %1303
    %1305 = vrot.lane.b32.xlu0 %v486, 48
    %v1306 = vpop.permute.xlu0 %1305
    %1307 = vrot.lane.b32.xlu0 %v487, 48
    %v1308 = vpop.permute.xlu0 %1307
    %1309 = vrot.lane.b32.xlu0 %v488, 48
    %v1310 = vpop.permute.xlu0 %1309
    %1311 = vrot.lane.b32.xlu0 %v489, 48
    %v1312 = vpop.permute.xlu0 %1311
    %1313 = vrot.lane.b32.xlu0 %v490, 48
    %v1314 = vpop.permute.xlu0 %1313
    %1315 = vrot.lane.b32.xlu0 %v491, 48
    %v1316 = vpop.permute.xlu0 %1315
    %1317 = vrot.lane.b32.xlu0 %v492, 48
    %v1318 = vpop.permute.xlu0 %1317
    %1319 = vrot.lane.b32.xlu0 %v493, 48
    %v1320 = vpop.permute.xlu0 %1319
    %1321 = vrot.lane.b32.xlu0 %v494, 48
    %v1322 = vpop.permute.xlu0 %1321
    %1323 = vrot.lane.b32.xlu0 %v495, 48
    %v1324 = vpop.permute.xlu0 %1323
    %1325 = vrot.lane.b32.xlu0 %v496, 48
    %v1326 = vpop.permute.xlu0 %1325
    %1327 = vrot.lane.b32.xlu0 %v497, 48
    %v1328 = vpop.permute.xlu0 %1327
    %1329 = vrot.lane.b32.xlu0 %v498, 48
    %v1330 = vpop.permute.xlu0 %1329
    %1331 = vrot.lane.b32.xlu0 %v499, 48
    %v1332 = vpop.permute.xlu0 %1331
    %1461 = vrot.lane.b32.xlu0 %v500, 72
    %v1462 = vpop.permute.xlu0 %1461
    %1463 = vrot.lane.b32.xlu0 %v501, 72
    %v1464 = vpop.permute.xlu0 %1463
    %1465 = vrot.lane.b32.xlu0 %v502, 72
    %v1466 = vpop.permute.xlu0 %1465
    %1467 = vrot.lane.b32.xlu0 %v503, 72
    %v1468 = vpop.permute.xlu0 %1467
    %1469 = vrot.lane.b32.xlu0 %v504, 72
    %v1470 = vpop.permute.xlu0 %1469
    %1471 = vrot.lane.b32.xlu0 %v505, 72
    %v1472 = vpop.permute.xlu0 %1471
    %1473 = vrot.lane.b32.xlu0 %v506, 72
    %v1474 = vpop.permute.xlu0 %1473
    %1475 = vrot.lane.b32.xlu0 %v507, 72
    %v1476 = vpop.permute.xlu0 %1475
    %1477 = vrot.lane.b32.xlu0 %v508, 72
    %v1478 = vpop.permute.xlu0 %1477
    %1479 = vrot.lane.b32.xlu0 %v509, 72
    %v1480 = vpop.permute.xlu0 %1479
    %1481 = vrot.lane.b32.xlu0 %v510, 72
    %v1482 = vpop.permute.xlu0 %1481
    %1483 = vrot.lane.b32.xlu0 %v511, 72
    %v1484 = vpop.permute.xlu0 %1483
    %1485 = vrot.lane.b32.xlu0 %v512, 72
    %v1486 = vpop.permute.xlu0 %1485
    %1487 = vrot.lane.b32.xlu0 %v513, 72
    %v1488 = vpop.permute.xlu0 %1487
    %1489 = vrot.lane.b32.xlu0 %v514, 72
    %v1490 = vpop.permute.xlu0 %1489
    %1491 = vrot.lane.b32.xlu0 %v515, 72
    %v1492 = vpop.permute.xlu0 %1491
    %1493 = vrot.lane.b32.xlu0 %v516, 72
    %v1494 = vpop.permute.xlu0 %1493
    %1495 = vrot.lane.b32.xlu0 %v517, 72
    %v1496 = vpop.permute.xlu0 %1495
    %1497 = vrot.lane.b32.xlu0 %v518, 72
    %v1498 = vpop.permute.xlu0 %1497
    %1499 = vrot.lane.b32.xlu0 %v519, 72
    %v1500 = vpop.permute.xlu0 %1499
    %1501 = vrot.lane.b32.xlu0 %v520, 72
    %v1502 = vpop.permute.xlu0 %1501
    %1503 = vrot.lane.b32.xlu0 %v521, 72
    %v1504 = vpop.permute.xlu0 %1503
    %1505 = vrot.lane.b32.xlu0 %v522, 72
    %v1506 = vpop.permute.xlu0 %1505
    %1507 = vrot.lane.b32.xlu0 %v523, 72
    %v1508 = vpop.permute.xlu0 %1507
    %1509 = vrot.lane.b32.xlu0 %v524, 72
    %v1510 = vpop.permute.xlu0 %1509
    %1511 = vrot.lane.b32.xlu0 %v525, 72
    %v1512 = vpop.permute.xlu0 %1511
    %1513 = vrot.lane.b32.xlu0 %v526, 72
    %v1514 = vpop.permute.xlu0 %1513
    %1515 = vrot.lane.b32.xlu0 %v527, 72
    %v1516 = vpop.permute.xlu0 %1515
    %1517 = vrot.lane.b32.xlu0 %v528, 72
    %v1518 = vpop.permute.xlu0 %1517
    %1519 = vrot.lane.b32.xlu0 %v529, 72
    %v1520 = vpop.permute.xlu0 %1519
    %1521 = vrot.lane.b32.xlu0 %v530, 72
    %v1522 = vpop.permute.xlu0 %1521
    %1523 = vrot.lane.b32.xlu0 %v531, 72
    %v1524 = vpop.permute.xlu0 %1523
    %1525 = vrot.lane.b32.xlu0 %v532, 72
    %v1526 = vpop.permute.xlu0 %1525
    %1527 = vrot.lane.b32.xlu0 %v533, 72
    %v1528 = vpop.permute.xlu0 %1527
    %1529 = vrot.lane.b32.xlu0 %v534, 72
    %v1530 = vpop.permute.xlu0 %1529
    %1531 = vrot.lane.b32.xlu0 %v535, 72
    %v1532 = vpop.permute.xlu0 %1531
    %1533 = vrot.lane.b32.xlu0 %v536, 72
    %v1534 = vpop.permute.xlu0 %1533
    %1535 = vrot.lane.b32.xlu0 %v537, 72
    %v1536 = vpop.permute.xlu0 %1535
    %1537 = vrot.lane.b32.xlu0 %v538, 72
    %v1538 = vpop.permute.xlu0 %1537
    %1539 = vrot.lane.b32.xlu0 %v539, 72
    %v1540 = vpop.permute.xlu0 %1539
    %1541 = vrot.lane.b32.xlu0 %v540, 72
    %v1542 = vpop.permute.xlu0 %1541
    %1543 = vrot.lane.b32.xlu0 %v541, 72
    %v1544 = vpop.permute.xlu0 %1543
    %1545 = vrot.lane.b32.xlu0 %v542, 72
    %v1546 = vpop.permute.xlu0 %1545
    %1547 = vrot.lane.b32.xlu0 %v543, 72
    %v1548 = vpop.permute.xlu0 %1547
    %1549 = vrot.lane.b32.xlu0 %v544, 72
    %v1550 = vpop.permute.xlu0 %1549
    %1551 = vrot.lane.b32.xlu0 %v545, 72
    %v1552 = vpop.permute.xlu0 %1551
    %1553 = vrot.lane.b32.xlu0 %v546, 72
    %v1554 = vpop.permute.xlu0 %1553
    %1555 = vrot.lane.b32.xlu0 %v547, 72
    %v1556 = vpop.permute.xlu0 %1555
    %1557 = vrot.lane.b32.xlu0 %v548, 72
    %v1558 = vpop.permute.xlu0 %1557
    %1559 = vrot.lane.b32.xlu0 %v549, 72
    %v1560 = vpop.permute.xlu0 %1559
    %1561 = vrot.lane.b32.xlu0 %v550, 72
    %v1562 = vpop.permute.xlu0 %1561
    %1563 = vrot.lane.b32.xlu0 %v551, 72
    %v1564 = vpop.permute.xlu0 %1563
    %1565 = vrot.lane.b32.xlu0 %v552, 72
    %v1566 = vpop.permute.xlu0 %1565
    %1567 = vrot.lane.b32.xlu0 %v553, 72
    %v1568 = vpop.permute.xlu0 %1567
    %1569 = vrot.lane.b32.xlu0 %v554, 72
    %v1570 = vpop.permute.xlu0 %1569
    %1571 = vrot.lane.b32.xlu0 %v555, 72
    %v1572 = vpop.permute.xlu0 %1571
    %1573 = vrot.lane.b32.xlu0 %v556, 72
    %v1574 = vpop.permute.xlu0 %1573
    %1575 = vrot.lane.b32.xlu0 %v557, 72
    %v1576 = vpop.permute.xlu0 %1575
    %1577 = vrot.lane.b32.xlu0 %v558, 72
    %v1578 = vpop.permute.xlu0 %1577
    %1579 = vrot.lane.b32.xlu0 %v559, 72
    %v1580 = vpop.permute.xlu0 %1579
    %1581 = vrot.lane.b32.xlu0 %v560, 72
    %v1582 = vpop.permute.xlu0 %1581
    %1583 = vrot.lane.b32.xlu0 %v561, 72
    %v1584 = vpop.permute.xlu0 %1583
    %1585 = vrot.lane.b32.xlu0 %v562, 72
    %v1586 = vpop.permute.xlu0 %1585
    %1587 = vrot.lane.b32.xlu0 %v563, 72
    %v1588 = vpop.permute.xlu0 %1587
    %1717 = vrot.lane.b32.xlu0 %v564, 96
    %v1718 = vpop.permute.xlu0 %1717
    %1719 = vrot.lane.b32.xlu0 %v565, 96
    %v1720 = vpop.permute.xlu0 %1719
    %1721 = vrot.lane.b32.xlu0 %v566, 96
    %v1722 = vpop.permute.xlu0 %1721
    %1723 = vrot.lane.b32.xlu0 %v567, 96
    %v1724 = vpop.permute.xlu0 %1723
    %1725 = vrot.lane.b32.xlu0 %v568, 96
    %v1726 = vpop.permute.xlu0 %1725
    %1727 = vrot.lane.b32.xlu0 %v569, 96
    %v1728 = vpop.permute.xlu0 %1727
    %1729 = vrot.lane.b32.xlu0 %v570, 96
    %v1730 = vpop.permute.xlu0 %1729
    %1731 = vrot.lane.b32.xlu0 %v571, 96
    %v1732 = vpop.permute.xlu0 %1731
    %1733 = vrot.lane.b32.xlu0 %v572, 96
    %v1734 = vpop.permute.xlu0 %1733
    %1735 = vrot.lane.b32.xlu0 %v573, 96
    %v1736 = vpop.permute.xlu0 %1735
    %1737 = vrot.lane.b32.xlu0 %v574, 96
    %v1738 = vpop.permute.xlu0 %1737
    %1739 = vrot.lane.b32.xlu0 %v575, 96
    %v1740 = vpop.permute.xlu0 %1739
    %1741 = vrot.lane.b32.xlu0 %v576, 96
    %v1742 = vpop.permute.xlu0 %1741
    %1743 = vrot.lane.b32.xlu0 %v577, 96
    %v1744 = vpop.permute.xlu0 %1743
    %1745 = vrot.lane.b32.xlu0 %v578, 96
    %v1746 = vpop.permute.xlu0 %1745
    %1747 = vrot.lane.b32.xlu0 %v579, 96
    %v1748 = vpop.permute.xlu0 %1747
    %1749 = vrot.lane.b32.xlu0 %v580, 96
    %v1750 = vpop.permute.xlu0 %1749
    %1751 = vrot.lane.b32.xlu0 %v581, 96
    %v1752 = vpop.permute.xlu0 %1751
    %1753 = vrot.lane.b32.xlu0 %v582, 96
    %v1754 = vpop.permute.xlu0 %1753
    %1755 = vrot.lane.b32.xlu0 %v583, 96
    %v1756 = vpop.permute.xlu0 %1755
    %1757 = vrot.lane.b32.xlu0 %v584, 96
    %v1758 = vpop.permute.xlu0 %1757
    %1759 = vrot.lane.b32.xlu0 %v585, 96
    %v1760 = vpop.permute.xlu0 %1759
    %1761 = vrot.lane.b32.xlu0 %v586, 96
    %v1762 = vpop.permute.xlu0 %1761
    %1763 = vrot.lane.b32.xlu0 %v587, 96
    %v1764 = vpop.permute.xlu0 %1763
    %1765 = vrot.lane.b32.xlu0 %v588, 96
    %v1766 = vpop.permute.xlu0 %1765
    %1767 = vrot.lane.b32.xlu0 %v589, 96
    %v1768 = vpop.permute.xlu0 %1767
    %1769 = vrot.lane.b32.xlu0 %v590, 96
    %v1770 = vpop.permute.xlu0 %1769
    %1771 = vrot.lane.b32.xlu0 %v591, 96
    %v1772 = vpop.permute.xlu0 %1771
    %1773 = vrot.lane.b32.xlu0 %v592, 96
    %v1774 = vpop.permute.xlu0 %1773
    %1775 = vrot.lane.b32.xlu0 %v593, 96
    %v1776 = vpop.permute.xlu0 %1775
    %1777 = vrot.lane.b32.xlu0 %v594, 96
    %v1778 = vpop.permute.xlu0 %1777
    %1779 = vrot.lane.b32.xlu0 %v595, 96
    %v1780 = vpop.permute.xlu0 %1779
    %1781 = vrot.lane.b32.xlu0 %v596, 96
    %v1782 = vpop.permute.xlu0 %1781
    %1783 = vrot.lane.b32.xlu0 %v597, 96
    %v1784 = vpop.permute.xlu0 %1783
    %1785 = vrot.lane.b32.xlu0 %v598, 96
    %v1786 = vpop.permute.xlu0 %1785
    %1787 = vrot.lane.b32.xlu0 %v599, 96
    %v1788 = vpop.permute.xlu0 %1787
    %1789 = vrot.lane.b32.xlu0 %v600, 96
    %v1790 = vpop.permute.xlu0 %1789
    %1791 = vrot.lane.b32.xlu0 %v601, 96
    %v1792 = vpop.permute.xlu0 %1791
    %1793 = vrot.lane.b32.xlu0 %v602, 96
    %v1794 = vpop.permute.xlu0 %1793
    %1795 = vrot.lane.b32.xlu0 %v603, 96
    %v1796 = vpop.permute.xlu0 %1795
    %1797 = vrot.lane.b32.xlu0 %v604, 96
    %v1798 = vpop.permute.xlu0 %1797
    %1799 = vrot.lane.b32.xlu0 %v605, 96
    %v1800 = vpop.permute.xlu0 %1799
    %1801 = vrot.lane.b32.xlu0 %v606, 96
    %v1802 = vpop.permute.xlu0 %1801
    %1803 = vrot.lane.b32.xlu0 %v607, 96
    %v1804 = vpop.permute.xlu0 %1803
    %1805 = vrot.lane.b32.xlu0 %v608, 96
    %v1806 = vpop.permute.xlu0 %1805
    %1807 = vrot.lane.b32.xlu0 %v609, 96
    %v1808 = vpop.permute.xlu0 %1807
    %1809 = vrot.lane.b32.xlu0 %v610, 96
    %v1810 = vpop.permute.xlu0 %1809
    %1811 = vrot.lane.b32.xlu0 %v611, 96
    %v1812 = vpop.permute.xlu0 %1811
    %1813 = vrot.lane.b32.xlu0 %v612, 96
    %v1814 = vpop.permute.xlu0 %1813
    %1815 = vrot.lane.b32.xlu0 %v613, 96
    %v1816 = vpop.permute.xlu0 %1815
    %1817 = vrot.lane.b32.xlu0 %v614, 96
    %v1818 = vpop.permute.xlu0 %1817
    %1819 = vrot.lane.b32.xlu0 %v615, 96
    %v1820 = vpop.permute.xlu0 %1819
    %1821 = vrot.lane.b32.xlu0 %v616, 96
    %v1822 = vpop.permute.xlu0 %1821
    %1823 = vrot.lane.b32.xlu0 %v617, 96
    %v1824 = vpop.permute.xlu0 %1823
    %1825 = vrot.lane.b32.xlu0 %v618, 96
    %v1826 = vpop.permute.xlu0 %1825
    %1827 = vrot.lane.b32.xlu0 %v619, 96
    %v1828 = vpop.permute.xlu0 %1827
    %1829 = vrot.lane.b32.xlu0 %v620, 96
    %v1830 = vpop.permute.xlu0 %1829
    %1831 = vrot.lane.b32.xlu0 %v621, 96
    %v1832 = vpop.permute.xlu0 %1831
    %1833 = vrot.lane.b32.xlu0 %v622, 96
    %v1834 = vpop.permute.xlu0 %1833
    %1835 = vrot.lane.b32.xlu0 %v623, 96
    %v1836 = vpop.permute.xlu0 %1835
    %1837 = vrot.lane.b32.xlu0 %v624, 96
    %v1838 = vpop.permute.xlu0 %1837
    %1839 = vrot.lane.b32.xlu0 %v625, 96
    %v1840 = vpop.permute.xlu0 %1839
    %1841 = vrot.lane.b32.xlu0 %v626, 96
    %v1842 = vpop.permute.xlu0 %1841
    %1843 = vrot.lane.b32.xlu0 %v627, 96
    %v1844 = vpop.permute.xlu0 %1843
    %1973 = vrot.lane.b32.xlu0 %v628, 120
    %v1974 = vpop.permute.xlu0 %1973
    %1975 = vrot.lane.b32.xlu0 %v629, 120
    %v1976 = vpop.permute.xlu0 %1975
    %1977 = vrot.lane.b32.xlu0 %v630, 120
    %v1978 = vpop.permute.xlu0 %1977
    %1979 = vrot.lane.b32.xlu0 %v631, 120
    %v1980 = vpop.permute.xlu0 %1979
    %1981 = vrot.lane.b32.xlu0 %v632, 120
    %v1982 = vpop.permute.xlu0 %1981
    %1983 = vrot.lane.b32.xlu0 %v633, 120
    %v1984 = vpop.permute.xlu0 %1983
    %1985 = vrot.lane.b32.xlu0 %v634, 120
    %v1986 = vpop.permute.xlu0 %1985
    %1987 = vrot.lane.b32.xlu0 %v635, 120
    %v1988 = vpop.permute.xlu0 %1987
    %1989 = vrot.lane.b32.xlu0 %v636, 120
    %v1990 = vpop.permute.xlu0 %1989
    %1991 = vrot.lane.b32.xlu0 %v637, 120
    %v1992 = vpop.permute.xlu0 %1991
    %1993 = vrot.lane.b32.xlu0 %v638, 120
    %v1994 = vpop.permute.xlu0 %1993
    %1995 = vrot.lane.b32.xlu0 %v639, 120
    %v1996 = vpop.permute.xlu0 %1995
    %1997 = vrot.lane.b32.xlu0 %v640, 120
    %v1998 = vpop.permute.xlu0 %1997
    %1999 = vrot.lane.b32.xlu0 %v641, 120
    %v2000 = vpop.permute.xlu0 %1999
    %2001 = vrot.lane.b32.xlu0 %v642, 120
    %v2002 = vpop.permute.xlu0 %2001
    %2003 = vrot.lane.b32.xlu0 %v643, 120
    %v2004 = vpop.permute.xlu0 %2003
    %2005 = vrot.lane.b32.xlu0 %v644, 120
    %v2006 = vpop.permute.xlu0 %2005
    %2007 = vrot.lane.b32.xlu0 %v645, 120
    %v2008 = vpop.permute.xlu0 %2007
    %2009 = vrot.lane.b32.xlu0 %v646, 120
    %v2010 = vpop.permute.xlu0 %2009
    %2011 = vrot.lane.b32.xlu0 %v647, 120
    %v2012 = vpop.permute.xlu0 %2011
    %2013 = vrot.lane.b32.xlu0 %v648, 120
    %v2014 = vpop.permute.xlu0 %2013
    %2015 = vrot.lane.b32.xlu0 %v649, 120
    %v2016 = vpop.permute.xlu0 %2015
    %2017 = vrot.lane.b32.xlu0 %v650, 120
    %v2018 = vpop.permute.xlu0 %2017
    %2019 = vrot.lane.b32.xlu0 %v651, 120
    %v2020 = vpop.permute.xlu0 %2019
    %2021 = vrot.lane.b32.xlu0 %v652, 120
    %v2022 = vpop.permute.xlu0 %2021
    %2023 = vrot.lane.b32.xlu0 %v653, 120
    %v2024 = vpop.permute.xlu0 %2023
    %2025 = vrot.lane.b32.xlu0 %v654, 120
    %v2026 = vpop.permute.xlu0 %2025
    %2027 = vrot.lane.b32.xlu0 %v655, 120
    %v2028 = vpop.permute.xlu0 %2027
    %2029 = vrot.lane.b32.xlu0 %v656, 120
    %v2030 = vpop.permute.xlu0 %2029
    %2031 = vrot.lane.b32.xlu0 %v657, 120
    %v2032 = vpop.permute.xlu0 %2031
    %2033 = vrot.lane.b32.xlu0 %v658, 120
    %v2034 = vpop.permute.xlu0 %2033
    %2035 = vrot.lane.b32.xlu0 %v659, 120
    %v2036 = vpop.permute.xlu0 %2035
    %2037 = vrot.lane.b32.xlu0 %v660, 120
    %v2038 = vpop.permute.xlu0 %2037
    %2039 = vrot.lane.b32.xlu0 %v661, 120
    %v2040 = vpop.permute.xlu0 %2039
    %2041 = vrot.lane.b32.xlu0 %v662, 120
    %v2042 = vpop.permute.xlu0 %2041
    %2043 = vrot.lane.b32.xlu0 %v663, 120
    %v2044 = vpop.permute.xlu0 %2043
    %2045 = vrot.lane.b32.xlu0 %v664, 120
    %v2046 = vpop.permute.xlu0 %2045
    %2047 = vrot.lane.b32.xlu0 %v665, 120
    %v2048 = vpop.permute.xlu0 %2047
    %2049 = vrot.lane.b32.xlu0 %v666, 120
    %v2050 = vpop.permute.xlu0 %2049
    %2051 = vrot.lane.b32.xlu0 %v667, 120
    %v2052 = vpop.permute.xlu0 %2051
    %2053 = vrot.lane.b32.xlu0 %v668, 120
    %v2054 = vpop.permute.xlu0 %2053
    %2055 = vrot.lane.b32.xlu0 %v669, 120
    %v2056 = vpop.permute.xlu0 %2055
    %2057 = vrot.lane.b32.xlu0 %v670, 120
    %v2058 = vpop.permute.xlu0 %2057
    %2059 = vrot.lane.b32.xlu0 %v671, 120
    %v2060 = vpop.permute.xlu0 %2059
    %2061 = vrot.lane.b32.xlu0 %v672, 120
    %v2062 = vpop.permute.xlu0 %2061
    %2063 = vrot.lane.b32.xlu0 %v673, 120
    %v2064 = vpop.permute.xlu0 %2063
    %2065 = vrot.lane.b32.xlu0 %v674, 120
    %v2066 = vpop.permute.xlu0 %2065
    %2067 = vrot.lane.b32.xlu0 %v675, 120
    %v2068 = vpop.permute.xlu0 %2067
    %2069 = vrot.lane.b32.xlu0 %v676, 120
    %v2070 = vpop.permute.xlu0 %2069
    %2071 = vrot.lane.b32.xlu0 %v677, 120
    %v2072 = vpop.permute.xlu0 %2071
    %2073 = vrot.lane.b32.xlu0 %v678, 120
    %v2074 = vpop.permute.xlu0 %2073
    %2075 = vrot.lane.b32.xlu0 %v679, 120
    %v2076 = vpop.permute.xlu0 %2075
    %2077 = vrot.lane.b32.xlu0 %v680, 120
    %v2078 = vpop.permute.xlu0 %2077
    %2079 = vrot.lane.b32.xlu0 %v681, 120
    %v2080 = vpop.permute.xlu0 %2079
    %2081 = vrot.lane.b32.xlu0 %v682, 120
    %v2082 = vpop.permute.xlu0 %2081
    %2083 = vrot.lane.b32.xlu0 %v683, 120
    %v2084 = vpop.permute.xlu0 %2083
    %2085 = vrot.lane.b32.xlu0 %v684, 120
    %v2086 = vpop.permute.xlu0 %2085
    %2087 = vrot.lane.b32.xlu0 %v685, 120
    %v2088 = vpop.permute.xlu0 %2087
    %2089 = vrot.lane.b32.xlu0 %v686, 120
    %v2090 = vpop.permute.xlu0 %2089
    %2091 = vrot.lane.b32.xlu0 %v687, 120
    %v2092 = vpop.permute.xlu0 %2091
    %2093 = vrot.lane.b32.xlu0 %v688, 120
    %v2094 = vpop.permute.xlu0 %2093
    %2095 = vrot.lane.b32.xlu0 %v689, 120
    %v2096 = vpop.permute.xlu0 %2095
    %2097 = vrot.lane.b32.xlu0 %v690, 120
    %v2098 = vpop.permute.xlu0 %2097
    %2099 = vrot.lane.b32.xlu0 %v691, 120
    %v2100 = vpop.permute.xlu0 %2099
    %2229 = vrot.lane.b32.xlu0 %v693, 16
    %v2230 = vpop.permute.xlu0 %2229
    %2231 = vrot.lane.b32.xlu0 %v694, 16
    %v2232 = vpop.permute.xlu0 %2231
    %2233 = vrot.lane.b32.xlu0 %v695, 16
    %v2234 = vpop.permute.xlu0 %2233
    %2235 = vrot.lane.b32.xlu0 %v696, 16
    %v2236 = vpop.permute.xlu0 %2235
    %2237 = vrot.lane.b32.xlu0 %v697, 16
    %v2238 = vpop.permute.xlu0 %2237
    %2239 = vrot.lane.b32.xlu0 %v698, 16
    %v2240 = vpop.permute.xlu0 %2239
    %2241 = vrot.lane.b32.xlu0 %v699, 16
    %v2242 = vpop.permute.xlu0 %2241
    %2243 = vrot.lane.b32.xlu0 %v700, 16
    %v2244 = vpop.permute.xlu0 %2243
    %2245 = vrot.lane.b32.xlu0 %v701, 16
    %v2246 = vpop.permute.xlu0 %2245
    %2247 = vrot.lane.b32.xlu0 %v702, 16
    %v2248 = vpop.permute.xlu0 %2247
    %2249 = vrot.lane.b32.xlu0 %v703, 16
    %v2250 = vpop.permute.xlu0 %2249
    %2251 = vrot.lane.b32.xlu0 %v704, 16
    %v2252 = vpop.permute.xlu0 %2251
    %2253 = vrot.lane.b32.xlu0 %v705, 16
    %v2254 = vpop.permute.xlu0 %2253
    %2255 = vrot.lane.b32.xlu0 %v706, 16
    %v2256 = vpop.permute.xlu0 %2255
    %2257 = vrot.lane.b32.xlu0 %v707, 16
    %v2258 = vpop.permute.xlu0 %2257
    %2259 = vrot.lane.b32.xlu0 %v708, 16
    %v2260 = vpop.permute.xlu0 %2259
    %2261 = vrot.lane.b32.xlu0 %v709, 16
    %v2262 = vpop.permute.xlu0 %2261
    %2263 = vrot.lane.b32.xlu0 %v710, 16
    %v2264 = vpop.permute.xlu0 %2263
    %2265 = vrot.lane.b32.xlu0 %v711, 16
    %v2266 = vpop.permute.xlu0 %2265
    %2267 = vrot.lane.b32.xlu0 %v712, 16
    %v2268 = vpop.permute.xlu0 %2267
    %2269 = vrot.lane.b32.xlu0 %v713, 16
    %v2270 = vpop.permute.xlu0 %2269
    %2271 = vrot.lane.b32.xlu0 %v714, 16
    %v2272 = vpop.permute.xlu0 %2271
    %2273 = vrot.lane.b32.xlu0 %v715, 16
    %v2274 = vpop.permute.xlu0 %2273
    %2275 = vrot.lane.b32.xlu0 %v716, 16
    %v2276 = vpop.permute.xlu0 %2275
    %2277 = vrot.lane.b32.xlu0 %v717, 16
    %v2278 = vpop.permute.xlu0 %2277
    %2279 = vrot.lane.b32.xlu0 %v718, 16
    %v2280 = vpop.permute.xlu0 %2279
    %2281 = vrot.lane.b32.xlu0 %v719, 16
    %v2282 = vpop.permute.xlu0 %2281
    %2283 = vrot.lane.b32.xlu0 %v720, 16
    %v2284 = vpop.permute.xlu0 %2283
    %2285 = vrot.lane.b32.xlu0 %v721, 16
    %v2286 = vpop.permute.xlu0 %2285
    %2287 = vrot.lane.b32.xlu0 %v722, 16
    %v2288 = vpop.permute.xlu0 %2287
    %2289 = vrot.lane.b32.xlu0 %v723, 16
    %v2290 = vpop.permute.xlu0 %2289
    %2291 = vrot.lane.b32.xlu0 %v724, 16
    %v2292 = vpop.permute.xlu0 %2291
    %2293 = vrot.lane.b32.xlu0 %v725, 16
    %v2294 = vpop.permute.xlu0 %2293
    %2295 = vrot.lane.b32.xlu0 %v726, 16
    %v2296 = vpop.permute.xlu0 %2295
    %2297 = vrot.lane.b32.xlu0 %v727, 16
    %v2298 = vpop.permute.xlu0 %2297
    %2299 = vrot.lane.b32.xlu0 %v728, 16
    %v2300 = vpop.permute.xlu0 %2299
    %2301 = vrot.lane.b32.xlu0 %v729, 16
    %v2302 = vpop.permute.xlu0 %2301
    %2303 = vrot.lane.b32.xlu0 %v730, 16
    %v2304 = vpop.permute.xlu0 %2303
    %2305 = vrot.lane.b32.xlu0 %v731, 16
    %v2306 = vpop.permute.xlu0 %2305
    %2307 = vrot.lane.b32.xlu0 %v732, 16
    %v2308 = vpop.permute.xlu0 %2307
    %2309 = vrot.lane.b32.xlu0 %v733, 16
    %v2310 = vpop.permute.xlu0 %2309
    %2311 = vrot.lane.b32.xlu0 %v734, 16
    %v2312 = vpop.permute.xlu0 %2311
    %2313 = vrot.lane.b32.xlu0 %v735, 16
    %v2314 = vpop.permute.xlu0 %2313
    %2315 = vrot.lane.b32.xlu0 %v736, 16
    %v2316 = vpop.permute.xlu0 %2315
    %2317 = vrot.lane.b32.xlu0 %v737, 16
    %v2318 = vpop.permute.xlu0 %2317
    %2319 = vrot.lane.b32.xlu0 %v738, 16
    %v2320 = vpop.permute.xlu0 %2319
    %2321 = vrot.lane.b32.xlu0 %v739, 16
    %v2322 = vpop.permute.xlu0 %2321
    %2323 = vrot.lane.b32.xlu0 %v740, 16
    %v2324 = vpop.permute.xlu0 %2323
    %2325 = vrot.lane.b32.xlu0 %v741, 16
    %v2326 = vpop.permute.xlu0 %2325
    %2327 = vrot.lane.b32.xlu0 %v742, 16
    %v2328 = vpop.permute.xlu0 %2327
    %2329 = vrot.lane.b32.xlu0 %v743, 16
    %v2330 = vpop.permute.xlu0 %2329
    %2331 = vrot.lane.b32.xlu0 %v744, 16
    %v2332 = vpop.permute.xlu0 %2331
    %2333 = vrot.lane.b32.xlu0 %v745, 16
    %v2334 = vpop.permute.xlu0 %2333
    %2335 = vrot.lane.b32.xlu0 %v746, 16
    %v2336 = vpop.permute.xlu0 %2335
    %2337 = vrot.lane.b32.xlu0 %v747, 16
    %v2338 = vpop.permute.xlu0 %2337
    %2339 = vrot.lane.b32.xlu0 %v748, 16
    %v2340 = vpop.permute.xlu0 %2339
    %2341 = vrot.lane.b32.xlu0 %v749, 16
    %v2342 = vpop.permute.xlu0 %2341
    %2343 = vrot.lane.b32.xlu0 %v750, 16
    %v2344 = vpop.permute.xlu0 %2343
    %2345 = vrot.lane.b32.xlu0 %v751, 16
    %v2346 = vpop.permute.xlu0 %2345
    %2347 = vrot.lane.b32.xlu0 %v752, 16
    %v2348 = vpop.permute.xlu0 %2347
    %2349 = vrot.lane.b32.xlu0 %v753, 16
    %v2350 = vpop.permute.xlu0 %2349
    %2351 = vrot.lane.b32.xlu0 %v754, 16
    %v2352 = vpop.permute.xlu0 %2351
    %2353 = vrot.lane.b32.xlu0 %v755, 16
    %v2354 = vpop.permute.xlu0 %2353
    %2355 = vrot.lane.b32.xlu0 %v756, 16
    %v2356 = vpop.permute.xlu0 %2355
    %2485 = vrot.lane.b32.xlu0 %v757, 40
    %v2486 = vpop.permute.xlu0 %2485
    %2487 = vrot.lane.b32.xlu0 %v758, 40
    %v2488 = vpop.permute.xlu0 %2487
    %2489 = vrot.lane.b32.xlu0 %v759, 40
    %v2490 = vpop.permute.xlu0 %2489
    %2491 = vrot.lane.b32.xlu0 %v760, 40
    %v2492 = vpop.permute.xlu0 %2491
    %2493 = vrot.lane.b32.xlu0 %v761, 40
    %v2494 = vpop.permute.xlu0 %2493
    %2495 = vrot.lane.b32.xlu0 %v762, 40
    %v2496 = vpop.permute.xlu0 %2495
    %2497 = vrot.lane.b32.xlu0 %v763, 40
    %v2498 = vpop.permute.xlu0 %2497
    %2499 = vrot.lane.b32.xlu0 %v764, 40
    %v2500 = vpop.permute.xlu0 %2499
    %2501 = vrot.lane.b32.xlu0 %v765, 40
    %v2502 = vpop.permute.xlu0 %2501
    %2503 = vrot.lane.b32.xlu0 %v766, 40
    %v2504 = vpop.permute.xlu0 %2503
    %2505 = vrot.lane.b32.xlu0 %v767, 40
    %v2506 = vpop.permute.xlu0 %2505
    %2507 = vrot.lane.b32.xlu0 %v768, 40
    %v2508 = vpop.permute.xlu0 %2507
    %2509 = vrot.lane.b32.xlu0 %v769, 40
    %v2510 = vpop.permute.xlu0 %2509
    %2511 = vrot.lane.b32.xlu0 %v770, 40
    %v2512 = vpop.permute.xlu0 %2511
    %2513 = vrot.lane.b32.xlu0 %v771, 40
    %v2514 = vpop.permute.xlu0 %2513
    %2515 = vrot.lane.b32.xlu0 %v772, 40
    %v2516 = vpop.permute.xlu0 %2515
    %2517 = vrot.lane.b32.xlu0 %v773, 40
    %v2518 = vpop.permute.xlu0 %2517
    %2519 = vrot.lane.b32.xlu0 %v774, 40
    %v2520 = vpop.permute.xlu0 %2519
    %2521 = vrot.lane.b32.xlu0 %v775, 40
    %v2522 = vpop.permute.xlu0 %2521
    %2523 = vrot.lane.b32.xlu0 %v776, 40
    %v2524 = vpop.permute.xlu0 %2523
    %2525 = vrot.lane.b32.xlu0 %v777, 40
    %v2526 = vpop.permute.xlu0 %2525
    %2527 = vrot.lane.b32.xlu0 %v778, 40
    %v2528 = vpop.permute.xlu0 %2527
    %2529 = vrot.lane.b32.xlu0 %v779, 40
    %v2530 = vpop.permute.xlu0 %2529
    %2531 = vrot.lane.b32.xlu0 %v780, 40
    %v2532 = vpop.permute.xlu0 %2531
    %2533 = vrot.lane.b32.xlu0 %v781, 40
    %v2534 = vpop.permute.xlu0 %2533
    %2535 = vrot.lane.b32.xlu0 %v782, 40
    %v2536 = vpop.permute.xlu0 %2535
    %2537 = vrot.lane.b32.xlu0 %v783, 40
    %v2538 = vpop.permute.xlu0 %2537
    %2539 = vrot.lane.b32.xlu0 %v784, 40
    %v2540 = vpop.permute.xlu0 %2539
    %2541 = vrot.lane.b32.xlu0 %v785, 40
    %v2542 = vpop.permute.xlu0 %2541
    %2543 = vrot.lane.b32.xlu0 %v786, 40
    %v2544 = vpop.permute.xlu0 %2543
    %2545 = vrot.lane.b32.xlu0 %v787, 40
    %v2546 = vpop.permute.xlu0 %2545
    %2547 = vrot.lane.b32.xlu0 %v788, 40
    %v2548 = vpop.permute.xlu0 %2547
    %2549 = vrot.lane.b32.xlu0 %v789, 40
    %v2550 = vpop.permute.xlu0 %2549
    %2551 = vrot.lane.b32.xlu0 %v790, 40
    %v2552 = vpop.permute.xlu0 %2551
    %2553 = vrot.lane.b32.xlu0 %v791, 40
    %v2554 = vpop.permute.xlu0 %2553
    %2555 = vrot.lane.b32.xlu0 %v792, 40
    %v2556 = vpop.permute.xlu0 %2555
    %2557 = vrot.lane.b32.xlu0 %v793, 40
    %v2558 = vpop.permute.xlu0 %2557
    %2559 = vrot.lane.b32.xlu0 %v794, 40
    %v2560 = vpop.permute.xlu0 %2559
    %2561 = vrot.lane.b32.xlu0 %v795, 40
    %v2562 = vpop.permute.xlu0 %2561
    %2563 = vrot.lane.b32.xlu0 %v796, 40
    %v2564 = vpop.permute.xlu0 %2563
    %2565 = vrot.lane.b32.xlu0 %v797, 40
    %v2566 = vpop.permute.xlu0 %2565
    %2567 = vrot.lane.b32.xlu0 %v798, 40
    %v2568 = vpop.permute.xlu0 %2567
    %2569 = vrot.lane.b32.xlu0 %v799, 40
    %v2570 = vpop.permute.xlu0 %2569
    %2571 = vrot.lane.b32.xlu0 %v800, 40
    %v2572 = vpop.permute.xlu0 %2571
    %2573 = vrot.lane.b32.xlu0 %v801, 40
    %v2574 = vpop.permute.xlu0 %2573
    %2575 = vrot.lane.b32.xlu0 %v802, 40
    %v2576 = vpop.permute.xlu0 %2575
    %2577 = vrot.lane.b32.xlu0 %v803, 40
    %v2578 = vpop.permute.xlu0 %2577
    %2579 = vrot.lane.b32.xlu0 %v804, 40
    %v2580 = vpop.permute.xlu0 %2579
    %2581 = vrot.lane.b32.xlu0 %v805, 40
    %v2582 = vpop.permute.xlu0 %2581
    %2583 = vrot.lane.b32.xlu0 %v806, 40
    %v2584 = vpop.permute.xlu0 %2583
    %2585 = vrot.lane.b32.xlu0 %v807, 40
    %v2586 = vpop.permute.xlu0 %2585
    %2587 = vrot.lane.b32.xlu0 %v808, 40
    %v2588 = vpop.permute.xlu0 %2587
    %2589 = vrot.lane.b32.xlu0 %v809, 40
    %v2590 = vpop.permute.xlu0 %2589
    %2591 = vrot.lane.b32.xlu0 %v810, 40
    %v2592 = vpop.permute.xlu0 %2591
    %2593 = vrot.lane.b32.xlu0 %v811, 40
    %v2594 = vpop.permute.xlu0 %2593
    %2595 = vrot.lane.b32.xlu0 %v812, 40
    %v2596 = vpop.permute.xlu0 %2595
    %2597 = vrot.lane.b32.xlu0 %v813, 40
    %v2598 = vpop.permute.xlu0 %2597
    %2599 = vrot.lane.b32.xlu0 %v814, 40
    %v2600 = vpop.permute.xlu0 %2599
    %2601 = vrot.lane.b32.xlu0 %v815, 40
    %v2602 = vpop.permute.xlu0 %2601
    %2603 = vrot.lane.b32.xlu0 %v816, 40
    %v2604 = vpop.permute.xlu0 %2603
    %2605 = vrot.lane.b32.xlu0 %v817, 40
    %v2606 = vpop.permute.xlu0 %2605
    %2607 = vrot.lane.b32.xlu0 %v818, 40
    %v2608 = vpop.permute.xlu0 %2607
    %2609 = vrot.lane.b32.xlu0 %v819, 40
    %v2610 = vpop.permute.xlu0 %2609
    %2611 = vrot.lane.b32.xlu0 %v820, 40
    %v2612 = vpop.permute.xlu0 %2611
    %2741 = vrot.lane.b32.xlu0 %v821, 64
    %v2742 = vpop.permute.xlu0 %2741
    %2743 = vrot.lane.b32.xlu0 %v822, 64
    %v2744 = vpop.permute.xlu0 %2743
    %2745 = vrot.lane.b32.xlu0 %v823, 64
    %v2746 = vpop.permute.xlu0 %2745
    %2747 = vrot.lane.b32.xlu0 %v824, 64
    %v2748 = vpop.permute.xlu0 %2747
    %2749 = vrot.lane.b32.xlu0 %v825, 64
    %v2750 = vpop.permute.xlu0 %2749
    %2751 = vrot.lane.b32.xlu0 %v826, 64
    %v2752 = vpop.permute.xlu0 %2751
    %2753 = vrot.lane.b32.xlu0 %v827, 64
    %v2754 = vpop.permute.xlu0 %2753
    %2755 = vrot.lane.b32.xlu0 %v828, 64
    %v2756 = vpop.permute.xlu0 %2755
    %2757 = vrot.lane.b32.xlu0 %v829, 64
    %v2758 = vpop.permute.xlu0 %2757
    %2759 = vrot.lane.b32.xlu0 %v830, 64
    %v2760 = vpop.permute.xlu0 %2759
    %2761 = vrot.lane.b32.xlu0 %v831, 64
    %v2762 = vpop.permute.xlu0 %2761
    %2763 = vrot.lane.b32.xlu0 %v832, 64
    %v2764 = vpop.permute.xlu0 %2763
    %2765 = vrot.lane.b32.xlu0 %v833, 64
    %v2766 = vpop.permute.xlu0 %2765
    %2767 = vrot.lane.b32.xlu0 %v834, 64
    %v2768 = vpop.permute.xlu0 %2767
    %2769 = vrot.lane.b32.xlu0 %v835, 64
    %v2770 = vpop.permute.xlu0 %2769
    %2771 = vrot.lane.b32.xlu0 %v836, 64
    %v2772 = vpop.permute.xlu0 %2771
    %2773 = vrot.lane.b32.xlu0 %v837, 64
    %v2774 = vpop.permute.xlu0 %2773
    %2775 = vrot.lane.b32.xlu0 %v838, 64
    %v2776 = vpop.permute.xlu0 %2775
    %2777 = vrot.lane.b32.xlu0 %v839, 64
    %v2778 = vpop.permute.xlu0 %2777
    %2779 = vrot.lane.b32.xlu0 %v840, 64
    %v2780 = vpop.permute.xlu0 %2779
    %2781 = vrot.lane.b32.xlu0 %v841, 64
    %v2782 = vpop.permute.xlu0 %2781
    %2783 = vrot.lane.b32.xlu0 %v842, 64
    %v2784 = vpop.permute.xlu0 %2783
    %2785 = vrot.lane.b32.xlu0 %v843, 64
    %v2786 = vpop.permute.xlu0 %2785
    %2787 = vrot.lane.b32.xlu0 %v844, 64
    %v2788 = vpop.permute.xlu0 %2787
    %2789 = vrot.lane.b32.xlu0 %v845, 64
    %v2790 = vpop.permute.xlu0 %2789
    %2791 = vrot.lane.b32.xlu0 %v846, 64
    %v2792 = vpop.permute.xlu0 %2791
    %2793 = vrot.lane.b32.xlu0 %v847, 64
    %v2794 = vpop.permute.xlu0 %2793
    %2795 = vrot.lane.b32.xlu0 %v848, 64
    %v2796 = vpop.permute.xlu0 %2795
    %2797 = vrot.lane.b32.xlu0 %v849, 64
    %v2798 = vpop.permute.xlu0 %2797
    %2799 = vrot.lane.b32.xlu0 %v850, 64
    %v2800 = vpop.permute.xlu0 %2799
    %2801 = vrot.lane.b32.xlu0 %v851, 64
    %v2802 = vpop.permute.xlu0 %2801
    %2803 = vrot.lane.b32.xlu0 %v852, 64
    %v2804 = vpop.permute.xlu0 %2803
    %2805 = vrot.lane.b32.xlu0 %v853, 64
    %v2806 = vpop.permute.xlu0 %2805
    %2807 = vrot.lane.b32.xlu0 %v854, 64
    %v2808 = vpop.permute.xlu0 %2807
    %2809 = vrot.lane.b32.xlu0 %v855, 64
    %v2810 = vpop.permute.xlu0 %2809
    %2811 = vrot.lane.b32.xlu0 %v856, 64
    %v2812 = vpop.permute.xlu0 %2811
    %2813 = vrot.lane.b32.xlu0 %v857, 64
    %v2814 = vpop.permute.xlu0 %2813
    %2815 = vrot.lane.b32.xlu0 %v858, 64
    %v2816 = vpop.permute.xlu0 %2815
    %2817 = vrot.lane.b32.xlu0 %v859, 64
    %v2818 = vpop.permute.xlu0 %2817
    %2819 = vrot.lane.b32.xlu0 %v860, 64
    %v2820 = vpop.permute.xlu0 %2819
    %2821 = vrot.lane.b32.xlu0 %v861, 64
    %v2822 = vpop.permute.xlu0 %2821
    %2823 = vrot.lane.b32.xlu0 %v862, 64
    %v2824 = vpop.permute.xlu0 %2823
    %2825 = vrot.lane.b32.xlu0 %v863, 64
    %v2826 = vpop.permute.xlu0 %2825
    %2827 = vrot.lane.b32.xlu0 %v864, 64
    %v2828 = vpop.permute.xlu0 %2827
    %2829 = vrot.lane.b32.xlu0 %v865, 64
    %v2830 = vpop.permute.xlu0 %2829
    %2831 = vrot.lane.b32.xlu0 %v866, 64
    %v2832 = vpop.permute.xlu0 %2831
    %2833 = vrot.lane.b32.xlu0 %v867, 64
    %v2834 = vpop.permute.xlu0 %2833
    %2835 = vrot.lane.b32.xlu0 %v868, 64
    %v2836 = vpop.permute.xlu0 %2835
    %2837 = vrot.lane.b32.xlu0 %v869, 64
    %v2838 = vpop.permute.xlu0 %2837
    %2839 = vrot.lane.b32.xlu0 %v870, 64
    %v2840 = vpop.permute.xlu0 %2839
    %2841 = vrot.lane.b32.xlu0 %v871, 64
    %v2842 = vpop.permute.xlu0 %2841
    %2843 = vrot.lane.b32.xlu0 %v872, 64
    %v2844 = vpop.permute.xlu0 %2843
    %2845 = vrot.lane.b32.xlu0 %v873, 64
    %v2846 = vpop.permute.xlu0 %2845
    %2847 = vrot.lane.b32.xlu0 %v874, 64
    %v2848 = vpop.permute.xlu0 %2847
    %2849 = vrot.lane.b32.xlu0 %v875, 64
    %v2850 = vpop.permute.xlu0 %2849
    %2851 = vrot.lane.b32.xlu0 %v876, 64
    %v2852 = vpop.permute.xlu0 %2851
    %2853 = vrot.lane.b32.xlu0 %v877, 64
    %v2854 = vpop.permute.xlu0 %2853
    %2855 = vrot.lane.b32.xlu0 %v878, 64
    %v2856 = vpop.permute.xlu0 %2855
    %2857 = vrot.lane.b32.xlu0 %v879, 64
    %v2858 = vpop.permute.xlu0 %2857
    %2859 = vrot.lane.b32.xlu0 %v880, 64
    %v2860 = vpop.permute.xlu0 %2859
    %2861 = vrot.lane.b32.xlu0 %v881, 64
    %v2862 = vpop.permute.xlu0 %2861
    %2863 = vrot.lane.b32.xlu0 %v882, 64
    %v2864 = vpop.permute.xlu0 %2863
    %2865 = vrot.lane.b32.xlu0 %v883, 64
    %v2866 = vpop.permute.xlu0 %2865
    %2867 = vrot.lane.b32.xlu0 %v884, 64
    %v2868 = vpop.permute.xlu0 %2867
    %v2933 = vsel %vm133, %v308, %v950
    %v2934 = vsel %vm133, %v309, %v952
    %v2935 = vsel %vm133, %v310, %v954
    %v2936 = vsel %vm133, %v311, %v956
    %v2937 = vsel %vm133, %v312, %v958
    %v2938 = vsel %vm133, %v313, %v960
    %v2939 = vsel %vm133, %v314, %v962
    %v2940 = vsel %vm133, %v315, %v964
    %v2941 = vsel %vm133, %v316, %v966
    %v2942 = vsel %vm133, %v317, %v968
    %v2943 = vsel %vm133, %v318, %v970
    %v2944 = vsel %vm133, %v319, %v972
    %v2945 = vsel %vm133, %v320, %v974
    %v2946 = vsel %vm133, %v321, %v976
    %v2947 = vsel %vm133, %v322, %v978
    %v2948 = vsel %vm133, %v323, %v980
    %v2949 = vsel %vm133, %v324, %v982
    %v2950 = vsel %vm133, %v325, %v984
    %v2951 = vsel %vm133, %v326, %v986
    %v2952 = vsel %vm133, %v327, %v988
    %v2953 = vsel %vm133, %v328, %v990
    %v2954 = vsel %vm133, %v329, %v992
    %v2955 = vsel %vm133, %v330, %v994
    %v2956 = vsel %vm133, %v331, %v996
    %v2957 = vsel %vm133, %v332, %v998
    %v2958 = vsel %vm133, %v333, %v1000
    %v2959 = vsel %vm133, %v334, %v1002
    %v2960 = vsel %vm133, %v335, %v1004
    %v2961 = vsel %vm133, %v336, %v1006
    %v2962 = vsel %vm133, %v337, %v1008
    %v2963 = vsel %vm133, %v338, %v1010
    %v2964 = vsel %vm133, %v339, %v1012
    %v2965 = vsel %vm133, %v340, %v1014
    %v2966 = vsel %vm133, %v341, %v1016
    %v2967 = vsel %vm133, %v342, %v1018
    %v2968 = vsel %vm133, %v343, %v1020
    %v2969 = vsel %vm133, %v344, %v1022
    %v2970 = vsel %vm133, %v345, %v1024
    %v2971 = vsel %vm133, %v346, %v1026
    %v2972 = vsel %vm133, %v347, %v1028
    %v2973 = vsel %vm133, %v348, %v1030
    %v2974 = vsel %vm133, %v349, %v1032
    %v2975 = vsel %vm133, %v350, %v1034
    %v2976 = vsel %vm133, %v351, %v1036
    %v2977 = vsel %vm133, %v352, %v1038
    %v2978 = vsel %vm133, %v353, %v1040
    %v2979 = vsel %vm133, %v354, %v1042
    %v2980 = vsel %vm133, %v355, %v1044
    %v2981 = vsel %vm133, %v356, %v1046
    %v2982 = vsel %vm133, %v357, %v1048
    %v2983 = vsel %vm133, %v358, %v1050
    %v2984 = vsel %vm133, %v359, %v1052
    %v2985 = vsel %vm133, %v360, %v1054
    %v2986 = vsel %vm133, %v361, %v1056
    %v2987 = vsel %vm133, %v362, %v1058
    %v2988 = vsel %vm133, %v363, %v1060
    %v2989 = vsel %vm133, %v364, %v1062
    %v2990 = vsel %vm133, %v365, %v1064
    %v2991 = vsel %vm133, %v366, %v1066
    %v2992 = vsel %vm133, %v367, %v1068
    %v2993 = vsel %vm133, %v368, %v1070
    %v2994 = vsel %vm133, %v369, %v1072
    %v2995 = vsel %vm133, %v370, %v1074
    %v2996 = vsel %vm133, %v371, %v1076
    %vm2997 = vcmask 392192
    %v2998 = vsel %vm2997, %v2933, %v1206
    %v2999 = vsel %vm2997, %v2934, %v1208
    %v3000 = vsel %vm2997, %v2935, %v1210
    %v3001 = vsel %vm2997, %v2936, %v1212
    %v3002 = vsel %vm2997, %v2937, %v1214
    %v3003 = vsel %vm2997, %v2938, %v1216
    %v3004 = vsel %vm2997, %v2939, %v1218
    %v3005 = vsel %vm2997, %v2940, %v1220
    %v3006 = vsel %vm2997, %v2941, %v1222
    %v3007 = vsel %vm2997, %v2942, %v1224
    %v3008 = vsel %vm2997, %v2943, %v1226
    %v3009 = vsel %vm2997, %v2944, %v1228
    %v3010 = vsel %vm2997, %v2945, %v1230
    %v3011 = vsel %vm2997, %v2946, %v1232
    %v3012 = vsel %vm2997, %v2947, %v1234
    %v3013 = vsel %vm2997, %v2948, %v1236
    %v3014 = vsel %vm2997, %v2949, %v1238
    %v3015 = vsel %vm2997, %v2950, %v1240
    %v3016 = vsel %vm2997, %v2951, %v1242
    %v3017 = vsel %vm2997, %v2952, %v1244
    %v3018 = vsel %vm2997, %v2953, %v1246
    %v3019 = vsel %vm2997, %v2954, %v1248
    %v3020 = vsel %vm2997, %v2955, %v1250
    %v3021 = vsel %vm2997, %v2956, %v1252
    %v3022 = vsel %vm2997, %v2957, %v1254
    %v3023 = vsel %vm2997, %v2958, %v1256
    %v3024 = vsel %vm2997, %v2959, %v1258
    %v3025 = vsel %vm2997, %v2960, %v1260
    %v3026 = vsel %vm2997, %v2961, %v1262
    %v3027 = vsel %vm2997, %v2962, %v1264
    %v3028 = vsel %vm2997, %v2963, %v1266
    %v3029 = vsel %vm2997, %v2964, %v1268
    %v3030 = vsel %vm2997, %v2965, %v1270
    %v3031 = vsel %vm2997, %v2966, %v1272
    %v3032 = vsel %vm2997, %v2967, %v1274
    %v3033 = vsel %vm2997, %v2968, %v1276
    %v3034 = vsel %vm2997, %v2969, %v1278
    %v3035 = vsel %vm2997, %v2970, %v1280
    %v3036 = vsel %vm2997, %v2971, %v1282
    %v3037 = vsel %vm2997, %v2972, %v1284
    %v3038 = vsel %vm2997, %v2973, %v1286
    %v3039 = vsel %vm2997, %v2974, %v1288
    %v3040 = vsel %vm2997, %v2975, %v1290
    %v3041 = vsel %vm2997, %v2976, %v1292
    %v3042 = vsel %vm2997, %v2977, %v1294
    %v3043 = vsel %vm2997, %v2978, %v1296
    %v3044 = vsel %vm2997, %v2979, %v1298
    %v3045 = vsel %vm2997, %v2980, %v1300
    %v3046 = vsel %vm2997, %v2981, %v1302
    %v3047 = vsel %vm2997, %v2982, %v1304
    %v3048 = vsel %vm2997, %v2983, %v1306
    %v3049 = vsel %vm2997, %v2984, %v1308
    %v3050 = vsel %vm2997, %v2985, %v1310
    %v3051 = vsel %vm2997, %v2986, %v1312
    %v3052 = vsel %vm2997, %v2987, %v1314
    %v3053 = vsel %vm2997, %v2988, %v1316
    %v3054 = vsel %vm2997, %v2989, %v1318
    %v3055 = vsel %vm2997, %v2990, %v1320
    %v3056 = vsel %vm2997, %v2991, %v1322
    %v3057 = vsel %vm2997, %v2992, %v1324
    %v3058 = vsel %vm2997, %v2993, %v1326
    %v3059 = vsel %vm2997, %v2994, %v1328
    %v3060 = vsel %vm2997, %v2995, %v1330
    %v3061 = vsel %vm2997, %v2996, %v1332
    %vm3062 = vcmask 588800
    %v3063 = vsel %vm3062, %v2998, %v1462
    %v3064 = vsel %vm3062, %v2999, %v1464
    %v3065 = vsel %vm3062, %v3000, %v1466
    %v3066 = vsel %vm3062, %v3001, %v1468
    %v3067 = vsel %vm3062, %v3002, %v1470
    %v3068 = vsel %vm3062, %v3003, %v1472
    %v3069 = vsel %vm3062, %v3004, %v1474
    %v3070 = vsel %vm3062, %v3005, %v1476
    %v3071 = vsel %vm3062, %v3006, %v1478
    %v3072 = vsel %vm3062, %v3007, %v1480
    %v3073 = vsel %vm3062, %v3008, %v1482
    %v3074 = vsel %vm3062, %v3009, %v1484
    %v3075 = vsel %vm3062, %v3010, %v1486
    %v3076 = vsel %vm3062, %v3011, %v1488
    %v3077 = vsel %vm3062, %v3012, %v1490
    %v3078 = vsel %vm3062, %v3013, %v1492
    %v3079 = vsel %vm3062, %v3014, %v1494
    %v3080 = vsel %vm3062, %v3015, %v1496
    %v3081 = vsel %vm3062, %v3016, %v1498
    %v3082 = vsel %vm3062, %v3017, %v1500
    %v3083 = vsel %vm3062, %v3018, %v1502
    %v3084 = vsel %vm3062, %v3019, %v1504
    %v3085 = vsel %vm3062, %v3020, %v1506
    %v3086 = vsel %vm3062, %v3021, %v1508
    %v3087 = vsel %vm3062, %v3022, %v1510
    %v3088 = vsel %vm3062, %v3023, %v1512
    %v3089 = vsel %vm3062, %v3024, %v1514
    %v3090 = vsel %vm3062, %v3025, %v1516
    %v3091 = vsel %vm3062, %v3026, %v1518
    %v3092 = vsel %vm3062, %v3027, %v1520
    %v3093 = vsel %vm3062, %v3028, %v1522
    %v3094 = vsel %vm3062, %v3029, %v1524
    %v3095 = vsel %vm3062, %v3030, %v1526
    %v3096 = vsel %vm3062, %v3031, %v1528
    %v3097 = vsel %vm3062, %v3032, %v1530
    %v3098 = vsel %vm3062, %v3033, %v1532
    %v3099 = vsel %vm3062, %v3034, %v1534
    %v3100 = vsel %vm3062, %v3035, %v1536
    %v3101 = vsel %vm3062, %v3036, %v1538
    %v3102 = vsel %vm3062, %v3037, %v1540
    %v3103 = vsel %vm3062, %v3038, %v1542
    %v3104 = vsel %vm3062, %v3039, %v1544
    %v3105 = vsel %vm3062, %v3040, %v1546
    %v3106 = vsel %vm3062, %v3041, %v1548
    %v3107 = vsel %vm3062, %v3042, %v1550
    %v3108 = vsel %vm3062, %v3043, %v1552
    %v3109 = vsel %vm3062, %v3044, %v1554
    %v3110 = vsel %vm3062, %v3045, %v1556
    %v3111 = vsel %vm3062, %v3046, %v1558
    %v3112 = vsel %vm3062, %v3047, %v1560
    %v3113 = vsel %vm3062, %v3048, %v1562
    %v3114 = vsel %vm3062, %v3049, %v1564
    %v3115 = vsel %vm3062, %v3050, %v1566
    %v3116 = vsel %vm3062, %v3051, %v1568
    %v3117 = vsel %vm3062, %v3052, %v1570
    %v3118 = vsel %vm3062, %v3053, %v1572
    %v3119 = vsel %vm3062, %v3054, %v1574
    %v3120 = vsel %vm3062, %v3055, %v1576
    %v3121 = vsel %vm3062, %v3056, %v1578
    %v3122 = vsel %vm3062, %v3057, %v1580
    %v3123 = vsel %vm3062, %v3058, %v1582
    %v3124 = vsel %vm3062, %v3059, %v1584
    %v3125 = vsel %vm3062, %v3060, %v1586
    %v3126 = vsel %vm3062, %v3061, %v1588
    %vm3127 = vcmask 785408
    %v3128 = vsel %vm3127, %v3063, %v1718
    %v3129 = vsel %vm3127, %v3064, %v1720
    %v3130 = vsel %vm3127, %v3065, %v1722
    %v3131 = vsel %vm3127, %v3066, %v1724
    %v3132 = vsel %vm3127, %v3067, %v1726
    %v3133 = vsel %vm3127, %v3068, %v1728
    %v3134 = vsel %vm3127, %v3069, %v1730
    %v3135 = vsel %vm3127, %v3070, %v1732
    %v3136 = vsel %vm3127, %v3071, %v1734
    %v3137 = vsel %vm3127, %v3072, %v1736
    %v3138 = vsel %vm3127, %v3073, %v1738
    %v3139 = vsel %vm3127, %v3074, %v1740
    %v3140 = vsel %vm3127, %v3075, %v1742
    %v3141 = vsel %vm3127, %v3076, %v1744
    %v3142 = vsel %vm3127, %v3077, %v1746
    %v3143 = vsel %vm3127, %v3078, %v1748
    %v3144 = vsel %vm3127, %v3079, %v1750
    %v3145 = vsel %vm3127, %v3080, %v1752
    %v3146 = vsel %vm3127, %v3081, %v1754
    %v3147 = vsel %vm3127, %v3082, %v1756
    %v3148 = vsel %vm3127, %v3083, %v1758
    %v3149 = vsel %vm3127, %v3084, %v1760
    %v3150 = vsel %vm3127, %v3085, %v1762
    %v3151 = vsel %vm3127, %v3086, %v1764
    %v3152 = vsel %vm3127, %v3087, %v1766
    %v3153 = vsel %vm3127, %v3088, %v1768
    %v3154 = vsel %vm3127, %v3089, %v1770
    %v3155 = vsel %vm3127, %v3090, %v1772
    %v3156 = vsel %vm3127, %v3091, %v1774
    %v3157 = vsel %vm3127, %v3092, %v1776
    %v3158 = vsel %vm3127, %v3093, %v1778
    %v3159 = vsel %vm3127, %v3094, %v1780
    %v3160 = vsel %vm3127, %v3095, %v1782
    %v3161 = vsel %vm3127, %v3096, %v1784
    %v3162 = vsel %vm3127, %v3097, %v1786
    %v3163 = vsel %vm3127, %v3098, %v1788
    %v3164 = vsel %vm3127, %v3099, %v1790
    %v3165 = vsel %vm3127, %v3100, %v1792
    %v3166 = vsel %vm3127, %v3101, %v1794
    %v3167 = vsel %vm3127, %v3102, %v1796
    %v3168 = vsel %vm3127, %v3103, %v1798
    %v3169 = vsel %vm3127, %v3104, %v1800
    %v3170 = vsel %vm3127, %v3105, %v1802
    %v3171 = vsel %vm3127, %v3106, %v1804
    %v3172 = vsel %vm3127, %v3107, %v1806
    %v3173 = vsel %vm3127, %v3108, %v1808
    %v3174 = vsel %vm3127, %v3109, %v1810
    %v3175 = vsel %vm3127, %v3110, %v1812
    %v3176 = vsel %vm3127, %v3111, %v1814
    %v3177 = vsel %vm3127, %v3112, %v1816
    %v3178 = vsel %vm3127, %v3113, %v1818
    %v3179 = vsel %vm3127, %v3114, %v1820
    %v3180 = vsel %vm3127, %v3115, %v1822
    %v3181 = vsel %vm3127, %v3116, %v1824
    %v3182 = vsel %vm3127, %v3117, %v1826
    %v3183 = vsel %vm3127, %v3118, %v1828
    %v3184 = vsel %vm3127, %v3119, %v1830
    %v3185 = vsel %vm3127, %v3120, %v1832
    %v3186 = vsel %vm3127, %v3121, %v1834
    %v3187 = vsel %vm3127, %v3122, %v1836
    %v3188 = vsel %vm3127, %v3123, %v1838
    %v3189 = vsel %vm3127, %v3124, %v1840
    %v3190 = vsel %vm3127, %v3125, %v1842
    %v3191 = vsel %vm3127, %v3126, %v1844
    %vm3192 = vcmask 982016
    %v3193 = vsel %vm3192, %v3128, %v1974
    %v3194 = vsel %vm3192, %v3129, %v1976
    %v3195 = vsel %vm3192, %v3130, %v1978
    %v3196 = vsel %vm3192, %v3131, %v1980
    %v3197 = vsel %vm3192, %v3132, %v1982
    %v3198 = vsel %vm3192, %v3133, %v1984
    %v3199 = vsel %vm3192, %v3134, %v1986
    %v3200 = vsel %vm3192, %v3135, %v1988
    %v3201 = vsel %vm3192, %v3136, %v1990
    %v3202 = vsel %vm3192, %v3137, %v1992
    %v3203 = vsel %vm3192, %v3138, %v1994
    %v3204 = vsel %vm3192, %v3139, %v1996
    %v3205 = vsel %vm3192, %v3140, %v1998
    %v3206 = vsel %vm3192, %v3141, %v2000
    %v3207 = vsel %vm3192, %v3142, %v2002
    %v3208 = vsel %vm3192, %v3143, %v2004
    %v3209 = vsel %vm3192, %v3144, %v2006
    %v3210 = vsel %vm3192, %v3145, %v2008
    %v3211 = vsel %vm3192, %v3146, %v2010
    %v3212 = vsel %vm3192, %v3147, %v2012
    %v3213 = vsel %vm3192, %v3148, %v2014
    %v3214 = vsel %vm3192, %v3149, %v2016
    %v3215 = vsel %vm3192, %v3150, %v2018
    %v3216 = vsel %vm3192, %v3151, %v2020
    %v3217 = vsel %vm3192, %v3152, %v2022
    %v3218 = vsel %vm3192, %v3153, %v2024
    %v3219 = vsel %vm3192, %v3154, %v2026
    %v3220 = vsel %vm3192, %v3155, %v2028
    %v3221 = vsel %vm3192, %v3156, %v2030
    %v3222 = vsel %vm3192, %v3157, %v2032
    %v3223 = vsel %vm3192, %v3158, %v2034
    %v3224 = vsel %vm3192, %v3159, %v2036
    %v3225 = vsel %vm3192, %v3160, %v2038
    %v3226 = vsel %vm3192, %v3161, %v2040
    %v3227 = vsel %vm3192, %v3162, %v2042
    %v3228 = vsel %vm3192, %v3163, %v2044
    %v3229 = vsel %vm3192, %v3164, %v2046
    %v3230 = vsel %vm3192, %v3165, %v2048
    %v3231 = vsel %vm3192, %v3166, %v2050
    %v3232 = vsel %vm3192, %v3167, %v2052
    %v3233 = vsel %vm3192, %v3168, %v2054
    %v3234 = vsel %vm3192, %v3169, %v2056
    %v3235 = vsel %vm3192, %v3170, %v2058
    %v3236 = vsel %vm3192, %v3171, %v2060
    %v3237 = vsel %vm3192, %v3172, %v2062
    %v3238 = vsel %vm3192, %v3173, %v2064
    %v3239 = vsel %vm3192, %v3174, %v2066
    %v3240 = vsel %vm3192, %v3175, %v2068
    %v3241 = vsel %vm3192, %v3176, %v2070
    %v3242 = vsel %vm3192, %v3177, %v2072
    %v3243 = vsel %vm3192, %v3178, %v2074
    %v3244 = vsel %vm3192, %v3179, %v2076
    %v3245 = vsel %vm3192, %v3180, %v2078
    %v3246 = vsel %vm3192, %v3181, %v2080
    %v3247 = vsel %vm3192, %v3182, %v2082
    %v3248 = vsel %vm3192, %v3183, %v2084
    %v3249 = vsel %vm3192, %v3184, %v2086
    %v3250 = vsel %vm3192, %v3185, %v2088
    %v3251 = vsel %vm3192, %v3186, %v2090
    %v3252 = vsel %vm3192, %v3187, %v2092
    %v3253 = vsel %vm3192, %v3188, %v2094
    %v3254 = vsel %vm3192, %v3189, %v2096
    %v3255 = vsel %vm3192, %v3190, %v2098
    %v3256 = vsel %vm3192, %v3191, %v2100
    %vm3257 = vcmask 130048
    %v3258 = vsel %vm3257, %v1974, %v2230
    %v3259 = vsel %vm3257, %v1976, %v2232
    %v3260 = vsel %vm3257, %v1978, %v2234
    %v3261 = vsel %vm3257, %v1980, %v2236
    %v3262 = vsel %vm3257, %v1982, %v2238
    %v3263 = vsel %vm3257, %v1984, %v2240
    %v3264 = vsel %vm3257, %v1986, %v2242
    %v3265 = vsel %vm3257, %v1988, %v2244
    %v3266 = vsel %vm3257, %v1990, %v2246
    %v3267 = vsel %vm3257, %v1992, %v2248
    %v3268 = vsel %vm3257, %v1994, %v2250
    %v3269 = vsel %vm3257, %v1996, %v2252
    %v3270 = vsel %vm3257, %v1998, %v2254
    %v3271 = vsel %vm3257, %v2000, %v2256
    %v3272 = vsel %vm3257, %v2002, %v2258
    %v3273 = vsel %vm3257, %v2004, %v2260
    %v3274 = vsel %vm3257, %v2006, %v2262
    %v3275 = vsel %vm3257, %v2008, %v2264
    %v3276 = vsel %vm3257, %v2010, %v2266
    %v3277 = vsel %vm3257, %v2012, %v2268
    %v3278 = vsel %vm3257, %v2014, %v2270
    %v3279 = vsel %vm3257, %v2016, %v2272
    %v3280 = vsel %vm3257, %v2018, %v2274
    %v3281 = vsel %vm3257, %v2020, %v2276
    %v3282 = vsel %vm3257, %v2022, %v2278
    %v3283 = vsel %vm3257, %v2024, %v2280
    %v3284 = vsel %vm3257, %v2026, %v2282
    %v3285 = vsel %vm3257, %v2028, %v2284
    %v3286 = vsel %vm3257, %v2030, %v2286
    %v3287 = vsel %vm3257, %v2032, %v2288
    %v3288 = vsel %vm3257, %v2034, %v2290
    %v3289 = vsel %vm3257, %v2036, %v2292
    %v3290 = vsel %vm3257, %v2038, %v2294
    %v3291 = vsel %vm3257, %v2040, %v2296
    %v3292 = vsel %vm3257, %v2042, %v2298
    %v3293 = vsel %vm3257, %v2044, %v2300
    %v3294 = vsel %vm3257, %v2046, %v2302
    %v3295 = vsel %vm3257, %v2048, %v2304
    %v3296 = vsel %vm3257, %v2050, %v2306
    %v3297 = vsel %vm3257, %v2052, %v2308
    %v3298 = vsel %vm3257, %v2054, %v2310
    %v3299 = vsel %vm3257, %v2056, %v2312
    %v3300 = vsel %vm3257, %v2058, %v2314
    %v3301 = vsel %vm3257, %v2060, %v2316
    %v3302 = vsel %vm3257, %v2062, %v2318
    %v3303 = vsel %vm3257, %v2064, %v2320
    %v3304 = vsel %vm3257, %v2066, %v2322
    %v3305 = vsel %vm3257, %v2068, %v2324
    %v3306 = vsel %vm3257, %v2070, %v2326
    %v3307 = vsel %vm3257, %v2072, %v2328
    %v3308 = vsel %vm3257, %v2074, %v2330
    %v3309 = vsel %vm3257, %v2076, %v2332
    %v3310 = vsel %vm3257, %v2078, %v2334
    %v3311 = vsel %vm3257, %v2080, %v2336
    %v3312 = vsel %vm3257, %v2082, %v2338
    %v3313 = vsel %vm3257, %v2084, %v2340
    %v3314 = vsel %vm3257, %v2086, %v2342
    %v3315 = vsel %vm3257, %v2088, %v2344
    %v3316 = vsel %vm3257, %v2090, %v2346
    %v3317 = vsel %vm3257, %v2092, %v2348
    %v3318 = vsel %vm3257, %v2094, %v2350
    %v3319 = vsel %vm3257, %v2096, %v2352
    %v3320 = vsel %vm3257, %v2098, %v2354
    %v3321 = vsel %vm3257, %v2100, %v2356
    %vm3322 = vcmask 326656
    %v3323 = vsel %vm3322, %v3258, %v2486
    %v3324 = vsel %vm3322, %v3259, %v2488
    %v3325 = vsel %vm3322, %v3260, %v2490
    %v3326 = vsel %vm3322, %v3261, %v2492
    %v3327 = vsel %vm3322, %v3262, %v2494
    %v3328 = vsel %vm3322, %v3263, %v2496
    %v3329 = vsel %vm3322, %v3264, %v2498
    %v3330 = vsel %vm3322, %v3265, %v2500
    %v3331 = vsel %vm3322, %v3266, %v2502
    %v3332 = vsel %vm3322, %v3267, %v2504
    %v3333 = vsel %vm3322, %v3268, %v2506
    %v3334 = vsel %vm3322, %v3269, %v2508
    %v3335 = vsel %vm3322, %v3270, %v2510
    %v3336 = vsel %vm3322, %v3271, %v2512
    %v3337 = vsel %vm3322, %v3272, %v2514
    %v3338 = vsel %vm3322, %v3273, %v2516
    %v3339 = vsel %vm3322, %v3274, %v2518
    %v3340 = vsel %vm3322, %v3275, %v2520
    %v3341 = vsel %vm3322, %v3276, %v2522
    %v3342 = vsel %vm3322, %v3277, %v2524
    %v3343 = vsel %vm3322, %v3278, %v2526
    %v3344 = vsel %vm3322, %v3279, %v2528
    %v3345 = vsel %vm3322, %v3280, %v2530
    %v3346 = vsel %vm3322, %v3281, %v2532
    %v3347 = vsel %vm3322, %v3282, %v2534
    %v3348 = vsel %vm3322, %v3283, %v2536
    %v3349 = vsel %vm3322, %v3284, %v2538
    %v3350 = vsel %vm3322, %v3285, %v2540
    %v3351 = vsel %vm3322, %v3286, %v2542
    %v3352 = vsel %vm3322, %v3287, %v2544
    %v3353 = vsel %vm3322, %v3288, %v2546
    %v3354 = vsel %vm3322, %v3289, %v2548
    %v3355 = vsel %vm3322, %v3290, %v2550
    %v3356 = vsel %vm3322, %v3291, %v2552
    %v3357 = vsel %vm3322, %v3292, %v2554
    %v3358 = vsel %vm3322, %v3293, %v2556
    %v3359 = vsel %vm3322, %v3294, %v2558
    %v3360 = vsel %vm3322, %v3295, %v2560
    %v3361 = vsel %vm3322, %v3296, %v2562
    %v3362 = vsel %vm3322, %v3297, %v2564
    %v3363 = vsel %vm3322, %v3298, %v2566
    %v3364 = vsel %vm3322, %v3299, %v2568
    %v3365 = vsel %vm3322, %v3300, %v2570
    %v3366 = vsel %vm3322, %v3301, %v2572
    %v3367 = vsel %vm3322, %v3302, %v2574
    %v3368 = vsel %vm3322, %v3303, %v2576
    %v3369 = vsel %vm3322, %v3304, %v2578
    %v3370 = vsel %vm3322, %v3305, %v2580
    %v3371 = vsel %vm3322, %v3306, %v2582
    %v3372 = vsel %vm3322, %v3307, %v2584
    %v3373 = vsel %vm3322, %v3308, %v2586
    %v3374 = vsel %vm3322, %v3309, %v2588
    %v3375 = vsel %vm3322, %v3310, %v2590
    %v3376 = vsel %vm3322, %v3311, %v2592
    %v3377 = vsel %vm3322, %v3312, %v2594
    %v3378 = vsel %vm3322, %v3313, %v2596
    %v3379 = vsel %vm3322, %v3314, %v2598
    %v3380 = vsel %vm3322, %v3315, %v2600
    %v3381 = vsel %vm3322, %v3316, %v2602
    %v3382 = vsel %vm3322, %v3317, %v2604
    %v3383 = vsel %vm3322, %v3318, %v2606
    %v3384 = vsel %vm3322, %v3319, %v2608
    %v3385 = vsel %vm3322, %v3320, %v2610
    %v3386 = vsel %vm3322, %v3321, %v2612
    %vm3387 = vcmask 523264
    %v3388 = vsel %vm3387, %v3323, %v2742
    %v3389 = vsel %vm3387, %v3324, %v2744
    %v3390 = vsel %vm3387, %v3325, %v2746
    %v3391 = vsel %vm3387, %v3326, %v2748
    %v3392 = vsel %vm3387, %v3327, %v2750
    %v3393 = vsel %vm3387, %v3328, %v2752
    %v3394 = vsel %vm3387, %v3329, %v2754
    %v3395 = vsel %vm3387, %v3330, %v2756
    %v3396 = vsel %vm3387, %v3331, %v2758
    %v3397 = vsel %vm3387, %v3332, %v2760
    %v3398 = vsel %vm3387, %v3333, %v2762
    %v3399 = vsel %vm3387, %v3334, %v2764
    %v3400 = vsel %vm3387, %v3335, %v2766
    %v3401 = vsel %vm3387, %v3336, %v2768
    %v3402 = vsel %vm3387, %v3337, %v2770
    %v3403 = vsel %vm3387, %v3338, %v2772
    %v3404 = vsel %vm3387, %v3339, %v2774
    %v3405 = vsel %vm3387, %v3340, %v2776
    %v3406 = vsel %vm3387, %v3341, %v2778
    %v3407 = vsel %vm3387, %v3342, %v2780
    %v3408 = vsel %vm3387, %v3343, %v2782
    %v3409 = vsel %vm3387, %v3344, %v2784
    %v3410 = vsel %vm3387, %v3345, %v2786
    %v3411 = vsel %vm3387, %v3346, %v2788
    %v3412 = vsel %vm3387, %v3347, %v2790
    %v3413 = vsel %vm3387, %v3348, %v2792
    %v3414 = vsel %vm3387, %v3349, %v2794
    %v3415 = vsel %vm3387, %v3350, %v2796
    %v3416 = vsel %vm3387, %v3351, %v2798
    %v3417 = vsel %vm3387, %v3352, %v2800
    %v3418 = vsel %vm3387, %v3353, %v2802
    %v3419 = vsel %vm3387, %v3354, %v2804
    %v3420 = vsel %vm3387, %v3355, %v2806
    %v3421 = vsel %vm3387, %v3356, %v2808
    %v3422 = vsel %vm3387, %v3357, %v2810
    %v3423 = vsel %vm3387, %v3358, %v2812
    %v3424 = vsel %vm3387, %v3359, %v2814
    %v3425 = vsel %vm3387, %v3360, %v2816
    %v3426 = vsel %vm3387, %v3361, %v2818
    %v3427 = vsel %vm3387, %v3362, %v2820
    %v3428 = vsel %vm3387, %v3363, %v2822
    %v3429 = vsel %vm3387, %v3364, %v2824
    %v3430 = vsel %vm3387, %v3365, %v2826
    %v3431 = vsel %vm3387, %v3366, %v2828
    %v3432 = vsel %vm3387, %v3367, %v2830
    %v3433 = vsel %vm3387, %v3368, %v2832
    %v3434 = vsel %vm3387, %v3369, %v2834
    %v3435 = vsel %vm3387, %v3370, %v2836
    %v3436 = vsel %vm3387, %v3371, %v2838
    %v3437 = vsel %vm3387, %v3372, %v2840
    %v3438 = vsel %vm3387, %v3373, %v2842
    %v3439 = vsel %vm3387, %v3374, %v2844
    %v3440 = vsel %vm3387, %v3375, %v2846
    %v3441 = vsel %vm3387, %v3376, %v2848
    %v3442 = vsel %vm3387, %v3377, %v2850
    %v3443 = vsel %vm3387, %v3378, %v2852
    %v3444 = vsel %vm3387, %v3379, %v2854
    %v3445 = vsel %vm3387, %v3380, %v2856
    %v3446 = vsel %vm3387, %v3381, %v2858
    %v3447 = vsel %vm3387, %v3382, %v2860
    %v3448 = vsel %vm3387, %v3383, %v2862
    %v3449 = vsel %vm3387, %v3384, %v2864
    %v3450 = vsel %vm3387, %v3385, %v2866
    %v3451 = vsel %vm3387, %v3386, %v2868
    %v3452 = vld [vmem:[#allocation8] sm:$0xff]
    %v3453 = vld [vmem:[#allocation8 + $0x8] sm:$0xff]
    %v3454 = vld [vmem:[#allocation8 + $0x10] sm:$0xff]
    %v3455 = vld [vmem:[#allocation8 + $0x18] sm:$0xff]
    %v3456 = vld [vmem:[#allocation8 + $0x20] sm:$0xff]
    %v3457 = vld [vmem:[#allocation8 + $0x28] sm:$0xff]
    %v3458 = vld [vmem:[#allocation8 + $0x30] sm:$0xff]
    %v3459 = vld [vmem:[#allocation8 + $0x38] sm:$0xff]
    %v3460 = vld [vmem:[#allocation8 + $0x40] sm:$0xff]
    %v3461 = vld [vmem:[#allocation8 + $0x48] sm:$0xff]
    %v3462 = vld [vmem:[#allocation8 + $0x50] sm:$0xff]
    %v3463 = vld [vmem:[#allocation8 + $0x58] sm:$0xff]
    %v3464 = vld [vmem:[#allocation8 + $0x60] sm:$0xff]
    %v3465 = vld [vmem:[#allocation8 + $0x68] sm:$0xff]
    %v3466 = vld [vmem:[#allocation8 + $0x70] sm:$0xff]
    %v3467 = vld [vmem:[#allocation8 + $0x78] sm:$0xff]
    %v3468 = vld [vmem:[#allocation8 + $0x80] sm:$0xff]
    %v3469 = vld [vmem:[#allocation8 + $0x88] sm:$0xff]
    %v3470 = vld [vmem:[#allocation8 + $0x90] sm:$0xff]
    %v3471 = vld [vmem:[#allocation8 + $0x98] sm:$0xff]
    %v3472 = vld [vmem:[#allocation8 + $0xa0] sm:$0xff]
    %v3473 = vld [vmem:[#allocation8 + $0xa8] sm:$0xff]
    %v3474 = vld [vmem:[#allocation8 + $0xb0] sm:$0xff]
    %v3475 = vld [vmem:[#allocation8 + $0xb8] sm:$0xff]
    %v3476 = vld [vmem:[#allocation8 + $0xc0] sm:$0xff]
    %v3477 = vld [vmem:[#allocation8 + $0xc8] sm:$0xff]
    %v3478 = vld [vmem:[#allocation8 + $0xd0] sm:$0xff]
    %v3479 = vld [vmem:[%s2] sm:$0x1]
    %v3481 = vlaneseq
    %v3482 = vshrl.u32 %v3481, 7
    %v3483 = vsub.s32 0, %v3482
    %v3484 = vrot.slane %v3479, %v3483
    %vm3486 = vcmask 719872
    %v3488 = vsel %vm3486, %v3388, 0
    %v3491 = vsel %vm3486, %v3389, 0
    %v3494 = vsel %vm3486, %v3390, 0
    %v3497 = vsel %vm3486, %v3391, 0
    %v3500 = vsel %vm3486, %v3392, 0
    %v3503 = vsel %vm3486, %v3393, 0
    %v3506 = vsel %vm3486, %v3394, 0
    %v3509 = vsel %vm3486, %v3395, 0
    %v3512 = vsel %vm3486, %v3396, 0
    %v3515 = vsel %vm3486, %v3397, 0
    %v3518 = vsel %vm3486, %v3398, 0
    %v3521 = vsel %vm3486, %v3399, 0
    %v3524 = vsel %vm3486, %v3400, 0
    %v3527 = vsel %vm3486, %v3401, 0
    %v3530 = vsel %vm3486, %v3402, 0
    %v3533 = vsel %vm3486, %v3403, 0
    %v3536 = vsel %vm3486, %v3404, 0
    %v3539 = vsel %vm3486, %v3405, 0
    %v3542 = vsel %vm3486, %v3406, 0
    %v3545 = vsel %vm3486, %v3407, 0
    %v3548 = vsel %vm3486, %v3408, 0
    %v3551 = vsel %vm3486, %v3409, 0
    %v3554 = vsel %vm3486, %v3410, 0
    %v3557 = vsel %vm3486, %v3411, 0
    %v3560 = vsel %vm3486, %v3412, 0
    %v3563 = vsel %vm3486, %v3413, 0
    %v3566 = vsel %vm3486, %v3414, 0
    %v3569 = vsel %vm3486, %v3415, 0
    %v3572 = vsel %vm3486, %v3416, 0
    %v3575 = vsel %vm3486, %v3417, 0
    %v3578 = vsel %vm3486, %v3418, 0
    %v3581 = vsel %vm3486, %v3419, 0
    %v3584 = vsel %vm3486, %v3420, 0
    %v3587 = vsel %vm3486, %v3421, 0
    %v3590 = vsel %vm3486, %v3422, 0
    %v3593 = vsel %vm3486, %v3423, 0
    %v3596 = vsel %vm3486, %v3424, 0
    %v3599 = vsel %vm3486, %v3425, 0
    %v3602 = vsel %vm3486, %v3426, 0
    %v3605 = vsel %vm3486, %v3427, 0
    %v3608 = vsel %vm3486, %v3428, 0
    %v3611 = vsel %vm3486, %v3429, 0
    %v3614 = vsel %vm3486, %v3430, 0
    %v3617 = vsel %vm3486, %v3431, 0
    %v3620 = vsel %vm3486, %v3432, 0
    %v3623 = vsel %vm3486, %v3433, 0
    %v3626 = vsel %vm3486, %v3434, 0
    %v3629 = vsel %vm3486, %v3435, 0
    %v3632 = vsel %vm3486, %v3436, 0
    %v3635 = vsel %vm3486, %v3437, 0
    %v3638 = vsel %vm3486, %v3438, 0
    %v3641 = vsel %vm3486, %v3439, 0
    %v3644 = vsel %vm3486, %v3440, 0
    %v3647 = vsel %vm3486, %v3441, 0
    %v3650 = vsel %vm3486, %v3442, 0
    %v3653 = vsel %vm3486, %v3443, 0
    %v3656 = vsel %vm3486, %v3444, 0
    %v3659 = vsel %vm3486, %v3445, 0
    %v3662 = vsel %vm3486, %v3446, 0
    %v3665 = vsel %vm3486, %v3447, 0
    %v3668 = vsel %vm3486, %v3448, 0
    %v3671 = vsel %vm3486, %v3449, 0
    %v3674 = vsel %vm3486, %v3450, 0
    %v3677 = vsel %vm3486, %v3451, 0
    %3679 = vmatprep.subr.mxu0 0.0
    %3680 = vmatpush1.msra.mxu0 %v3467
    %3681 = vmatprep.subr.mxu0 0.0
    %3682 = vmatpush1.msra.mxu0 %v3466
    %3683 = vmatprep.subr.mxu0 0.0
    %3684 = vmatpush1.msra.mxu0 %v3465
    %3685 = vmatprep.subr.mxu0 0.0
    %3686 = vmatpush1.msra.mxu0 %v3464
    %3687 = vmatprep.subr.mxu0 0.0
    %3688 = vmatpush1.msra.mxu0 %v3463
    %3689 = vmatprep.subr.mxu0 0.0
    %3690 = vmatpush1.msra.mxu0 %v3462
    %3691 = vmatprep.subr.mxu0 0.0
    %3692 = vmatpush1.msra.mxu0 %v3461
    %3693 = vmatprep.subr.mxu0 0.0
    %3694 = vmatpush1.msra.mxu0 %v3460
    %3695 = vmatprep.subr.mxu0 0.0
    %3696 = vmatpush1.msra.mxu0 %v3459
    %3697 = vmatprep.subr.mxu0 0.0
    %3698 = vmatpush1.msra.mxu0 %v3458
    %3699 = vmatprep.subr.mxu0 0.0
    %3700 = vmatpush1.msra.mxu0 %v3457
    %3701 = vmatprep.subr.mxu0 0.0
    %3702 = vmatpush1.msra.mxu0 %v3456
    %3703 = vmatprep.subr.mxu0 0.0
    %3704 = vmatpush1.msra.mxu0 %v3455
    %3705 = vmatprep.subr.mxu0 0.0
    %3706 = vmatpush1.msra.mxu0 %v3454
    %3707 = vmatprep.subr.mxu0 0.0
    %3708 = vmatpush1.msra.mxu0 %v3453
    %3709 = vmatprep.subr.mxu0 0.0
    %3710 = vmatpush1.msra.mxu0 %v3452
    %3711 = vmatprep.subr.mxu0 0.0
    %3712 = vmatpush2.msra.mxu0 0.0
    %3713 = vmatprep.subr.mxu0 0.0
    %3714 = vmatpush2.msra.mxu0 0.0
    %3715 = vmatprep.subr.mxu0 0.0
    %3716 = vmatpush2.msra.mxu0 0.0
    %3717 = vmatprep.subr.mxu0 0.0
    %3718 = vmatpush2.msra.mxu0 0.0
    %3719 = vmatprep.subr.mxu0 0.0
    %3720 = vmatpush2.msra.mxu0 0.0
    %3721 = vmatprep.subr.mxu0 0.0
    %3722 = vmatpush2.msra.mxu0 %v3478
    %3723 = vmatprep.subr.mxu0 0.0
    %3724 = vmatpush2.msra.mxu0 %v3477
    %3725 = vmatprep.subr.mxu0 0.0
    %3726 = vmatpush2.msra.mxu0 %v3476
    %3727 = vmatprep.subr.mxu0 0.0
    %3728 = vmatpush2.msra.mxu0 %v3475
    %3729 = vmatprep.subr.mxu0 0.0
    %3730 = vmatpush2.msra.mxu0 %v3474
    %3731 = vmatprep.subr.mxu0 0.0
    %3732 = vmatpush2.msra.mxu0 %v3473
    %3733 = vmatprep.subr.mxu0 0.0
    %3734 = vmatpush2.msra.mxu0 %v3472
    %3735 = vmatprep.subr.mxu0 0.0
    %3736 = vmatpush2.msra.mxu0 %v3471
    %3737 = vmatprep.subr.mxu0 0.0
    %3738 = vmatpush2.msra.mxu0 %v3470
    %3739 = vmatprep.subr.mxu0 0.0
    %3740 = vmatpush2.msra.mxu0 %v3469
    %3741 = vmatprep.subr.mxu0 0.0
    %3742 = vmatpush2.msra.mxu0 %v3468
    %3743 = vmatprep.mubr.f32.mxu0 %v3488
    %3744 = vmatmul.mubr.f32.gmra.mxu0 %v3193
    %v3745 = vpop.f32.mrf.mxu0
    %v3746 = vadd.f32 %v3484, %v3745
    %v3747 = vpop.f32.mrf.mxu0
    %3748 = vmatprep.mubr.f32.mxu0 %v3491
    %3749 = vmatmul.mubr.f32.gmra.mxu0 %v3194
    %v3750 = vpop.f32.mrf.mxu0
    %v3751 = vadd.f32 %v3484, %v3750
    %v3752 = vpop.f32.mrf.mxu0
    %3753 = vmatprep.mubr.f32.mxu0 %v3494
    %3754 = vmatmul.mubr.f32.gmra.mxu0 %v3195
    %v3755 = vpop.f32.mrf.mxu0
    %v3756 = vadd.f32 %v3484, %v3755
    %v3757 = vpop.f32.mrf.mxu0
    %3758 = vmatprep.mubr.f32.mxu0 %v3497
    %3759 = vmatmul.mubr.f32.gmra.mxu0 %v3196
    %v3760 = vpop.f32.mrf.mxu0
    %v3761 = vadd.f32 %v3484, %v3760
    %v3762 = vpop.f32.mrf.mxu0
    %3763 = vmatprep.mubr.f32.mxu0 %v3500
    %3764 = vmatmul.mubr.f32.gmra.mxu0 %v3197
    %v3765 = vpop.f32.mrf.mxu0
    %v3766 = vadd.f32 %v3484, %v3765
    %v3767 = vpop.f32.mrf.mxu0
    %3768 = vmatprep.mubr.f32.mxu0 %v3503
    %3769 = vmatmul.mubr.f32.gmra.mxu0 %v3198
    %v3770 = vpop.f32.mrf.mxu0
    %v3771 = vadd.f32 %v3484, %v3770
    %v3772 = vpop.f32.mrf.mxu0
    %3773 = vmatprep.mubr.f32.mxu0 %v3506
    %3774 = vmatmul.mubr.f32.gmra.mxu0 %v3199
    %v3775 = vpop.f32.mrf.mxu0
    %v3776 = vadd.f32 %v3484, %v3775
    %v3777 = vpop.f32.mrf.mxu0
    %3778 = vmatprep.mubr.f32.mxu0 %v3509
    %3779 = vmatmul.mubr.f32.gmra.mxu0 %v3200
    %v3780 = vpop.f32.mrf.mxu0
    %v3781 = vadd.f32 %v3484, %v3780
    %v3782 = vpop.f32.mrf.mxu0
    %3783 = vmatprep.mubr.f32.mxu0 %v3512
    %3784 = vmatmul.mubr.f32.gmra.mxu0 %v3201
    %v3785 = vpop.f32.mrf.mxu0
    %v3786 = vadd.f32 %v3484, %v3785
    %v3787 = vpop.f32.mrf.mxu0
    %3788 = vmatprep.mubr.f32.mxu0 %v3515
    %3789 = vmatmul.mubr.f32.gmra.mxu0 %v3202
    %v3790 = vpop.f32.mrf.mxu0
    %v3791 = vadd.f32 %v3484, %v3790
    %v3792 = vpop.f32.mrf.mxu0
    %3793 = vmatprep.mubr.f32.mxu0 %v3518
    %3794 = vmatmul.mubr.f32.gmra.mxu0 %v3203
    %v3795 = vpop.f32.mrf.mxu0
    %v3796 = vadd.f32 %v3484, %v3795
    %v3797 = vpop.f32.mrf.mxu0
    %3798 = vmatprep.mubr.f32.mxu0 %v3521
    %3799 = vmatmul.mubr.f32.gmra.mxu0 %v3204
    %v3800 = vpop.f32.mrf.mxu0
    %v3801 = vadd.f32 %v3484, %v3800
    %v3802 = vpop.f32.mrf.mxu0
    %3803 = vmatprep.mubr.f32.mxu0 %v3524
    %3804 = vmatmul.mubr.f32.gmra.mxu0 %v3205
    %v3805 = vpop.f32.mrf.mxu0
    %v3806 = vadd.f32 %v3484, %v3805
    %v3807 = vpop.f32.mrf.mxu0
    %3808 = vmatprep.mubr.f32.mxu0 %v3527
    %3809 = vmatmul.mubr.f32.gmra.mxu0 %v3206
    %v3810 = vpop.f32.mrf.mxu0
    %v3811 = vadd.f32 %v3484, %v3810
    %v3812 = vpop.f32.mrf.mxu0
    %3813 = vmatprep.mubr.f32.mxu0 %v3530
    %3814 = vmatmul.mubr.f32.gmra.mxu0 %v3207
    %v3815 = vpop.f32.mrf.mxu0
    %v3816 = vadd.f32 %v3484, %v3815
    %v3817 = vpop.f32.mrf.mxu0
    %3818 = vmatprep.mubr.f32.mxu0 %v3533
    %3819 = vmatmul.mubr.f32.gmra.mxu0 %v3208
    %v3820 = vpop.f32.mrf.mxu0
    %v3821 = vadd.f32 %v3484, %v3820
    %v3822 = vpop.f32.mrf.mxu0
    %3823 = vmatprep.mubr.f32.mxu0 %v3536
    %3824 = vmatmul.mubr.f32.gmra.mxu0 %v3209
    %v3825 = vpop.f32.mrf.mxu0
    %v3826 = vadd.f32 %v3484, %v3825
    %v3827 = vpop.f32.mrf.mxu0
    %3828 = vmatprep.mubr.f32.mxu0 %v3539
    %3829 = vmatmul.mubr.f32.gmra.mxu0 %v3210
    %v3830 = vpop.f32.mrf.mxu0
    %v3831 = vadd.f32 %v3484, %v3830
    %v3832 = vpop.f32.mrf.mxu0
    %3833 = vmatprep.mubr.f32.mxu0 %v3542
    %3834 = vmatmul.mubr.f32.gmra.mxu0 %v3211
    %v3835 = vpop.f32.mrf.mxu0
    %v3836 = vadd.f32 %v3484, %v3835
    %v3837 = vpop.f32.mrf.mxu0
    %3838 = vmatprep.mubr.f32.mxu0 %v3545
    %3839 = vmatmul.mubr.f32.gmra.mxu0 %v3212
    %v3840 = vpop.f32.mrf.mxu0
    %v3841 = vadd.f32 %v3484, %v3840
    %v3842 = vpop.f32.mrf.mxu0
    %3843 = vmatprep.mubr.f32.mxu0 %v3548
    %3844 = vmatmul.mubr.f32.gmra.mxu0 %v3213
    %v3845 = vpop.f32.mrf.mxu0
    %v3846 = vadd.f32 %v3484, %v3845
    %v3847 = vpop.f32.mrf.mxu0
    %3848 = vmatprep.mubr.f32.mxu0 %v3551
    %3849 = vmatmul.mubr.f32.gmra.mxu0 %v3214
    %v3850 = vpop.f32.mrf.mxu0
    %v3851 = vadd.f32 %v3484, %v3850
    %v3852 = vpop.f32.mrf.mxu0
    %3853 = vmatprep.mubr.f32.mxu0 %v3554
    %3854 = vmatmul.mubr.f32.gmra.mxu0 %v3215
    %v3855 = vpop.f32.mrf.mxu0
    %v3856 = vadd.f32 %v3484, %v3855
    %v3857 = vpop.f32.mrf.mxu0
    %3858 = vmatprep.mubr.f32.mxu0 %v3557
    %3859 = vmatmul.mubr.f32.gmra.mxu0 %v3216
    %v3860 = vpop.f32.mrf.mxu0
    %v3861 = vadd.f32 %v3484, %v3860
    %v3862 = vpop.f32.mrf.mxu0
    %3863 = vmatprep.mubr.f32.mxu0 %v3560
    %3864 = vmatmul.mubr.f32.gmra.mxu0 %v3217
    %v3865 = vpop.f32.mrf.mxu0
    %v3866 = vadd.f32 %v3484, %v3865
    %v3867 = vpop.f32.mrf.mxu0
    %3868 = vmatprep.mubr.f32.mxu0 %v3563
    %3869 = vmatmul.mubr.f32.gmra.mxu0 %v3218
    %v3870 = vpop.f32.mrf.mxu0
    %v3871 = vadd.f32 %v3484, %v3870
    %v3872 = vpop.f32.mrf.mxu0
    %3873 = vmatprep.mubr.f32.mxu0 %v3566
    %3874 = vmatmul.mubr.f32.gmra.mxu0 %v3219
    %v3875 = vpop.f32.mrf.mxu0
    %v3876 = vadd.f32 %v3484, %v3875
    %v3877 = vpop.f32.mrf.mxu0
    %3878 = vmatprep.mubr.f32.mxu0 %v3569
    %3879 = vmatmul.mubr.f32.gmra.mxu0 %v3220
    %v3880 = vpop.f32.mrf.mxu0
    %v3881 = vadd.f32 %v3484, %v3880
    %v3882 = vpop.f32.mrf.mxu0
    %3883 = vmatprep.mubr.f32.mxu0 %v3572
    %3884 = vmatmul.mubr.f32.gmra.mxu0 %v3221
    %v3885 = vpop.f32.mrf.mxu0
    %v3886 = vadd.f32 %v3484, %v3885
    %v3887 = vpop.f32.mrf.mxu0
    %3888 = vmatprep.mubr.f32.mxu0 %v3575
    %3889 = vmatmul.mubr.f32.gmra.mxu0 %v3222
    %v3890 = vpop.f32.mrf.mxu0
    %v3891 = vadd.f32 %v3484, %v3890
    %v3892 = vpop.f32.mrf.mxu0
    %3893 = vmatprep.mubr.f32.mxu0 %v3578
    %3894 = vmatmul.mubr.f32.gmra.mxu0 %v3223
    %v3895 = vpop.f32.mrf.mxu0
    %v3896 = vadd.f32 %v3484, %v3895
    %v3897 = vpop.f32.mrf.mxu0
    %3898 = vmatprep.mubr.f32.mxu0 %v3581
    %3899 = vmatmul.mubr.f32.gmra.mxu0 %v3224
    %v3900 = vpop.f32.mrf.mxu0
    %v3901 = vadd.f32 %v3484, %v3900
    %v3902 = vpop.f32.mrf.mxu0
    %3903 = vmatprep.mubr.f32.mxu0 %v3584
    %3904 = vmatmul.mubr.f32.gmra.mxu0 %v3225
    %v3905 = vpop.f32.mrf.mxu0
    %v3906 = vadd.f32 %v3484, %v3905
    %v3907 = vpop.f32.mrf.mxu0
    %3908 = vmatprep.mubr.f32.mxu0 %v3587
    %3909 = vmatmul.mubr.f32.gmra.mxu0 %v3226
    %v3910 = vpop.f32.mrf.mxu0
    %v3911 = vadd.f32 %v3484, %v3910
    %v3912 = vpop.f32.mrf.mxu0
    %3913 = vmatprep.mubr.f32.mxu0 %v3590
    %3914 = vmatmul.mubr.f32.gmra.mxu0 %v3227
    %v3915 = vpop.f32.mrf.mxu0
    %v3916 = vadd.f32 %v3484, %v3915
    %v3917 = vpop.f32.mrf.mxu0
    %3918 = vmatprep.mubr.f32.mxu0 %v3593
    %3919 = vmatmul.mubr.f32.gmra.mxu0 %v3228
    %v3920 = vpop.f32.mrf.mxu0
    %v3921 = vadd.f32 %v3484, %v3920
    %v3922 = vpop.f32.mrf.mxu0
    %3923 = vmatprep.mubr.f32.mxu0 %v3596
    %3924 = vmatmul.mubr.f32.gmra.mxu0 %v3229
    %v3925 = vpop.f32.mrf.mxu0
    %v3926 = vadd.f32 %v3484, %v3925
    %v3927 = vpop.f32.mrf.mxu0
    %3928 = vmatprep.mubr.f32.mxu0 %v3599
    %3929 = vmatmul.mubr.f32.gmra.mxu0 %v3230
    %v3930 = vpop.f32.mrf.mxu0
    %v3931 = vadd.f32 %v3484, %v3930
    %v3932 = vpop.f32.mrf.mxu0
    %3933 = vmatprep.mubr.f32.mxu0 %v3602
    %3934 = vmatmul.mubr.f32.gmra.mxu0 %v3231
    %v3935 = vpop.f32.mrf.mxu0
    %v3936 = vadd.f32 %v3484, %v3935
    %v3937 = vpop.f32.mrf.mxu0
    %3938 = vmatprep.mubr.f32.mxu0 %v3605
    %3939 = vmatmul.mubr.f32.gmra.mxu0 %v3232
    %v3940 = vpop.f32.mrf.mxu0
    %v3941 = vadd.f32 %v3484, %v3940
    %v3942 = vpop.f32.mrf.mxu0
    %3943 = vmatprep.mubr.f32.mxu0 %v3608
    %3944 = vmatmul.mubr.f32.gmra.mxu0 %v3233
    %v3945 = vpop.f32.mrf.mxu0
    %v3946 = vadd.f32 %v3484, %v3945
    %v3947 = vpop.f32.mrf.mxu0
    %3948 = vmatprep.mubr.f32.mxu0 %v3611
    %3949 = vmatmul.mubr.f32.gmra.mxu0 %v3234
    %v3950 = vpop.f32.mrf.mxu0
    %v3951 = vadd.f32 %v3484, %v3950
    %v3952 = vpop.f32.mrf.mxu0
    %3953 = vmatprep.mubr.f32.mxu0 %v3614
    %3954 = vmatmul.mubr.f32.gmra.mxu0 %v3235
    %v3955 = vpop.f32.mrf.mxu0
    %v3956 = vadd.f32 %v3484, %v3955
    %v3957 = vpop.f32.mrf.mxu0
    %3958 = vmatprep.mubr.f32.mxu0 %v3617
    %3959 = vmatmul.mubr.f32.gmra.mxu0 %v3236
    %v3960 = vpop.f32.mrf.mxu0
    %v3961 = vadd.f32 %v3484, %v3960
    %v3962 = vpop.f32.mrf.mxu0
    %3963 = vmatprep.mubr.f32.mxu0 %v3620
    %3964 = vmatmul.mubr.f32.gmra.mxu0 %v3237
    %v3965 = vpop.f32.mrf.mxu0
    %v3966 = vadd.f32 %v3484, %v3965
    %v3967 = vpop.f32.mrf.mxu0
    %3968 = vmatprep.mubr.f32.mxu0 %v3623
    %3969 = vmatmul.mubr.f32.gmra.mxu0 %v3238
    %v3970 = vpop.f32.mrf.mxu0
    %v3971 = vadd.f32 %v3484, %v3970
    %v3972 = vpop.f32.mrf.mxu0
    %3973 = vmatprep.mubr.f32.mxu0 %v3626
    %3974 = vmatmul.mubr.f32.gmra.mxu0 %v3239
    %v3975 = vpop.f32.mrf.mxu0
    %v3976 = vadd.f32 %v3484, %v3975
    %v3977 = vpop.f32.mrf.mxu0
    %3978 = vmatprep.mubr.f32.mxu0 %v3629
    %3979 = vmatmul.mubr.f32.gmra.mxu0 %v3240
    %v3980 = vpop.f32.mrf.mxu0
    %v3981 = vadd.f32 %v3484, %v3980
    %v3982 = vpop.f32.mrf.mxu0
    %3983 = vmatprep.mubr.f32.mxu0 %v3632
    %3984 = vmatmul.mubr.f32.gmra.mxu0 %v3241
    %v3985 = vpop.f32.mrf.mxu0
    %v3986 = vadd.f32 %v3484, %v3985
    %v3987 = vpop.f32.mrf.mxu0
    %3988 = vmatprep.mubr.f32.mxu0 %v3635
    %3989 = vmatmul.mubr.f32.gmra.mxu0 %v3242
    %v3990 = vpop.f32.mrf.mxu0
    %v3991 = vadd.f32 %v3484, %v3990
    %v3992 = vpop.f32.mrf.mxu0
    %3993 = vmatprep.mubr.f32.mxu0 %v3638
    %3994 = vmatmul.mubr.f32.gmra.mxu0 %v3243
    %v3995 = vpop.f32.mrf.mxu0
    %v3996 = vadd.f32 %v3484, %v3995
    %v3997 = vpop.f32.mrf.mxu0
    %3998 = vmatprep.mubr.f32.mxu0 %v3641
    %3999 = vmatmul.mubr.f32.gmra.mxu0 %v3244
    %v4000 = vpop.f32.mrf.mxu0
    %v4001 = vadd.f32 %v3484, %v4000
    %v4002 = vpop.f32.mrf.mxu0
    %4003 = vmatprep.mubr.f32.mxu0 %v3644
    %4004 = vmatmul.mubr.f32.gmra.mxu0 %v3245
    %v4005 = vpop.f32.mrf.mxu0
    %v4006 = vadd.f32 %v3484, %v4005
    %v4007 = vpop.f32.mrf.mxu0
    %4008 = vmatprep.mubr.f32.mxu0 %v3647
    %4009 = vmatmul.mubr.f32.gmra.mxu0 %v3246
    %v4010 = vpop.f32.mrf.mxu0
    %v4011 = vadd.f32 %v3484, %v4010
    %v4012 = vpop.f32.mrf.mxu0
    %4013 = vmatprep.mubr.f32.mxu0 %v3650
    %4014 = vmatmul.mubr.f32.gmra.mxu0 %v3247
    %v4015 = vpop.f32.mrf.mxu0
    %v4016 = vadd.f32 %v3484, %v4015
    %v4017 = vpop.f32.mrf.mxu0
    %4018 = vmatprep.mubr.f32.mxu0 %v3653
    %4019 = vmatmul.mubr.f32.gmra.mxu0 %v3248
    %v4020 = vpop.f32.mrf.mxu0
    %v4021 = vadd.f32 %v3484, %v4020
    %v4022 = vpop.f32.mrf.mxu0
    %4023 = vmatprep.mubr.f32.mxu0 %v3656
    %4024 = vmatmul.mubr.f32.gmra.mxu0 %v3249
    %v4025 = vpop.f32.mrf.mxu0
    %v4026 = vadd.f32 %v3484, %v4025
    %v4027 = vpop.f32.mrf.mxu0
    %4028 = vmatprep.mubr.f32.mxu0 %v3659
    %4029 = vmatmul.mubr.f32.gmra.mxu0 %v3250
    %v4030 = vpop.f32.mrf.mxu0
    %v4031 = vadd.f32 %v3484, %v4030
    %v4032 = vpop.f32.mrf.mxu0
    %4033 = vmatprep.mubr.f32.mxu0 %v3662
    %4034 = vmatmul.mubr.f32.gmra.mxu0 %v3251
    %v4035 = vpop.f32.mrf.mxu0
    %v4036 = vadd.f32 %v3484, %v4035
    %v4037 = vpop.f32.mrf.mxu0
    %4038 = vmatprep.mubr.f32.mxu0 %v3665
    %4039 = vmatmul.mubr.f32.gmra.mxu0 %v3252
    %v4040 = vpop.f32.mrf.mxu0
    %v4041 = vadd.f32 %v3484, %v4040
    %v4042 = vpop.f32.mrf.mxu0
    %4043 = vmatprep.mubr.f32.mxu0 %v3668
    %4044 = vmatmul.mubr.f32.gmra.mxu0 %v3253
    %v4045 = vpop.f32.mrf.mxu0
    %v4046 = vadd.f32 %v3484, %v4045
    %v4047 = vpop.f32.mrf.mxu0
    %4048 = vmatprep.mubr.f32.mxu0 %v3671
    %4049 = vmatmul.mubr.f32.gmra.mxu0 %v3254
    %v4050 = vpop.f32.mrf.mxu0
    %v4051 = vadd.f32 %v3484, %v4050
    %v4052 = vpop.f32.mrf.mxu0
    %4053 = vmatprep.mubr.f32.mxu0 %v3674
    %4054 = vmatmul.mubr.f32.gmra.mxu0 %v3255
    %v4055 = vpop.f32.mrf.mxu0
    %v4056 = vadd.f32 %v3484, %v4055
    %v4057 = vpop.f32.mrf.mxu0
    %4058 = vmatprep.mubr.f32.mxu0 %v3677
    %4059 = vmatmul.mubr.f32.gmra.mxu0 %v3256
    %v4060 = vpop.f32.mrf.mxu0
    %v4061 = vadd.f32 %v3484, %v4060
    %v4062 = vpop.f32.mrf.mxu0
    %4063 = vdwg.mxu0
    %v4064 = vmax.f32 %v3746, 0.0
    %v4065 = vmax.f32 %v3751, 0.0
    %v4066 = vmax.f32 %v3756, 0.0
    %v4067 = vmax.f32 %v3761, 0.0
    %v4068 = vmax.f32 %v3766, 0.0
    %v4069 = vmax.f32 %v3771, 0.0
    %v4070 = vmax.f32 %v3776, 0.0
    %v4071 = vmax.f32 %v3781, 0.0
    %v4072 = vmax.f32 %v3786, 0.0
    %v4073 = vmax.f32 %v3791, 0.0
    %v4074 = vmax.f32 %v3796, 0.0
    %v4075 = vmax.f32 %v3801, 0.0
    %v4076 = vmax.f32 %v3806, 0.0
    %v4077 = vmax.f32 %v3811, 0.0
    %v4078 = vmax.f32 %v3816, 0.0
    %v4079 = vmax.f32 %v3821, 0.0
    %v4080 = vmax.f32 %v3826, 0.0
    %v4081 = vmax.f32 %v3831, 0.0
    %v4082 = vmax.f32 %v3836, 0.0
    %v4083 = vmax.f32 %v3841, 0.0
    %v4084 = vmax.f32 %v3846, 0.0
    %v4085 = vmax.f32 %v3851, 0.0
    %v4086 = vmax.f32 %v3856, 0.0
    %v4087 = vmax.f32 %v3861, 0.0
    %v4088 = vmax.f32 %v3866, 0.0
    %v4089 = vmax.f32 %v3871, 0.0
    %v4090 = vmax.f32 %v3876, 0.0
    %v4091 = vmax.f32 %v3881, 0.0
    %v4092 = vmax.f32 %v3886, 0.0
    %v4093 = vmax.f32 %v3891, 0.0
    %v4094 = vmax.f32 %v3896, 0.0
    %v4095 = vmax.f32 %v3901, 0.0
    %v4096 = vmax.f32 %v3906, 0.0
    %v4097 = vmax.f32 %v3911, 0.0
    %v4098 = vmax.f32 %v3916, 0.0
    %v4099 = vmax.f32 %v3921, 0.0
    %v4100 = vmax.f32 %v3926, 0.0
    %v4101 = vmax.f32 %v3931, 0.0
    %v4102 = vmax.f32 %v3936, 0.0
    %v4103 = vmax.f32 %v3941, 0.0
    %v4104 = vmax.f32 %v3946, 0.0
    %v4105 = vmax.f32 %v3951, 0.0
    %v4106 = vmax.f32 %v3956, 0.0
    %v4107 = vmax.f32 %v3961, 0.0
    %v4108 = vmax.f32 %v3966, 0.0
    %v4109 = vmax.f32 %v3971, 0.0
    %v4110 = vmax.f32 %v3976, 0.0
    %v4111 = vmax.f32 %v3981, 0.0
    %v4112 = vmax.f32 %v3986, 0.0
    %v4113 = vmax.f32 %v3991, 0.0
    %v4114 = vmax.f32 %v3996, 0.0
    %v4115 = vmax.f32 %v4001, 0.0
    %v4116 = vmax.f32 %v4006, 0.0
    %v4117 = vmax.f32 %v4011, 0.0
    %v4118 = vmax.f32 %v4016, 0.0
    %v4119 = vmax.f32 %v4021, 0.0
    %v4120 = vmax.f32 %v4026, 0.0
    %v4121 = vmax.f32 %v4031, 0.0
    %v4122 = vmax.f32 %v4036, 0.0
    %v4123 = vmax.f32 %v4041, 0.0
    %v4124 = vmax.f32 %v4046, 0.0
    %v4125 = vmax.f32 %v4051, 0.0
    %v4126 = vmax.f32 %v4056, 0.0
    %v4127 = vmax.f32 %v4061, 0.0
    %vm4128 = vcmask 261120
    %4129 = vst.msk [vmem:[#allocation3] sm:$0xff] %vm4128, 0.0
    %4130 = vst.msk [vmem:[#allocation3 + $0x8] sm:$0xff] %vm4128, 0.0
    %vm4131 = vcmask 254976
    %4132 = vst.msk [vmem:[#allocation3 + $0x10] sm:$0x3] %vm4131, 0.0
    %4133 = vst.msk [vmem:[#allocation3 + $0x18] sm:$0xff] %vm4128, 0.0
    %4134 = vst.msk [vmem:[#allocation3 + $0x20] sm:$0xff] %vm4128, 0.0
    %4135 = vst.msk [vmem:[#allocation3 + $0x28] sm:$0x3] %vm4131, 0.0
    %4136 = vst.msk [vmem:[#allocation3 + $0x30] sm:$0xff] %vm4128, 0.0
    %4137 = vst.msk [vmem:[#allocation3 + $0x38] sm:$0xff] %vm4128, 0.0
    %4138 = vst.msk [vmem:[#allocation3 + $0x40] sm:$0x3] %vm4131, 0.0
    %4139 = vst.msk [vmem:[#allocation3 + $0x48] sm:$0xff] %vm4128, 0.0
    %4140 = vst.msk [vmem:[#allocation3 + $0x50] sm:$0xff] %vm4128, 0.0
    %4141 = vst.msk [vmem:[#allocation3 + $0x58] sm:$0x3] %vm4131, 0.0
    %4142 = vst.msk [vmem:[#allocation3 + $0x60] sm:$0xff] %vm4128, 0.0
    %4143 = vst.msk [vmem:[#allocation3 + $0x68] sm:$0xff] %vm4128, 0.0
    %4144 = vst.msk [vmem:[#allocation3 + $0x70] sm:$0x3] %vm4131, 0.0
    %4145 = vst.msk [vmem:[#allocation3 + $0x78] sm:$0xff] %vm4128, 0.0
    %4146 = vst.msk [vmem:[#allocation3 + $0x80] sm:$0xff] %vm4128, 0.0
    %4147 = vst.msk [vmem:[#allocation3 + $0x88] sm:$0x3] %vm4131, 0.0
    %4148 = vst.msk [vmem:[#allocation3 + $0x90] sm:$0xff] %vm4128, 0.0
    %4149 = vst.msk [vmem:[#allocation3 + $0x98] sm:$0xff] %vm4128, 0.0
    %4150 = vst.msk [vmem:[#allocation3 + $0xa0] sm:$0x3] %vm4131, 0.0
    %4151 = vst.msk [vmem:[#allocation3 + $0xa8] sm:$0xff] %vm4128, 0.0
    %4152 = vst.msk [vmem:[#allocation3 + $0xb0] sm:$0xff] %vm4128, 0.0
    %4153 = vst.msk [vmem:[#allocation3 + $0xb8] sm:$0x3] %vm4131, 0.0
    %4154 = vst.msk [vmem:[#allocation3 + $0xc0] sm:$0xff] %vm4128, 0.0
    %4155 = vst.msk [vmem:[#allocation3 + $0xc8] sm:$0xff] %vm4128, 0.0
    %4156 = vst.msk [vmem:[#allocation3 + $0xd0] sm:$0x3] %vm4131, 0.0
    %4157 = vst.msk [vmem:[#allocation3 + $0xd8] sm:$0xff] %vm4128, 0.0
    %4158 = vst.msk [vmem:[#allocation3 + $0xe0] sm:$0xff] %vm4128, 0.0
    %4159 = vst.msk [vmem:[#allocation3 + $0xe8] sm:$0x3] %vm4131, 0.0
    %4160 = vst.msk [vmem:[#allocation3 + $0xf0] sm:$0xff] %vm4128, 0.0
    %4161 = vst.msk [vmem:[#allocation3 + $0xf8] sm:$0xff] %vm4128, 0.0
    %4162 = vst.msk [vmem:[#allocation3 + $0x100] sm:$0x3] %vm4131, 0.0
    %4163 = vst.msk [vmem:[#allocation3 + $0x108] sm:$0xff] %vm4128, 0.0
    %4164 = vst.msk [vmem:[#allocation3 + $0x110] sm:$0xff] %vm4128, 0.0
    %4165 = vst.msk [vmem:[#allocation3 + $0x118] sm:$0x3] %vm4131, 0.0
    %4166 = vst.msk [vmem:[#allocation3 + $0x120] sm:$0xff] %vm4128, 0.0
    %4167 = vst.msk [vmem:[#allocation3 + $0x128] sm:$0xff] %vm4128, 0.0
    %4168 = vst.msk [vmem:[#allocation3 + $0x130] sm:$0x3] %vm4131, 0.0
    %4169 = vst.msk [vmem:[#allocation3 + $0x138] sm:$0xff] %vm4128, 0.0
    %4170 = vst.msk [vmem:[#allocation3 + $0x140] sm:$0xff] %vm4128, 0.0
    %4171 = vst.msk [vmem:[#allocation3 + $0x148] sm:$0x3] %vm4131, 0.0
    %4172 = vst.msk [vmem:[#allocation3 + $0x150] sm:$0xff] %vm4128, 0.0
    %4173 = vst.msk [vmem:[#allocation3 + $0x158] sm:$0xff] %vm4128, 0.0
    %4174 = vst.msk [vmem:[#allocation3 + $0x160] sm:$0x3] %vm4131, 0.0
    %4175 = vst.msk [vmem:[#allocation3 + $0x168] sm:$0xff] %vm4128, 0.0
    %4176 = vst.msk [vmem:[#allocation3 + $0x170] sm:$0xff] %vm4128, 0.0
    %4177 = vst.msk [vmem:[#allocation3 + $0x178] sm:$0x3] %vm4131, 0.0
    %4178 = vst.msk [vmem:[#allocation3 + $0x180] sm:$0xff] %vm4128, 0.0
    %4179 = vst.msk [vmem:[#allocation3 + $0x188] sm:$0xff] %vm4128, 0.0
    %4180 = vst.msk [vmem:[#allocation3 + $0x190] sm:$0x3] %vm4131, 0.0
    %4181 = vst.msk [vmem:[#allocation3 + $0x198] sm:$0xff] %vm4128, 0.0
    %4182 = vst.msk [vmem:[#allocation3 + $0x1a0] sm:$0xff] %vm4128, 0.0
    %4183 = vst.msk [vmem:[#allocation3 + $0x1a8] sm:$0x3] %vm4131, 0.0
    %4184 = vst.msk [vmem:[#allocation3 + $0x1b0] sm:$0xff] %vm4128, 0.0
    %4185 = vst.msk [vmem:[#allocation3 + $0x1b8] sm:$0xff] %vm4128, 0.0
    %4186 = vst.msk [vmem:[#allocation3 + $0x1c0] sm:$0x3] %vm4131, 0.0
    %4187 = vst.msk [vmem:[#allocation3 + $0x1c8] sm:$0xff] %vm4128, 0.0
    %4188 = vst.msk [vmem:[#allocation3 + $0x1d0] sm:$0xff] %vm4128, 0.0
    %4189 = vst.msk [vmem:[#allocation3 + $0x1d8] sm:$0x3] %vm4131, 0.0
    %4190 = vst.msk [vmem:[#allocation3 + $0x1e0] sm:$0xff] %vm4128, 0.0
    %4191 = vst.msk [vmem:[#allocation3 + $0x1e8] sm:$0xff] %vm4128, 0.0
    %4192 = vst.msk [vmem:[#allocation3 + $0x1f0] sm:$0x3] %vm4131, 0.0
    %4193 = vst.msk [vmem:[#allocation3 + $0x1f8] sm:$0xff] %vm4128, 0.0
    %4194 = vst.msk [vmem:[#allocation3 + $0x200] sm:$0xff] %vm4128, 0.0
    %4195 = vst.msk [vmem:[#allocation3 + $0x208] sm:$0x3] %vm4131, 0.0
    %4196 = vst.msk [vmem:[#allocation3 + $0x210] sm:$0xff] %vm4128, 0.0
    %4197 = vst.msk [vmem:[#allocation3 + $0x218] sm:$0xff] %vm4128, 0.0
    %4198 = vst.msk [vmem:[#allocation3 + $0x220] sm:$0x3] %vm4131, 0.0
    %4199 = vst.msk [vmem:[#allocation3 + $0x228] sm:$0xff] %vm4128, 0.0
    %4200 = vst.msk [vmem:[#allocation3 + $0x230] sm:$0xff] %vm4128, 0.0
    %4201 = vst.msk [vmem:[#allocation3 + $0x238] sm:$0x3] %vm4131, 0.0
    %4202 = vst.msk [vmem:[#allocation3 + $0x240] sm:$0xff] %vm4128, 0.0
    %4203 = vst.msk [vmem:[#allocation3 + $0x248] sm:$0xff] %vm4128, 0.0
    %4204 = vst.msk [vmem:[#allocation3 + $0x250] sm:$0x3] %vm4131, 0.0
    %4205 = vst.msk [vmem:[#allocation3 + $0x258] sm:$0xff] %vm4128, 0.0
    %4206 = vst.msk [vmem:[#allocation3 + $0x260] sm:$0xff] %vm4128, 0.0
    %4207 = vst.msk [vmem:[#allocation3 + $0x268] sm:$0x3] %vm4131, 0.0
    %4208 = vst.msk [vmem:[#allocation3 + $0x270] sm:$0xff] %vm4128, 0.0
    %4209 = vst.msk [vmem:[#allocation3 + $0x278] sm:$0xff] %vm4128, 0.0
    %4210 = vst.msk [vmem:[#allocation3 + $0x280] sm:$0x3] %vm4131, 0.0
    %4211 = vst.msk [vmem:[#allocation3 + $0x288] sm:$0xff] %vm4128, 0.0
    %4212 = vst.msk [vmem:[#allocation3 + $0x290] sm:$0xff] %vm4128, 0.0
    %4213 = vst.msk [vmem:[#allocation3 + $0x298] sm:$0x3] %vm4131, 0.0
    %4214 = vst.msk [vmem:[#allocation3 + $0x2a0] sm:$0xff] %vm4128, 0.0
    %4215 = vst.msk [vmem:[#allocation3 + $0x2a8] sm:$0xff] %vm4128, 0.0
    %4216 = vst.msk [vmem:[#allocation3 + $0x2b0] sm:$0x3] %vm4131, 0.0
    %4217 = vst.msk [vmem:[#allocation3 + $0x2b8] sm:$0xff] %vm4128, 0.0
    %4218 = vst.msk [vmem:[#allocation3 + $0x2c0] sm:$0xff] %vm4128, 0.0
    %4219 = vst.msk [vmem:[#allocation3 + $0x2c8] sm:$0x3] %vm4131, 0.0
    %4220 = vst.msk [vmem:[#allocation3 + $0x2d0] sm:$0xff] %vm4128, 0.0
    %4221 = vst.msk [vmem:[#allocation3 + $0x2d8] sm:$0xff] %vm4128, 0.0
    %4222 = vst.msk [vmem:[#allocation3 + $0x2e0] sm:$0x3] %vm4131, 0.0
    %4223 = vst.msk [vmem:[#allocation3 + $0x2e8] sm:$0xff] %vm4128, 0.0
    %4224 = vst.msk [vmem:[#allocation3 + $0x2f0] sm:$0xff] %vm4128, 0.0
    %4225 = vst.msk [vmem:[#allocation3 + $0x2f8] sm:$0x3] %vm4131, 0.0
    %4226 = vst.msk [vmem:[#allocation3 + $0x300] sm:$0xff] %vm4128, 0.0
    %4227 = vst.msk [vmem:[#allocation3 + $0x308] sm:$0xff] %vm4128, 0.0
    %4228 = vst.msk [vmem:[#allocation3 + $0x310] sm:$0x3] %vm4131, 0.0
    %4229 = vst.msk [vmem:[#allocation3 + $0x318] sm:$0xff] %vm4128, 0.0
    %4230 = vst.msk [vmem:[#allocation3 + $0x320] sm:$0xff] %vm4128, 0.0
    %4231 = vst.msk [vmem:[#allocation3 + $0x328] sm:$0x3] %vm4131, 0.0
    %4232 = vst.msk [vmem:[#allocation3 + $0x330] sm:$0xff] %vm4128, 0.0
    %4233 = vst.msk [vmem:[#allocation3 + $0x338] sm:$0xff] %vm4128, 0.0
    %4234 = vst.msk [vmem:[#allocation3 + $0x340] sm:$0x3] %vm4131, 0.0
    %4235 = vst.msk [vmem:[#allocation3 + $0x348] sm:$0xff] %vm4128, 0.0
    %4236 = vst.msk [vmem:[#allocation3 + $0x350] sm:$0xff] %vm4128, 0.0
    %4237 = vst.msk [vmem:[#allocation3 + $0x358] sm:$0x3] %vm4131, 0.0
    %s4238 = scalar_lea.vmem [#allocation3], 24
    %4239 = vst.msk [vmem:[%s4238 + $0x1] sm:$0xff] %vm4128, %v4064
    %4240 = vst.msk [vmem:[%s4238 + $0x9] sm:$0xff] %vm4128, %v4065
    %4241 = vst.msk [vmem:[%s4238 + $0x19] sm:$0xff] %vm4128, %v4066
    %4242 = vst.msk [vmem:[%s4238 + $0x21] sm:$0xff] %vm4128, %v4067
    %4243 = vst.msk [vmem:[%s4238 + $0x31] sm:$0xff] %vm4128, %v4068
    %4244 = vst.msk [vmem:[%s4238 + $0x39] sm:$0xff] %vm4128, %v4069
    %4245 = vst.msk [vmem:[%s4238 + $0x49] sm:$0xff] %vm4128, %v4070
    %4246 = vst.msk [vmem:[%s4238 + $0x51] sm:$0xff] %vm4128, %v4071
    %4247 = vst.msk [vmem:[%s4238 + $0x61] sm:$0xff] %vm4128, %v4072
    %4248 = vst.msk [vmem:[%s4238 + $0x69] sm:$0xff] %vm4128, %v4073
    %4249 = vst.msk [vmem:[%s4238 + $0x79] sm:$0xff] %vm4128, %v4074
    %4250 = vst.msk [vmem:[%s4238 + $0x81] sm:$0xff] %vm4128, %v4075
    %4251 = vst.msk [vmem:[%s4238 + $0x91] sm:$0xff] %vm4128, %v4076
    %4252 = vst.msk [vmem:[%s4238 + $0x99] sm:$0xff] %vm4128, %v4077
    %4253 = vst.msk [vmem:[%s4238 + $0xa9] sm:$0xff] %vm4128, %v4078
    %4254 = vst.msk [vmem:[%s4238 + $0xb1] sm:$0xff] %vm4128, %v4079
    %4255 = vst.msk [vmem:[%s4238 + $0xc1] sm:$0xff] %vm4128, %v4080
    %4256 = vst.msk [vmem:[%s4238 + $0xc9] sm:$0xff] %vm4128, %v4081
    %4257 = vst.msk [vmem:[%s4238 + $0xd9] sm:$0xff] %vm4128, %v4082
    %4258 = vst.msk [vmem:[%s4238 + $0xe1] sm:$0xff] %vm4128, %v4083
    %4259 = vst.msk [vmem:[%s4238 + $0xf1] sm:$0xff] %vm4128, %v4084
    %4260 = vst.msk [vmem:[%s4238 + $0xf9] sm:$0xff] %vm4128, %v4085
    %4261 = vst.msk [vmem:[%s4238 + $0x109] sm:$0xff] %vm4128, %v4086
    %4262 = vst.msk [vmem:[%s4238 + $0x111] sm:$0xff] %vm4128, %v4087
    %4263 = vst.msk [vmem:[%s4238 + $0x121] sm:$0xff] %vm4128, %v4088
    %4264 = vst.msk [vmem:[%s4238 + $0x129] sm:$0xff] %vm4128, %v4089
    %4265 = vst.msk [vmem:[%s4238 + $0x139] sm:$0xff] %vm4128, %v4090
    %4266 = vst.msk [vmem:[%s4238 + $0x141] sm:$0xff] %vm4128, %v4091
    %4267 = vst.msk [vmem:[%s4238 + $0x151] sm:$0xff] %vm4128, %v4092
    %4268 = vst.msk [vmem:[%s4238 + $0x159] sm:$0xff] %vm4128, %v4093
    %4269 = vst.msk [vmem:[%s4238 + $0x169] sm:$0xff] %vm4128, %v4094
    %4270 = vst.msk [vmem:[%s4238 + $0x171] sm:$0xff] %vm4128, %v4095
    %4271 = vst.msk [vmem:[%s4238 + $0x1b1] sm:$0xff] %vm4128, %v4096
    %4272 = vst.msk [vmem:[%s4238 + $0x1b9] sm:$0xff] %vm4128, %v4097
    %4273 = vst.msk [vmem:[%s4238 + $0x1c9] sm:$0xff] %vm4128, %v4098
    %4274 = vst.msk [vmem:[%s4238 + $0x1d1] sm:$0xff] %vm4128, %v4099
    %4275 = vst.msk [vmem:[%s4238 + $0x1e1] sm:$0xff] %vm4128, %v4100
    %4276 = vst.msk [vmem:[%s4238 + $0x1e9] sm:$0xff] %vm4128, %v4101
    %4277 = vst.msk [vmem:[%s4238 + $0x1f9] sm:$0xff] %vm4128, %v4102
    %4278 = vst.msk [vmem:[%s4238 + $0x201] sm:$0xff] %vm4128, %v4103
    %4279 = vst.msk [vmem:[%s4238 + $0x211] sm:$0xff] %vm4128, %v4104
    %4280 = vst.msk [vmem:[%s4238 + $0x219] sm:$0xff] %vm4128, %v4105
    %4281 = vst.msk [vmem:[%s4238 + $0x229] sm:$0xff] %vm4128, %v4106
    %4282 = vst.msk [vmem:[%s4238 + $0x231] sm:$0xff] %vm4128, %v4107
    %4283 = vst.msk [vmem:[%s4238 + $0x241] sm:$0xff] %vm4128, %v4108
    %4284 = vst.msk [vmem:[%s4238 + $0x249] sm:$0xff] %vm4128, %v4109
    %4285 = vst.msk [vmem:[%s4238 + $0x259] sm:$0xff] %vm4128, %v4110
    %4286 = vst.msk [vmem:[%s4238 + $0x261] sm:$0xff] %vm4128, %v4111
    %4287 = vst.msk [vmem:[%s4238 + $0x271] sm:$0xff] %vm4128, %v4112
    %4288 = vst.msk [vmem:[%s4238 + $0x279] sm:$0xff] %vm4128, %v4113
    %4289 = vst.msk [vmem:[%s4238 + $0x289] sm:$0xff] %vm4128, %v4114
    %4290 = vst.msk [vmem:[%s4238 + $0x291] sm:$0xff] %vm4128, %v4115
    %4291 = vst.msk [vmem:[%s4238 + $0x2a1] sm:$0xff] %vm4128, %v4116
    %4292 = vst.msk [vmem:[%s4238 + $0x2a9] sm:$0xff] %vm4128, %v4117
    %4293 = vst.msk [vmem:[%s4238 + $0x2b9] sm:$0xff] %vm4128, %v4118
    %4294 = vst.msk [vmem:[%s4238 + $0x2c1] sm:$0xff] %vm4128, %v4119
    %4295 = vst.msk [vmem:[%s4238 + $0x2d1] sm:$0xff] %vm4128, %v4120
    %4296 = vst.msk [vmem:[%s4238 + $0x2d9] sm:$0xff] %vm4128, %v4121
    %4297 = vst.msk [vmem:[%s4238 + $0x2e9] sm:$0xff] %vm4128, %v4122
    %4298 = vst.msk [vmem:[%s4238 + $0x2f1] sm:$0xff] %vm4128, %v4123
    %4299 = vst.msk [vmem:[%s4238 + $0x301] sm:$0xff] %vm4128, %v4124
    %4300 = vst.msk [vmem:[%s4238 + $0x309] sm:$0xff] %vm4128, %v4125
    %4301 = vst.msk [vmem:[%s4238 + $0x319] sm:$0xff] %vm4128, %v4126
    %4302 = vst.msk [vmem:[%s4238 + $0x321] sm:$0xff] %vm4128, %v4127
    %v4303 = vld [vmem:[#allocation3] sm:$0xff]
    %v4304 = vld [vmem:[#allocation3 + $0x8] sm:$0xff]
    %v4305 = vld [vmem:[#allocation3 + $0x18] sm:$0xff]
    %v4306 = vld [vmem:[#allocation3 + $0x20] sm:$0xff]
    %v4307 = vld [vmem:[#allocation3 + $0x30] sm:$0xff]
    %v4308 = vld [vmem:[#allocation3 + $0x38] sm:$0xff]
    %v4309 = vld [vmem:[#allocation3 + $0x48] sm:$0xff]
    %v4310 = vld [vmem:[#allocation3 + $0x50] sm:$0xff]
    %v4311 = vld [vmem:[#allocation3 + $0x60] sm:$0xff]
    %v4312 = vld [vmem:[#allocation3 + $0x68] sm:$0xff]
    %v4313 = vld [vmem:[#allocation3 + $0x78] sm:$0xff]
    %v4314 = vld [vmem:[#allocation3 + $0x80] sm:$0xff]
    %v4315 = vld [vmem:[#allocation3 + $0x90] sm:$0xff]
    %v4316 = vld [vmem:[#allocation3 + $0x98] sm:$0xff]
    %v4317 = vld [vmem:[#allocation3 + $0xa8] sm:$0xff]
    %v4318 = vld [vmem:[#allocation3 + $0xb0] sm:$0xff]
    %v4319 = vld [vmem:[#allocation3 + $0xc0] sm:$0xff]
    %v4320 = vld [vmem:[#allocation3 + $0xc8] sm:$0xff]
    %v4321 = vld [vmem:[#allocation3 + $0xd8] sm:$0xff]
    %v4322 = vld [vmem:[#allocation3 + $0xe0] sm:$0xff]
    %v4323 = vld [vmem:[#allocation3 + $0xf0] sm:$0xff]
    %v4324 = vld [vmem:[#allocation3 + $0xf8] sm:$0xff]
    %v4325 = vld [vmem:[#allocation3 + $0x108] sm:$0xff]
    %v4326 = vld [vmem:[#allocation3 + $0x110] sm:$0xff]
    %v4327 = vld [vmem:[#allocation3 + $0x120] sm:$0xff]
    %v4328 = vld [vmem:[#allocation3 + $0x128] sm:$0xff]
    %v4329 = vld [vmem:[#allocation3 + $0x138] sm:$0xff]
    %v4330 = vld [vmem:[#allocation3 + $0x140] sm:$0xff]
    %v4331 = vld [vmem:[#allocation3 + $0x150] sm:$0xff]
    %v4332 = vld [vmem:[#allocation3 + $0x158] sm:$0xff]
    %v4333 = vld [vmem:[#allocation3 + $0x168] sm:$0xff]
    %v4334 = vld [vmem:[#allocation3 + $0x170] sm:$0xff]
    %v4335 = vld [vmem:[#allocation3 + $0x1b0] sm:$0xff]
    %v4336 = vld [vmem:[#allocation3 + $0x1b8] sm:$0xff]
    %v4337 = vld [vmem:[#allocation3 + $0x1c8] sm:$0xff]
    %v4338 = vld [vmem:[#allocation3 + $0x1d0] sm:$0xff]
    %v4339 = vld [vmem:[#allocation3 + $0x1e0] sm:$0xff]
    %v4340 = vld [vmem:[#allocation3 + $0x1e8] sm:$0xff]
    %v4341 = vld [vmem:[#allocation3 + $0x1f8] sm:$0xff]
    %v4342 = vld [vmem:[#allocation3 + $0x200] sm:$0xff]
    %v4343 = vld [vmem:[#allocation3 + $0x210] sm:$0xff]
    %v4344 = vld [vmem:[#allocation3 + $0x218] sm:$0xff]
    %v4345 = vld [vmem:[#allocation3 + $0x228] sm:$0xff]
    %v4346 = vld [vmem:[#allocation3 + $0x230] sm:$0xff]
    %v4347 = vld [vmem:[#allocation3 + $0x240] sm:$0xff]
    %v4348 = vld [vmem:[#allocation3 + $0x248] sm:$0xff]
    %v4349 = vld [vmem:[#allocation3 + $0x258] sm:$0xff]
    %v4350 = vld [vmem:[#allocation3 + $0x260] sm:$0xff]
    %v4351 = vld [vmem:[#allocation3 + $0x270] sm:$0xff]
    %v4352 = vld [vmem:[#allocation3 + $0x278] sm:$0xff]
    %v4353 = vld [vmem:[#allocation3 + $0x288] sm:$0xff]
    %v4354 = vld [vmem:[#allocation3 + $0x290] sm:$0xff]
    %v4355 = vld [vmem:[#allocation3 + $0x2a0] sm:$0xff]
    %v4356 = vld [vmem:[#allocation3 + $0x2a8] sm:$0xff]
    %v4357 = vld [vmem:[#allocation3 + $0x2b8] sm:$0xff]
    %v4358 = vld [vmem:[#allocation3 + $0x2c0] sm:$0xff]
    %v4359 = vld [vmem:[#allocation3 + $0x2d0] sm:$0xff]
    %v4360 = vld [vmem:[#allocation3 + $0x2d8] sm:$0xff]
    %v4361 = vld [vmem:[#allocation3 + $0x2e8] sm:$0xff]
    %v4362 = vld [vmem:[#allocation3 + $0x2f0] sm:$0xff]
    %v4363 = vld [vmem:[#allocation3 + $0x300] sm:$0xff]
    %v4364 = vld [vmem:[#allocation3 + $0x308] sm:$0xff]
    %v4365 = vld [vmem:[#allocation3 + $0x318] sm:$0xff]
    %v4366 = vld [vmem:[#allocation3 + $0x320] sm:$0xff]
    %v4367 = vld [vmem:[#allocation3 + $0x1] sm:$0xff]
    %v4368 = vld [vmem:[#allocation3 + $0x9] sm:$0xff]
    %v4369 = vld [vmem:[#allocation3 + $0x19] sm:$0xff]
    %v4370 = vld [vmem:[#allocation3 + $0x21] sm:$0xff]
    %v4371 = vld [vmem:[#allocation3 + $0x31] sm:$0xff]
    %v4372 = vld [vmem:[#allocation3 + $0x39] sm:$0xff]
    %v4373 = vld [vmem:[#allocation3 + $0x49] sm:$0xff]
    %v4374 = vld [vmem:[#allocation3 + $0x51] sm:$0xff]
    %v4375 = vld [vmem:[#allocation3 + $0x61] sm:$0xff]
    %v4376 = vld [vmem:[#allocation3 + $0x69] sm:$0xff]
    %v4377 = vld [vmem:[#allocation3 + $0x79] sm:$0xff]
    %v4378 = vld [vmem:[#allocation3 + $0x81] sm:$0xff]
    %v4379 = vld [vmem:[#allocation3 + $0x91] sm:$0xff]
    %v4380 = vld [vmem:[#allocation3 + $0x99] sm:$0xff]
    %v4381 = vld [vmem:[#allocation3 + $0xa9] sm:$0xff]
    %v4382 = vld [vmem:[#allocation3 + $0xb1] sm:$0xff]
    %v4383 = vld [vmem:[#allocation3 + $0xc1] sm:$0xff]
    %v4384 = vld [vmem:[#allocation3 + $0xc9] sm:$0xff]
    %v4385 = vld [vmem:[#allocation3 + $0xd9] sm:$0xff]
    %v4386 = vld [vmem:[#allocation3 + $0xe1] sm:$0xff]
    %v4387 = vld [vmem:[#allocation3 + $0xf1] sm:$0xff]
    %v4388 = vld [vmem:[#allocation3 + $0xf9] sm:$0xff]
    %v4389 = vld [vmem:[#allocation3 + $0x109] sm:$0xff]
    %v4390 = vld [vmem:[#allocation3 + $0x111] sm:$0xff]
    %v4391 = vld [vmem:[#allocation3 + $0x121] sm:$0xff]
    %v4392 = vld [vmem:[#allocation3 + $0x129] sm:$0xff]
    %v4393 = vld [vmem:[#allocation3 + $0x139] sm:$0xff]
    %v4394 = vld [vmem:[#allocation3 + $0x141] sm:$0xff]
    %v4395 = vld [vmem:[#allocation3 + $0x151] sm:$0xff]
    %v4396 = vld [vmem:[#allocation3 + $0x159] sm:$0xff]
    %v4397 = vld [vmem:[#allocation3 + $0x169] sm:$0xff]
    %v4398 = vld [vmem:[#allocation3 + $0x171] sm:$0xff]
    %v4399 = vld [vmem:[#allocation3 + $0x1b1] sm:$0xff]
    %v4400 = vld [vmem:[#allocation3 + $0x1b9] sm:$0xff]
    %v4401 = vld [vmem:[#allocation3 + $0x1c9] sm:$0xff]
    %v4402 = vld [vmem:[#allocation3 + $0x1d1] sm:$0xff]
    %v4403 = vld [vmem:[#allocation3 + $0x1e1] sm:$0xff]
    %v4404 = vld [vmem:[#allocation3 + $0x1e9] sm:$0xff]
    %v4405 = vld [vmem:[#allocation3 + $0x1f9] sm:$0xff]
    %v4406 = vld [vmem:[#allocation3 + $0x201] sm:$0xff]
    %v4407 = vld [vmem:[#allocation3 + $0x211] sm:$0xff]
    %v4408 = vld [vmem:[#allocation3 + $0x219] sm:$0xff]
    %v4409 = vld [vmem:[#allocation3 + $0x229] sm:$0xff]
    %v4410 = vld [vmem:[#allocation3 + $0x231] sm:$0xff]
    %v4411 = vld [vmem:[#allocation3 + $0x241] sm:$0xff]
    %v4412 = vld [vmem:[#allocation3 + $0x249] sm:$0xff]
    %v4413 = vld [vmem:[#allocation3 + $0x259] sm:$0xff]
    %v4414 = vld [vmem:[#allocation3 + $0x261] sm:$0xff]
    %v4415 = vld [vmem:[#allocation3 + $0x271] sm:$0xff]
    %v4416 = vld [vmem:[#allocation3 + $0x279] sm:$0xff]
    %v4417 = vld [vmem:[#allocation3 + $0x289] sm:$0xff]
    %v4418 = vld [vmem:[#allocation3 + $0x291] sm:$0xff]
    %v4419 = vld [vmem:[#allocation3 + $0x2a1] sm:$0xff]
    %v4420 = vld [vmem:[#allocation3 + $0x2a9] sm:$0xff]
    %v4421 = vld [vmem:[#allocation3 + $0x2b9] sm:$0xff]
    %v4422 = vld [vmem:[#allocation3 + $0x2c1] sm:$0xff]
    %v4423 = vld [vmem:[#allocation3 + $0x2d1] sm:$0xff]
    %v4424 = vld [vmem:[#allocation3 + $0x2d9] sm:$0xff]
    %v4425 = vld [vmem:[#allocation3 + $0x2e9] sm:$0xff]
    %v4426 = vld [vmem:[#allocation3 + $0x2f1] sm:$0xff]
    %v4427 = vld [vmem:[#allocation3 + $0x301] sm:$0xff]
    %v4428 = vld [vmem:[#allocation3 + $0x309] sm:$0xff]
    %v4429 = vld [vmem:[#allocation3 + $0x319] sm:$0xff]
    %v4430 = vld [vmem:[#allocation3 + $0x321] sm:$0xff]
    %v4431 = vld [vmem:[#allocation3 + $0x2] sm:$0xff]
    %v4432 = vld [vmem:[#allocation3 + $0xa] sm:$0xff]
    %v4433 = vld [vmem:[#allocation3 + $0x1a] sm:$0xff]
    %v4434 = vld [vmem:[#allocation3 + $0x22] sm:$0xff]
    %v4435 = vld [vmem:[#allocation3 + $0x32] sm:$0xff]
    %v4436 = vld [vmem:[#allocation3 + $0x3a] sm:$0xff]
    %v4437 = vld [vmem:[#allocation3 + $0x4a] sm:$0xff]
    %v4438 = vld [vmem:[#allocation3 + $0x52] sm:$0xff]
    %v4439 = vld [vmem:[#allocation3 + $0x62] sm:$0xff]
    %v4440 = vld [vmem:[#allocation3 + $0x6a] sm:$0xff]
    %v4441 = vld [vmem:[#allocation3 + $0x7a] sm:$0xff]
    %v4442 = vld [vmem:[#allocation3 + $0x82] sm:$0xff]
    %v4443 = vld [vmem:[#allocation3 + $0x92] sm:$0xff]
    %v4444 = vld [vmem:[#allocation3 + $0x9a] sm:$0xff]
    %v4445 = vld [vmem:[#allocation3 + $0xaa] sm:$0xff]
    %v4446 = vld [vmem:[#allocation3 + $0xb2] sm:$0xff]
    %v4447 = vld [vmem:[#allocation3 + $0xc2] sm:$0xff]
    %v4448 = vld [vmem:[#allocation3 + $0xca] sm:$0xff]
    %v4449 = vld [vmem:[#allocation3 + $0xda] sm:$0xff]
    %v4450 = vld [vmem:[#allocation3 + $0xe2] sm:$0xff]
    %v4451 = vld [vmem:[#allocation3 + $0xf2] sm:$0xff]
    %v4452 = vld [vmem:[#allocation3 + $0xfa] sm:$0xff]
    %v4453 = vld [vmem:[#allocation3 + $0x10a] sm:$0xff]
    %v4454 = vld [vmem:[#allocation3 + $0x112] sm:$0xff]
    %v4455 = vld [vmem:[#allocation3 + $0x122] sm:$0xff]
    %v4456 = vld [vmem:[#allocation3 + $0x12a] sm:$0xff]
    %v4457 = vld [vmem:[#allocation3 + $0x13a] sm:$0xff]
    %v4458 = vld [vmem:[#allocation3 + $0x142] sm:$0xff]
    %v4459 = vld [vmem:[#allocation3 + $0x152] sm:$0xff]
    %v4460 = vld [vmem:[#allocation3 + $0x15a] sm:$0xff]
    %v4461 = vld [vmem:[#allocation3 + $0x16a] sm:$0xff]
    %v4462 = vld [vmem:[#allocation3 + $0x172] sm:$0xff]
    %v4463 = vld [vmem:[#allocation3 + $0x1b2] sm:$0xff]
    %v4464 = vld [vmem:[#allocation3 + $0x1ba] sm:$0xff]
    %v4465 = vld [vmem:[#allocation3 + $0x1ca] sm:$0xff]
    %v4466 = vld [vmem:[#allocation3 + $0x1d2] sm:$0xff]
    %v4467 = vld [vmem:[#allocation3 + $0x1e2] sm:$0xff]
    %v4468 = vld [vmem:[#allocation3 + $0x1ea] sm:$0xff]
    %v4469 = vld [vmem:[#allocation3 + $0x1fa] sm:$0xff]
    %v4470 = vld [vmem:[#allocation3 + $0x202] sm:$0xff]
    %v4471 = vld [vmem:[#allocation3 + $0x212] sm:$0xff]
    %v4472 = vld [vmem:[#allocation3 + $0x21a] sm:$0xff]
    %v4473 = vld [vmem:[#allocation3 + $0x22a] sm:$0xff]
    %v4474 = vld [vmem:[#allocation3 + $0x232] sm:$0xff]
    %v4475 = vld [vmem:[#allocation3 + $0x242] sm:$0xff]
    %v4476 = vld [vmem:[#allocation3 + $0x24a] sm:$0xff]
    %v4477 = vld [vmem:[#allocation3 + $0x25a] sm:$0xff]
    %v4478 = vld [vmem:[#allocation3 + $0x262] sm:$0xff]
    %v4479 = vld [vmem:[#allocation3 + $0x272] sm:$0xff]
    %v4480 = vld [vmem:[#allocation3 + $0x27a] sm:$0xff]
    %v4481 = vld [vmem:[#allocation3 + $0x28a] sm:$0xff]
    %v4482 = vld [vmem:[#allocation3 + $0x292] sm:$0xff]
    %v4483 = vld [vmem:[#allocation3 + $0x2a2] sm:$0xff]
    %v4484 = vld [vmem:[#allocation3 + $0x2aa] sm:$0xff]
    %v4485 = vld [vmem:[#allocation3 + $0x2ba] sm:$0xff]
    %v4486 = vld [vmem:[#allocation3 + $0x2c2] sm:$0xff]
    %v4487 = vld [vmem:[#allocation3 + $0x2d2] sm:$0xff]
    %v4488 = vld [vmem:[#allocation3 + $0x2da] sm:$0xff]
    %v4489 = vld [vmem:[#allocation3 + $0x2ea] sm:$0xff]
    %v4490 = vld [vmem:[#allocation3 + $0x2f2] sm:$0xff]
    %v4491 = vld [vmem:[#allocation3 + $0x302] sm:$0xff]
    %v4492 = vld [vmem:[#allocation3 + $0x30a] sm:$0xff]
    %v4493 = vld [vmem:[#allocation3 + $0x31a] sm:$0xff]
    %v4494 = vld [vmem:[#allocation3 + $0x322] sm:$0xff]
    %v4495 = vld [vmem:[%s4238] sm:$0xff]
    %v4496 = vld [vmem:[%s4238 + $0x8] sm:$0xff]
    %v4497 = vld [vmem:[%s4238 + $0x18] sm:$0xff]
    %v4498 = vld [vmem:[%s4238 + $0x20] sm:$0xff]
    %v4499 = vld [vmem:[%s4238 + $0x30] sm:$0xff]
    %v4500 = vld [vmem:[%s4238 + $0x38] sm:$0xff]
    %v4501 = vld [vmem:[%s4238 + $0x48] sm:$0xff]
    %v4502 = vld [vmem:[%s4238 + $0x50] sm:$0xff]
    %v4503 = vld [vmem:[%s4238 + $0x60] sm:$0xff]
    %v4504 = vld [vmem:[%s4238 + $0x68] sm:$0xff]
    %v4505 = vld [vmem:[%s4238 + $0x78] sm:$0xff]
    %v4506 = vld [vmem:[%s4238 + $0x80] sm:$0xff]
    %v4507 = vld [vmem:[%s4238 + $0x90] sm:$0xff]
    %v4508 = vld [vmem:[%s4238 + $0x98] sm:$0xff]
    %v4509 = vld [vmem:[%s4238 + $0xa8] sm:$0xff]
    %v4510 = vld [vmem:[%s4238 + $0xb0] sm:$0xff]
    %v4511 = vld [vmem:[%s4238 + $0xc0] sm:$0xff]
    %v4512 = vld [vmem:[%s4238 + $0xc8] sm:$0xff]
    %v4513 = vld [vmem:[%s4238 + $0xd8] sm:$0xff]
    %v4514 = vld [vmem:[%s4238 + $0xe0] sm:$0xff]
    %v4515 = vld [vmem:[%s4238 + $0xf0] sm:$0xff]
    %v4516 = vld [vmem:[%s4238 + $0xf8] sm:$0xff]
    %v4517 = vld [vmem:[%s4238 + $0x108] sm:$0xff]
    %v4518 = vld [vmem:[%s4238 + $0x110] sm:$0xff]
    %v4519 = vld [vmem:[%s4238 + $0x120] sm:$0xff]
    %v4520 = vld [vmem:[%s4238 + $0x128] sm:$0xff]
    %v4521 = vld [vmem:[%s4238 + $0x138] sm:$0xff]
    %v4522 = vld [vmem:[%s4238 + $0x140] sm:$0xff]
    %v4523 = vld [vmem:[%s4238 + $0x150] sm:$0xff]
    %v4524 = vld [vmem:[%s4238 + $0x158] sm:$0xff]
    %v4525 = vld [vmem:[%s4238 + $0x168] sm:$0xff]
    %v4526 = vld [vmem:[%s4238 + $0x170] sm:$0xff]
    %v4527 = vld [vmem:[%s4238 + $0x1b0] sm:$0xff]
    %v4528 = vld [vmem:[%s4238 + $0x1b8] sm:$0xff]
    %v4529 = vld [vmem:[%s4238 + $0x1c8] sm:$0xff]
    %v4530 = vld [vmem:[%s4238 + $0x1d0] sm:$0xff]
    %v4531 = vld [vmem:[%s4238 + $0x1e0] sm:$0xff]
    %v4532 = vld [vmem:[%s4238 + $0x1e8] sm:$0xff]
    %v4533 = vld [vmem:[%s4238 + $0x1f8] sm:$0xff]
    %v4534 = vld [vmem:[%s4238 + $0x200] sm:$0xff]
    %v4535 = vld [vmem:[%s4238 + $0x210] sm:$0xff]
    %v4536 = vld [vmem:[%s4238 + $0x218] sm:$0xff]
    %v4537 = vld [vmem:[%s4238 + $0x228] sm:$0xff]
    %v4538 = vld [vmem:[%s4238 + $0x230] sm:$0xff]
    %v4539 = vld [vmem:[%s4238 + $0x240] sm:$0xff]
    %v4540 = vld [vmem:[%s4238 + $0x248] sm:$0xff]
    %v4541 = vld [vmem:[%s4238 + $0x258] sm:$0xff]
    %v4542 = vld [vmem:[%s4238 + $0x260] sm:$0xff]
    %v4543 = vld [vmem:[%s4238 + $0x270] sm:$0xff]
    %v4544 = vld [vmem:[%s4238 + $0x278] sm:$0xff]
    %v4545 = vld [vmem:[%s4238 + $0x288] sm:$0xff]
    %v4546 = vld [vmem:[%s4238 + $0x290] sm:$0xff]
    %v4547 = vld [vmem:[%s4238 + $0x2a0] sm:$0xff]
    %v4548 = vld [vmem:[%s4238 + $0x2a8] sm:$0xff]
    %v4549 = vld [vmem:[%s4238 + $0x2b8] sm:$0xff]
    %v4550 = vld [vmem:[%s4238 + $0x2c0] sm:$0xff]
    %v4551 = vld [vmem:[%s4238 + $0x2d0] sm:$0xff]
    %v4552 = vld [vmem:[%s4238 + $0x2d8] sm:$0xff]
    %v4553 = vld [vmem:[%s4238 + $0x2e8] sm:$0xff]
    %v4554 = vld [vmem:[%s4238 + $0x2f0] sm:$0xff]
    %v4555 = vld [vmem:[%s4238 + $0x300] sm:$0xff]
    %v4556 = vld [vmem:[%s4238 + $0x308] sm:$0xff]
    %v4557 = vld [vmem:[%s4238 + $0x318] sm:$0xff]
    %v4558 = vld [vmem:[%s4238 + $0x320] sm:$0xff]
    %v4559 = vld [vmem:[%s4238 + $0x1] sm:$0xff]
    %v4560 = vld [vmem:[%s4238 + $0x9] sm:$0xff]
    %v4561 = vld [vmem:[%s4238 + $0x19] sm:$0xff]
    %v4562 = vld [vmem:[%s4238 + $0x21] sm:$0xff]
    %v4563 = vld [vmem:[%s4238 + $0x31] sm:$0xff]
    %v4564 = vld [vmem:[%s4238 + $0x39] sm:$0xff]
    %v4565 = vld [vmem:[%s4238 + $0x49] sm:$0xff]
    %v4566 = vld [vmem:[%s4238 + $0x51] sm:$0xff]
    %v4567 = vld [vmem:[%s4238 + $0x61] sm:$0xff]
    %v4568 = vld [vmem:[%s4238 + $0x69] sm:$0xff]
    %v4569 = vld [vmem:[%s4238 + $0x79] sm:$0xff]
    %v4570 = vld [vmem:[%s4238 + $0x81] sm:$0xff]
    %v4571 = vld [vmem:[%s4238 + $0x91] sm:$0xff]
    %v4572 = vld [vmem:[%s4238 + $0x99] sm:$0xff]
    %v4573 = vld [vmem:[%s4238 + $0xa9] sm:$0xff]
    %v4574 = vld [vmem:[%s4238 + $0xb1] sm:$0xff]
    %v4575 = vld [vmem:[%s4238 + $0xc1] sm:$0xff]
    %v4576 = vld [vmem:[%s4238 + $0xc9] sm:$0xff]
    %v4577 = vld [vmem:[%s4238 + $0xd9] sm:$0xff]
    %v4578 = vld [vmem:[%s4238 + $0xe1] sm:$0xff]
    %v4579 = vld [vmem:[%s4238 + $0xf1] sm:$0xff]
    %v4580 = vld [vmem:[%s4238 + $0xf9] sm:$0xff]
    %v4581 = vld [vmem:[%s4238 + $0x109] sm:$0xff]
    %v4582 = vld [vmem:[%s4238 + $0x111] sm:$0xff]
    %v4583 = vld [vmem:[%s4238 + $0x121] sm:$0xff]
    %v4584 = vld [vmem:[%s4238 + $0x129] sm:$0xff]
    %v4585 = vld [vmem:[%s4238 + $0x139] sm:$0xff]
    %v4586 = vld [vmem:[%s4238 + $0x141] sm:$0xff]
    %v4587 = vld [vmem:[%s4238 + $0x151] sm:$0xff]
    %v4588 = vld [vmem:[%s4238 + $0x159] sm:$0xff]
    %v4589 = vld [vmem:[%s4238 + $0x169] sm:$0xff]
    %v4590 = vld [vmem:[%s4238 + $0x171] sm:$0xff]
    %v4591 = vld [vmem:[%s4238 + $0x1b1] sm:$0xff]
    %v4592 = vld [vmem:[%s4238 + $0x1b9] sm:$0xff]
    %v4593 = vld [vmem:[%s4238 + $0x1c9] sm:$0xff]
    %v4594 = vld [vmem:[%s4238 + $0x1d1] sm:$0xff]
    %v4595 = vld [vmem:[%s4238 + $0x1e1] sm:$0xff]
    %v4596 = vld [vmem:[%s4238 + $0x1e9] sm:$0xff]
    %v4597 = vld [vmem:[%s4238 + $0x1f9] sm:$0xff]
    %v4598 = vld [vmem:[%s4238 + $0x201] sm:$0xff]
    %v4599 = vld [vmem:[%s4238 + $0x211] sm:$0xff]
    %v4600 = vld [vmem:[%s4238 + $0x219] sm:$0xff]
    %v4601 = vld [vmem:[%s4238 + $0x229] sm:$0xff]
    %v4602 = vld [vmem:[%s4238 + $0x231] sm:$0xff]
    %v4603 = vld [vmem:[%s4238 + $0x241] sm:$0xff]
    %v4604 = vld [vmem:[%s4238 + $0x249] sm:$0xff]
    %v4605 = vld [vmem:[%s4238 + $0x259] sm:$0xff]
    %v4606 = vld [vmem:[%s4238 + $0x261] sm:$0xff]
    %v4607 = vld [vmem:[%s4238 + $0x271] sm:$0xff]
    %v4608 = vld [vmem:[%s4238 + $0x279] sm:$0xff]
    %v4609 = vld [vmem:[%s4238 + $0x289] sm:$0xff]
    %v4610 = vld [vmem:[%s4238 + $0x291] sm:$0xff]
    %v4611 = vld [vmem:[%s4238 + $0x2a1] sm:$0xff]
    %v4612 = vld [vmem:[%s4238 + $0x2a9] sm:$0xff]
    %v4613 = vld [vmem:[%s4238 + $0x2b9] sm:$0xff]
    %v4614 = vld [vmem:[%s4238 + $0x2c1] sm:$0xff]
    %v4615 = vld [vmem:[%s4238 + $0x2d1] sm:$0xff]
    %v4616 = vld [vmem:[%s4238 + $0x2d9] sm:$0xff]
    %v4617 = vld [vmem:[%s4238 + $0x2e9] sm:$0xff]
    %v4618 = vld [vmem:[%s4238 + $0x2f1] sm:$0xff]
    %v4619 = vld [vmem:[%s4238 + $0x301] sm:$0xff]
    %v4620 = vld [vmem:[%s4238 + $0x309] sm:$0xff]
    %v4621 = vld [vmem:[%s4238 + $0x319] sm:$0xff]
    %v4622 = vld [vmem:[%s4238 + $0x321] sm:$0xff]
    %v4623 = vld [vmem:[%s4238 + $0x2] sm:$0xff]
    %v4624 = vld [vmem:[%s4238 + $0xa] sm:$0xff]
    %v4625 = vld [vmem:[%s4238 + $0x1a] sm:$0xff]
    %v4626 = vld [vmem:[%s4238 + $0x22] sm:$0xff]
    %v4627 = vld [vmem:[%s4238 + $0x32] sm:$0xff]
    %v4628 = vld [vmem:[%s4238 + $0x3a] sm:$0xff]
    %v4629 = vld [vmem:[%s4238 + $0x4a] sm:$0xff]
    %v4630 = vld [vmem:[%s4238 + $0x52] sm:$0xff]
    %v4631 = vld [vmem:[%s4238 + $0x62] sm:$0xff]
    %v4632 = vld [vmem:[%s4238 + $0x6a] sm:$0xff]
    %v4633 = vld [vmem:[%s4238 + $0x7a] sm:$0xff]
    %v4634 = vld [vmem:[%s4238 + $0x82] sm:$0xff]
    %v4635 = vld [vmem:[%s4238 + $0x92] sm:$0xff]
    %v4636 = vld [vmem:[%s4238 + $0x9a] sm:$0xff]
    %v4637 = vld [vmem:[%s4238 + $0xaa] sm:$0xff]
    %v4638 = vld [vmem:[%s4238 + $0xb2] sm:$0xff]
    %v4639 = vld [vmem:[%s4238 + $0xc2] sm:$0xff]
    %v4640 = vld [vmem:[%s4238 + $0xca] sm:$0xff]
    %v4641 = vld [vmem:[%s4238 + $0xda] sm:$0xff]
    %v4642 = vld [vmem:[%s4238 + $0xe2] sm:$0xff]
    %v4643 = vld [vmem:[%s4238 + $0xf2] sm:$0xff]
    %v4644 = vld [vmem:[%s4238 + $0xfa] sm:$0xff]
    %v4645 = vld [vmem:[%s4238 + $0x10a] sm:$0xff]
    %v4646 = vld [vmem:[%s4238 + $0x112] sm:$0xff]
    %v4647 = vld [vmem:[%s4238 + $0x122] sm:$0xff]
    %v4648 = vld [vmem:[%s4238 + $0x12a] sm:$0xff]
    %v4649 = vld [vmem:[%s4238 + $0x13a] sm:$0xff]
    %v4650 = vld [vmem:[%s4238 + $0x142] sm:$0xff]
    %v4651 = vld [vmem:[%s4238 + $0x152] sm:$0xff]
    %v4652 = vld [vmem:[%s4238 + $0x15a] sm:$0xff]
    %v4653 = vld [vmem:[%s4238 + $0x16a] sm:$0xff]
    %v4654 = vld [vmem:[%s4238 + $0x172] sm:$0xff]
    %v4655 = vld [vmem:[%s4238 + $0x1b2] sm:$0xff]
    %v4656 = vld [vmem:[%s4238 + $0x1ba] sm:$0xff]
    %v4657 = vld [vmem:[%s4238 + $0x1ca] sm:$0xff]
    %v4658 = vld [vmem:[%s4238 + $0x1d2] sm:$0xff]
    %v4659 = vld [vmem:[%s4238 + $0x1e2] sm:$0xff]
    %v4660 = vld [vmem:[%s4238 + $0x1ea] sm:$0xff]
    %v4661 = vld [vmem:[%s4238 + $0x1fa] sm:$0xff]
    %v4662 = vld [vmem:[%s4238 + $0x202] sm:$0xff]
    %v4663 = vld [vmem:[%s4238 + $0x212] sm:$0xff]
    %v4664 = vld [vmem:[%s4238 + $0x21a] sm:$0xff]
    %v4665 = vld [vmem:[%s4238 + $0x22a] sm:$0xff]
    %v4666 = vld [vmem:[%s4238 + $0x232] sm:$0xff]
    %v4667 = vld [vmem:[%s4238 + $0x242] sm:$0xff]
    %v4668 = vld [vmem:[%s4238 + $0x24a] sm:$0xff]
    %v4669 = vld [vmem:[%s4238 + $0x25a] sm:$0xff]
    %v4670 = vld [vmem:[%s4238 + $0x262] sm:$0xff]
    %v4671 = vld [vmem:[%s4238 + $0x272] sm:$0xff]
    %v4672 = vld [vmem:[%s4238 + $0x27a] sm:$0xff]
    %v4673 = vld [vmem:[%s4238 + $0x28a] sm:$0xff]
    %v4674 = vld [vmem:[%s4238 + $0x292] sm:$0xff]
    %v4675 = vld [vmem:[%s4238 + $0x2a2] sm:$0xff]
    %v4676 = vld [vmem:[%s4238 + $0x2aa] sm:$0xff]
    %v4677 = vld [vmem:[%s4238 + $0x2ba] sm:$0xff]
    %v4678 = vld [vmem:[%s4238 + $0x2c2] sm:$0xff]
    %v4679 = vld [vmem:[%s4238 + $0x2d2] sm:$0xff]
    %v4680 = vld [vmem:[%s4238 + $0x2da] sm:$0xff]
    %v4681 = vld [vmem:[%s4238 + $0x2ea] sm:$0xff]
    %v4682 = vld [vmem:[%s4238 + $0x2f2] sm:$0xff]
    %v4683 = vld [vmem:[%s4238 + $0x302] sm:$0xff]
    %v4684 = vld [vmem:[%s4238 + $0x30a] sm:$0xff]
    %v4685 = vld [vmem:[%s4238 + $0x31a] sm:$0xff]
    %v4686 = vld [vmem:[%s4238 + $0x322] sm:$0xff]
    %s4687 = scalar_lea.vmem [#allocation3], 48
    %v4688 = vld [vmem:[%s4687] sm:$0xff]
    %v4689 = vld [vmem:[%s4687 + $0x8] sm:$0xff]
    %v4690 = vld [vmem:[%s4687 + $0x18] sm:$0xff]
    %v4691 = vld [vmem:[%s4687 + $0x20] sm:$0xff]
    %v4692 = vld [vmem:[%s4687 + $0x30] sm:$0xff]
    %v4693 = vld [vmem:[%s4687 + $0x38] sm:$0xff]
    %v4694 = vld [vmem:[%s4687 + $0x48] sm:$0xff]
    %v4695 = vld [vmem:[%s4687 + $0x50] sm:$0xff]
    %v4696 = vld [vmem:[%s4687 + $0x60] sm:$0xff]
    %v4697 = vld [vmem:[%s4687 + $0x68] sm:$0xff]
    %v4698 = vld [vmem:[%s4687 + $0x78] sm:$0xff]
    %v4699 = vld [vmem:[%s4687 + $0x80] sm:$0xff]
    %v4700 = vld [vmem:[%s4687 + $0x90] sm:$0xff]
    %v4701 = vld [vmem:[%s4687 + $0x98] sm:$0xff]
    %v4702 = vld [vmem:[%s4687 + $0xa8] sm:$0xff]
    %v4703 = vld [vmem:[%s4687 + $0xb0] sm:$0xff]
    %v4704 = vld [vmem:[%s4687 + $0xc0] sm:$0xff]
    %v4705 = vld [vmem:[%s4687 + $0xc8] sm:$0xff]
    %v4706 = vld [vmem:[%s4687 + $0xd8] sm:$0xff]
    %v4707 = vld [vmem:[%s4687 + $0xe0] sm:$0xff]
    %v4708 = vld [vmem:[%s4687 + $0xf0] sm:$0xff]
    %v4709 = vld [vmem:[%s4687 + $0xf8] sm:$0xff]
    %v4710 = vld [vmem:[%s4687 + $0x108] sm:$0xff]
    %v4711 = vld [vmem:[%s4687 + $0x110] sm:$0xff]
    %v4712 = vld [vmem:[%s4687 + $0x120] sm:$0xff]
    %v4713 = vld [vmem:[%s4687 + $0x128] sm:$0xff]
    %v4714 = vld [vmem:[%s4687 + $0x138] sm:$0xff]
    %v4715 = vld [vmem:[%s4687 + $0x140] sm:$0xff]
    %v4716 = vld [vmem:[%s4687 + $0x150] sm:$0xff]
    %v4717 = vld [vmem:[%s4687 + $0x158] sm:$0xff]
    %v4718 = vld [vmem:[%s4687 + $0x168] sm:$0xff]
    %v4719 = vld [vmem:[%s4687 + $0x170] sm:$0xff]
    %v4720 = vld [vmem:[%s4687 + $0x1b0] sm:$0xff]
    %v4721 = vld [vmem:[%s4687 + $0x1b8] sm:$0xff]
    %v4722 = vld [vmem:[%s4687 + $0x1c8] sm:$0xff]
    %v4723 = vld [vmem:[%s4687 + $0x1d0] sm:$0xff]
    %v4724 = vld [vmem:[%s4687 + $0x1e0] sm:$0xff]
    %v4725 = vld [vmem:[%s4687 + $0x1e8] sm:$0xff]
    %v4726 = vld [vmem:[%s4687 + $0x1f8] sm:$0xff]
    %v4727 = vld [vmem:[%s4687 + $0x200] sm:$0xff]
    %v4728 = vld [vmem:[%s4687 + $0x210] sm:$0xff]
    %v4729 = vld [vmem:[%s4687 + $0x218] sm:$0xff]
    %v4730 = vld [vmem:[%s4687 + $0x228] sm:$0xff]
    %v4731 = vld [vmem:[%s4687 + $0x230] sm:$0xff]
    %v4732 = vld [vmem:[%s4687 + $0x240] sm:$0xff]
    %v4733 = vld [vmem:[%s4687 + $0x248] sm:$0xff]
    %v4734 = vld [vmem:[%s4687 + $0x258] sm:$0xff]
    %v4735 = vld [vmem:[%s4687 + $0x260] sm:$0xff]
    %v4736 = vld [vmem:[%s4687 + $0x270] sm:$0xff]
    %v4737 = vld [vmem:[%s4687 + $0x278] sm:$0xff]
    %v4738 = vld [vmem:[%s4687 + $0x288] sm:$0xff]
    %v4739 = vld [vmem:[%s4687 + $0x290] sm:$0xff]
    %v4740 = vld [vmem:[%s4687 + $0x2a0] sm:$0xff]
    %v4741 = vld [vmem:[%s4687 + $0x2a8] sm:$0xff]
    %v4742 = vld [vmem:[%s4687 + $0x2b8] sm:$0xff]
    %v4743 = vld [vmem:[%s4687 + $0x2c0] sm:$0xff]
    %v4744 = vld [vmem:[%s4687 + $0x2d0] sm:$0xff]
    %v4745 = vld [vmem:[%s4687 + $0x2d8] sm:$0xff]
    %v4746 = vld [vmem:[%s4687 + $0x2e8] sm:$0xff]
    %v4747 = vld [vmem:[%s4687 + $0x2f0] sm:$0xff]
    %v4748 = vld [vmem:[%s4687 + $0x300] sm:$0xff]
    %v4749 = vld [vmem:[%s4687 + $0x308] sm:$0xff]
    %v4750 = vld [vmem:[%s4687 + $0x318] sm:$0xff]
    %v4751 = vld [vmem:[%s4687 + $0x320] sm:$0xff]
    %v4752 = vld [vmem:[%s4687 + $0x1] sm:$0xff]
    %v4753 = vld [vmem:[%s4687 + $0x9] sm:$0xff]
    %v4754 = vld [vmem:[%s4687 + $0x19] sm:$0xff]
    %v4755 = vld [vmem:[%s4687 + $0x21] sm:$0xff]
    %v4756 = vld [vmem:[%s4687 + $0x31] sm:$0xff]
    %v4757 = vld [vmem:[%s4687 + $0x39] sm:$0xff]
    %v4758 = vld [vmem:[%s4687 + $0x49] sm:$0xff]
    %v4759 = vld [vmem:[%s4687 + $0x51] sm:$0xff]
    %v4760 = vld [vmem:[%s4687 + $0x61] sm:$0xff]
    %v4761 = vld [vmem:[%s4687 + $0x69] sm:$0xff]
    %v4762 = vld [vmem:[%s4687 + $0x79] sm:$0xff]
    %v4763 = vld [vmem:[%s4687 + $0x81] sm:$0xff]
    %v4764 = vld [vmem:[%s4687 + $0x91] sm:$0xff]
    %v4765 = vld [vmem:[%s4687 + $0x99] sm:$0xff]
    %v4766 = vld [vmem:[%s4687 + $0xa9] sm:$0xff]
    %v4767 = vld [vmem:[%s4687 + $0xb1] sm:$0xff]
    %v4768 = vld [vmem:[%s4687 + $0xc1] sm:$0xff]
    %v4769 = vld [vmem:[%s4687 + $0xc9] sm:$0xff]
    %v4770 = vld [vmem:[%s4687 + $0xd9] sm:$0xff]
    %v4771 = vld [vmem:[%s4687 + $0xe1] sm:$0xff]
    %v4772 = vld [vmem:[%s4687 + $0xf1] sm:$0xff]
    %v4773 = vld [vmem:[%s4687 + $0xf9] sm:$0xff]
    %v4774 = vld [vmem:[%s4687 + $0x109] sm:$0xff]
    %v4775 = vld [vmem:[%s4687 + $0x111] sm:$0xff]
    %v4776 = vld [vmem:[%s4687 + $0x121] sm:$0xff]
    %v4777 = vld [vmem:[%s4687 + $0x129] sm:$0xff]
    %v4778 = vld [vmem:[%s4687 + $0x139] sm:$0xff]
    %v4779 = vld [vmem:[%s4687 + $0x141] sm:$0xff]
    %v4780 = vld [vmem:[%s4687 + $0x151] sm:$0xff]
    %v4781 = vld [vmem:[%s4687 + $0x159] sm:$0xff]
    %v4782 = vld [vmem:[%s4687 + $0x169] sm:$0xff]
    %v4783 = vld [vmem:[%s4687 + $0x171] sm:$0xff]
    %v4784 = vld [vmem:[%s4687 + $0x1b1] sm:$0xff]
    %v4785 = vld [vmem:[%s4687 + $0x1b9] sm:$0xff]
    %v4786 = vld [vmem:[%s4687 + $0x1c9] sm:$0xff]
    %v4787 = vld [vmem:[%s4687 + $0x1d1] sm:$0xff]
    %v4788 = vld [vmem:[%s4687 + $0x1e1] sm:$0xff]
    %v4789 = vld [vmem:[%s4687 + $0x1e9] sm:$0xff]
    %v4790 = vld [vmem:[%s4687 + $0x1f9] sm:$0xff]
    %v4791 = vld [vmem:[%s4687 + $0x201] sm:$0xff]
    %v4792 = vld [vmem:[%s4687 + $0x211] sm:$0xff]
    %v4793 = vld [vmem:[%s4687 + $0x219] sm:$0xff]
    %v4794 = vld [vmem:[%s4687 + $0x229] sm:$0xff]
    %v4795 = vld [vmem:[%s4687 + $0x231] sm:$0xff]
    %v4796 = vld [vmem:[%s4687 + $0x241] sm:$0xff]
    %v4797 = vld [vmem:[%s4687 + $0x249] sm:$0xff]
    %v4798 = vld [vmem:[%s4687 + $0x259] sm:$0xff]
    %v4799 = vld [vmem:[%s4687 + $0x261] sm:$0xff]
    %v4800 = vld [vmem:[%s4687 + $0x271] sm:$0xff]
    %v4801 = vld [vmem:[%s4687 + $0x279] sm:$0xff]
    %v4802 = vld [vmem:[%s4687 + $0x289] sm:$0xff]
    %v4803 = vld [vmem:[%s4687 + $0x291] sm:$0xff]
    %v4804 = vld [vmem:[%s4687 + $0x2a1] sm:$0xff]
    %v4805 = vld [vmem:[%s4687 + $0x2a9] sm:$0xff]
    %v4806 = vld [vmem:[%s4687 + $0x2b9] sm:$0xff]
    %v4807 = vld [vmem:[%s4687 + $0x2c1] sm:$0xff]
    %v4808 = vld [vmem:[%s4687 + $0x2d1] sm:$0xff]
    %v4809 = vld [vmem:[%s4687 + $0x2d9] sm:$0xff]
    %v4810 = vld [vmem:[%s4687 + $0x2e9] sm:$0xff]
    %v4811 = vld [vmem:[%s4687 + $0x2f1] sm:$0xff]
    %v4812 = vld [vmem:[%s4687 + $0x301] sm:$0xff]
    %v4813 = vld [vmem:[%s4687 + $0x309] sm:$0xff]
    %v4814 = vld [vmem:[%s4687 + $0x319] sm:$0xff]
    %v4815 = vld [vmem:[%s4687 + $0x321] sm:$0xff]
    %v4816 = vld [vmem:[%s4687 + $0x2] sm:$0xff]
    %v4817 = vld [vmem:[%s4687 + $0xa] sm:$0xff]
    %v4818 = vld [vmem:[%s4687 + $0x1a] sm:$0xff]
    %v4819 = vld [vmem:[%s4687 + $0x22] sm:$0xff]
    %v4820 = vld [vmem:[%s4687 + $0x32] sm:$0xff]
    %v4821 = vld [vmem:[%s4687 + $0x3a] sm:$0xff]
    %v4822 = vld [vmem:[%s4687 + $0x4a] sm:$0xff]
    %v4823 = vld [vmem:[%s4687 + $0x52] sm:$0xff]
    %v4824 = vld [vmem:[%s4687 + $0x62] sm:$0xff]
    %v4825 = vld [vmem:[%s4687 + $0x6a] sm:$0xff]
    %v4826 = vld [vmem:[%s4687 + $0x7a] sm:$0xff]
    %v4827 = vld [vmem:[%s4687 + $0x82] sm:$0xff]
    %v4828 = vld [vmem:[%s4687 + $0x92] sm:$0xff]
    %v4829 = vld [vmem:[%s4687 + $0x9a] sm:$0xff]
    %v4830 = vld [vmem:[%s4687 + $0xaa] sm:$0xff]
    %v4831 = vld [vmem:[%s4687 + $0xb2] sm:$0xff]
    %v4832 = vld [vmem:[%s4687 + $0xc2] sm:$0xff]
    %v4833 = vld [vmem:[%s4687 + $0xca] sm:$0xff]
    %v4834 = vld [vmem:[%s4687 + $0xda] sm:$0xff]
    %v4835 = vld [vmem:[%s4687 + $0xe2] sm:$0xff]
    %v4836 = vld [vmem:[%s4687 + $0xf2] sm:$0xff]
    %v4837 = vld [vmem:[%s4687 + $0xfa] sm:$0xff]
    %v4838 = vld [vmem:[%s4687 + $0x10a] sm:$0xff]
    %v4839 = vld [vmem:[%s4687 + $0x112] sm:$0xff]
    %v4840 = vld [vmem:[%s4687 + $0x122] sm:$0xff]
    %v4841 = vld [vmem:[%s4687 + $0x12a] sm:$0xff]
    %v4842 = vld [vmem:[%s4687 + $0x13a] sm:$0xff]
    %v4843 = vld [vmem:[%s4687 + $0x142] sm:$0xff]
    %v4844 = vld [vmem:[%s4687 + $0x152] sm:$0xff]
    %v4845 = vld [vmem:[%s4687 + $0x15a] sm:$0xff]
    %v4846 = vld [vmem:[%s4687 + $0x16a] sm:$0xff]
    %v4847 = vld [vmem:[%s4687 + $0x172] sm:$0xff]
    %v4848 = vld [vmem:[%s4687 + $0x1b2] sm:$0xff]
    %v4849 = vld [vmem:[%s4687 + $0x1ba] sm:$0xff]
    %v4850 = vld [vmem:[%s4687 + $0x1ca] sm:$0xff]
    %v4851 = vld [vmem:[%s4687 + $0x1d2] sm:$0xff]
    %v4852 = vld [vmem:[%s4687 + $0x1e2] sm:$0xff]
    %v4853 = vld [vmem:[%s4687 + $0x1ea] sm:$0xff]
    %v4854 = vld [vmem:[%s4687 + $0x1fa] sm:$0xff]
    %v4855 = vld [vmem:[%s4687 + $0x202] sm:$0xff]
    %v4856 = vld [vmem:[%s4687 + $0x212] sm:$0xff]
    %v4857 = vld [vmem:[%s4687 + $0x21a] sm:$0xff]
    %v4858 = vld [vmem:[%s4687 + $0x22a] sm:$0xff]
    %v4859 = vld [vmem:[%s4687 + $0x232] sm:$0xff]
    %v4860 = vld [vmem:[%s4687 + $0x242] sm:$0xff]
    %v4861 = vld [vmem:[%s4687 + $0x24a] sm:$0xff]
    %v4862 = vld [vmem:[%s4687 + $0x25a] sm:$0xff]
    %v4863 = vld [vmem:[%s4687 + $0x262] sm:$0xff]
    %v4864 = vld [vmem:[%s4687 + $0x272] sm:$0xff]
    %v4865 = vld [vmem:[%s4687 + $0x27a] sm:$0xff]
    %v4866 = vld [vmem:[%s4687 + $0x28a] sm:$0xff]
    %v4867 = vld [vmem:[%s4687 + $0x292] sm:$0xff]
    %v4868 = vld [vmem:[%s4687 + $0x2a2] sm:$0xff]
    %v4869 = vld [vmem:[%s4687 + $0x2aa] sm:$0xff]
    %v4870 = vld [vmem:[%s4687 + $0x2ba] sm:$0xff]
    %v4871 = vld [vmem:[%s4687 + $0x2c2] sm:$0xff]
    %v4872 = vld [vmem:[%s4687 + $0x2d2] sm:$0xff]
    %v4873 = vld [vmem:[%s4687 + $0x2da] sm:$0xff]
    %v4874 = vld [vmem:[%s4687 + $0x2ea] sm:$0xff]
    %v4875 = vld [vmem:[%s4687 + $0x2f2] sm:$0xff]
    %v4876 = vld [vmem:[%s4687 + $0x302] sm:$0xff]
    %v4877 = vld [vmem:[%s4687 + $0x30a] sm:$0xff]
    %v4878 = vld [vmem:[%s4687 + $0x31a] sm:$0xff]
    %v4879 = vld [vmem:[%s4687 + $0x322] sm:$0xff]
    %4944 = vrot.lane.b32.xlu0 %v4367, 32
    %v4945 = vpop.permute.xlu0 %4944
    %4946 = vrot.lane.b32.xlu0 %v4368, 32
    %v4947 = vpop.permute.xlu0 %4946
    %4948 = vrot.lane.b32.xlu0 %v4369, 32
    %v4949 = vpop.permute.xlu0 %4948
    %4950 = vrot.lane.b32.xlu0 %v4370, 32
    %v4951 = vpop.permute.xlu0 %4950
    %4952 = vrot.lane.b32.xlu0 %v4371, 32
    %v4953 = vpop.permute.xlu0 %4952
    %4954 = vrot.lane.b32.xlu0 %v4372, 32
    %v4955 = vpop.permute.xlu0 %4954
    %4956 = vrot.lane.b32.xlu0 %v4373, 32
    %v4957 = vpop.permute.xlu0 %4956
    %4958 = vrot.lane.b32.xlu0 %v4374, 32
    %v4959 = vpop.permute.xlu0 %4958
    %4960 = vrot.lane.b32.xlu0 %v4375, 32
    %v4961 = vpop.permute.xlu0 %4960
    %4962 = vrot.lane.b32.xlu0 %v4376, 32
    %v4963 = vpop.permute.xlu0 %4962
    %4964 = vrot.lane.b32.xlu0 %v4377, 32
    %v4965 = vpop.permute.xlu0 %4964
    %4966 = vrot.lane.b32.xlu0 %v4378, 32
    %v4967 = vpop.permute.xlu0 %4966
    %4968 = vrot.lane.b32.xlu0 %v4379, 32
    %v4969 = vpop.permute.xlu0 %4968
    %4970 = vrot.lane.b32.xlu0 %v4380, 32
    %v4971 = vpop.permute.xlu0 %4970
    %4972 = vrot.lane.b32.xlu0 %v4381, 32
    %v4973 = vpop.permute.xlu0 %4972
    %4974 = vrot.lane.b32.xlu0 %v4382, 32
    %v4975 = vpop.permute.xlu0 %4974
    %4976 = vrot.lane.b32.xlu0 %v4383, 32
    %v4977 = vpop.permute.xlu0 %4976
    %4978 = vrot.lane.b32.xlu0 %v4384, 32
    %v4979 = vpop.permute.xlu0 %4978
    %4980 = vrot.lane.b32.xlu0 %v4385, 32
    %v4981 = vpop.permute.xlu0 %4980
    %4982 = vrot.lane.b32.xlu0 %v4386, 32
    %v4983 = vpop.permute.xlu0 %4982
    %4984 = vrot.lane.b32.xlu0 %v4387, 32
    %v4985 = vpop.permute.xlu0 %4984
    %4986 = vrot.lane.b32.xlu0 %v4388, 32
    %v4987 = vpop.permute.xlu0 %4986
    %4988 = vrot.lane.b32.xlu0 %v4389, 32
    %v4989 = vpop.permute.xlu0 %4988
    %4990 = vrot.lane.b32.xlu0 %v4390, 32
    %v4991 = vpop.permute.xlu0 %4990
    %4992 = vrot.lane.b32.xlu0 %v4391, 32
    %v4993 = vpop.permute.xlu0 %4992
    %4994 = vrot.lane.b32.xlu0 %v4392, 32
    %v4995 = vpop.permute.xlu0 %4994
    %4996 = vrot.lane.b32.xlu0 %v4393, 32
    %v4997 = vpop.permute.xlu0 %4996
    %4998 = vrot.lane.b32.xlu0 %v4394, 32
    %v4999 = vpop.permute.xlu0 %4998
    %5000 = vrot.lane.b32.xlu0 %v4395, 32
    %v5001 = vpop.permute.xlu0 %5000
    %5002 = vrot.lane.b32.xlu0 %v4396, 32
    %v5003 = vpop.permute.xlu0 %5002
    %5004 = vrot.lane.b32.xlu0 %v4397, 32
    %v5005 = vpop.permute.xlu0 %5004
    %5006 = vrot.lane.b32.xlu0 %v4398, 32
    %v5007 = vpop.permute.xlu0 %5006
    %5008 = vrot.lane.b32.xlu0 %v4399, 32
    %v5009 = vpop.permute.xlu0 %5008
    %5010 = vrot.lane.b32.xlu0 %v4400, 32
    %v5011 = vpop.permute.xlu0 %5010
    %5012 = vrot.lane.b32.xlu0 %v4401, 32
    %v5013 = vpop.permute.xlu0 %5012
    %5014 = vrot.lane.b32.xlu0 %v4402, 32
    %v5015 = vpop.permute.xlu0 %5014
    %5016 = vrot.lane.b32.xlu0 %v4403, 32
    %v5017 = vpop.permute.xlu0 %5016
    %5018 = vrot.lane.b32.xlu0 %v4404, 32
    %v5019 = vpop.permute.xlu0 %5018
    %5020 = vrot.lane.b32.xlu0 %v4405, 32
    %v5021 = vpop.permute.xlu0 %5020
    %5022 = vrot.lane.b32.xlu0 %v4406, 32
    %v5023 = vpop.permute.xlu0 %5022
    %5024 = vrot.lane.b32.xlu0 %v4407, 32
    %v5025 = vpop.permute.xlu0 %5024
    %5026 = vrot.lane.b32.xlu0 %v4408, 32
    %v5027 = vpop.permute.xlu0 %5026
    %5028 = vrot.lane.b32.xlu0 %v4409, 32
    %v5029 = vpop.permute.xlu0 %5028
    %5030 = vrot.lane.b32.xlu0 %v4410, 32
    %v5031 = vpop.permute.xlu0 %5030
    %5032 = vrot.lane.b32.xlu0 %v4411, 32
    %v5033 = vpop.permute.xlu0 %5032
    %5034 = vrot.lane.b32.xlu0 %v4412, 32
    %v5035 = vpop.permute.xlu0 %5034
    %5036 = vrot.lane.b32.xlu0 %v4413, 32
    %v5037 = vpop.permute.xlu0 %5036
    %5038 = vrot.lane.b32.xlu0 %v4414, 32
    %v5039 = vpop.permute.xlu0 %5038
    %5040 = vrot.lane.b32.xlu0 %v4415, 32
    %v5041 = vpop.permute.xlu0 %5040
    %5042 = vrot.lane.b32.xlu0 %v4416, 32
    %v5043 = vpop.permute.xlu0 %5042
    %5044 = vrot.lane.b32.xlu0 %v4417, 32
    %v5045 = vpop.permute.xlu0 %5044
    %5046 = vrot.lane.b32.xlu0 %v4418, 32
    %v5047 = vpop.permute.xlu0 %5046
    %5048 = vrot.lane.b32.xlu0 %v4419, 32
    %v5049 = vpop.permute.xlu0 %5048
    %5050 = vrot.lane.b32.xlu0 %v4420, 32
    %v5051 = vpop.permute.xlu0 %5050
    %5052 = vrot.lane.b32.xlu0 %v4421, 32
    %v5053 = vpop.permute.xlu0 %5052
    %5054 = vrot.lane.b32.xlu0 %v4422, 32
    %v5055 = vpop.permute.xlu0 %5054
    %5056 = vrot.lane.b32.xlu0 %v4423, 32
    %v5057 = vpop.permute.xlu0 %5056
    %5058 = vrot.lane.b32.xlu0 %v4424, 32
    %v5059 = vpop.permute.xlu0 %5058
    %5060 = vrot.lane.b32.xlu0 %v4425, 32
    %v5061 = vpop.permute.xlu0 %5060
    %5062 = vrot.lane.b32.xlu0 %v4426, 32
    %v5063 = vpop.permute.xlu0 %5062
    %5064 = vrot.lane.b32.xlu0 %v4427, 32
    %v5065 = vpop.permute.xlu0 %5064
    %5066 = vrot.lane.b32.xlu0 %v4428, 32
    %v5067 = vpop.permute.xlu0 %5066
    %5068 = vrot.lane.b32.xlu0 %v4429, 32
    %v5069 = vpop.permute.xlu0 %5068
    %5070 = vrot.lane.b32.xlu0 %v4430, 32
    %v5071 = vpop.permute.xlu0 %5070
    %5200 = vrot.lane.b32.xlu0 %v4431, 64
    %v5201 = vpop.permute.xlu0 %5200
    %5202 = vrot.lane.b32.xlu0 %v4432, 64
    %v5203 = vpop.permute.xlu0 %5202
    %5204 = vrot.lane.b32.xlu0 %v4433, 64
    %v5205 = vpop.permute.xlu0 %5204
    %5206 = vrot.lane.b32.xlu0 %v4434, 64
    %v5207 = vpop.permute.xlu0 %5206
    %5208 = vrot.lane.b32.xlu0 %v4435, 64
    %v5209 = vpop.permute.xlu0 %5208
    %5210 = vrot.lane.b32.xlu0 %v4436, 64
    %v5211 = vpop.permute.xlu0 %5210
    %5212 = vrot.lane.b32.xlu0 %v4437, 64
    %v5213 = vpop.permute.xlu0 %5212
    %5214 = vrot.lane.b32.xlu0 %v4438, 64
    %v5215 = vpop.permute.xlu0 %5214
    %5216 = vrot.lane.b32.xlu0 %v4439, 64
    %v5217 = vpop.permute.xlu0 %5216
    %5218 = vrot.lane.b32.xlu0 %v4440, 64
    %v5219 = vpop.permute.xlu0 %5218
    %5220 = vrot.lane.b32.xlu0 %v4441, 64
    %v5221 = vpop.permute.xlu0 %5220
    %5222 = vrot.lane.b32.xlu0 %v4442, 64
    %v5223 = vpop.permute.xlu0 %5222
    %5224 = vrot.lane.b32.xlu0 %v4443, 64
    %v5225 = vpop.permute.xlu0 %5224
    %5226 = vrot.lane.b32.xlu0 %v4444, 64
    %v5227 = vpop.permute.xlu0 %5226
    %5228 = vrot.lane.b32.xlu0 %v4445, 64
    %v5229 = vpop.permute.xlu0 %5228
    %5230 = vrot.lane.b32.xlu0 %v4446, 64
    %v5231 = vpop.permute.xlu0 %5230
    %5232 = vrot.lane.b32.xlu0 %v4447, 64
    %v5233 = vpop.permute.xlu0 %5232
    %5234 = vrot.lane.b32.xlu0 %v4448, 64
    %v5235 = vpop.permute.xlu0 %5234
    %5236 = vrot.lane.b32.xlu0 %v4449, 64
    %v5237 = vpop.permute.xlu0 %5236
    %5238 = vrot.lane.b32.xlu0 %v4450, 64
    %v5239 = vpop.permute.xlu0 %5238
    %5240 = vrot.lane.b32.xlu0 %v4451, 64
    %v5241 = vpop.permute.xlu0 %5240
    %5242 = vrot.lane.b32.xlu0 %v4452, 64
    %v5243 = vpop.permute.xlu0 %5242
    %5244 = vrot.lane.b32.xlu0 %v4453, 64
    %v5245 = vpop.permute.xlu0 %5244
    %5246 = vrot.lane.b32.xlu0 %v4454, 64
    %v5247 = vpop.permute.xlu0 %5246
    %5248 = vrot.lane.b32.xlu0 %v4455, 64
    %v5249 = vpop.permute.xlu0 %5248
    %5250 = vrot.lane.b32.xlu0 %v4456, 64
    %v5251 = vpop.permute.xlu0 %5250
    %5252 = vrot.lane.b32.xlu0 %v4457, 64
    %v5253 = vpop.permute.xlu0 %5252
    %5254 = vrot.lane.b32.xlu0 %v4458, 64
    %v5255 = vpop.permute.xlu0 %5254
    %5256 = vrot.lane.b32.xlu0 %v4459, 64
    %v5257 = vpop.permute.xlu0 %5256
    %5258 = vrot.lane.b32.xlu0 %v4460, 64
    %v5259 = vpop.permute.xlu0 %5258
    %5260 = vrot.lane.b32.xlu0 %v4461, 64
    %v5261 = vpop.permute.xlu0 %5260
    %5262 = vrot.lane.b32.xlu0 %v4462, 64
    %v5263 = vpop.permute.xlu0 %5262
    %5264 = vrot.lane.b32.xlu0 %v4463, 64
    %v5265 = vpop.permute.xlu0 %5264
    %5266 = vrot.lane.b32.xlu0 %v4464, 64
    %v5267 = vpop.permute.xlu0 %5266
    %5268 = vrot.lane.b32.xlu0 %v4465, 64
    %v5269 = vpop.permute.xlu0 %5268
    %5270 = vrot.lane.b32.xlu0 %v4466, 64
    %v5271 = vpop.permute.xlu0 %5270
    %5272 = vrot.lane.b32.xlu0 %v4467, 64
    %v5273 = vpop.permute.xlu0 %5272
    %5274 = vrot.lane.b32.xlu0 %v4468, 64
    %v5275 = vpop.permute.xlu0 %5274
    %5276 = vrot.lane.b32.xlu0 %v4469, 64
    %v5277 = vpop.permute.xlu0 %5276
    %5278 = vrot.lane.b32.xlu0 %v4470, 64
    %v5279 = vpop.permute.xlu0 %5278
    %5280 = vrot.lane.b32.xlu0 %v4471, 64
    %v5281 = vpop.permute.xlu0 %5280
    %5282 = vrot.lane.b32.xlu0 %v4472, 64
    %v5283 = vpop.permute.xlu0 %5282
    %5284 = vrot.lane.b32.xlu0 %v4473, 64
    %v5285 = vpop.permute.xlu0 %5284
    %5286 = vrot.lane.b32.xlu0 %v4474, 64
    %v5287 = vpop.permute.xlu0 %5286
    %5288 = vrot.lane.b32.xlu0 %v4475, 64
    %v5289 = vpop.permute.xlu0 %5288
    %5290 = vrot.lane.b32.xlu0 %v4476, 64
    %v5291 = vpop.permute.xlu0 %5290
    %5292 = vrot.lane.b32.xlu0 %v4477, 64
    %v5293 = vpop.permute.xlu0 %5292
    %5294 = vrot.lane.b32.xlu0 %v4478, 64
    %v5295 = vpop.permute.xlu0 %5294
    %5296 = vrot.lane.b32.xlu0 %v4479, 64
    %v5297 = vpop.permute.xlu0 %5296
    %5298 = vrot.lane.b32.xlu0 %v4480, 64
    %v5299 = vpop.permute.xlu0 %5298
    %5300 = vrot.lane.b32.xlu0 %v4481, 64
    %v5301 = vpop.permute.xlu0 %5300
    %5302 = vrot.lane.b32.xlu0 %v4482, 64
    %v5303 = vpop.permute.xlu0 %5302
    %5304 = vrot.lane.b32.xlu0 %v4483, 64
    %v5305 = vpop.permute.xlu0 %5304
    %5306 = vrot.lane.b32.xlu0 %v4484, 64
    %v5307 = vpop.permute.xlu0 %5306
    %5308 = vrot.lane.b32.xlu0 %v4485, 64
    %v5309 = vpop.permute.xlu0 %5308
    %5310 = vrot.lane.b32.xlu0 %v4486, 64
    %v5311 = vpop.permute.xlu0 %5310
    %5312 = vrot.lane.b32.xlu0 %v4487, 64
    %v5313 = vpop.permute.xlu0 %5312
    %5314 = vrot.lane.b32.xlu0 %v4488, 64
    %v5315 = vpop.permute.xlu0 %5314
    %5316 = vrot.lane.b32.xlu0 %v4489, 64
    %v5317 = vpop.permute.xlu0 %5316
    %5318 = vrot.lane.b32.xlu0 %v4490, 64
    %v5319 = vpop.permute.xlu0 %5318
    %5320 = vrot.lane.b32.xlu0 %v4491, 64
    %v5321 = vpop.permute.xlu0 %5320
    %5322 = vrot.lane.b32.xlu0 %v4492, 64
    %v5323 = vpop.permute.xlu0 %5322
    %5324 = vrot.lane.b32.xlu0 %v4493, 64
    %v5325 = vpop.permute.xlu0 %5324
    %5326 = vrot.lane.b32.xlu0 %v4494, 64
    %v5327 = vpop.permute.xlu0 %5326
    %5456 = vrot.lane.b32.xlu0 %v4495, 96
    %v5457 = vpop.permute.xlu0 %5456
    %5458 = vrot.lane.b32.xlu0 %v4496, 96
    %v5459 = vpop.permute.xlu0 %5458
    %5460 = vrot.lane.b32.xlu0 %v4497, 96
    %v5461 = vpop.permute.xlu0 %5460
    %5462 = vrot.lane.b32.xlu0 %v4498, 96
    %v5463 = vpop.permute.xlu0 %5462
    %5464 = vrot.lane.b32.xlu0 %v4499, 96
    %v5465 = vpop.permute.xlu0 %5464
    %5466 = vrot.lane.b32.xlu0 %v4500, 96
    %v5467 = vpop.permute.xlu0 %5466
    %5468 = vrot.lane.b32.xlu0 %v4501, 96
    %v5469 = vpop.permute.xlu0 %5468
    %5470 = vrot.lane.b32.xlu0 %v4502, 96
    %v5471 = vpop.permute.xlu0 %5470
    %5472 = vrot.lane.b32.xlu0 %v4503, 96
    %v5473 = vpop.permute.xlu0 %5472
    %5474 = vrot.lane.b32.xlu0 %v4504, 96
    %v5475 = vpop.permute.xlu0 %5474
    %5476 = vrot.lane.b32.xlu0 %v4505, 96
    %v5477 = vpop.permute.xlu0 %5476
    %5478 = vrot.lane.b32.xlu0 %v4506, 96
    %v5479 = vpop.permute.xlu0 %5478
    %5480 = vrot.lane.b32.xlu0 %v4507, 96
    %v5481 = vpop.permute.xlu0 %5480
    %5482 = vrot.lane.b32.xlu0 %v4508, 96
    %v5483 = vpop.permute.xlu0 %5482
    %5484 = vrot.lane.b32.xlu0 %v4509, 96
    %v5485 = vpop.permute.xlu0 %5484
    %5486 = vrot.lane.b32.xlu0 %v4510, 96
    %v5487 = vpop.permute.xlu0 %5486
    %5488 = vrot.lane.b32.xlu0 %v4511, 96
    %v5489 = vpop.permute.xlu0 %5488
    %5490 = vrot.lane.b32.xlu0 %v4512, 96
    %v5491 = vpop.permute.xlu0 %5490
    %5492 = vrot.lane.b32.xlu0 %v4513, 96
    %v5493 = vpop.permute.xlu0 %5492
    %5494 = vrot.lane.b32.xlu0 %v4514, 96
    %v5495 = vpop.permute.xlu0 %5494
    %5496 = vrot.lane.b32.xlu0 %v4515, 96
    %v5497 = vpop.permute.xlu0 %5496
    %5498 = vrot.lane.b32.xlu0 %v4516, 96
    %v5499 = vpop.permute.xlu0 %5498
    %5500 = vrot.lane.b32.xlu0 %v4517, 96
    %v5501 = vpop.permute.xlu0 %5500
    %5502 = vrot.lane.b32.xlu0 %v4518, 96
    %v5503 = vpop.permute.xlu0 %5502
    %5504 = vrot.lane.b32.xlu0 %v4519, 96
    %v5505 = vpop.permute.xlu0 %5504
    %5506 = vrot.lane.b32.xlu0 %v4520, 96
    %v5507 = vpop.permute.xlu0 %5506
    %5508 = vrot.lane.b32.xlu0 %v4521, 96
    %v5509 = vpop.permute.xlu0 %5508
    %5510 = vrot.lane.b32.xlu0 %v4522, 96
    %v5511 = vpop.permute.xlu0 %5510
    %5512 = vrot.lane.b32.xlu0 %v4523, 96
    %v5513 = vpop.permute.xlu0 %5512
    %5514 = vrot.lane.b32.xlu0 %v4524, 96
    %v5515 = vpop.permute.xlu0 %5514
    %5516 = vrot.lane.b32.xlu0 %v4525, 96
    %v5517 = vpop.permute.xlu0 %5516
    %5518 = vrot.lane.b32.xlu0 %v4526, 96
    %v5519 = vpop.permute.xlu0 %5518
    %5520 = vrot.lane.b32.xlu0 %v4527, 96
    %v5521 = vpop.permute.xlu0 %5520
    %5522 = vrot.lane.b32.xlu0 %v4528, 96
    %v5523 = vpop.permute.xlu0 %5522
    %5524 = vrot.lane.b32.xlu0 %v4529, 96
    %v5525 = vpop.permute.xlu0 %5524
    %5526 = vrot.lane.b32.xlu0 %v4530, 96
    %v5527 = vpop.permute.xlu0 %5526
    %5528 = vrot.lane.b32.xlu0 %v4531, 96
    %v5529 = vpop.permute.xlu0 %5528
    %5530 = vrot.lane.b32.xlu0 %v4532, 96
    %v5531 = vpop.permute.xlu0 %5530
    %5532 = vrot.lane.b32.xlu0 %v4533, 96
    %v5533 = vpop.permute.xlu0 %5532
    %5534 = vrot.lane.b32.xlu0 %v4534, 96
    %v5535 = vpop.permute.xlu0 %5534
    %5536 = vrot.lane.b32.xlu0 %v4535, 96
    %v5537 = vpop.permute.xlu0 %5536
    %5538 = vrot.lane.b32.xlu0 %v4536, 96
    %v5539 = vpop.permute.xlu0 %5538
    %5540 = vrot.lane.b32.xlu0 %v4537, 96
    %v5541 = vpop.permute.xlu0 %5540
    %5542 = vrot.lane.b32.xlu0 %v4538, 96
    %v5543 = vpop.permute.xlu0 %5542
    %5544 = vrot.lane.b32.xlu0 %v4539, 96
    %v5545 = vpop.permute.xlu0 %5544
    %5546 = vrot.lane.b32.xlu0 %v4540, 96
    %v5547 = vpop.permute.xlu0 %5546
    %5548 = vrot.lane.b32.xlu0 %v4541, 96
    %v5549 = vpop.permute.xlu0 %5548
    %5550 = vrot.lane.b32.xlu0 %v4542, 96
    %v5551 = vpop.permute.xlu0 %5550
    %5552 = vrot.lane.b32.xlu0 %v4543, 96
    %v5553 = vpop.permute.xlu0 %5552
    %5554 = vrot.lane.b32.xlu0 %v4544, 96
    %v5555 = vpop.permute.xlu0 %5554
    %5556 = vrot.lane.b32.xlu0 %v4545, 96
    %v5557 = vpop.permute.xlu0 %5556
    %5558 = vrot.lane.b32.xlu0 %v4546, 96
    %v5559 = vpop.permute.xlu0 %5558
    %5560 = vrot.lane.b32.xlu0 %v4547, 96
    %v5561 = vpop.permute.xlu0 %5560
    %5562 = vrot.lane.b32.xlu0 %v4548, 96
    %v5563 = vpop.permute.xlu0 %5562
    %5564 = vrot.lane.b32.xlu0 %v4549, 96
    %v5565 = vpop.permute.xlu0 %5564
    %5566 = vrot.lane.b32.xlu0 %v4550, 96
    %v5567 = vpop.permute.xlu0 %5566
    %5568 = vrot.lane.b32.xlu0 %v4551, 96
    %v5569 = vpop.permute.xlu0 %5568
    %5570 = vrot.lane.b32.xlu0 %v4552, 96
    %v5571 = vpop.permute.xlu0 %5570
    %5572 = vrot.lane.b32.xlu0 %v4553, 96
    %v5573 = vpop.permute.xlu0 %5572
    %5574 = vrot.lane.b32.xlu0 %v4554, 96
    %v5575 = vpop.permute.xlu0 %5574
    %5576 = vrot.lane.b32.xlu0 %v4555, 96
    %v5577 = vpop.permute.xlu0 %5576
    %5578 = vrot.lane.b32.xlu0 %v4556, 96
    %v5579 = vpop.permute.xlu0 %5578
    %5580 = vrot.lane.b32.xlu0 %v4557, 96
    %v5581 = vpop.permute.xlu0 %5580
    %5582 = vrot.lane.b32.xlu0 %v4558, 96
    %v5583 = vpop.permute.xlu0 %5582
    %5712 = vrot.lane.b32.xlu0 %v4623, 32
    %v5713 = vpop.permute.xlu0 %5712
    %5714 = vrot.lane.b32.xlu0 %v4624, 32
    %v5715 = vpop.permute.xlu0 %5714
    %5716 = vrot.lane.b32.xlu0 %v4625, 32
    %v5717 = vpop.permute.xlu0 %5716
    %5718 = vrot.lane.b32.xlu0 %v4626, 32
    %v5719 = vpop.permute.xlu0 %5718
    %5720 = vrot.lane.b32.xlu0 %v4627, 32
    %v5721 = vpop.permute.xlu0 %5720
    %5722 = vrot.lane.b32.xlu0 %v4628, 32
    %v5723 = vpop.permute.xlu0 %5722
    %5724 = vrot.lane.b32.xlu0 %v4629, 32
    %v5725 = vpop.permute.xlu0 %5724
    %5726 = vrot.lane.b32.xlu0 %v4630, 32
    %v5727 = vpop.permute.xlu0 %5726
    %5728 = vrot.lane.b32.xlu0 %v4631, 32
    %v5729 = vpop.permute.xlu0 %5728
    %5730 = vrot.lane.b32.xlu0 %v4632, 32
    %v5731 = vpop.permute.xlu0 %5730
    %5732 = vrot.lane.b32.xlu0 %v4633, 32
    %v5733 = vpop.permute.xlu0 %5732
    %5734 = vrot.lane.b32.xlu0 %v4634, 32
    %v5735 = vpop.permute.xlu0 %5734
    %5736 = vrot.lane.b32.xlu0 %v4635, 32
    %v5737 = vpop.permute.xlu0 %5736
    %5738 = vrot.lane.b32.xlu0 %v4636, 32
    %v5739 = vpop.permute.xlu0 %5738
    %5740 = vrot.lane.b32.xlu0 %v4637, 32
    %v5741 = vpop.permute.xlu0 %5740
    %5742 = vrot.lane.b32.xlu0 %v4638, 32
    %v5743 = vpop.permute.xlu0 %5742
    %5744 = vrot.lane.b32.xlu0 %v4639, 32
    %v5745 = vpop.permute.xlu0 %5744
    %5746 = vrot.lane.b32.xlu0 %v4640, 32
    %v5747 = vpop.permute.xlu0 %5746
    %5748 = vrot.lane.b32.xlu0 %v4641, 32
    %v5749 = vpop.permute.xlu0 %5748
    %5750 = vrot.lane.b32.xlu0 %v4642, 32
    %v5751 = vpop.permute.xlu0 %5750
    %5752 = vrot.lane.b32.xlu0 %v4643, 32
    %v5753 = vpop.permute.xlu0 %5752
    %5754 = vrot.lane.b32.xlu0 %v4644, 32
    %v5755 = vpop.permute.xlu0 %5754
    %5756 = vrot.lane.b32.xlu0 %v4645, 32
    %v5757 = vpop.permute.xlu0 %5756
    %5758 = vrot.lane.b32.xlu0 %v4646, 32
    %v5759 = vpop.permute.xlu0 %5758
    %5760 = vrot.lane.b32.xlu0 %v4647, 32
    %v5761 = vpop.permute.xlu0 %5760
    %5762 = vrot.lane.b32.xlu0 %v4648, 32
    %v5763 = vpop.permute.xlu0 %5762
    %5764 = vrot.lane.b32.xlu0 %v4649, 32
    %v5765 = vpop.permute.xlu0 %5764
    %5766 = vrot.lane.b32.xlu0 %v4650, 32
    %v5767 = vpop.permute.xlu0 %5766
    %5768 = vrot.lane.b32.xlu0 %v4651, 32
    %v5769 = vpop.permute.xlu0 %5768
    %5770 = vrot.lane.b32.xlu0 %v4652, 32
    %v5771 = vpop.permute.xlu0 %5770
    %5772 = vrot.lane.b32.xlu0 %v4653, 32
    %v5773 = vpop.permute.xlu0 %5772
    %5774 = vrot.lane.b32.xlu0 %v4654, 32
    %v5775 = vpop.permute.xlu0 %5774
    %5776 = vrot.lane.b32.xlu0 %v4655, 32
    %v5777 = vpop.permute.xlu0 %5776
    %5778 = vrot.lane.b32.xlu0 %v4656, 32
    %v5779 = vpop.permute.xlu0 %5778
    %5780 = vrot.lane.b32.xlu0 %v4657, 32
    %v5781 = vpop.permute.xlu0 %5780
    %5782 = vrot.lane.b32.xlu0 %v4658, 32
    %v5783 = vpop.permute.xlu0 %5782
    %5784 = vrot.lane.b32.xlu0 %v4659, 32
    %v5785 = vpop.permute.xlu0 %5784
    %5786 = vrot.lane.b32.xlu0 %v4660, 32
    %v5787 = vpop.permute.xlu0 %5786
    %5788 = vrot.lane.b32.xlu0 %v4661, 32
    %v5789 = vpop.permute.xlu0 %5788
    %5790 = vrot.lane.b32.xlu0 %v4662, 32
    %v5791 = vpop.permute.xlu0 %5790
    %5792 = vrot.lane.b32.xlu0 %v4663, 32
    %v5793 = vpop.permute.xlu0 %5792
    %5794 = vrot.lane.b32.xlu0 %v4664, 32
    %v5795 = vpop.permute.xlu0 %5794
    %5796 = vrot.lane.b32.xlu0 %v4665, 32
    %v5797 = vpop.permute.xlu0 %5796
    %5798 = vrot.lane.b32.xlu0 %v4666, 32
    %v5799 = vpop.permute.xlu0 %5798
    %5800 = vrot.lane.b32.xlu0 %v4667, 32
    %v5801 = vpop.permute.xlu0 %5800
    %5802 = vrot.lane.b32.xlu0 %v4668, 32
    %v5803 = vpop.permute.xlu0 %5802
    %5804 = vrot.lane.b32.xlu0 %v4669, 32
    %v5805 = vpop.permute.xlu0 %5804
    %5806 = vrot.lane.b32.xlu0 %v4670, 32
    %v5807 = vpop.permute.xlu0 %5806
    %5808 = vrot.lane.b32.xlu0 %v4671, 32
    %v5809 = vpop.permute.xlu0 %5808
    %5810 = vrot.lane.b32.xlu0 %v4672, 32
    %v5811 = vpop.permute.xlu0 %5810
    %5812 = vrot.lane.b32.xlu0 %v4673, 32
    %v5813 = vpop.permute.xlu0 %5812
    %5814 = vrot.lane.b32.xlu0 %v4674, 32
    %v5815 = vpop.permute.xlu0 %5814
    %5816 = vrot.lane.b32.xlu0 %v4675, 32
    %v5817 = vpop.permute.xlu0 %5816
    %5818 = vrot.lane.b32.xlu0 %v4676, 32
    %v5819 = vpop.permute.xlu0 %5818
    %5820 = vrot.lane.b32.xlu0 %v4677, 32
    %v5821 = vpop.permute.xlu0 %5820
    %5822 = vrot.lane.b32.xlu0 %v4678, 32
    %v5823 = vpop.permute.xlu0 %5822
    %5824 = vrot.lane.b32.xlu0 %v4679, 32
    %v5825 = vpop.permute.xlu0 %5824
    %5826 = vrot.lane.b32.xlu0 %v4680, 32
    %v5827 = vpop.permute.xlu0 %5826
    %5828 = vrot.lane.b32.xlu0 %v4681, 32
    %v5829 = vpop.permute.xlu0 %5828
    %5830 = vrot.lane.b32.xlu0 %v4682, 32
    %v5831 = vpop.permute.xlu0 %5830
    %5832 = vrot.lane.b32.xlu0 %v4683, 32
    %v5833 = vpop.permute.xlu0 %5832
    %5834 = vrot.lane.b32.xlu0 %v4684, 32
    %v5835 = vpop.permute.xlu0 %5834
    %5836 = vrot.lane.b32.xlu0 %v4685, 32
    %v5837 = vpop.permute.xlu0 %5836
    %5838 = vrot.lane.b32.xlu0 %v4686, 32
    %v5839 = vpop.permute.xlu0 %5838
    %5968 = vrot.lane.b32.xlu0 %v4688, 64
    %v5969 = vpop.permute.xlu0 %5968
    %5970 = vrot.lane.b32.xlu0 %v4689, 64
    %v5971 = vpop.permute.xlu0 %5970
    %5972 = vrot.lane.b32.xlu0 %v4690, 64
    %v5973 = vpop.permute.xlu0 %5972
    %5974 = vrot.lane.b32.xlu0 %v4691, 64
    %v5975 = vpop.permute.xlu0 %5974
    %5976 = vrot.lane.b32.xlu0 %v4692, 64
    %v5977 = vpop.permute.xlu0 %5976
    %5978 = vrot.lane.b32.xlu0 %v4693, 64
    %v5979 = vpop.permute.xlu0 %5978
    %5980 = vrot.lane.b32.xlu0 %v4694, 64
    %v5981 = vpop.permute.xlu0 %5980
    %5982 = vrot.lane.b32.xlu0 %v4695, 64
    %v5983 = vpop.permute.xlu0 %5982
    %5984 = vrot.lane.b32.xlu0 %v4696, 64
    %v5985 = vpop.permute.xlu0 %5984
    %5986 = vrot.lane.b32.xlu0 %v4697, 64
    %v5987 = vpop.permute.xlu0 %5986
    %5988 = vrot.lane.b32.xlu0 %v4698, 64
    %v5989 = vpop.permute.xlu0 %5988
    %5990 = vrot.lane.b32.xlu0 %v4699, 64
    %v5991 = vpop.permute.xlu0 %5990
    %5992 = vrot.lane.b32.xlu0 %v4700, 64
    %v5993 = vpop.permute.xlu0 %5992
    %5994 = vrot.lane.b32.xlu0 %v4701, 64
    %v5995 = vpop.permute.xlu0 %5994
    %5996 = vrot.lane.b32.xlu0 %v4702, 64
    %v5997 = vpop.permute.xlu0 %5996
    %5998 = vrot.lane.b32.xlu0 %v4703, 64
    %v5999 = vpop.permute.xlu0 %5998
    %6000 = vrot.lane.b32.xlu0 %v4704, 64
    %v6001 = vpop.permute.xlu0 %6000
    %6002 = vrot.lane.b32.xlu0 %v4705, 64
    %v6003 = vpop.permute.xlu0 %6002
    %6004 = vrot.lane.b32.xlu0 %v4706, 64
    %v6005 = vpop.permute.xlu0 %6004
    %6006 = vrot.lane.b32.xlu0 %v4707, 64
    %v6007 = vpop.permute.xlu0 %6006
    %6008 = vrot.lane.b32.xlu0 %v4708, 64
    %v6009 = vpop.permute.xlu0 %6008
    %6010 = vrot.lane.b32.xlu0 %v4709, 64
    %v6011 = vpop.permute.xlu0 %6010
    %6012 = vrot.lane.b32.xlu0 %v4710, 64
    %v6013 = vpop.permute.xlu0 %6012
    %6014 = vrot.lane.b32.xlu0 %v4711, 64
    %v6015 = vpop.permute.xlu0 %6014
    %6016 = vrot.lane.b32.xlu0 %v4712, 64
    %v6017 = vpop.permute.xlu0 %6016
    %6018 = vrot.lane.b32.xlu0 %v4713, 64
    %v6019 = vpop.permute.xlu0 %6018
    %6020 = vrot.lane.b32.xlu0 %v4714, 64
    %v6021 = vpop.permute.xlu0 %6020
    %6022 = vrot.lane.b32.xlu0 %v4715, 64
    %v6023 = vpop.permute.xlu0 %6022
    %6024 = vrot.lane.b32.xlu0 %v4716, 64
    %v6025 = vpop.permute.xlu0 %6024
    %6026 = vrot.lane.b32.xlu0 %v4717, 64
    %v6027 = vpop.permute.xlu0 %6026
    %6028 = vrot.lane.b32.xlu0 %v4718, 64
    %v6029 = vpop.permute.xlu0 %6028
    %6030 = vrot.lane.b32.xlu0 %v4719, 64
    %v6031 = vpop.permute.xlu0 %6030
    %6032 = vrot.lane.b32.xlu0 %v4720, 64
    %v6033 = vpop.permute.xlu0 %6032
    %6034 = vrot.lane.b32.xlu0 %v4721, 64
    %v6035 = vpop.permute.xlu0 %6034
    %6036 = vrot.lane.b32.xlu0 %v4722, 64
    %v6037 = vpop.permute.xlu0 %6036
    %6038 = vrot.lane.b32.xlu0 %v4723, 64
    %v6039 = vpop.permute.xlu0 %6038
    %6040 = vrot.lane.b32.xlu0 %v4724, 64
    %v6041 = vpop.permute.xlu0 %6040
    %6042 = vrot.lane.b32.xlu0 %v4725, 64
    %v6043 = vpop.permute.xlu0 %6042
    %6044 = vrot.lane.b32.xlu0 %v4726, 64
    %v6045 = vpop.permute.xlu0 %6044
    %6046 = vrot.lane.b32.xlu0 %v4727, 64
    %v6047 = vpop.permute.xlu0 %6046
    %6048 = vrot.lane.b32.xlu0 %v4728, 64
    %v6049 = vpop.permute.xlu0 %6048
    %6050 = vrot.lane.b32.xlu0 %v4729, 64
    %v6051 = vpop.permute.xlu0 %6050
    %6052 = vrot.lane.b32.xlu0 %v4730, 64
    %v6053 = vpop.permute.xlu0 %6052
    %6054 = vrot.lane.b32.xlu0 %v4731, 64
    %v6055 = vpop.permute.xlu0 %6054
    %6056 = vrot.lane.b32.xlu0 %v4732, 64
    %v6057 = vpop.permute.xlu0 %6056
    %6058 = vrot.lane.b32.xlu0 %v4733, 64
    %v6059 = vpop.permute.xlu0 %6058
    %6060 = vrot.lane.b32.xlu0 %v4734, 64
    %v6061 = vpop.permute.xlu0 %6060
    %6062 = vrot.lane.b32.xlu0 %v4735, 64
    %v6063 = vpop.permute.xlu0 %6062
    %6064 = vrot.lane.b32.xlu0 %v4736, 64
    %v6065 = vpop.permute.xlu0 %6064
    %6066 = vrot.lane.b32.xlu0 %v4737, 64
    %v6067 = vpop.permute.xlu0 %6066
    %6068 = vrot.lane.b32.xlu0 %v4738, 64
    %v6069 = vpop.permute.xlu0 %6068
    %6070 = vrot.lane.b32.xlu0 %v4739, 64
    %v6071 = vpop.permute.xlu0 %6070
    %6072 = vrot.lane.b32.xlu0 %v4740, 64
    %v6073 = vpop.permute.xlu0 %6072
    %6074 = vrot.lane.b32.xlu0 %v4741, 64
    %v6075 = vpop.permute.xlu0 %6074
    %6076 = vrot.lane.b32.xlu0 %v4742, 64
    %v6077 = vpop.permute.xlu0 %6076
    %6078 = vrot.lane.b32.xlu0 %v4743, 64
    %v6079 = vpop.permute.xlu0 %6078
    %6080 = vrot.lane.b32.xlu0 %v4744, 64
    %v6081 = vpop.permute.xlu0 %6080
    %6082 = vrot.lane.b32.xlu0 %v4745, 64
    %v6083 = vpop.permute.xlu0 %6082
    %6084 = vrot.lane.b32.xlu0 %v4746, 64
    %v6085 = vpop.permute.xlu0 %6084
    %6086 = vrot.lane.b32.xlu0 %v4747, 64
    %v6087 = vpop.permute.xlu0 %6086
    %6088 = vrot.lane.b32.xlu0 %v4748, 64
    %v6089 = vpop.permute.xlu0 %6088
    %6090 = vrot.lane.b32.xlu0 %v4749, 64
    %v6091 = vpop.permute.xlu0 %6090
    %6092 = vrot.lane.b32.xlu0 %v4750, 64
    %v6093 = vpop.permute.xlu0 %6092
    %6094 = vrot.lane.b32.xlu0 %v4751, 64
    %v6095 = vpop.permute.xlu0 %6094
    %6224 = vrot.lane.b32.xlu0 %v4752, 96
    %v6225 = vpop.permute.xlu0 %6224
    %6226 = vrot.lane.b32.xlu0 %v4753, 96
    %v6227 = vpop.permute.xlu0 %6226
    %6228 = vrot.lane.b32.xlu0 %v4754, 96
    %v6229 = vpop.permute.xlu0 %6228
    %6230 = vrot.lane.b32.xlu0 %v4755, 96
    %v6231 = vpop.permute.xlu0 %6230
    %6232 = vrot.lane.b32.xlu0 %v4756, 96
    %v6233 = vpop.permute.xlu0 %6232
    %6234 = vrot.lane.b32.xlu0 %v4757, 96
    %v6235 = vpop.permute.xlu0 %6234
    %6236 = vrot.lane.b32.xlu0 %v4758, 96
    %v6237 = vpop.permute.xlu0 %6236
    %6238 = vrot.lane.b32.xlu0 %v4759, 96
    %v6239 = vpop.permute.xlu0 %6238
    %6240 = vrot.lane.b32.xlu0 %v4760, 96
    %v6241 = vpop.permute.xlu0 %6240
    %6242 = vrot.lane.b32.xlu0 %v4761, 96
    %v6243 = vpop.permute.xlu0 %6242
    %6244 = vrot.lane.b32.xlu0 %v4762, 96
    %v6245 = vpop.permute.xlu0 %6244
    %6246 = vrot.lane.b32.xlu0 %v4763, 96
    %v6247 = vpop.permute.xlu0 %6246
    %6248 = vrot.lane.b32.xlu0 %v4764, 96
    %v6249 = vpop.permute.xlu0 %6248
    %6250 = vrot.lane.b32.xlu0 %v4765, 96
    %v6251 = vpop.permute.xlu0 %6250
    %6252 = vrot.lane.b32.xlu0 %v4766, 96
    %v6253 = vpop.permute.xlu0 %6252
    %6254 = vrot.lane.b32.xlu0 %v4767, 96
    %v6255 = vpop.permute.xlu0 %6254
    %6256 = vrot.lane.b32.xlu0 %v4768, 96
    %v6257 = vpop.permute.xlu0 %6256
    %6258 = vrot.lane.b32.xlu0 %v4769, 96
    %v6259 = vpop.permute.xlu0 %6258
    %6260 = vrot.lane.b32.xlu0 %v4770, 96
    %v6261 = vpop.permute.xlu0 %6260
    %6262 = vrot.lane.b32.xlu0 %v4771, 96
    %v6263 = vpop.permute.xlu0 %6262
    %6264 = vrot.lane.b32.xlu0 %v4772, 96
    %v6265 = vpop.permute.xlu0 %6264
    %6266 = vrot.lane.b32.xlu0 %v4773, 96
    %v6267 = vpop.permute.xlu0 %6266
    %6268 = vrot.lane.b32.xlu0 %v4774, 96
    %v6269 = vpop.permute.xlu0 %6268
    %6270 = vrot.lane.b32.xlu0 %v4775, 96
    %v6271 = vpop.permute.xlu0 %6270
    %6272 = vrot.lane.b32.xlu0 %v4776, 96
    %v6273 = vpop.permute.xlu0 %6272
    %6274 = vrot.lane.b32.xlu0 %v4777, 96
    %v6275 = vpop.permute.xlu0 %6274
    %6276 = vrot.lane.b32.xlu0 %v4778, 96
    %v6277 = vpop.permute.xlu0 %6276
    %6278 = vrot.lane.b32.xlu0 %v4779, 96
    %v6279 = vpop.permute.xlu0 %6278
    %6280 = vrot.lane.b32.xlu0 %v4780, 96
    %v6281 = vpop.permute.xlu0 %6280
    %6282 = vrot.lane.b32.xlu0 %v4781, 96
    %v6283 = vpop.permute.xlu0 %6282
    %6284 = vrot.lane.b32.xlu0 %v4782, 96
    %v6285 = vpop.permute.xlu0 %6284
    %6286 = vrot.lane.b32.xlu0 %v4783, 96
    %v6287 = vpop.permute.xlu0 %6286
    %6288 = vrot.lane.b32.xlu0 %v4784, 96
    %v6289 = vpop.permute.xlu0 %6288
    %6290 = vrot.lane.b32.xlu0 %v4785, 96
    %v6291 = vpop.permute.xlu0 %6290
    %6292 = vrot.lane.b32.xlu0 %v4786, 96
    %v6293 = vpop.permute.xlu0 %6292
    %6294 = vrot.lane.b32.xlu0 %v4787, 96
    %v6295 = vpop.permute.xlu0 %6294
    %6296 = vrot.lane.b32.xlu0 %v4788, 96
    %v6297 = vpop.permute.xlu0 %6296
    %6298 = vrot.lane.b32.xlu0 %v4789, 96
    %v6299 = vpop.permute.xlu0 %6298
    %6300 = vrot.lane.b32.xlu0 %v4790, 96
    %v6301 = vpop.permute.xlu0 %6300
    %6302 = vrot.lane.b32.xlu0 %v4791, 96
    %v6303 = vpop.permute.xlu0 %6302
    %6304 = vrot.lane.b32.xlu0 %v4792, 96
    %v6305 = vpop.permute.xlu0 %6304
    %6306 = vrot.lane.b32.xlu0 %v4793, 96
    %v6307 = vpop.permute.xlu0 %6306
    %6308 = vrot.lane.b32.xlu0 %v4794, 96
    %v6309 = vpop.permute.xlu0 %6308
    %6310 = vrot.lane.b32.xlu0 %v4795, 96
    %v6311 = vpop.permute.xlu0 %6310
    %6312 = vrot.lane.b32.xlu0 %v4796, 96
    %v6313 = vpop.permute.xlu0 %6312
    %6314 = vrot.lane.b32.xlu0 %v4797, 96
    %v6315 = vpop.permute.xlu0 %6314
    %6316 = vrot.lane.b32.xlu0 %v4798, 96
    %v6317 = vpop.permute.xlu0 %6316
    %6318 = vrot.lane.b32.xlu0 %v4799, 96
    %v6319 = vpop.permute.xlu0 %6318
    %6320 = vrot.lane.b32.xlu0 %v4800, 96
    %v6321 = vpop.permute.xlu0 %6320
    %6322 = vrot.lane.b32.xlu0 %v4801, 96
    %v6323 = vpop.permute.xlu0 %6322
    %6324 = vrot.lane.b32.xlu0 %v4802, 96
    %v6325 = vpop.permute.xlu0 %6324
    %6326 = vrot.lane.b32.xlu0 %v4803, 96
    %v6327 = vpop.permute.xlu0 %6326
    %6328 = vrot.lane.b32.xlu0 %v4804, 96
    %v6329 = vpop.permute.xlu0 %6328
    %6330 = vrot.lane.b32.xlu0 %v4805, 96
    %v6331 = vpop.permute.xlu0 %6330
    %6332 = vrot.lane.b32.xlu0 %v4806, 96
    %v6333 = vpop.permute.xlu0 %6332
    %6334 = vrot.lane.b32.xlu0 %v4807, 96
    %v6335 = vpop.permute.xlu0 %6334
    %6336 = vrot.lane.b32.xlu0 %v4808, 96
    %v6337 = vpop.permute.xlu0 %6336
    %6338 = vrot.lane.b32.xlu0 %v4809, 96
    %v6339 = vpop.permute.xlu0 %6338
    %6340 = vrot.lane.b32.xlu0 %v4810, 96
    %v6341 = vpop.permute.xlu0 %6340
    %6342 = vrot.lane.b32.xlu0 %v4811, 96
    %v6343 = vpop.permute.xlu0 %6342
    %6344 = vrot.lane.b32.xlu0 %v4812, 96
    %v6345 = vpop.permute.xlu0 %6344
    %6346 = vrot.lane.b32.xlu0 %v4813, 96
    %v6347 = vpop.permute.xlu0 %6346
    %6348 = vrot.lane.b32.xlu0 %v4814, 96
    %v6349 = vpop.permute.xlu0 %6348
    %6350 = vrot.lane.b32.xlu0 %v4815, 96
    %v6351 = vpop.permute.xlu0 %6350
    %v6416 = vsel %vm4128, %v4303, %v4945
    %v6417 = vsel %vm4128, %v4304, %v4947
    %v6418 = vsel %vm4128, %v4305, %v4949
    %v6419 = vsel %vm4128, %v4306, %v4951
    %v6420 = vsel %vm4128, %v4307, %v4953
    %v6421 = vsel %vm4128, %v4308, %v4955
    %v6422 = vsel %vm4128, %v4309, %v4957
    %v6423 = vsel %vm4128, %v4310, %v4959
    %v6424 = vsel %vm4128, %v4311, %v4961
    %v6425 = vsel %vm4128, %v4312, %v4963
    %v6426 = vsel %vm4128, %v4313, %v4965
    %v6427 = vsel %vm4128, %v4314, %v4967
    %v6428 = vsel %vm4128, %v4315, %v4969
    %v6429 = vsel %vm4128, %v4316, %v4971
    %v6430 = vsel %vm4128, %v4317, %v4973
    %v6431 = vsel %vm4128, %v4318, %v4975
    %v6432 = vsel %vm4128, %v4319, %v4977
    %v6433 = vsel %vm4128, %v4320, %v4979
    %v6434 = vsel %vm4128, %v4321, %v4981
    %v6435 = vsel %vm4128, %v4322, %v4983
    %v6436 = vsel %vm4128, %v4323, %v4985
    %v6437 = vsel %vm4128, %v4324, %v4987
    %v6438 = vsel %vm4128, %v4325, %v4989
    %v6439 = vsel %vm4128, %v4326, %v4991
    %v6440 = vsel %vm4128, %v4327, %v4993
    %v6441 = vsel %vm4128, %v4328, %v4995
    %v6442 = vsel %vm4128, %v4329, %v4997
    %v6443 = vsel %vm4128, %v4330, %v4999
    %v6444 = vsel %vm4128, %v4331, %v5001
    %v6445 = vsel %vm4128, %v4332, %v5003
    %v6446 = vsel %vm4128, %v4333, %v5005
    %v6447 = vsel %vm4128, %v4334, %v5007
    %v6448 = vsel %vm4128, %v4335, %v5009
    %v6449 = vsel %vm4128, %v4336, %v5011
    %v6450 = vsel %vm4128, %v4337, %v5013
    %v6451 = vsel %vm4128, %v4338, %v5015
    %v6452 = vsel %vm4128, %v4339, %v5017
    %v6453 = vsel %vm4128, %v4340, %v5019
    %v6454 = vsel %vm4128, %v4341, %v5021
    %v6455 = vsel %vm4128, %v4342, %v5023
    %v6456 = vsel %vm4128, %v4343, %v5025
    %v6457 = vsel %vm4128, %v4344, %v5027
    %v6458 = vsel %vm4128, %v4345, %v5029
    %v6459 = vsel %vm4128, %v4346, %v5031
    %v6460 = vsel %vm4128, %v4347, %v5033
    %v6461 = vsel %vm4128, %v4348, %v5035
    %v6462 = vsel %vm4128, %v4349, %v5037
    %v6463 = vsel %vm4128, %v4350, %v5039
    %v6464 = vsel %vm4128, %v4351, %v5041
    %v6465 = vsel %vm4128, %v4352, %v5043
    %v6466 = vsel %vm4128, %v4353, %v5045
    %v6467 = vsel %vm4128, %v4354, %v5047
    %v6468 = vsel %vm4128, %v4355, %v5049
    %v6469 = vsel %vm4128, %v4356, %v5051
    %v6470 = vsel %vm4128, %v4357, %v5053
    %v6471 = vsel %vm4128, %v4358, %v5055
    %v6472 = vsel %vm4128, %v4359, %v5057
    %v6473 = vsel %vm4128, %v4360, %v5059
    %v6474 = vsel %vm4128, %v4361, %v5061
    %v6475 = vsel %vm4128, %v4362, %v5063
    %v6476 = vsel %vm4128, %v4363, %v5065
    %v6477 = vsel %vm4128, %v4364, %v5067
    %v6478 = vsel %vm4128, %v4365, %v5069
    %v6479 = vsel %vm4128, %v4366, %v5071
    %v6480 = vsel %vm3387, %v6416, %v5201
    %v6481 = vsel %vm3387, %v6417, %v5203
    %v6482 = vsel %vm3387, %v6418, %v5205
    %v6483 = vsel %vm3387, %v6419, %v5207
    %v6484 = vsel %vm3387, %v6420, %v5209
    %v6485 = vsel %vm3387, %v6421, %v5211
    %v6486 = vsel %vm3387, %v6422, %v5213
    %v6487 = vsel %vm3387, %v6423, %v5215
    %v6488 = vsel %vm3387, %v6424, %v5217
    %v6489 = vsel %vm3387, %v6425, %v5219
    %v6490 = vsel %vm3387, %v6426, %v5221
    %v6491 = vsel %vm3387, %v6427, %v5223
    %v6492 = vsel %vm3387, %v6428, %v5225
    %v6493 = vsel %vm3387, %v6429, %v5227
    %v6494 = vsel %vm3387, %v6430, %v5229
    %v6495 = vsel %vm3387, %v6431, %v5231
    %v6496 = vsel %vm3387, %v6432, %v5233
    %v6497 = vsel %vm3387, %v6433, %v5235
    %v6498 = vsel %vm3387, %v6434, %v5237
    %v6499 = vsel %vm3387, %v6435, %v5239
    %v6500 = vsel %vm3387, %v6436, %v5241
    %v6501 = vsel %vm3387, %v6437, %v5243
    %v6502 = vsel %vm3387, %v6438, %v5245
    %v6503 = vsel %vm3387, %v6439, %v5247
    %v6504 = vsel %vm3387, %v6440, %v5249
    %v6505 = vsel %vm3387, %v6441, %v5251
    %v6506 = vsel %vm3387, %v6442, %v5253
    %v6507 = vsel %vm3387, %v6443, %v5255
    %v6508 = vsel %vm3387, %v6444, %v5257
    %v6509 = vsel %vm3387, %v6445, %v5259
    %v6510 = vsel %vm3387, %v6446, %v5261
    %v6511 = vsel %vm3387, %v6447, %v5263
    %v6512 = vsel %vm3387, %v6448, %v5265
    %v6513 = vsel %vm3387, %v6449, %v5267
    %v6514 = vsel %vm3387, %v6450, %v5269
    %v6515 = vsel %vm3387, %v6451, %v5271
    %v6516 = vsel %vm3387, %v6452, %v5273
    %v6517 = vsel %vm3387, %v6453, %v5275
    %v6518 = vsel %vm3387, %v6454, %v5277
    %v6519 = vsel %vm3387, %v6455, %v5279
    %v6520 = vsel %vm3387, %v6456, %v5281
    %v6521 = vsel %vm3387, %v6457, %v5283
    %v6522 = vsel %vm3387, %v6458, %v5285
    %v6523 = vsel %vm3387, %v6459, %v5287
    %v6524 = vsel %vm3387, %v6460, %v5289
    %v6525 = vsel %vm3387, %v6461, %v5291
    %v6526 = vsel %vm3387, %v6462, %v5293
    %v6527 = vsel %vm3387, %v6463, %v5295
    %v6528 = vsel %vm3387, %v6464, %v5297
    %v6529 = vsel %vm3387, %v6465, %v5299
    %v6530 = vsel %vm3387, %v6466, %v5301
    %v6531 = vsel %vm3387, %v6467, %v5303
    %v6532 = vsel %vm3387, %v6468, %v5305
    %v6533 = vsel %vm3387, %v6469, %v5307
    %v6534 = vsel %vm3387, %v6470, %v5309
    %v6535 = vsel %vm3387, %v6471, %v5311
    %v6536 = vsel %vm3387, %v6472, %v5313
    %v6537 = vsel %vm3387, %v6473, %v5315
    %v6538 = vsel %vm3387, %v6474, %v5317
    %v6539 = vsel %vm3387, %v6475, %v5319
    %v6540 = vsel %vm3387, %v6476, %v5321
    %v6541 = vsel %vm3387, %v6477, %v5323
    %v6542 = vsel %vm3387, %v6478, %v5325
    %v6543 = vsel %vm3387, %v6479, %v5327
    %v6544 = vsel %vm3127, %v6480, %v5457
    %v6545 = vsel %vm3127, %v6481, %v5459
    %v6546 = vsel %vm3127, %v6482, %v5461
    %v6547 = vsel %vm3127, %v6483, %v5463
    %v6548 = vsel %vm3127, %v6484, %v5465
    %v6549 = vsel %vm3127, %v6485, %v5467
    %v6550 = vsel %vm3127, %v6486, %v5469
    %v6551 = vsel %vm3127, %v6487, %v5471
    %v6552 = vsel %vm3127, %v6488, %v5473
    %v6553 = vsel %vm3127, %v6489, %v5475
    %v6554 = vsel %vm3127, %v6490, %v5477
    %v6555 = vsel %vm3127, %v6491, %v5479
    %v6556 = vsel %vm3127, %v6492, %v5481
    %v6557 = vsel %vm3127, %v6493, %v5483
    %v6558 = vsel %vm3127, %v6494, %v5485
    %v6559 = vsel %vm3127, %v6495, %v5487
    %v6560 = vsel %vm3127, %v6496, %v5489
    %v6561 = vsel %vm3127, %v6497, %v5491
    %v6562 = vsel %vm3127, %v6498, %v5493
    %v6563 = vsel %vm3127, %v6499, %v5495
    %v6564 = vsel %vm3127, %v6500, %v5497
    %v6565 = vsel %vm3127, %v6501, %v5499
    %v6566 = vsel %vm3127, %v6502, %v5501
    %v6567 = vsel %vm3127, %v6503, %v5503
    %v6568 = vsel %vm3127, %v6504, %v5505
    %v6569 = vsel %vm3127, %v6505, %v5507
    %v6570 = vsel %vm3127, %v6506, %v5509
    %v6571 = vsel %vm3127, %v6507, %v5511
    %v6572 = vsel %vm3127, %v6508, %v5513
    %v6573 = vsel %vm3127, %v6509, %v5515
    %v6574 = vsel %vm3127, %v6510, %v5517
    %v6575 = vsel %vm3127, %v6511, %v5519
    %v6576 = vsel %vm3127, %v6512, %v5521
    %v6577 = vsel %vm3127, %v6513, %v5523
    %v6578 = vsel %vm3127, %v6514, %v5525
    %v6579 = vsel %vm3127, %v6515, %v5527
    %v6580 = vsel %vm3127, %v6516, %v5529
    %v6581 = vsel %vm3127, %v6517, %v5531
    %v6582 = vsel %vm3127, %v6518, %v5533
    %v6583 = vsel %vm3127, %v6519, %v5535
    %v6584 = vsel %vm3127, %v6520, %v5537
    %v6585 = vsel %vm3127, %v6521, %v5539
    %v6586 = vsel %vm3127, %v6522, %v5541
    %v6587 = vsel %vm3127, %v6523, %v5543
    %v6588 = vsel %vm3127, %v6524, %v5545
    %v6589 = vsel %vm3127, %v6525, %v5547
    %v6590 = vsel %vm3127, %v6526, %v5549
    %v6591 = vsel %vm3127, %v6527, %v5551
    %v6592 = vsel %vm3127, %v6528, %v5553
    %v6593 = vsel %vm3127, %v6529, %v5555
    %v6594 = vsel %vm3127, %v6530, %v5557
    %v6595 = vsel %vm3127, %v6531, %v5559
    %v6596 = vsel %vm3127, %v6532, %v5561
    %v6597 = vsel %vm3127, %v6533, %v5563
    %v6598 = vsel %vm3127, %v6534, %v5565
    %v6599 = vsel %vm3127, %v6535, %v5567
    %v6600 = vsel %vm3127, %v6536, %v5569
    %v6601 = vsel %vm3127, %v6537, %v5571
    %v6602 = vsel %vm3127, %v6538, %v5573
    %v6603 = vsel %vm3127, %v6539, %v5575
    %v6604 = vsel %vm3127, %v6540, %v5577
    %v6605 = vsel %vm3127, %v6541, %v5579
    %v6606 = vsel %vm3127, %v6542, %v5581
    %v6607 = vsel %vm3127, %v6543, %v5583
    %v6608 = vsel %vm4128, %v4559, %v5713
    %v6609 = vsel %vm4128, %v4560, %v5715
    %v6610 = vsel %vm4128, %v4561, %v5717
    %v6611 = vsel %vm4128, %v4562, %v5719
    %v6612 = vsel %vm4128, %v4563, %v5721
    %v6613 = vsel %vm4128, %v4564, %v5723
    %v6614 = vsel %vm4128, %v4565, %v5725
    %v6615 = vsel %vm4128, %v4566, %v5727
    %v6616 = vsel %vm4128, %v4567, %v5729
    %v6617 = vsel %vm4128, %v4568, %v5731
    %v6618 = vsel %vm4128, %v4569, %v5733
    %v6619 = vsel %vm4128, %v4570, %v5735
    %v6620 = vsel %vm4128, %v4571, %v5737
    %v6621 = vsel %vm4128, %v4572, %v5739
    %v6622 = vsel %vm4128, %v4573, %v5741
    %v6623 = vsel %vm4128, %v4574, %v5743
    %v6624 = vsel %vm4128, %v4575, %v5745
    %v6625 = vsel %vm4128, %v4576, %v5747
    %v6626 = vsel %vm4128, %v4577, %v5749
    %v6627 = vsel %vm4128, %v4578, %v5751
    %v6628 = vsel %vm4128, %v4579, %v5753
    %v6629 = vsel %vm4128, %v4580, %v5755
    %v6630 = vsel %vm4128, %v4581, %v5757
    %v6631 = vsel %vm4128, %v4582, %v5759
    %v6632 = vsel %vm4128, %v4583, %v5761
    %v6633 = vsel %vm4128, %v4584, %v5763
    %v6634 = vsel %vm4128, %v4585, %v5765
    %v6635 = vsel %vm4128, %v4586, %v5767
    %v6636 = vsel %vm4128, %v4587, %v5769
    %v6637 = vsel %vm4128, %v4588, %v5771
    %v6638 = vsel %vm4128, %v4589, %v5773
    %v6639 = vsel %vm4128, %v4590, %v5775
    %v6640 = vsel %vm4128, %v4591, %v5777
    %v6641 = vsel %vm4128, %v4592, %v5779
    %v6642 = vsel %vm4128, %v4593, %v5781
    %v6643 = vsel %vm4128, %v4594, %v5783
    %v6644 = vsel %vm4128, %v4595, %v5785
    %v6645 = vsel %vm4128, %v4596, %v5787
    %v6646 = vsel %vm4128, %v4597, %v5789
    %v6647 = vsel %vm4128, %v4598, %v5791
    %v6648 = vsel %vm4128, %v4599, %v5793
    %v6649 = vsel %vm4128, %v4600, %v5795
    %v6650 = vsel %vm4128, %v4601, %v5797
    %v6651 = vsel %vm4128, %v4602, %v5799
    %v6652 = vsel %vm4128, %v4603, %v5801
    %v6653 = vsel %vm4128, %v4604, %v5803
    %v6654 = vsel %vm4128, %v4605, %v5805
    %v6655 = vsel %vm4128, %v4606, %v5807
    %v6656 = vsel %vm4128, %v4607, %v5809
    %v6657 = vsel %vm4128, %v4608, %v5811
    %v6658 = vsel %vm4128, %v4609, %v5813
    %v6659 = vsel %vm4128, %v4610, %v5815
    %v6660 = vsel %vm4128, %v4611, %v5817
    %v6661 = vsel %vm4128, %v4612, %v5819
    %v6662 = vsel %vm4128, %v4613, %v5821
    %v6663 = vsel %vm4128, %v4614, %v5823
    %v6664 = vsel %vm4128, %v4615, %v5825
    %v6665 = vsel %vm4128, %v4616, %v5827
    %v6666 = vsel %vm4128, %v4617, %v5829
    %v6667 = vsel %vm4128, %v4618, %v5831
    %v6668 = vsel %vm4128, %v4619, %v5833
    %v6669 = vsel %vm4128, %v4620, %v5835
    %v6670 = vsel %vm4128, %v4621, %v5837
    %v6671 = vsel %vm4128, %v4622, %v5839
    %v6672 = vsel %vm3387, %v6608, %v5969
    %v6673 = vsel %vm3387, %v6609, %v5971
    %v6674 = vsel %vm3387, %v6610, %v5973
    %v6675 = vsel %vm3387, %v6611, %v5975
    %v6676 = vsel %vm3387, %v6612, %v5977
    %v6677 = vsel %vm3387, %v6613, %v5979
    %v6678 = vsel %vm3387, %v6614, %v5981
    %v6679 = vsel %vm3387, %v6615, %v5983
    %v6680 = vsel %vm3387, %v6616, %v5985
    %v6681 = vsel %vm3387, %v6617, %v5987
    %v6682 = vsel %vm3387, %v6618, %v5989
    %v6683 = vsel %vm3387, %v6619, %v5991
    %v6684 = vsel %vm3387, %v6620, %v5993
    %v6685 = vsel %vm3387, %v6621, %v5995
    %v6686 = vsel %vm3387, %v6622, %v5997
    %v6687 = vsel %vm3387, %v6623, %v5999
    %v6688 = vsel %vm3387, %v6624, %v6001
    %v6689 = vsel %vm3387, %v6625, %v6003
    %v6690 = vsel %vm3387, %v6626, %v6005
    %v6691 = vsel %vm3387, %v6627, %v6007
    %v6692 = vsel %vm3387, %v6628, %v6009
    %v6693 = vsel %vm3387, %v6629, %v6011
    %v6694 = vsel %vm3387, %v6630, %v6013
    %v6695 = vsel %vm3387, %v6631, %v6015
    %v6696 = vsel %vm3387, %v6632, %v6017
    %v6697 = vsel %vm3387, %v6633, %v6019
    %v6698 = vsel %vm3387, %v6634, %v6021
    %v6699 = vsel %vm3387, %v6635, %v6023
    %v6700 = vsel %vm3387, %v6636, %v6025
    %v6701 = vsel %vm3387, %v6637, %v6027
    %v6702 = vsel %vm3387, %v6638, %v6029
    %v6703 = vsel %vm3387, %v6639, %v6031
    %v6704 = vsel %vm3387, %v6640, %v6033
    %v6705 = vsel %vm3387, %v6641, %v6035
    %v6706 = vsel %vm3387, %v6642, %v6037
    %v6707 = vsel %vm3387, %v6643, %v6039
    %v6708 = vsel %vm3387, %v6644, %v6041
    %v6709 = vsel %vm3387, %v6645, %v6043
    %v6710 = vsel %vm3387, %v6646, %v6045
    %v6711 = vsel %vm3387, %v6647, %v6047
    %v6712 = vsel %vm3387, %v6648, %v6049
    %v6713 = vsel %vm3387, %v6649, %v6051
    %v6714 = vsel %vm3387, %v6650, %v6053
    %v6715 = vsel %vm3387, %v6651, %v6055
    %v6716 = vsel %vm3387, %v6652, %v6057
    %v6717 = vsel %vm3387, %v6653, %v6059
    %v6718 = vsel %vm3387, %v6654, %v6061
    %v6719 = vsel %vm3387, %v6655, %v6063
    %v6720 = vsel %vm3387, %v6656, %v6065
    %v6721 = vsel %vm3387, %v6657, %v6067
    %v6722 = vsel %vm3387, %v6658, %v6069
    %v6723 = vsel %vm3387, %v6659, %v6071
    %v6724 = vsel %vm3387, %v6660, %v6073
    %v6725 = vsel %vm3387, %v6661, %v6075
    %v6726 = vsel %vm3387, %v6662, %v6077
    %v6727 = vsel %vm3387, %v6663, %v6079
    %v6728 = vsel %vm3387, %v6664, %v6081
    %v6729 = vsel %vm3387, %v6665, %v6083
    %v6730 = vsel %vm3387, %v6666, %v6085
    %v6731 = vsel %vm3387, %v6667, %v6087
    %v6732 = vsel %vm3387, %v6668, %v6089
    %v6733 = vsel %vm3387, %v6669, %v6091
    %v6734 = vsel %vm3387, %v6670, %v6093
    %v6735 = vsel %vm3387, %v6671, %v6095
    %v6736 = vsel %vm3127, %v6672, %v6225
    %v6737 = vsel %vm3127, %v6673, %v6227
    %v6738 = vsel %vm3127, %v6674, %v6229
    %v6739 = vsel %vm3127, %v6675, %v6231
    %v6740 = vsel %vm3127, %v6676, %v6233
    %v6741 = vsel %vm3127, %v6677, %v6235
    %v6742 = vsel %vm3127, %v6678, %v6237
    %v6743 = vsel %vm3127, %v6679, %v6239
    %v6744 = vsel %vm3127, %v6680, %v6241
    %v6745 = vsel %vm3127, %v6681, %v6243
    %v6746 = vsel %vm3127, %v6682, %v6245
    %v6747 = vsel %vm3127, %v6683, %v6247
    %v6748 = vsel %vm3127, %v6684, %v6249
    %v6749 = vsel %vm3127, %v6685, %v6251
    %v6750 = vsel %vm3127, %v6686, %v6253
    %v6751 = vsel %vm3127, %v6687, %v6255
    %v6752 = vsel %vm3127, %v6688, %v6257
    %v6753 = vsel %vm3127, %v6689, %v6259
    %v6754 = vsel %vm3127, %v6690, %v6261
    %v6755 = vsel %vm3127, %v6691, %v6263
    %v6756 = vsel %vm3127, %v6692, %v6265
    %v6757 = vsel %vm3127, %v6693, %v6267
    %v6758 = vsel %vm3127, %v6694, %v6269
    %v6759 = vsel %vm3127, %v6695, %v6271
    %v6760 = vsel %vm3127, %v6696, %v6273
    %v6761 = vsel %vm3127, %v6697, %v6275
    %v6762 = vsel %vm3127, %v6698, %v6277
    %v6763 = vsel %vm3127, %v6699, %v6279
    %v6764 = vsel %vm3127, %v6700, %v6281
    %v6765 = vsel %vm3127, %v6701, %v6283
    %v6766 = vsel %vm3127, %v6702, %v6285
    %v6767 = vsel %vm3127, %v6703, %v6287
    %v6768 = vsel %vm3127, %v6704, %v6289
    %v6769 = vsel %vm3127, %v6705, %v6291
    %v6770 = vsel %vm3127, %v6706, %v6293
    %v6771 = vsel %vm3127, %v6707, %v6295
    %v6772 = vsel %vm3127, %v6708, %v6297
    %v6773 = vsel %vm3127, %v6709, %v6299
    %v6774 = vsel %vm3127, %v6710, %v6301
    %v6775 = vsel %vm3127, %v6711, %v6303
    %v6776 = vsel %vm3127, %v6712, %v6305
    %v6777 = vsel %vm3127, %v6713, %v6307
    %v6778 = vsel %vm3127, %v6714, %v6309
    %v6779 = vsel %vm3127, %v6715, %v6311
    %v6780 = vsel %vm3127, %v6716, %v6313
    %v6781 = vsel %vm3127, %v6717, %v6315
    %v6782 = vsel %vm3127, %v6718, %v6317
    %v6783 = vsel %vm3127, %v6719, %v6319
    %v6784 = vsel %vm3127, %v6720, %v6321
    %v6785 = vsel %vm3127, %v6721, %v6323
    %v6786 = vsel %vm3127, %v6722, %v6325
    %v6787 = vsel %vm3127, %v6723, %v6327
    %v6788 = vsel %vm3127, %v6724, %v6329
    %v6789 = vsel %vm3127, %v6725, %v6331
    %v6790 = vsel %vm3127, %v6726, %v6333
    %v6791 = vsel %vm3127, %v6727, %v6335
    %v6792 = vsel %vm3127, %v6728, %v6337
    %v6793 = vsel %vm3127, %v6729, %v6339
    %v6794 = vsel %vm3127, %v6730, %v6341
    %v6795 = vsel %vm3127, %v6731, %v6343
    %v6796 = vsel %vm3127, %v6732, %v6345
    %v6797 = vsel %vm3127, %v6733, %v6347
    %v6798 = vsel %vm3127, %v6734, %v6349
    %v6799 = vsel %vm3127, %v6735, %v6351
    %v6800 = vld [vmem:[#allocation10] sm:$0xff]
    %v6801 = vld [vmem:[#allocation10 + $0x8] sm:$0xff]
    %v6802 = vld [vmem:[#allocation10 + $0x10] sm:$0xff]
    %v6803 = vld [vmem:[#allocation10 + $0x18] sm:$0xff]
    %v6804 = vld [vmem:[#allocation10 + $0x20] sm:$0xff]
    %v6805 = vld [vmem:[#allocation10 + $0x28] sm:$0xff]
    %v6806 = vld [vmem:[#allocation10 + $0x30] sm:$0xff]
    %v6807 = vld [vmem:[#allocation10 + $0x38] sm:$0xff]
    %v6808 = vld [vmem:[#allocation10 + $0x40] sm:$0xff]
    %v6809 = vld [vmem:[#allocation10 + $0x48] sm:$0xff]
    %v6810 = vld [vmem:[#allocation10 + $0x50] sm:$0xff]
    %v6811 = vld [vmem:[#allocation10 + $0x58] sm:$0xff]
    %v6812 = vld [vmem:[#allocation10 + $0x60] sm:$0xff]
    %v6813 = vld [vmem:[#allocation10 + $0x68] sm:$0xff]
    %v6814 = vld [vmem:[#allocation10 + $0x70] sm:$0xff]
    %v6815 = vld [vmem:[#allocation10 + $0x78] sm:$0xff]
    %v6816 = vld [vmem:[#allocation10 + $0x80] sm:$0xff]
    %v6817 = vld [vmem:[#allocation10 + $0x88] sm:$0xff]
    %v6818 = vld [vmem:[#allocation10 + $0x90] sm:$0xff]
    %v6819 = vld [vmem:[#allocation10 + $0x98] sm:$0xff]
    %v6820 = vld [vmem:[#allocation10 + $0xa0] sm:$0xff]
    %v6821 = vld [vmem:[#allocation10 + $0xa8] sm:$0xff]
    %v6822 = vld [vmem:[#allocation10 + $0xb0] sm:$0xff]
    %v6823 = vld [vmem:[#allocation10 + $0xb8] sm:$0xff]
    %v6824 = vld [vmem:[#allocation10 + $0xc0] sm:$0xff]
    %v6825 = vld [vmem:[#allocation10 + $0xc8] sm:$0xff]
    %v6826 = vld [vmem:[#allocation10 + $0xd0] sm:$0xff]
    %v6827 = vld [vmem:[#allocation10 + $0xd8] sm:$0xff]
    %v6828 = vld [vmem:[#allocation10 + $0xe0] sm:$0xff]
    %v6829 = vld [vmem:[#allocation10 + $0xe8] sm:$0xff]
    %v6830 = vld [vmem:[#allocation10 + $0xf0] sm:$0xff]
    %v6831 = vld [vmem:[#allocation10 + $0xf8] sm:$0xff]
    %v6832 = vld [vmem:[#allocation10 + $0x100] sm:$0xff]
    %v6833 = vld [vmem:[#allocation10 + $0x108] sm:$0xff]
    %v6834 = vld [vmem:[#allocation10 + $0x110] sm:$0xff]
    %v6835 = vld [vmem:[#allocation10 + $0x118] sm:$0xff]
    %v6836 = vld [vmem:[%s4] sm:$0x1]
    %v6838 = vlaneseq
    %v6839 = vshrl.u32 %v6838, 7
    %v6840 = vsub.s32 0, %v6839
    %v6841 = vrot.slane %v6836, %v6840
    %v6844 = vsel %vm4128, %v4816, 0
    %v6847 = vsel %vm4128, %v4817, 0
    %v6850 = vsel %vm4128, %v4818, 0
    %v6853 = vsel %vm4128, %v4819, 0
    %v6856 = vsel %vm4128, %v4820, 0
    %v6859 = vsel %vm4128, %v4821, 0
    %v6862 = vsel %vm4128, %v4822, 0
    %v6865 = vsel %vm4128, %v4823, 0
    %v6868 = vsel %vm4128, %v4824, 0
    %v6871 = vsel %vm4128, %v4825, 0
    %v6874 = vsel %vm4128, %v4826, 0
    %v6877 = vsel %vm4128, %v4827, 0
    %v6880 = vsel %vm4128, %v4828, 0
    %v6883 = vsel %vm4128, %v4829, 0
    %v6886 = vsel %vm4128, %v4830, 0
    %v6889 = vsel %vm4128, %v4831, 0
    %v6892 = vsel %vm4128, %v4832, 0
    %v6895 = vsel %vm4128, %v4833, 0
    %v6898 = vsel %vm4128, %v4834, 0
    %v6901 = vsel %vm4128, %v4835, 0
    %v6904 = vsel %vm4128, %v4836, 0
    %v6907 = vsel %vm4128, %v4837, 0
    %v6910 = vsel %vm4128, %v4838, 0
    %v6913 = vsel %vm4128, %v4839, 0
    %v6916 = vsel %vm4128, %v4840, 0
    %v6919 = vsel %vm4128, %v4841, 0
    %v6922 = vsel %vm4128, %v4842, 0
    %v6925 = vsel %vm4128, %v4843, 0
    %v6928 = vsel %vm4128, %v4844, 0
    %v6931 = vsel %vm4128, %v4845, 0
    %v6934 = vsel %vm4128, %v4846, 0
    %v6937 = vsel %vm4128, %v4847, 0
    %v6940 = vsel %vm4128, %v4848, 0
    %v6943 = vsel %vm4128, %v4849, 0
    %v6946 = vsel %vm4128, %v4850, 0
    %v6949 = vsel %vm4128, %v4851, 0
    %v6952 = vsel %vm4128, %v4852, 0
    %v6955 = vsel %vm4128, %v4853, 0
    %v6958 = vsel %vm4128, %v4854, 0
    %v6961 = vsel %vm4128, %v4855, 0
    %v6964 = vsel %vm4128, %v4856, 0
    %v6967 = vsel %vm4128, %v4857, 0
    %v6970 = vsel %vm4128, %v4858, 0
    %v6973 = vsel %vm4128, %v4859, 0
    %v6976 = vsel %vm4128, %v4860, 0
    %v6979 = vsel %vm4128, %v4861, 0
    %v6982 = vsel %vm4128, %v4862, 0
    %v6985 = vsel %vm4128, %v4863, 0
    %v6988 = vsel %vm4128, %v4864, 0
    %v6991 = vsel %vm4128, %v4865, 0
    %v6994 = vsel %vm4128, %v4866, 0
    %v6997 = vsel %vm4128, %v4867, 0
    %v7000 = vsel %vm4128, %v4868, 0
    %v7003 = vsel %vm4128, %v4869, 0
    %v7006 = vsel %vm4128, %v4870, 0
    %v7009 = vsel %vm4128, %v4871, 0
    %v7012 = vsel %vm4128, %v4872, 0
    %v7015 = vsel %vm4128, %v4873, 0
    %v7018 = vsel %vm4128, %v4874, 0
    %v7021 = vsel %vm4128, %v4875, 0
    %v7024 = vsel %vm4128, %v4876, 0
    %v7027 = vsel %vm4128, %v4877, 0
    %v7030 = vsel %vm4128, %v4878, 0
    %v7033 = vsel %vm4128, %v4879, 0
    %7035 = vmatprep.subr.mxu0 0.0
    %7036 = vmatpush1.msra.mxu0 %v6815
    %7037 = vmatprep.subr.mxu0 0.0
    %7038 = vmatpush1.msra.mxu0 %v6814
    %7039 = vmatprep.subr.mxu0 0.0
    %7040 = vmatpush1.msra.mxu0 %v6813
    %7041 = vmatprep.subr.mxu0 0.0
    %7042 = vmatpush1.msra.mxu0 %v6812
    %7043 = vmatprep.subr.mxu0 0.0
    %7044 = vmatpush1.msra.mxu0 %v6811
    %7045 = vmatprep.subr.mxu0 0.0
    %7046 = vmatpush1.msra.mxu0 %v6810
    %7047 = vmatprep.subr.mxu0 0.0
    %7048 = vmatpush1.msra.mxu0 %v6809
    %7049 = vmatprep.subr.mxu0 0.0
    %7050 = vmatpush1.msra.mxu0 %v6808
    %7051 = vmatprep.subr.mxu0 0.0
    %7052 = vmatpush1.msra.mxu0 %v6807
    %7053 = vmatprep.subr.mxu0 0.0
    %7054 = vmatpush1.msra.mxu0 %v6806
    %7055 = vmatprep.subr.mxu0 0.0
    %7056 = vmatpush1.msra.mxu0 %v6805
    %7057 = vmatprep.subr.mxu0 0.0
    %7058 = vmatpush1.msra.mxu0 %v6804
    %7059 = vmatprep.subr.mxu0 0.0
    %7060 = vmatpush1.msra.mxu0 %v6803
    %7061 = vmatprep.subr.mxu0 0.0
    %7062 = vmatpush1.msra.mxu0 %v6802
    %7063 = vmatprep.subr.mxu0 0.0
    %7064 = vmatpush1.msra.mxu0 %v6801
    %7065 = vmatprep.subr.mxu0 0.0
    %7066 = vmatpush1.msra.mxu0 %v6800
    %7067 = vmatprep.subr.mxu0 0.0
    %7068 = vmatpush2.msra.mxu0 %v6831
    %7069 = vmatprep.subr.mxu0 0.0
    %7070 = vmatpush2.msra.mxu0 %v6830
    %7071 = vmatprep.subr.mxu0 0.0
    %7072 = vmatpush2.msra.mxu0 %v6829
    %7073 = vmatprep.subr.mxu0 0.0
    %7074 = vmatpush2.msra.mxu0 %v6828
    %7075 = vmatprep.subr.mxu0 0.0
    %7076 = vmatpush2.msra.mxu0 %v6827
    %7077 = vmatprep.subr.mxu0 0.0
    %7078 = vmatpush2.msra.mxu0 %v6826
    %7079 = vmatprep.subr.mxu0 0.0
    %7080 = vmatpush2.msra.mxu0 %v6825
    %7081 = vmatprep.subr.mxu0 0.0
    %7082 = vmatpush2.msra.mxu0 %v6824
    %7083 = vmatprep.subr.mxu0 0.0
    %7084 = vmatpush2.msra.mxu0 %v6823
    %7085 = vmatprep.subr.mxu0 0.0
    %7086 = vmatpush2.msra.mxu0 %v6822
    %7087 = vmatprep.subr.mxu0 0.0
    %7088 = vmatpush2.msra.mxu0 %v6821
    %7089 = vmatprep.subr.mxu0 0.0
    %7090 = vmatpush2.msra.mxu0 %v6820
    %7091 = vmatprep.subr.mxu0 0.0
    %7092 = vmatpush2.msra.mxu0 %v6819
    %7093 = vmatprep.subr.mxu0 0.0
    %7094 = vmatpush2.msra.mxu0 %v6818
    %7095 = vmatprep.subr.mxu0 0.0
    %7096 = vmatpush2.msra.mxu0 %v6817
    %7097 = vmatprep.subr.mxu0 0.0
    %7098 = vmatpush2.msra.mxu0 %v6816
    %7099 = vmatprep.mubr.f32.mxu0 %v6736
    %7100 = vmatmul.mubr.f32.gmra.mxu0 %v6544
    %v7101 = vpop.f32.mrf.mxu0
    %v7102 = vadd.f32 %v6841, %v7101
    %v7103 = vpop.f32.mrf.mxu0
    %7104 = vmatprep.mubr.f32.mxu0 %v6737
    %7105 = vmatmul.mubr.f32.gmra.mxu0 %v6545
    %v7106 = vpop.f32.mrf.mxu0
    %v7107 = vadd.f32 %v6841, %v7106
    %v7108 = vpop.f32.mrf.mxu0
    %7109 = vmatprep.mubr.f32.mxu0 %v6738
    %7110 = vmatmul.mubr.f32.gmra.mxu0 %v6546
    %v7111 = vpop.f32.mrf.mxu0
    %v7112 = vadd.f32 %v6841, %v7111
    %v7113 = vpop.f32.mrf.mxu0
    %7114 = vmatprep.mubr.f32.mxu0 %v6739
    %7115 = vmatmul.mubr.f32.gmra.mxu0 %v6547
    %v7116 = vpop.f32.mrf.mxu0
    %v7117 = vadd.f32 %v6841, %v7116
    %v7118 = vpop.f32.mrf.mxu0
    %7119 = vmatprep.mubr.f32.mxu0 %v6740
    %7120 = vmatmul.mubr.f32.gmra.mxu0 %v6548
    %v7121 = vpop.f32.mrf.mxu0
    %v7122 = vadd.f32 %v6841, %v7121
    %v7123 = vpop.f32.mrf.mxu0
    %7124 = vmatprep.mubr.f32.mxu0 %v6741
    %7125 = vmatmul.mubr.f32.gmra.mxu0 %v6549
    %v7126 = vpop.f32.mrf.mxu0
    %v7127 = vadd.f32 %v6841, %v7126
    %v7128 = vpop.f32.mrf.mxu0
    %7129 = vmatprep.mubr.f32.mxu0 %v6742
    %7130 = vmatmul.mubr.f32.gmra.mxu0 %v6550
    %v7131 = vpop.f32.mrf.mxu0
    %v7132 = vadd.f32 %v6841, %v7131
    %v7133 = vpop.f32.mrf.mxu0
    %7134 = vmatprep.mubr.f32.mxu0 %v6743
    %7135 = vmatmul.mubr.f32.gmra.mxu0 %v6551
    %v7136 = vpop.f32.mrf.mxu0
    %v7137 = vadd.f32 %v6841, %v7136
    %v7138 = vpop.f32.mrf.mxu0
    %7139 = vmatprep.mubr.f32.mxu0 %v6744
    %7140 = vmatmul.mubr.f32.gmra.mxu0 %v6552
    %v7141 = vpop.f32.mrf.mxu0
    %v7142 = vadd.f32 %v6841, %v7141
    %v7143 = vpop.f32.mrf.mxu0
    %7144 = vmatprep.mubr.f32.mxu0 %v6745
    %7145 = vmatmul.mubr.f32.gmra.mxu0 %v6553
    %v7146 = vpop.f32.mrf.mxu0
    %v7147 = vadd.f32 %v6841, %v7146
    %v7148 = vpop.f32.mrf.mxu0
    %7149 = vmatprep.mubr.f32.mxu0 %v6746
    %7150 = vmatmul.mubr.f32.gmra.mxu0 %v6554
    %v7151 = vpop.f32.mrf.mxu0
    %v7152 = vadd.f32 %v6841, %v7151
    %v7153 = vpop.f32.mrf.mxu0
    %7154 = vmatprep.mubr.f32.mxu0 %v6747
    %7155 = vmatmul.mubr.f32.gmra.mxu0 %v6555
    %v7156 = vpop.f32.mrf.mxu0
    %v7157 = vadd.f32 %v6841, %v7156
    %v7158 = vpop.f32.mrf.mxu0
    %7159 = vmatprep.mubr.f32.mxu0 %v6748
    %7160 = vmatmul.mubr.f32.gmra.mxu0 %v6556
    %v7161 = vpop.f32.mrf.mxu0
    %v7162 = vadd.f32 %v6841, %v7161
    %v7163 = vpop.f32.mrf.mxu0
    %7164 = vmatprep.mubr.f32.mxu0 %v6749
    %7165 = vmatmul.mubr.f32.gmra.mxu0 %v6557
    %v7166 = vpop.f32.mrf.mxu0
    %v7167 = vadd.f32 %v6841, %v7166
    %v7168 = vpop.f32.mrf.mxu0
    %7169 = vmatprep.mubr.f32.mxu0 %v6750
    %7170 = vmatmul.mubr.f32.gmra.mxu0 %v6558
    %v7171 = vpop.f32.mrf.mxu0
    %v7172 = vadd.f32 %v6841, %v7171
    %v7173 = vpop.f32.mrf.mxu0
    %7174 = vmatprep.mubr.f32.mxu0 %v6751
    %7175 = vmatmul.mubr.f32.gmra.mxu0 %v6559
    %v7176 = vpop.f32.mrf.mxu0
    %v7177 = vadd.f32 %v6841, %v7176
    %v7178 = vpop.f32.mrf.mxu0
    %7179 = vmatprep.mubr.f32.mxu0 %v6752
    %7180 = vmatmul.mubr.f32.gmra.mxu0 %v6560
    %v7181 = vpop.f32.mrf.mxu0
    %v7182 = vadd.f32 %v6841, %v7181
    %v7183 = vpop.f32.mrf.mxu0
    %7184 = vmatprep.mubr.f32.mxu0 %v6753
    %7185 = vmatmul.mubr.f32.gmra.mxu0 %v6561
    %v7186 = vpop.f32.mrf.mxu0
    %v7187 = vadd.f32 %v6841, %v7186
    %v7188 = vpop.f32.mrf.mxu0
    %7189 = vmatprep.mubr.f32.mxu0 %v6754
    %7190 = vmatmul.mubr.f32.gmra.mxu0 %v6562
    %v7191 = vpop.f32.mrf.mxu0
    %v7192 = vadd.f32 %v6841, %v7191
    %v7193 = vpop.f32.mrf.mxu0
    %7194 = vmatprep.mubr.f32.mxu0 %v6755
    %7195 = vmatmul.mubr.f32.gmra.mxu0 %v6563
    %v7196 = vpop.f32.mrf.mxu0
    %v7197 = vadd.f32 %v6841, %v7196
    %v7198 = vpop.f32.mrf.mxu0
    %7199 = vmatprep.mubr.f32.mxu0 %v6756
    %7200 = vmatmul.mubr.f32.gmra.mxu0 %v6564
    %v7201 = vpop.f32.mrf.mxu0
    %v7202 = vadd.f32 %v6841, %v7201
    %v7203 = vpop.f32.mrf.mxu0
    %7204 = vmatprep.mubr.f32.mxu0 %v6757
    %7205 = vmatmul.mubr.f32.gmra.mxu0 %v6565
    %v7206 = vpop.f32.mrf.mxu0
    %v7207 = vadd.f32 %v6841, %v7206
    %v7208 = vpop.f32.mrf.mxu0
    %7209 = vmatprep.mubr.f32.mxu0 %v6758
    %7210 = vmatmul.mubr.f32.gmra.mxu0 %v6566
    %v7211 = vpop.f32.mrf.mxu0
    %v7212 = vadd.f32 %v6841, %v7211
    %v7213 = vpop.f32.mrf.mxu0
    %7214 = vmatprep.mubr.f32.mxu0 %v6759
    %7215 = vmatmul.mubr.f32.gmra.mxu0 %v6567
    %v7216 = vpop.f32.mrf.mxu0
    %v7217 = vadd.f32 %v6841, %v7216
    %v7218 = vpop.f32.mrf.mxu0
    %7219 = vmatprep.mubr.f32.mxu0 %v6760
    %7220 = vmatmul.mubr.f32.gmra.mxu0 %v6568
    %v7221 = vpop.f32.mrf.mxu0
    %v7222 = vadd.f32 %v6841, %v7221
    %v7223 = vpop.f32.mrf.mxu0
    %7224 = vmatprep.mubr.f32.mxu0 %v6761
    %7225 = vmatmul.mubr.f32.gmra.mxu0 %v6569
    %v7226 = vpop.f32.mrf.mxu0
    %v7227 = vadd.f32 %v6841, %v7226
    %v7228 = vpop.f32.mrf.mxu0
    %7229 = vmatprep.mubr.f32.mxu0 %v6762
    %7230 = vmatmul.mubr.f32.gmra.mxu0 %v6570
    %v7231 = vpop.f32.mrf.mxu0
    %v7232 = vadd.f32 %v6841, %v7231
    %v7233 = vpop.f32.mrf.mxu0
    %7234 = vmatprep.mubr.f32.mxu0 %v6763
    %7235 = vmatmul.mubr.f32.gmra.mxu0 %v6571
    %v7236 = vpop.f32.mrf.mxu0
    %v7237 = vadd.f32 %v6841, %v7236
    %v7238 = vpop.f32.mrf.mxu0
    %7239 = vmatprep.mubr.f32.mxu0 %v6764
    %7240 = vmatmul.mubr.f32.gmra.mxu0 %v6572
    %v7241 = vpop.f32.mrf.mxu0
    %v7242 = vadd.f32 %v6841, %v7241
    %v7243 = vpop.f32.mrf.mxu0
    %7244 = vmatprep.mubr.f32.mxu0 %v6765
    %7245 = vmatmul.mubr.f32.gmra.mxu0 %v6573
    %v7246 = vpop.f32.mrf.mxu0
    %v7247 = vadd.f32 %v6841, %v7246
    %v7248 = vpop.f32.mrf.mxu0
    %7249 = vmatprep.mubr.f32.mxu0 %v6766
    %7250 = vmatmul.mubr.f32.gmra.mxu0 %v6574
    %v7251 = vpop.f32.mrf.mxu0
    %v7252 = vadd.f32 %v6841, %v7251
    %v7253 = vpop.f32.mrf.mxu0
    %7254 = vmatprep.mubr.f32.mxu0 %v6767
    %7255 = vmatmul.mubr.f32.gmra.mxu0 %v6575
    %v7256 = vpop.f32.mrf.mxu0
    %v7257 = vadd.f32 %v6841, %v7256
    %v7258 = vpop.f32.mrf.mxu0
    %7259 = vmatprep.mubr.f32.mxu0 %v6768
    %7260 = vmatmul.mubr.f32.gmra.mxu0 %v6576
    %v7261 = vpop.f32.mrf.mxu0
    %v7262 = vadd.f32 %v6841, %v7261
    %v7263 = vpop.f32.mrf.mxu0
    %7264 = vmatprep.mubr.f32.mxu0 %v6769
    %7265 = vmatmul.mubr.f32.gmra.mxu0 %v6577
    %v7266 = vpop.f32.mrf.mxu0
    %v7267 = vadd.f32 %v6841, %v7266
    %v7268 = vpop.f32.mrf.mxu0
    %7269 = vmatprep.mubr.f32.mxu0 %v6770
    %7270 = vmatmul.mubr.f32.gmra.mxu0 %v6578
    %v7271 = vpop.f32.mrf.mxu0
    %v7272 = vadd.f32 %v6841, %v7271
    %v7273 = vpop.f32.mrf.mxu0
    %7274 = vmatprep.mubr.f32.mxu0 %v6771
    %7275 = vmatmul.mubr.f32.gmra.mxu0 %v6579
    %v7276 = vpop.f32.mrf.mxu0
    %v7277 = vadd.f32 %v6841, %v7276
    %v7278 = vpop.f32.mrf.mxu0
    %7279 = vmatprep.mubr.f32.mxu0 %v6772
    %7280 = vmatmul.mubr.f32.gmra.mxu0 %v6580
    %v7281 = vpop.f32.mrf.mxu0
    %v7282 = vadd.f32 %v6841, %v7281
    %v7283 = vpop.f32.mrf.mxu0
    %7284 = vmatprep.mubr.f32.mxu0 %v6773
    %7285 = vmatmul.mubr.f32.gmra.mxu0 %v6581
    %v7286 = vpop.f32.mrf.mxu0
    %v7287 = vadd.f32 %v6841, %v7286
    %v7288 = vpop.f32.mrf.mxu0
    %7289 = vmatprep.mubr.f32.mxu0 %v6774
    %7290 = vmatmul.mubr.f32.gmra.mxu0 %v6582
    %v7291 = vpop.f32.mrf.mxu0
    %v7292 = vadd.f32 %v6841, %v7291
    %v7293 = vpop.f32.mrf.mxu0
    %7294 = vmatprep.mubr.f32.mxu0 %v6775
    %7295 = vmatmul.mubr.f32.gmra.mxu0 %v6583
    %v7296 = vpop.f32.mrf.mxu0
    %v7297 = vadd.f32 %v6841, %v7296
    %v7298 = vpop.f32.mrf.mxu0
    %7299 = vmatprep.mubr.f32.mxu0 %v6776
    %7300 = vmatmul.mubr.f32.gmra.mxu0 %v6584
    %v7301 = vpop.f32.mrf.mxu0
    %v7302 = vadd.f32 %v6841, %v7301
    %v7303 = vpop.f32.mrf.mxu0
    %7304 = vmatprep.mubr.f32.mxu0 %v6777
    %7305 = vmatmul.mubr.f32.gmra.mxu0 %v6585
    %v7306 = vpop.f32.mrf.mxu0
    %v7307 = vadd.f32 %v6841, %v7306
    %v7308 = vpop.f32.mrf.mxu0
    %7309 = vmatprep.mubr.f32.mxu0 %v6778
    %7310 = vmatmul.mubr.f32.gmra.mxu0 %v6586
    %v7311 = vpop.f32.mrf.mxu0
    %v7312 = vadd.f32 %v6841, %v7311
    %v7313 = vpop.f32.mrf.mxu0
    %7314 = vmatprep.mubr.f32.mxu0 %v6779
    %7315 = vmatmul.mubr.f32.gmra.mxu0 %v6587
    %v7316 = vpop.f32.mrf.mxu0
    %v7317 = vadd.f32 %v6841, %v7316
    %v7318 = vpop.f32.mrf.mxu0
    %7319 = vmatprep.mubr.f32.mxu0 %v6780
    %7320 = vmatmul.mubr.f32.gmra.mxu0 %v6588
    %v7321 = vpop.f32.mrf.mxu0
    %v7322 = vadd.f32 %v6841, %v7321
    %v7323 = vpop.f32.mrf.mxu0
    %7324 = vmatprep.mubr.f32.mxu0 %v6781
    %7325 = vmatmul.mubr.f32.gmra.mxu0 %v6589
    %v7326 = vpop.f32.mrf.mxu0
    %v7327 = vadd.f32 %v6841, %v7326
    %v7328 = vpop.f32.mrf.mxu0
    %7329 = vmatprep.mubr.f32.mxu0 %v6782
    %7330 = vmatmul.mubr.f32.gmra.mxu0 %v6590
    %v7331 = vpop.f32.mrf.mxu0
    %v7332 = vadd.f32 %v6841, %v7331
    %v7333 = vpop.f32.mrf.mxu0
    %7334 = vmatprep.mubr.f32.mxu0 %v6783
    %7335 = vmatmul.mubr.f32.gmra.mxu0 %v6591
    %v7336 = vpop.f32.mrf.mxu0
    %v7337 = vadd.f32 %v6841, %v7336
    %v7338 = vpop.f32.mrf.mxu0
    %7339 = vmatprep.mubr.f32.mxu0 %v6784
    %7340 = vmatmul.mubr.f32.gmra.mxu0 %v6592
    %v7341 = vpop.f32.mrf.mxu0
    %v7342 = vadd.f32 %v6841, %v7341
    %v7343 = vpop.f32.mrf.mxu0
    %7344 = vmatprep.mubr.f32.mxu0 %v6785
    %7345 = vmatmul.mubr.f32.gmra.mxu0 %v6593
    %v7346 = vpop.f32.mrf.mxu0
    %v7347 = vadd.f32 %v6841, %v7346
    %v7348 = vpop.f32.mrf.mxu0
    %7349 = vmatprep.mubr.f32.mxu0 %v6786
    %7350 = vmatmul.mubr.f32.gmra.mxu0 %v6594
    %v7351 = vpop.f32.mrf.mxu0
    %v7352 = vadd.f32 %v6841, %v7351
    %v7353 = vpop.f32.mrf.mxu0
    %7354 = vmatprep.mubr.f32.mxu0 %v6787
    %7355 = vmatmul.mubr.f32.gmra.mxu0 %v6595
    %v7356 = vpop.f32.mrf.mxu0
    %v7357 = vadd.f32 %v6841, %v7356
    %v7358 = vpop.f32.mrf.mxu0
    %7359 = vmatprep.mubr.f32.mxu0 %v6788
    %7360 = vmatmul.mubr.f32.gmra.mxu0 %v6596
    %v7361 = vpop.f32.mrf.mxu0
    %v7362 = vadd.f32 %v6841, %v7361
    %v7363 = vpop.f32.mrf.mxu0
    %7364 = vmatprep.mubr.f32.mxu0 %v6789
    %7365 = vmatmul.mubr.f32.gmra.mxu0 %v6597
    %v7366 = vpop.f32.mrf.mxu0
    %v7367 = vadd.f32 %v6841, %v7366
    %v7368 = vpop.f32.mrf.mxu0
    %7369 = vmatprep.mubr.f32.mxu0 %v6790
    %7370 = vmatmul.mubr.f32.gmra.mxu0 %v6598
    %v7371 = vpop.f32.mrf.mxu0
    %v7372 = vadd.f32 %v6841, %v7371
    %v7373 = vpop.f32.mrf.mxu0
    %7374 = vmatprep.mubr.f32.mxu0 %v6791
    %7375 = vmatmul.mubr.f32.gmra.mxu0 %v6599
    %v7376 = vpop.f32.mrf.mxu0
    %v7377 = vadd.f32 %v6841, %v7376
    %v7378 = vpop.f32.mrf.mxu0
    %7379 = vmatprep.mubr.f32.mxu0 %v6792
    %7380 = vmatmul.mubr.f32.gmra.mxu0 %v6600
    %v7381 = vpop.f32.mrf.mxu0
    %v7382 = vadd.f32 %v6841, %v7381
    %v7383 = vpop.f32.mrf.mxu0
    %7384 = vmatprep.mubr.f32.mxu0 %v6793
    %7385 = vmatmul.mubr.f32.gmra.mxu0 %v6601
    %v7386 = vpop.f32.mrf.mxu0
    %v7387 = vadd.f32 %v6841, %v7386
    %v7388 = vpop.f32.mrf.mxu0
    %7389 = vmatprep.mubr.f32.mxu0 %v6794
    %7390 = vmatmul.mubr.f32.gmra.mxu0 %v6602
    %v7391 = vpop.f32.mrf.mxu0
    %v7392 = vadd.f32 %v6841, %v7391
    %v7393 = vpop.f32.mrf.mxu0
    %7394 = vmatprep.mubr.f32.mxu0 %v6795
    %7395 = vmatmul.mubr.f32.gmra.mxu0 %v6603
    %v7396 = vpop.f32.mrf.mxu0
    %v7397 = vadd.f32 %v6841, %v7396
    %v7398 = vpop.f32.mrf.mxu0
    %7399 = vmatprep.mubr.f32.mxu0 %v6796
    %7400 = vmatmul.mubr.f32.gmra.mxu0 %v6604
    %v7401 = vpop.f32.mrf.mxu0
    %v7402 = vadd.f32 %v6841, %v7401
    %v7403 = vpop.f32.mrf.mxu0
    %7404 = vmatprep.mubr.f32.mxu0 %v6797
    %7405 = vmatmul.mubr.f32.gmra.mxu0 %v6605
    %v7406 = vpop.f32.mrf.mxu0
    %v7407 = vadd.f32 %v6841, %v7406
    %v7408 = vpop.f32.mrf.mxu0
    %7409 = vmatprep.mubr.f32.mxu0 %v6798
    %7410 = vmatmul.mubr.f32.gmra.mxu0 %v6606
    %v7411 = vpop.f32.mrf.mxu0
    %v7412 = vadd.f32 %v6841, %v7411
    %v7413 = vpop.f32.mrf.mxu0
    %7414 = vmatprep.mubr.f32.mxu0 %v6799
    %7415 = vmatmul.mubr.f32.gmra.mxu0 %v6607
    %v7416 = vpop.f32.mrf.mxu0
    %v7417 = vadd.f32 %v6841, %v7416
    %v7418 = vpop.f32.mrf.mxu0
    %7419 = vdwg.mxu0
    %7420 = vmatprep.subr.mxu0 0.0
    %7421 = vmatpush1.msra.mxu0 0.0
    %7422 = vmatprep.subr.mxu0 0.0
    %7423 = vmatpush1.msra.mxu0 0.0
    %7424 = vmatprep.subr.mxu0 0.0
    %7425 = vmatpush1.msra.mxu0 0.0
    %7426 = vmatprep.subr.mxu0 0.0
    %7427 = vmatpush1.msra.mxu0 0.0
    %7428 = vmatprep.subr.mxu0 0.0
    %7429 = vmatpush1.msra.mxu0 0.0
    %7430 = vmatprep.subr.mxu0 0.0
    %7431 = vmatpush1.msra.mxu0 0.0
    %7432 = vmatprep.subr.mxu0 0.0
    %7433 = vmatpush1.msra.mxu0 0.0
    %7434 = vmatprep.subr.mxu0 0.0
    %7435 = vmatpush1.msra.mxu0 0.0
    %7436 = vmatprep.subr.mxu0 0.0
    %7437 = vmatpush1.msra.mxu0 0.0
    %7438 = vmatprep.subr.mxu0 0.0
    %7439 = vmatpush1.msra.mxu0 0.0
    %7440 = vmatprep.subr.mxu0 0.0
    %7441 = vmatpush1.msra.mxu0 0.0
    %7442 = vmatprep.subr.mxu0 0.0
    %7443 = vmatpush1.msra.mxu0 0.0
    %7444 = vmatprep.subr.mxu0 0.0
    %7445 = vmatpush1.msra.mxu0 %v6835
    %7446 = vmatprep.subr.mxu0 0.0
    %7447 = vmatpush1.msra.mxu0 %v6834
    %7448 = vmatprep.subr.mxu0 0.0
    %7449 = vmatpush1.msra.mxu0 %v6833
    %7450 = vmatprep.subr.mxu0 0.0
    %7451 = vmatpush1.msra.mxu0 %v6832
    %7452 = vmatprep.subr.mxu0 0.0
    %7453 = vmatpush2.msra.mxu0 0.0
    %7454 = vmatprep.subr.mxu0 0.0
    %7455 = vmatpush2.msra.mxu0 0.0
    %7456 = vmatprep.subr.mxu0 0.0
    %7457 = vmatpush2.msra.mxu0 0.0
    %7458 = vmatprep.subr.mxu0 0.0
    %7459 = vmatpush2.msra.mxu0 0.0
    %7460 = vmatprep.subr.mxu0 0.0
    %7461 = vmatpush2.msra.mxu0 0.0
    %7462 = vmatprep.subr.mxu0 0.0
    %7463 = vmatpush2.msra.mxu0 0.0
    %7464 = vmatprep.subr.mxu0 0.0
    %7465 = vmatpush2.msra.mxu0 0.0
    %7466 = vmatprep.subr.mxu0 0.0
    %7467 = vmatpush2.msra.mxu0 0.0
    %7468 = vmatprep.subr.mxu0 0.0
    %7469 = vmatpush2.msra.mxu0 0.0
    %7470 = vmatprep.subr.mxu0 0.0
    %7471 = vmatpush2.msra.mxu0 0.0
    %7472 = vmatprep.subr.mxu0 0.0
    %7473 = vmatpush2.msra.mxu0 0.0
    %7474 = vmatprep.subr.mxu0 0.0
    %7475 = vmatpush2.msra.mxu0 0.0
    %7476 = vmatprep.subr.mxu0 0.0
    %7477 = vmatpush2.msra.mxu0 0.0
    %7478 = vmatprep.subr.mxu0 0.0
    %7479 = vmatpush2.msra.mxu0 0.0
    %7480 = vmatprep.subr.mxu0 0.0
    %7481 = vmatpush2.msra.mxu0 0.0
    %7482 = vmatprep.subr.mxu0 0.0
    %7483 = vmatpush2.msra.mxu0 0.0
    %7484 = vmatprep.mubr.f32.mxu0 0.0
    %7485 = vmatmul.mubr.f32.gmra.mxu0 %v6844
    %v7486 = vpop.f32.mrf.mxu0
    %v7487 = vadd.f32 %v7102, %v7486
    %v7488 = vpop.f32.mrf.mxu0
    %7489 = vmatprep.mubr.f32.mxu0 0.0
    %7490 = vmatmul.mubr.f32.gmra.mxu0 %v6847
    %v7491 = vpop.f32.mrf.mxu0
    %v7492 = vadd.f32 %v7107, %v7491
    %v7493 = vpop.f32.mrf.mxu0
    %7494 = vmatprep.mubr.f32.mxu0 0.0
    %7495 = vmatmul.mubr.f32.gmra.mxu0 %v6850
    %v7496 = vpop.f32.mrf.mxu0
    %v7497 = vadd.f32 %v7112, %v7496
    %v7498 = vpop.f32.mrf.mxu0
    %7499 = vmatprep.mubr.f32.mxu0 0.0
    %7500 = vmatmul.mubr.f32.gmra.mxu0 %v6853
    %v7501 = vpop.f32.mrf.mxu0
    %v7502 = vadd.f32 %v7117, %v7501
    %v7503 = vpop.f32.mrf.mxu0
    %7504 = vmatprep.mubr.f32.mxu0 0.0
    %7505 = vmatmul.mubr.f32.gmra.mxu0 %v6856
    %v7506 = vpop.f32.mrf.mxu0
    %v7507 = vadd.f32 %v7122, %v7506
    %v7508 = vpop.f32.mrf.mxu0
    %7509 = vmatprep.mubr.f32.mxu0 0.0
    %7510 = vmatmul.mubr.f32.gmra.mxu0 %v6859
    %v7511 = vpop.f32.mrf.mxu0
    %v7512 = vadd.f32 %v7127, %v7511
    %v7513 = vpop.f32.mrf.mxu0
    %7514 = vmatprep.mubr.f32.mxu0 0.0
    %7515 = vmatmul.mubr.f32.gmra.mxu0 %v6862
    %v7516 = vpop.f32.mrf.mxu0
    %v7517 = vadd.f32 %v7132, %v7516
    %v7518 = vpop.f32.mrf.mxu0
    %7519 = vmatprep.mubr.f32.mxu0 0.0
    %7520 = vmatmul.mubr.f32.gmra.mxu0 %v6865
    %v7521 = vpop.f32.mrf.mxu0
    %v7522 = vadd.f32 %v7137, %v7521
    %v7523 = vpop.f32.mrf.mxu0
    %7524 = vmatprep.mubr.f32.mxu0 0.0
    %7525 = vmatmul.mubr.f32.gmra.mxu0 %v6868
    %v7526 = vpop.f32.mrf.mxu0
    %v7527 = vadd.f32 %v7142, %v7526
    %v7528 = vpop.f32.mrf.mxu0
    %7529 = vmatprep.mubr.f32.mxu0 0.0
    %7530 = vmatmul.mubr.f32.gmra.mxu0 %v6871
    %v7531 = vpop.f32.mrf.mxu0
    %v7532 = vadd.f32 %v7147, %v7531
    %v7533 = vpop.f32.mrf.mxu0
    %7534 = vmatprep.mubr.f32.mxu0 0.0
    %7535 = vmatmul.mubr.f32.gmra.mxu0 %v6874
    %v7536 = vpop.f32.mrf.mxu0
    %v7537 = vadd.f32 %v7152, %v7536
    %v7538 = vpop.f32.mrf.mxu0
    %7539 = vmatprep.mubr.f32.mxu0 0.0
    %7540 = vmatmul.mubr.f32.gmra.mxu0 %v6877
    %v7541 = vpop.f32.mrf.mxu0
    %v7542 = vadd.f32 %v7157, %v7541
    %v7543 = vpop.f32.mrf.mxu0
    %7544 = vmatprep.mubr.f32.mxu0 0.0
    %7545 = vmatmul.mubr.f32.gmra.mxu0 %v6880
    %v7546 = vpop.f32.mrf.mxu0
    %v7547 = vadd.f32 %v7162, %v7546
    %v7548 = vpop.f32.mrf.mxu0
    %7549 = vmatprep.mubr.f32.mxu0 0.0
    %7550 = vmatmul.mubr.f32.gmra.mxu0 %v6883
    %v7551 = vpop.f32.mrf.mxu0
    %v7552 = vadd.f32 %v7167, %v7551
    %v7553 = vpop.f32.mrf.mxu0
    %7554 = vmatprep.mubr.f32.mxu0 0.0
    %7555 = vmatmul.mubr.f32.gmra.mxu0 %v6886
    %v7556 = vpop.f32.mrf.mxu0
    %v7557 = vadd.f32 %v7172, %v7556
    %v7558 = vpop.f32.mrf.mxu0
    %7559 = vmatprep.mubr.f32.mxu0 0.0
    %7560 = vmatmul.mubr.f32.gmra.mxu0 %v6889
    %v7561 = vpop.f32.mrf.mxu0
    %v7562 = vadd.f32 %v7177, %v7561
    %v7563 = vpop.f32.mrf.mxu0
    %7564 = vmatprep.mubr.f32.mxu0 0.0
    %7565 = vmatmul.mubr.f32.gmra.mxu0 %v6892
    %v7566 = vpop.f32.mrf.mxu0
    %v7567 = vadd.f32 %v7182, %v7566
    %v7568 = vpop.f32.mrf.mxu0
    %7569 = vmatprep.mubr.f32.mxu0 0.0
    %7570 = vmatmul.mubr.f32.gmra.mxu0 %v6895
    %v7571 = vpop.f32.mrf.mxu0
    %v7572 = vadd.f32 %v7187, %v7571
    %v7573 = vpop.f32.mrf.mxu0
    %7574 = vmatprep.mubr.f32.mxu0 0.0
    %7575 = vmatmul.mubr.f32.gmra.mxu0 %v6898
    %v7576 = vpop.f32.mrf.mxu0
    %v7577 = vadd.f32 %v7192, %v7576
    %v7578 = vpop.f32.mrf.mxu0
    %7579 = vmatprep.mubr.f32.mxu0 0.0
    %7580 = vmatmul.mubr.f32.gmra.mxu0 %v6901
    %v7581 = vpop.f32.mrf.mxu0
    %v7582 = vadd.f32 %v7197, %v7581
    %v7583 = vpop.f32.mrf.mxu0
    %7584 = vmatprep.mubr.f32.mxu0 0.0
    %7585 = vmatmul.mubr.f32.gmra.mxu0 %v6904
    %v7586 = vpop.f32.mrf.mxu0
    %v7587 = vadd.f32 %v7202, %v7586
    %v7588 = vpop.f32.mrf.mxu0
    %7589 = vmatprep.mubr.f32.mxu0 0.0
    %7590 = vmatmul.mubr.f32.gmra.mxu0 %v6907
    %v7591 = vpop.f32.mrf.mxu0
    %v7592 = vadd.f32 %v7207, %v7591
    %v7593 = vpop.f32.mrf.mxu0
    %7594 = vmatprep.mubr.f32.mxu0 0.0
    %7595 = vmatmul.mubr.f32.gmra.mxu0 %v6910
    %v7596 = vpop.f32.mrf.mxu0
    %v7597 = vadd.f32 %v7212, %v7596
    %v7598 = vpop.f32.mrf.mxu0
    %7599 = vmatprep.mubr.f32.mxu0 0.0
    %7600 = vmatmul.mubr.f32.gmra.mxu0 %v6913
    %v7601 = vpop.f32.mrf.mxu0
    %v7602 = vadd.f32 %v7217, %v7601
    %v7603 = vpop.f32.mrf.mxu0
    %7604 = vmatprep.mubr.f32.mxu0 0.0
    %7605 = vmatmul.mubr.f32.gmra.mxu0 %v6916
    %v7606 = vpop.f32.mrf.mxu0
    %v7607 = vadd.f32 %v7222, %v7606
    %v7608 = vpop.f32.mrf.mxu0
    %7609 = vmatprep.mubr.f32.mxu0 0.0
    %7610 = vmatmul.mubr.f32.gmra.mxu0 %v6919
    %v7611 = vpop.f32.mrf.mxu0
    %v7612 = vadd.f32 %v7227, %v7611
    %v7613 = vpop.f32.mrf.mxu0
    %7614 = vmatprep.mubr.f32.mxu0 0.0
    %7615 = vmatmul.mubr.f32.gmra.mxu0 %v6922
    %v7616 = vpop.f32.mrf.mxu0
    %v7617 = vadd.f32 %v7232, %v7616
    %v7618 = vpop.f32.mrf.mxu0
    %7619 = vmatprep.mubr.f32.mxu0 0.0
    %7620 = vmatmul.mubr.f32.gmra.mxu0 %v6925
    %v7621 = vpop.f32.mrf.mxu0
    %v7622 = vadd.f32 %v7237, %v7621
    %v7623 = vpop.f32.mrf.mxu0
    %7624 = vmatprep.mubr.f32.mxu0 0.0
    %7625 = vmatmul.mubr.f32.gmra.mxu0 %v6928
    %v7626 = vpop.f32.mrf.mxu0
    %v7627 = vadd.f32 %v7242, %v7626
    %v7628 = vpop.f32.mrf.mxu0
    %7629 = vmatprep.mubr.f32.mxu0 0.0
    %7630 = vmatmul.mubr.f32.gmra.mxu0 %v6931
    %v7631 = vpop.f32.mrf.mxu0
    %v7632 = vadd.f32 %v7247, %v7631
    %v7633 = vpop.f32.mrf.mxu0
    %7634 = vmatprep.mubr.f32.mxu0 0.0
    %7635 = vmatmul.mubr.f32.gmra.mxu0 %v6934
    %v7636 = vpop.f32.mrf.mxu0
    %v7637 = vadd.f32 %v7252, %v7636
    %v7638 = vpop.f32.mrf.mxu0
    %7639 = vmatprep.mubr.f32.mxu0 0.0
    %7640 = vmatmul.mubr.f32.gmra.mxu0 %v6937
    %v7641 = vpop.f32.mrf.mxu0
    %v7642 = vadd.f32 %v7257, %v7641
    %v7643 = vpop.f32.mrf.mxu0
    %7644 = vmatprep.mubr.f32.mxu0 0.0
    %7645 = vmatmul.mubr.f32.gmra.mxu0 %v6940
    %v7646 = vpop.f32.mrf.mxu0
    %v7647 = vadd.f32 %v7262, %v7646
    %v7648 = vpop.f32.mrf.mxu0
    %7649 = vmatprep.mubr.f32.mxu0 0.0
    %7650 = vmatmul.mubr.f32.gmra.mxu0 %v6943
    %v7651 = vpop.f32.mrf.mxu0
    %v7652 = vadd.f32 %v7267, %v7651
    %v7653 = vpop.f32.mrf.mxu0
    %7654 = vmatprep.mubr.f32.mxu0 0.0
    %7655 = vmatmul.mubr.f32.gmra.mxu0 %v6946
    %v7656 = vpop.f32.mrf.mxu0
    %v7657 = vadd.f32 %v7272, %v7656
    %v7658 = vpop.f32.mrf.mxu0
    %7659 = vmatprep.mubr.f32.mxu0 0.0
    %7660 = vmatmul.mubr.f32.gmra.mxu0 %v6949
    %v7661 = vpop.f32.mrf.mxu0
    %v7662 = vadd.f32 %v7277, %v7661
    %v7663 = vpop.f32.mrf.mxu0
    %7664 = vmatprep.mubr.f32.mxu0 0.0
    %7665 = vmatmul.mubr.f32.gmra.mxu0 %v6952
    %v7666 = vpop.f32.mrf.mxu0
    %v7667 = vadd.f32 %v7282, %v7666
    %v7668 = vpop.f32.mrf.mxu0
    %7669 = vmatprep.mubr.f32.mxu0 0.0
    %7670 = vmatmul.mubr.f32.gmra.mxu0 %v6955
    %v7671 = vpop.f32.mrf.mxu0
    %v7672 = vadd.f32 %v7287, %v7671
    %v7673 = vpop.f32.mrf.mxu0
    %7674 = vmatprep.mubr.f32.mxu0 0.0
    %7675 = vmatmul.mubr.f32.gmra.mxu0 %v6958
    %v7676 = vpop.f32.mrf.mxu0
    %v7677 = vadd.f32 %v7292, %v7676
    %v7678 = vpop.f32.mrf.mxu0
    %7679 = vmatprep.mubr.f32.mxu0 0.0
    %7680 = vmatmul.mubr.f32.gmra.mxu0 %v6961
    %v7681 = vpop.f32.mrf.mxu0
    %v7682 = vadd.f32 %v7297, %v7681
    %v7683 = vpop.f32.mrf.mxu0
    %7684 = vmatprep.mubr.f32.mxu0 0.0
    %7685 = vmatmul.mubr.f32.gmra.mxu0 %v6964
    %v7686 = vpop.f32.mrf.mxu0
    %v7687 = vadd.f32 %v7302, %v7686
    %v7688 = vpop.f32.mrf.mxu0
    %7689 = vmatprep.mubr.f32.mxu0 0.0
    %7690 = vmatmul.mubr.f32.gmra.mxu0 %v6967
    %v7691 = vpop.f32.mrf.mxu0
    %v7692 = vadd.f32 %v7307, %v7691
    %v7693 = vpop.f32.mrf.mxu0
    %7694 = vmatprep.mubr.f32.mxu0 0.0
    %7695 = vmatmul.mubr.f32.gmra.mxu0 %v6970
    %v7696 = vpop.f32.mrf.mxu0
    %v7697 = vadd.f32 %v7312, %v7696
    %v7698 = vpop.f32.mrf.mxu0
    %7699 = vmatprep.mubr.f32.mxu0 0.0
    %7700 = vmatmul.mubr.f32.gmra.mxu0 %v6973
    %v7701 = vpop.f32.mrf.mxu0
    %v7702 = vadd.f32 %v7317, %v7701
    %v7703 = vpop.f32.mrf.mxu0
    %7704 = vmatprep.mubr.f32.mxu0 0.0
    %7705 = vmatmul.mubr.f32.gmra.mxu0 %v6976
    %v7706 = vpop.f32.mrf.mxu0
    %v7707 = vadd.f32 %v7322, %v7706
    %v7708 = vpop.f32.mrf.mxu0
    %7709 = vmatprep.mubr.f32.mxu0 0.0
    %7710 = vmatmul.mubr.f32.gmra.mxu0 %v6979
    %v7711 = vpop.f32.mrf.mxu0
    %v7712 = vadd.f32 %v7327, %v7711
    %v7713 = vpop.f32.mrf.mxu0
    %7714 = vmatprep.mubr.f32.mxu0 0.0
    %7715 = vmatmul.mubr.f32.gmra.mxu0 %v6982
    %v7716 = vpop.f32.mrf.mxu0
    %v7717 = vadd.f32 %v7332, %v7716
    %v7718 = vpop.f32.mrf.mxu0
    %7719 = vmatprep.mubr.f32.mxu0 0.0
    %7720 = vmatmul.mubr.f32.gmra.mxu0 %v6985
    %v7721 = vpop.f32.mrf.mxu0
    %v7722 = vadd.f32 %v7337, %v7721
    %v7723 = vpop.f32.mrf.mxu0
    %7724 = vmatprep.mubr.f32.mxu0 0.0
    %7725 = vmatmul.mubr.f32.gmra.mxu0 %v6988
    %v7726 = vpop.f32.mrf.mxu0
    %v7727 = vadd.f32 %v7342, %v7726
    %v7728 = vpop.f32.mrf.mxu0
    %7729 = vmatprep.mubr.f32.mxu0 0.0
    %7730 = vmatmul.mubr.f32.gmra.mxu0 %v6991
    %v7731 = vpop.f32.mrf.mxu0
    %v7732 = vadd.f32 %v7347, %v7731
    %v7733 = vpop.f32.mrf.mxu0
    %7734 = vmatprep.mubr.f32.mxu0 0.0
    %7735 = vmatmul.mubr.f32.gmra.mxu0 %v6994
    %v7736 = vpop.f32.mrf.mxu0
    %v7737 = vadd.f32 %v7352, %v7736
    %v7738 = vpop.f32.mrf.mxu0
    %7739 = vmatprep.mubr.f32.mxu0 0.0
    %7740 = vmatmul.mubr.f32.gmra.mxu0 %v6997
    %v7741 = vpop.f32.mrf.mxu0
    %v7742 = vadd.f32 %v7357, %v7741
    %v7743 = vpop.f32.mrf.mxu0
    %7744 = vmatprep.mubr.f32.mxu0 0.0
    %7745 = vmatmul.mubr.f32.gmra.mxu0 %v7000
    %v7746 = vpop.f32.mrf.mxu0
    %v7747 = vadd.f32 %v7362, %v7746
    %v7748 = vpop.f32.mrf.mxu0
    %7749 = vmatprep.mubr.f32.mxu0 0.0
    %7750 = vmatmul.mubr.f32.gmra.mxu0 %v7003
    %v7751 = vpop.f32.mrf.mxu0
    %v7752 = vadd.f32 %v7367, %v7751
    %v7753 = vpop.f32.mrf.mxu0
    %7754 = vmatprep.mubr.f32.mxu0 0.0
    %7755 = vmatmul.mubr.f32.gmra.mxu0 %v7006
    %v7756 = vpop.f32.mrf.mxu0
    %v7757 = vadd.f32 %v7372, %v7756
    %v7758 = vpop.f32.mrf.mxu0
    %7759 = vmatprep.mubr.f32.mxu0 0.0
    %7760 = vmatmul.mubr.f32.gmra.mxu0 %v7009
    %v7761 = vpop.f32.mrf.mxu0
    %v7762 = vadd.f32 %v7377, %v7761
    %v7763 = vpop.f32.mrf.mxu0
    %7764 = vmatprep.mubr.f32.mxu0 0.0
    %7765 = vmatmul.mubr.f32.gmra.mxu0 %v7012
    %v7766 = vpop.f32.mrf.mxu0
    %v7767 = vadd.f32 %v7382, %v7766
    %v7768 = vpop.f32.mrf.mxu0
    %7769 = vmatprep.mubr.f32.mxu0 0.0
    %7770 = vmatmul.mubr.f32.gmra.mxu0 %v7015
    %v7771 = vpop.f32.mrf.mxu0
    %v7772 = vadd.f32 %v7387, %v7771
    %v7773 = vpop.f32.mrf.mxu0
    %7774 = vmatprep.mubr.f32.mxu0 0.0
    %7775 = vmatmul.mubr.f32.gmra.mxu0 %v7018
    %v7776 = vpop.f32.mrf.mxu0
    %v7777 = vadd.f32 %v7392, %v7776
    %v7778 = vpop.f32.mrf.mxu0
    %7779 = vmatprep.mubr.f32.mxu0 0.0
    %7780 = vmatmul.mubr.f32.gmra.mxu0 %v7021
    %v7781 = vpop.f32.mrf.mxu0
    %v7782 = vadd.f32 %v7397, %v7781
    %v7783 = vpop.f32.mrf.mxu0
    %7784 = vmatprep.mubr.f32.mxu0 0.0
    %7785 = vmatmul.mubr.f32.gmra.mxu0 %v7024
    %v7786 = vpop.f32.mrf.mxu0
    %v7787 = vadd.f32 %v7402, %v7786
    %v7788 = vpop.f32.mrf.mxu0
    %7789 = vmatprep.mubr.f32.mxu0 0.0
    %7790 = vmatmul.mubr.f32.gmra.mxu0 %v7027
    %v7791 = vpop.f32.mrf.mxu0
    %v7792 = vadd.f32 %v7407, %v7791
    %v7793 = vpop.f32.mrf.mxu0
    %7794 = vmatprep.mubr.f32.mxu0 0.0
    %7795 = vmatmul.mubr.f32.gmra.mxu0 %v7030
    %v7796 = vpop.f32.mrf.mxu0
    %v7797 = vadd.f32 %v7412, %v7796
    %v7798 = vpop.f32.mrf.mxu0
    %7799 = vmatprep.mubr.f32.mxu0 0.0
    %7800 = vmatmul.mubr.f32.gmra.mxu0 %v7033
    %v7801 = vpop.f32.mrf.mxu0
    %v7802 = vadd.f32 %v7417, %v7801
    %v7803 = vpop.f32.mrf.mxu0
    %7804 = vdwg.mxu0
    %v7805 = vmax.f32 %v7487, 0.0
    %v7806 = vmax.f32 %v7492, 0.0
    %v7807 = vmax.f32 %v7497, 0.0
    %v7808 = vmax.f32 %v7502, 0.0
    %v7809 = vmax.f32 %v7507, 0.0
    %v7810 = vmax.f32 %v7512, 0.0
    %v7811 = vmax.f32 %v7517, 0.0
    %v7812 = vmax.f32 %v7522, 0.0
    %v7813 = vmax.f32 %v7527, 0.0
    %v7814 = vmax.f32 %v7532, 0.0
    %v7815 = vmax.f32 %v7537, 0.0
    %v7816 = vmax.f32 %v7542, 0.0
    %v7817 = vmax.f32 %v7547, 0.0
    %v7818 = vmax.f32 %v7552, 0.0
    %v7819 = vmax.f32 %v7557, 0.0
    %v7820 = vmax.f32 %v7562, 0.0
    %v7821 = vmax.f32 %v7567, 0.0
    %v7822 = vmax.f32 %v7572, 0.0
    %v7823 = vmax.f32 %v7577, 0.0
    %v7824 = vmax.f32 %v7582, 0.0
    %v7825 = vmax.f32 %v7587, 0.0
    %v7826 = vmax.f32 %v7592, 0.0
    %v7827 = vmax.f32 %v7597, 0.0
    %v7828 = vmax.f32 %v7602, 0.0
    %v7829 = vmax.f32 %v7607, 0.0
    %v7830 = vmax.f32 %v7612, 0.0
    %v7831 = vmax.f32 %v7617, 0.0
    %v7832 = vmax.f32 %v7622, 0.0
    %v7833 = vmax.f32 %v7627, 0.0
    %v7834 = vmax.f32 %v7632, 0.0
    %v7835 = vmax.f32 %v7637, 0.0
    %v7836 = vmax.f32 %v7642, 0.0
    %v7837 = vmax.f32 %v7647, 0.0
    %v7838 = vmax.f32 %v7652, 0.0
    %v7839 = vmax.f32 %v7657, 0.0
    %v7840 = vmax.f32 %v7662, 0.0
    %v7841 = vmax.f32 %v7667, 0.0
    %v7842 = vmax.f32 %v7672, 0.0
    %v7843 = vmax.f32 %v7677, 0.0
    %v7844 = vmax.f32 %v7682, 0.0
    %v7845 = vmax.f32 %v7687, 0.0
    %v7846 = vmax.f32 %v7692, 0.0
    %v7847 = vmax.f32 %v7697, 0.0
    %v7848 = vmax.f32 %v7702, 0.0
    %v7849 = vmax.f32 %v7707, 0.0
    %v7850 = vmax.f32 %v7712, 0.0
    %v7851 = vmax.f32 %v7717, 0.0
    %v7852 = vmax.f32 %v7722, 0.0
    %v7853 = vmax.f32 %v7727, 0.0
    %v7854 = vmax.f32 %v7732, 0.0
    %v7855 = vmax.f32 %v7737, 0.0
    %v7856 = vmax.f32 %v7742, 0.0
    %v7857 = vmax.f32 %v7747, 0.0
    %v7858 = vmax.f32 %v7752, 0.0
    %v7859 = vmax.f32 %v7757, 0.0
    %v7860 = vmax.f32 %v7762, 0.0
    %v7861 = vmax.f32 %v7767, 0.0
    %v7862 = vmax.f32 %v7772, 0.0
    %v7863 = vmax.f32 %v7777, 0.0
    %v7864 = vmax.f32 %v7782, 0.0
    %v7865 = vmax.f32 %v7787, 0.0
    %v7866 = vmax.f32 %v7792, 0.0
    %v7867 = vmax.f32 %v7797, 0.0
    %v7868 = vmax.f32 %v7802, 0.0
    %7869 = vst.msk [vmem:[#allocation4] sm:$0xff] %vm4128, 0.0
    %7870 = vst.msk [vmem:[#allocation4 + $0x8] sm:$0xff] %vm4128, 0.0
    %7871 = vst.msk [vmem:[#allocation4 + $0x10] sm:$0x3] %vm4131, 0.0
    %7872 = vst.msk [vmem:[#allocation4 + $0x18] sm:$0xff] %vm4128, 0.0
    %7873 = vst.msk [vmem:[#allocation4 + $0x20] sm:$0xff] %vm4128, 0.0
    %7874 = vst.msk [vmem:[#allocation4 + $0x28] sm:$0x3] %vm4131, 0.0
    %7875 = vst.msk [vmem:[#allocation4 + $0x30] sm:$0xff] %vm4128, 0.0
    %7876 = vst.msk [vmem:[#allocation4 + $0x38] sm:$0xff] %vm4128, 0.0
    %7877 = vst.msk [vmem:[#allocation4 + $0x40] sm:$0x3] %vm4131, 0.0
    %7878 = vst.msk [vmem:[#allocation4 + $0x48] sm:$0xff] %vm4128, 0.0
    %7879 = vst.msk [vmem:[#allocation4 + $0x50] sm:$0xff] %vm4128, 0.0
    %7880 = vst.msk [vmem:[#allocation4 + $0x58] sm:$0x3] %vm4131, 0.0
    %7881 = vst.msk [vmem:[#allocation4 + $0x60] sm:$0xff] %vm4128, 0.0
    %7882 = vst.msk [vmem:[#allocation4 + $0x68] sm:$0xff] %vm4128, 0.0
    %7883 = vst.msk [vmem:[#allocation4 + $0x70] sm:$0x3] %vm4131, 0.0
    %7884 = vst.msk [vmem:[#allocation4 + $0x78] sm:$0xff] %vm4128, 0.0
    %7885 = vst.msk [vmem:[#allocation4 + $0x80] sm:$0xff] %vm4128, 0.0
    %7886 = vst.msk [vmem:[#allocation4 + $0x88] sm:$0x3] %vm4131, 0.0
    %7887 = vst.msk [vmem:[#allocation4 + $0x90] sm:$0xff] %vm4128, 0.0
    %7888 = vst.msk [vmem:[#allocation4 + $0x98] sm:$0xff] %vm4128, 0.0
    %7889 = vst.msk [vmem:[#allocation4 + $0xa0] sm:$0x3] %vm4131, 0.0
    %7890 = vst.msk [vmem:[#allocation4 + $0xa8] sm:$0xff] %vm4128, 0.0
    %7891 = vst.msk [vmem:[#allocation4 + $0xb0] sm:$0xff] %vm4128, 0.0
    %7892 = vst.msk [vmem:[#allocation4 + $0xb8] sm:$0x3] %vm4131, 0.0
    %7893 = vst.msk [vmem:[#allocation4 + $0xc0] sm:$0xff] %vm4128, 0.0
    %7894 = vst.msk [vmem:[#allocation4 + $0xc8] sm:$0xff] %vm4128, 0.0
    %7895 = vst.msk [vmem:[#allocation4 + $0xd0] sm:$0x3] %vm4131, 0.0
    %7896 = vst.msk [vmem:[#allocation4 + $0xd8] sm:$0xff] %vm4128, 0.0
    %7897 = vst.msk [vmem:[#allocation4 + $0xe0] sm:$0xff] %vm4128, 0.0
    %7898 = vst.msk [vmem:[#allocation4 + $0xe8] sm:$0x3] %vm4131, 0.0
    %7899 = vst.msk [vmem:[#allocation4 + $0xf0] sm:$0xff] %vm4128, 0.0
    %7900 = vst.msk [vmem:[#allocation4 + $0xf8] sm:$0xff] %vm4128, 0.0
    %7901 = vst.msk [vmem:[#allocation4 + $0x100] sm:$0x3] %vm4131, 0.0
    %7902 = vst.msk [vmem:[#allocation4 + $0x108] sm:$0xff] %vm4128, 0.0
    %7903 = vst.msk [vmem:[#allocation4 + $0x110] sm:$0xff] %vm4128, 0.0
    %7904 = vst.msk [vmem:[#allocation4 + $0x118] sm:$0x3] %vm4131, 0.0
    %7905 = vst.msk [vmem:[#allocation4 + $0x120] sm:$0xff] %vm4128, 0.0
    %7906 = vst.msk [vmem:[#allocation4 + $0x128] sm:$0xff] %vm4128, 0.0
    %7907 = vst.msk [vmem:[#allocation4 + $0x130] sm:$0x3] %vm4131, 0.0
    %7908 = vst.msk [vmem:[#allocation4 + $0x138] sm:$0xff] %vm4128, 0.0
    %7909 = vst.msk [vmem:[#allocation4 + $0x140] sm:$0xff] %vm4128, 0.0
    %7910 = vst.msk [vmem:[#allocation4 + $0x148] sm:$0x3] %vm4131, 0.0
    %7911 = vst.msk [vmem:[#allocation4 + $0x150] sm:$0xff] %vm4128, 0.0
    %7912 = vst.msk [vmem:[#allocation4 + $0x158] sm:$0xff] %vm4128, 0.0
    %7913 = vst.msk [vmem:[#allocation4 + $0x160] sm:$0x3] %vm4131, 0.0
    %7914 = vst.msk [vmem:[#allocation4 + $0x168] sm:$0xff] %vm4128, 0.0
    %7915 = vst.msk [vmem:[#allocation4 + $0x170] sm:$0xff] %vm4128, 0.0
    %7916 = vst.msk [vmem:[#allocation4 + $0x178] sm:$0x3] %vm4131, 0.0
    %7917 = vst.msk [vmem:[#allocation4 + $0x180] sm:$0xff] %vm4128, 0.0
    %7918 = vst.msk [vmem:[#allocation4 + $0x188] sm:$0xff] %vm4128, 0.0
    %7919 = vst.msk [vmem:[#allocation4 + $0x190] sm:$0x3] %vm4131, 0.0
    %7920 = vst.msk [vmem:[#allocation4 + $0x198] sm:$0xff] %vm4128, 0.0
    %7921 = vst.msk [vmem:[#allocation4 + $0x1a0] sm:$0xff] %vm4128, 0.0
    %7922 = vst.msk [vmem:[#allocation4 + $0x1a8] sm:$0x3] %vm4131, 0.0
    %7923 = vst.msk [vmem:[#allocation4 + $0x1b0] sm:$0xff] %vm4128, 0.0
    %7924 = vst.msk [vmem:[#allocation4 + $0x1b8] sm:$0xff] %vm4128, 0.0
    %7925 = vst.msk [vmem:[#allocation4 + $0x1c0] sm:$0x3] %vm4131, 0.0
    %7926 = vst.msk [vmem:[#allocation4 + $0x1c8] sm:$0xff] %vm4128, 0.0
    %7927 = vst.msk [vmem:[#allocation4 + $0x1d0] sm:$0xff] %vm4128, 0.0
    %7928 = vst.msk [vmem:[#allocation4 + $0x1d8] sm:$0x3] %vm4131, 0.0
    %7929 = vst.msk [vmem:[#allocation4 + $0x1e0] sm:$0xff] %vm4128, 0.0
    %7930 = vst.msk [vmem:[#allocation4 + $0x1e8] sm:$0xff] %vm4128, 0.0
    %7931 = vst.msk [vmem:[#allocation4 + $0x1f0] sm:$0x3] %vm4131, 0.0
    %7932 = vst.msk [vmem:[#allocation4 + $0x1f8] sm:$0xff] %vm4128, 0.0
    %7933 = vst.msk [vmem:[#allocation4 + $0x200] sm:$0xff] %vm4128, 0.0
    %7934 = vst.msk [vmem:[#allocation4 + $0x208] sm:$0x3] %vm4131, 0.0
    %7935 = vst.msk [vmem:[#allocation4 + $0x210] sm:$0xff] %vm4128, 0.0
    %7936 = vst.msk [vmem:[#allocation4 + $0x218] sm:$0xff] %vm4128, 0.0
    %7937 = vst.msk [vmem:[#allocation4 + $0x220] sm:$0x3] %vm4131, 0.0
    %7938 = vst.msk [vmem:[#allocation4 + $0x228] sm:$0xff] %vm4128, 0.0
    %7939 = vst.msk [vmem:[#allocation4 + $0x230] sm:$0xff] %vm4128, 0.0
    %7940 = vst.msk [vmem:[#allocation4 + $0x238] sm:$0x3] %vm4131, 0.0
    %7941 = vst.msk [vmem:[#allocation4 + $0x240] sm:$0xff] %vm4128, 0.0
    %7942 = vst.msk [vmem:[#allocation4 + $0x248] sm:$0xff] %vm4128, 0.0
    %7943 = vst.msk [vmem:[#allocation4 + $0x250] sm:$0x3] %vm4131, 0.0
    %7944 = vst.msk [vmem:[#allocation4 + $0x258] sm:$0xff] %vm4128, 0.0
    %7945 = vst.msk [vmem:[#allocation4 + $0x260] sm:$0xff] %vm4128, 0.0
    %7946 = vst.msk [vmem:[#allocation4 + $0x268] sm:$0x3] %vm4131, 0.0
    %7947 = vst.msk [vmem:[#allocation4 + $0x270] sm:$0xff] %vm4128, 0.0
    %7948 = vst.msk [vmem:[#allocation4 + $0x278] sm:$0xff] %vm4128, 0.0
    %7949 = vst.msk [vmem:[#allocation4 + $0x280] sm:$0x3] %vm4131, 0.0
    %7950 = vst.msk [vmem:[#allocation4 + $0x288] sm:$0xff] %vm4128, 0.0
    %7951 = vst.msk [vmem:[#allocation4 + $0x290] sm:$0xff] %vm4128, 0.0
    %7952 = vst.msk [vmem:[#allocation4 + $0x298] sm:$0x3] %vm4131, 0.0
    %7953 = vst.msk [vmem:[#allocation4 + $0x2a0] sm:$0xff] %vm4128, 0.0
    %7954 = vst.msk [vmem:[#allocation4 + $0x2a8] sm:$0xff] %vm4128, 0.0
    %7955 = vst.msk [vmem:[#allocation4 + $0x2b0] sm:$0x3] %vm4131, 0.0
    %7956 = vst.msk [vmem:[#allocation4 + $0x2b8] sm:$0xff] %vm4128, 0.0
    %7957 = vst.msk [vmem:[#allocation4 + $0x2c0] sm:$0xff] %vm4128, 0.0
    %7958 = vst.msk [vmem:[#allocation4 + $0x2c8] sm:$0x3] %vm4131, 0.0
    %7959 = vst.msk [vmem:[#allocation4 + $0x2d0] sm:$0xff] %vm4128, 0.0
    %7960 = vst.msk [vmem:[#allocation4 + $0x2d8] sm:$0xff] %vm4128, 0.0
    %7961 = vst.msk [vmem:[#allocation4 + $0x2e0] sm:$0x3] %vm4131, 0.0
    %7962 = vst.msk [vmem:[#allocation4 + $0x2e8] sm:$0xff] %vm4128, 0.0
    %7963 = vst.msk [vmem:[#allocation4 + $0x2f0] sm:$0xff] %vm4128, 0.0
    %7964 = vst.msk [vmem:[#allocation4 + $0x2f8] sm:$0x3] %vm4131, 0.0
    %7965 = vst.msk [vmem:[#allocation4 + $0x300] sm:$0xff] %vm4128, 0.0
    %7966 = vst.msk [vmem:[#allocation4 + $0x308] sm:$0xff] %vm4128, 0.0
    %7967 = vst.msk [vmem:[#allocation4 + $0x310] sm:$0x3] %vm4131, 0.0
    %7968 = vst.msk [vmem:[#allocation4 + $0x318] sm:$0xff] %vm4128, 0.0
    %7969 = vst.msk [vmem:[#allocation4 + $0x320] sm:$0xff] %vm4128, 0.0
    %7970 = vst.msk [vmem:[#allocation4 + $0x328] sm:$0x3] %vm4131, 0.0
    %7971 = vst.msk [vmem:[#allocation4 + $0x330] sm:$0xff] %vm4128, 0.0
    %7972 = vst.msk [vmem:[#allocation4 + $0x338] sm:$0xff] %vm4128, 0.0
    %7973 = vst.msk [vmem:[#allocation4 + $0x340] sm:$0x3] %vm4131, 0.0
    %7974 = vst.msk [vmem:[#allocation4 + $0x348] sm:$0xff] %vm4128, 0.0
    %7975 = vst.msk [vmem:[#allocation4 + $0x350] sm:$0xff] %vm4128, 0.0
    %7976 = vst.msk [vmem:[#allocation4 + $0x358] sm:$0x3] %vm4131, 0.0
    %s7977 = scalar_lea.vmem [#allocation4], 24
    %7978 = vst.msk [vmem:[%s7977 + $0x1] sm:$0xff] %vm4128, %v7805
    %7979 = vst.msk [vmem:[%s7977 + $0x9] sm:$0xff] %vm4128, %v7806
    %7980 = vst.msk [vmem:[%s7977 + $0x19] sm:$0xff] %vm4128, %v7807
    %7981 = vst.msk [vmem:[%s7977 + $0x21] sm:$0xff] %vm4128, %v7808
    %7982 = vst.msk [vmem:[%s7977 + $0x31] sm:$0xff] %vm4128, %v7809
    %7983 = vst.msk [vmem:[%s7977 + $0x39] sm:$0xff] %vm4128, %v7810
    %7984 = vst.msk [vmem:[%s7977 + $0x49] sm:$0xff] %vm4128, %v7811
    %7985 = vst.msk [vmem:[%s7977 + $0x51] sm:$0xff] %vm4128, %v7812
    %7986 = vst.msk [vmem:[%s7977 + $0x61] sm:$0xff] %vm4128, %v7813
    %7987 = vst.msk [vmem:[%s7977 + $0x69] sm:$0xff] %vm4128, %v7814
    %7988 = vst.msk [vmem:[%s7977 + $0x79] sm:$0xff] %vm4128, %v7815
    %7989 = vst.msk [vmem:[%s7977 + $0x81] sm:$0xff] %vm4128, %v7816
    %7990 = vst.msk [vmem:[%s7977 + $0x91] sm:$0xff] %vm4128, %v7817
    %7991 = vst.msk [vmem:[%s7977 + $0x99] sm:$0xff] %vm4128, %v7818
    %7992 = vst.msk [vmem:[%s7977 + $0xa9] sm:$0xff] %vm4128, %v7819
    %7993 = vst.msk [vmem:[%s7977 + $0xb1] sm:$0xff] %vm4128, %v7820
    %7994 = vst.msk [vmem:[%s7977 + $0xc1] sm:$0xff] %vm4128, %v7821
    %7995 = vst.msk [vmem:[%s7977 + $0xc9] sm:$0xff] %vm4128, %v7822
    %7996 = vst.msk [vmem:[%s7977 + $0xd9] sm:$0xff] %vm4128, %v7823
    %7997 = vst.msk [vmem:[%s7977 + $0xe1] sm:$0xff] %vm4128, %v7824
    %7998 = vst.msk [vmem:[%s7977 + $0xf1] sm:$0xff] %vm4128, %v7825
    %7999 = vst.msk [vmem:[%s7977 + $0xf9] sm:$0xff] %vm4128, %v7826
    %8000 = vst.msk [vmem:[%s7977 + $0x109] sm:$0xff] %vm4128, %v7827
    %8001 = vst.msk [vmem:[%s7977 + $0x111] sm:$0xff] %vm4128, %v7828
    %8002 = vst.msk [vmem:[%s7977 + $0x121] sm:$0xff] %vm4128, %v7829
    %8003 = vst.msk [vmem:[%s7977 + $0x129] sm:$0xff] %vm4128, %v7830
    %8004 = vst.msk [vmem:[%s7977 + $0x139] sm:$0xff] %vm4128, %v7831
    %8005 = vst.msk [vmem:[%s7977 + $0x141] sm:$0xff] %vm4128, %v7832
    %8006 = vst.msk [vmem:[%s7977 + $0x151] sm:$0xff] %vm4128, %v7833
    %8007 = vst.msk [vmem:[%s7977 + $0x159] sm:$0xff] %vm4128, %v7834
    %8008 = vst.msk [vmem:[%s7977 + $0x169] sm:$0xff] %vm4128, %v7835
    %8009 = vst.msk [vmem:[%s7977 + $0x171] sm:$0xff] %vm4128, %v7836
    %8010 = vst.msk [vmem:[%s7977 + $0x1b1] sm:$0xff] %vm4128, %v7837
    %8011 = vst.msk [vmem:[%s7977 + $0x1b9] sm:$0xff] %vm4128, %v7838
    %8012 = vst.msk [vmem:[%s7977 + $0x1c9] sm:$0xff] %vm4128, %v7839
    %8013 = vst.msk [vmem:[%s7977 + $0x1d1] sm:$0xff] %vm4128, %v7840
    %8014 = vst.msk [vmem:[%s7977 + $0x1e1] sm:$0xff] %vm4128, %v7841
    %8015 = vst.msk [vmem:[%s7977 + $0x1e9] sm:$0xff] %vm4128, %v7842
    %8016 = vst.msk [vmem:[%s7977 + $0x1f9] sm:$0xff] %vm4128, %v7843
    %8017 = vst.msk [vmem:[%s7977 + $0x201] sm:$0xff] %vm4128, %v7844
    %8018 = vst.msk [vmem:[%s7977 + $0x211] sm:$0xff] %vm4128, %v7845
    %8019 = vst.msk [vmem:[%s7977 + $0x219] sm:$0xff] %vm4128, %v7846
    %8020 = vst.msk [vmem:[%s7977 + $0x229] sm:$0xff] %vm4128, %v7847
    %8021 = vst.msk [vmem:[%s7977 + $0x231] sm:$0xff] %vm4128, %v7848
    %8022 = vst.msk [vmem:[%s7977 + $0x241] sm:$0xff] %vm4128, %v7849
    %8023 = vst.msk [vmem:[%s7977 + $0x249] sm:$0xff] %vm4128, %v7850
    %8024 = vst.msk [vmem:[%s7977 + $0x259] sm:$0xff] %vm4128, %v7851
    %8025 = vst.msk [vmem:[%s7977 + $0x261] sm:$0xff] %vm4128, %v7852
    %8026 = vst.msk [vmem:[%s7977 + $0x271] sm:$0xff] %vm4128, %v7853
    %8027 = vst.msk [vmem:[%s7977 + $0x279] sm:$0xff] %vm4128, %v7854
    %8028 = vst.msk [vmem:[%s7977 + $0x289] sm:$0xff] %vm4128, %v7855
    %8029 = vst.msk [vmem:[%s7977 + $0x291] sm:$0xff] %vm4128, %v7856
    %8030 = vst.msk [vmem:[%s7977 + $0x2a1] sm:$0xff] %vm4128, %v7857
    %8031 = vst.msk [vmem:[%s7977 + $0x2a9] sm:$0xff] %vm4128, %v7858
    %8032 = vst.msk [vmem:[%s7977 + $0x2b9] sm:$0xff] %vm4128, %v7859
    %8033 = vst.msk [vmem:[%s7977 + $0x2c1] sm:$0xff] %vm4128, %v7860
    %8034 = vst.msk [vmem:[%s7977 + $0x2d1] sm:$0xff] %vm4128, %v7861
    %8035 = vst.msk [vmem:[%s7977 + $0x2d9] sm:$0xff] %vm4128, %v7862
    %8036 = vst.msk [vmem:[%s7977 + $0x2e9] sm:$0xff] %vm4128, %v7863
    %8037 = vst.msk [vmem:[%s7977 + $0x2f1] sm:$0xff] %vm4128, %v7864
    %8038 = vst.msk [vmem:[%s7977 + $0x301] sm:$0xff] %vm4128, %v7865
    %8039 = vst.msk [vmem:[%s7977 + $0x309] sm:$0xff] %vm4128, %v7866
    %8040 = vst.msk [vmem:[%s7977 + $0x319] sm:$0xff] %vm4128, %v7867
    %8041 = vst.msk [vmem:[%s7977 + $0x321] sm:$0xff] %vm4128, %v7868
    %v8042 = vld [vmem:[#allocation4] sm:$0xff]
    %v8043 = vld [vmem:[#allocation4 + $0x8] sm:$0xff]
    %v8044 = vld [vmem:[#allocation4 + $0x18] sm:$0xff]
    %v8045 = vld [vmem:[#allocation4 + $0x20] sm:$0xff]
    %v8046 = vld [vmem:[#allocation4 + $0x30] sm:$0xff]
    %v8047 = vld [vmem:[#allocation4 + $0x38] sm:$0xff]
    %v8048 = vld [vmem:[#allocation4 + $0x48] sm:$0xff]
    %v8049 = vld [vmem:[#allocation4 + $0x50] sm:$0xff]
    %v8050 = vld [vmem:[#allocation4 + $0x60] sm:$0xff]
    %v8051 = vld [vmem:[#allocation4 + $0x68] sm:$0xff]
    %v8052 = vld [vmem:[#allocation4 + $0x78] sm:$0xff]
    %v8053 = vld [vmem:[#allocation4 + $0x80] sm:$0xff]
    %v8054 = vld [vmem:[#allocation4 + $0x90] sm:$0xff]
    %v8055 = vld [vmem:[#allocation4 + $0x98] sm:$0xff]
    %v8056 = vld [vmem:[#allocation4 + $0xa8] sm:$0xff]
    %v8057 = vld [vmem:[#allocation4 + $0xb0] sm:$0xff]
    %v8058 = vld [vmem:[#allocation4 + $0xc0] sm:$0xff]
    %v8059 = vld [vmem:[#allocation4 + $0xc8] sm:$0xff]
    %v8060 = vld [vmem:[#allocation4 + $0xd8] sm:$0xff]
    %v8061 = vld [vmem:[#allocation4 + $0xe0] sm:$0xff]
    %v8062 = vld [vmem:[#allocation4 + $0xf0] sm:$0xff]
    %v8063 = vld [vmem:[#allocation4 + $0xf8] sm:$0xff]
    %v8064 = vld [vmem:[#allocation4 + $0x108] sm:$0xff]
    %v8065 = vld [vmem:[#allocation4 + $0x110] sm:$0xff]
    %v8066 = vld [vmem:[#allocation4 + $0x120] sm:$0xff]
    %v8067 = vld [vmem:[#allocation4 + $0x128] sm:$0xff]
    %v8068 = vld [vmem:[#allocation4 + $0x138] sm:$0xff]
    %v8069 = vld [vmem:[#allocation4 + $0x140] sm:$0xff]
    %v8070 = vld [vmem:[#allocation4 + $0x150] sm:$0xff]
    %v8071 = vld [vmem:[#allocation4 + $0x158] sm:$0xff]
    %v8072 = vld [vmem:[#allocation4 + $0x168] sm:$0xff]
    %v8073 = vld [vmem:[#allocation4 + $0x170] sm:$0xff]
    %v8074 = vld [vmem:[#allocation4 + $0x1b0] sm:$0xff]
    %v8075 = vld [vmem:[#allocation4 + $0x1b8] sm:$0xff]
    %v8076 = vld [vmem:[#allocation4 + $0x1c8] sm:$0xff]
    %v8077 = vld [vmem:[#allocation4 + $0x1d0] sm:$0xff]
    %v8078 = vld [vmem:[#allocation4 + $0x1e0] sm:$0xff]
    %v8079 = vld [vmem:[#allocation4 + $0x1e8] sm:$0xff]
    %v8080 = vld [vmem:[#allocation4 + $0x1f8] sm:$0xff]
    %v8081 = vld [vmem:[#allocation4 + $0x200] sm:$0xff]
    %v8082 = vld [vmem:[#allocation4 + $0x210] sm:$0xff]
    %v8083 = vld [vmem:[#allocation4 + $0x218] sm:$0xff]
    %v8084 = vld [vmem:[#allocation4 + $0x228] sm:$0xff]
    %v8085 = vld [vmem:[#allocation4 + $0x230] sm:$0xff]
    %v8086 = vld [vmem:[#allocation4 + $0x240] sm:$0xff]
    %v8087 = vld [vmem:[#allocation4 + $0x248] sm:$0xff]
    %v8088 = vld [vmem:[#allocation4 + $0x258] sm:$0xff]
    %v8089 = vld [vmem:[#allocation4 + $0x260] sm:$0xff]
    %v8090 = vld [vmem:[#allocation4 + $0x270] sm:$0xff]
    %v8091 = vld [vmem:[#allocation4 + $0x278] sm:$0xff]
    %v8092 = vld [vmem:[#allocation4 + $0x288] sm:$0xff]
    %v8093 = vld [vmem:[#allocation4 + $0x290] sm:$0xff]
    %v8094 = vld [vmem:[#allocation4 + $0x2a0] sm:$0xff]
    %v8095 = vld [vmem:[#allocation4 + $0x2a8] sm:$0xff]
    %v8096 = vld [vmem:[#allocation4 + $0x2b8] sm:$0xff]
    %v8097 = vld [vmem:[#allocation4 + $0x2c0] sm:$0xff]
    %v8098 = vld [vmem:[#allocation4 + $0x2d0] sm:$0xff]
    %v8099 = vld [vmem:[#allocation4 + $0x2d8] sm:$0xff]
    %v8100 = vld [vmem:[#allocation4 + $0x2e8] sm:$0xff]
    %v8101 = vld [vmem:[#allocation4 + $0x2f0] sm:$0xff]
    %v8102 = vld [vmem:[#allocation4 + $0x300] sm:$0xff]
    %v8103 = vld [vmem:[#allocation4 + $0x308] sm:$0xff]
    %v8104 = vld [vmem:[#allocation4 + $0x318] sm:$0xff]
    %v8105 = vld [vmem:[#allocation4 + $0x320] sm:$0xff]
    %v8106 = vld [vmem:[%s5] sm:$0x1]
    %v8107 = vlaneseq
    %v8108 = vshrl.u32 %v8107, 7
    %v8109 = vsub.s32 0, %v8108
    %v8110 = vrot.slane %v8106, %v8109
    %v8111 = vmul.f32 %v8042, %v8110
    %v8112 = vmul.f32 %v8043, %v8110
    %v8113 = vmul.f32 %v8044, %v8110
    %v8114 = vmul.f32 %v8045, %v8110
    %v8115 = vmul.f32 %v8046, %v8110
    %v8116 = vmul.f32 %v8047, %v8110
    %v8117 = vmul.f32 %v8048, %v8110
    %v8118 = vmul.f32 %v8049, %v8110
    %v8119 = vmul.f32 %v8050, %v8110
    %v8120 = vmul.f32 %v8051, %v8110
    %v8121 = vmul.f32 %v8052, %v8110
    %v8122 = vmul.f32 %v8053, %v8110
    %v8123 = vmul.f32 %v8054, %v8110
    %v8124 = vmul.f32 %v8055, %v8110
    %v8125 = vmul.f32 %v8056, %v8110
    %v8126 = vmul.f32 %v8057, %v8110
    %v8127 = vmul.f32 %v8058, %v8110
    %v8128 = vmul.f32 %v8059, %v8110
    %v8129 = vmul.f32 %v8060, %v8110
    %v8130 = vmul.f32 %v8061, %v8110
    %v8131 = vmul.f32 %v8062, %v8110
    %v8132 = vmul.f32 %v8063, %v8110
    %v8133 = vmul.f32 %v8064, %v8110
    %v8134 = vmul.f32 %v8065, %v8110
    %v8135 = vmul.f32 %v8066, %v8110
    %v8136 = vmul.f32 %v8067, %v8110
    %v8137 = vmul.f32 %v8068, %v8110
    %v8138 = vmul.f32 %v8069, %v8110
    %v8139 = vmul.f32 %v8070, %v8110
    %v8140 = vmul.f32 %v8071, %v8110
    %v8141 = vmul.f32 %v8072, %v8110
    %v8142 = vmul.f32 %v8073, %v8110
    %v8143 = vmul.f32 %v8074, %v8110
    %v8144 = vmul.f32 %v8075, %v8110
    %v8145 = vmul.f32 %v8076, %v8110
    %v8146 = vmul.f32 %v8077, %v8110
    %v8147 = vmul.f32 %v8078, %v8110
    %v8148 = vmul.f32 %v8079, %v8110
    %v8149 = vmul.f32 %v8080, %v8110
    %v8150 = vmul.f32 %v8081, %v8110
    %v8151 = vmul.f32 %v8082, %v8110
    %v8152 = vmul.f32 %v8083, %v8110
    %v8153 = vmul.f32 %v8084, %v8110
    %v8154 = vmul.f32 %v8085, %v8110
    %v8155 = vmul.f32 %v8086, %v8110
    %v8156 = vmul.f32 %v8087, %v8110
    %v8157 = vmul.f32 %v8088, %v8110
    %v8158 = vmul.f32 %v8089, %v8110
    %v8159 = vmul.f32 %v8090, %v8110
    %v8160 = vmul.f32 %v8091, %v8110
    %v8161 = vmul.f32 %v8092, %v8110
    %v8162 = vmul.f32 %v8093, %v8110
    %v8163 = vmul.f32 %v8094, %v8110
    %v8164 = vmul.f32 %v8095, %v8110
    %v8165 = vmul.f32 %v8096, %v8110
    %v8166 = vmul.f32 %v8097, %v8110
    %v8167 = vmul.f32 %v8098, %v8110
    %v8168 = vmul.f32 %v8099, %v8110
    %v8169 = vmul.f32 %v8100, %v8110
    %v8170 = vmul.f32 %v8101, %v8110
    %v8171 = vmul.f32 %v8102, %v8110
    %v8172 = vmul.f32 %v8103, %v8110
    %v8173 = vmul.f32 %v8104, %v8110
    %v8174 = vmul.f32 %v8105, %v8110
    %v8175 = vadd.f32 %v8111, 0.0
    %v8176 = vadd.f32 %v8112, 0.0
    %v8177 = vadd.f32 %v8113, 0.0
    %v8178 = vadd.f32 %v8114, 0.0
    %v8179 = vadd.f32 %v8115, 0.0
    %v8180 = vadd.f32 %v8116, 0.0
    %v8181 = vadd.f32 %v8117, 0.0
    %v8182 = vadd.f32 %v8118, 0.0
    %v8183 = vadd.f32 %v8119, 0.0
    %v8184 = vadd.f32 %v8120, 0.0
    %v8185 = vadd.f32 %v8121, 0.0
    %v8186 = vadd.f32 %v8122, 0.0
    %v8187 = vadd.f32 %v8123, 0.0
    %v8188 = vadd.f32 %v8124, 0.0
    %v8189 = vadd.f32 %v8125, 0.0
    %v8190 = vadd.f32 %v8126, 0.0
    %v8191 = vadd.f32 %v8127, 0.0
    %v8192 = vadd.f32 %v8128, 0.0
    %v8193 = vadd.f32 %v8129, 0.0
    %v8194 = vadd.f32 %v8130, 0.0
    %v8195 = vadd.f32 %v8131, 0.0
    %v8196 = vadd.f32 %v8132, 0.0
    %v8197 = vadd.f32 %v8133, 0.0
    %v8198 = vadd.f32 %v8134, 0.0
    %v8199 = vadd.f32 %v8135, 0.0
    %v8200 = vadd.f32 %v8136, 0.0
    %v8201 = vadd.f32 %v8137, 0.0
    %v8202 = vadd.f32 %v8138, 0.0
    %v8203 = vadd.f32 %v8139, 0.0
    %v8204 = vadd.f32 %v8140, 0.0
    %v8205 = vadd.f32 %v8141, 0.0
    %v8206 = vadd.f32 %v8142, 0.0
    %v8207 = vadd.f32 %v8143, 0.0
    %v8208 = vadd.f32 %v8144, 0.0
    %v8209 = vadd.f32 %v8145, 0.0
    %v8210 = vadd.f32 %v8146, 0.0
    %v8211 = vadd.f32 %v8147, 0.0
    %v8212 = vadd.f32 %v8148, 0.0
    %v8213 = vadd.f32 %v8149, 0.0
    %v8214 = vadd.f32 %v8150, 0.0
    %v8215 = vadd.f32 %v8151, 0.0
    %v8216 = vadd.f32 %v8152, 0.0
    %v8217 = vadd.f32 %v8153, 0.0
    %v8218 = vadd.f32 %v8154, 0.0
    %v8219 = vadd.f32 %v8155, 0.0
    %v8220 = vadd.f32 %v8156, 0.0
    %v8221 = vadd.f32 %v8157, 0.0
    %v8222 = vadd.f32 %v8158, 0.0
    %v8223 = vadd.f32 %v8159, 0.0
    %v8224 = vadd.f32 %v8160, 0.0
    %v8225 = vadd.f32 %v8161, 0.0
    %v8226 = vadd.f32 %v8162, 0.0
    %v8227 = vadd.f32 %v8163, 0.0
    %v8228 = vadd.f32 %v8164, 0.0
    %v8229 = vadd.f32 %v8165, 0.0
    %v8230 = vadd.f32 %v8166, 0.0
    %v8231 = vadd.f32 %v8167, 0.0
    %v8232 = vadd.f32 %v8168, 0.0
    %v8233 = vadd.f32 %v8169, 0.0
    %v8234 = vadd.f32 %v8170, 0.0
    %v8235 = vadd.f32 %v8171, 0.0
    %v8236 = vadd.f32 %v8172, 0.0
    %v8237 = vadd.f32 %v8173, 0.0
    %v8238 = vadd.f32 %v8174, 0.0
    %v8239 = vld [vmem:[#allocation4 + $0x1] sm:$0xff]
    %v8240 = vld [vmem:[#allocation4 + $0x9] sm:$0xff]
    %v8241 = vld [vmem:[#allocation4 + $0x19] sm:$0xff]
    %v8242 = vld [vmem:[#allocation4 + $0x21] sm:$0xff]
    %v8243 = vld [vmem:[#allocation4 + $0x31] sm:$0xff]
    %v8244 = vld [vmem:[#allocation4 + $0x39] sm:$0xff]
    %v8245 = vld [vmem:[#allocation4 + $0x49] sm:$0xff]
    %v8246 = vld [vmem:[#allocation4 + $0x51] sm:$0xff]
    %v8247 = vld [vmem:[#allocation4 + $0x61] sm:$0xff]
    %v8248 = vld [vmem:[#allocation4 + $0x69] sm:$0xff]
    %v8249 = vld [vmem:[#allocation4 + $0x79] sm:$0xff]
    %v8250 = vld [vmem:[#allocation4 + $0x81] sm:$0xff]
    %v8251 = vld [vmem:[#allocation4 + $0x91] sm:$0xff]
    %v8252 = vld [vmem:[#allocation4 + $0x99] sm:$0xff]
    %v8253 = vld [vmem:[#allocation4 + $0xa9] sm:$0xff]
    %v8254 = vld [vmem:[#allocation4 + $0xb1] sm:$0xff]
    %v8255 = vld [vmem:[#allocation4 + $0xc1] sm:$0xff]
    %v8256 = vld [vmem:[#allocation4 + $0xc9] sm:$0xff]
    %v8257 = vld [vmem:[#allocation4 + $0xd9] sm:$0xff]
    %v8258 = vld [vmem:[#allocation4 + $0xe1] sm:$0xff]
    %v8259 = vld [vmem:[#allocation4 + $0xf1] sm:$0xff]
    %v8260 = vld [vmem:[#allocation4 + $0xf9] sm:$0xff]
    %v8261 = vld [vmem:[#allocation4 + $0x109] sm:$0xff]
    %v8262 = vld [vmem:[#allocation4 + $0x111] sm:$0xff]
    %v8263 = vld [vmem:[#allocation4 + $0x121] sm:$0xff]
    %v8264 = vld [vmem:[#allocation4 + $0x129] sm:$0xff]
    %v8265 = vld [vmem:[#allocation4 + $0x139] sm:$0xff]
    %v8266 = vld [vmem:[#allocation4 + $0x141] sm:$0xff]
    %v8267 = vld [vmem:[#allocation4 + $0x151] sm:$0xff]
    %v8268 = vld [vmem:[#allocation4 + $0x159] sm:$0xff]
    %v8269 = vld [vmem:[#allocation4 + $0x169] sm:$0xff]
    %v8270 = vld [vmem:[#allocation4 + $0x171] sm:$0xff]
    %v8271 = vld [vmem:[#allocation4 + $0x1b1] sm:$0xff]
    %v8272 = vld [vmem:[#allocation4 + $0x1b9] sm:$0xff]
    %v8273 = vld [vmem:[#allocation4 + $0x1c9] sm:$0xff]
    %v8274 = vld [vmem:[#allocation4 + $0x1d1] sm:$0xff]
    %v8275 = vld [vmem:[#allocation4 + $0x1e1] sm:$0xff]
    %v8276 = vld [vmem:[#allocation4 + $0x1e9] sm:$0xff]
    %v8277 = vld [vmem:[#allocation4 + $0x1f9] sm:$0xff]
    %v8278 = vld [vmem:[#allocation4 + $0x201] sm:$0xff]
    %v8279 = vld [vmem:[#allocation4 + $0x211] sm:$0xff]
    %v8280 = vld [vmem:[#allocation4 + $0x219] sm:$0xff]
    %v8281 = vld [vmem:[#allocation4 + $0x229] sm:$0xff]
    %v8282 = vld [vmem:[#allocation4 + $0x231] sm:$0xff]
    %v8283 = vld [vmem:[#allocation4 + $0x241] sm:$0xff]
    %v8284 = vld [vmem:[#allocation4 + $0x249] sm:$0xff]
    %v8285 = vld [vmem:[#allocation4 + $0x259] sm:$0xff]
    %v8286 = vld [vmem:[#allocation4 + $0x261] sm:$0xff]
    %v8287 = vld [vmem:[#allocation4 + $0x271] sm:$0xff]
    %v8288 = vld [vmem:[#allocation4 + $0x279] sm:$0xff]
    %v8289 = vld [vmem:[#allocation4 + $0x289] sm:$0xff]
    %v8290 = vld [vmem:[#allocation4 + $0x291] sm:$0xff]
    %v8291 = vld [vmem:[#allocation4 + $0x2a1] sm:$0xff]
    %v8292 = vld [vmem:[#allocation4 + $0x2a9] sm:$0xff]
    %v8293 = vld [vmem:[#allocation4 + $0x2b9] sm:$0xff]
    %v8294 = vld [vmem:[#allocation4 + $0x2c1] sm:$0xff]
    %v8295 = vld [vmem:[#allocation4 + $0x2d1] sm:$0xff]
    %v8296 = vld [vmem:[#allocation4 + $0x2d9] sm:$0xff]
    %v8297 = vld [vmem:[#allocation4 + $0x2e9] sm:$0xff]
    %v8298 = vld [vmem:[#allocation4 + $0x2f1] sm:$0xff]
    %v8299 = vld [vmem:[#allocation4 + $0x301] sm:$0xff]
    %v8300 = vld [vmem:[#allocation4 + $0x309] sm:$0xff]
    %v8301 = vld [vmem:[#allocation4 + $0x319] sm:$0xff]
    %v8302 = vld [vmem:[#allocation4 + $0x321] sm:$0xff]
    %v8303 = vld [vmem:[%s5 + $0x1] sm:$0x1]
    %v8304 = vlaneseq
    %v8305 = vshrl.u32 %v8304, 7
    %v8306 = vsub.s32 0, %v8305
    %v8307 = vrot.slane %v8303, %v8306
    %v8308 = vmul.f32 %v8239, %v8307
    %v8309 = vmul.f32 %v8240, %v8307
    %v8310 = vmul.f32 %v8241, %v8307
    %v8311 = vmul.f32 %v8242, %v8307
    %v8312 = vmul.f32 %v8243, %v8307
    %v8313 = vmul.f32 %v8244, %v8307
    %v8314 = vmul.f32 %v8245, %v8307
    %v8315 = vmul.f32 %v8246, %v8307
    %v8316 = vmul.f32 %v8247, %v8307
    %v8317 = vmul.f32 %v8248, %v8307
    %v8318 = vmul.f32 %v8249, %v8307
    %v8319 = vmul.f32 %v8250, %v8307
    %v8320 = vmul.f32 %v8251, %v8307
    %v8321 = vmul.f32 %v8252, %v8307
    %v8322 = vmul.f32 %v8253, %v8307
    %v8323 = vmul.f32 %v8254, %v8307
    %v8324 = vmul.f32 %v8255, %v8307
    %v8325 = vmul.f32 %v8256, %v8307
    %v8326 = vmul.f32 %v8257, %v8307
    %v8327 = vmul.f32 %v8258, %v8307
    %v8328 = vmul.f32 %v8259, %v8307
    %v8329 = vmul.f32 %v8260, %v8307
    %v8330 = vmul.f32 %v8261, %v8307
    %v8331 = vmul.f32 %v8262, %v8307
    %v8332 = vmul.f32 %v8263, %v8307
    %v8333 = vmul.f32 %v8264, %v8307
    %v8334 = vmul.f32 %v8265, %v8307
    %v8335 = vmul.f32 %v8266, %v8307
    %v8336 = vmul.f32 %v8267, %v8307
    %v8337 = vmul.f32 %v8268, %v8307
    %v8338 = vmul.f32 %v8269, %v8307
    %v8339 = vmul.f32 %v8270, %v8307
    %v8340 = vmul.f32 %v8271, %v8307
    %v8341 = vmul.f32 %v8272, %v8307
    %v8342 = vmul.f32 %v8273, %v8307
    %v8343 = vmul.f32 %v8274, %v8307
    %v8344 = vmul.f32 %v8275, %v8307
    %v8345 = vmul.f32 %v8276, %v8307
    %v8346 = vmul.f32 %v8277, %v8307
    %v8347 = vmul.f32 %v8278, %v8307
    %v8348 = vmul.f32 %v8279, %v8307
    %v8349 = vmul.f32 %v8280, %v8307
    %v8350 = vmul.f32 %v8281, %v8307
    %v8351 = vmul.f32 %v8282, %v8307
    %v8352 = vmul.f32 %v8283, %v8307
    %v8353 = vmul.f32 %v8284, %v8307
    %v8354 = vmul.f32 %v8285, %v8307
    %v8355 = vmul.f32 %v8286, %v8307
    %v8356 = vmul.f32 %v8287, %v8307
    %v8357 = vmul.f32 %v8288, %v8307
    %v8358 = vmul.f32 %v8289, %v8307
    %v8359 = vmul.f32 %v8290, %v8307
    %v8360 = vmul.f32 %v8291, %v8307
    %v8361 = vmul.f32 %v8292, %v8307
    %v8362 = vmul.f32 %v8293, %v8307
    %v8363 = vmul.f32 %v8294, %v8307
    %v8364 = vmul.f32 %v8295, %v8307
    %v8365 = vmul.f32 %v8296, %v8307
    %v8366 = vmul.f32 %v8297, %v8307
    %v8367 = vmul.f32 %v8298, %v8307
    %v8368 = vmul.f32 %v8299, %v8307
    %v8369 = vmul.f32 %v8300, %v8307
    %v8370 = vmul.f32 %v8301, %v8307
    %v8371 = vmul.f32 %v8302, %v8307
    %v8372 = vadd.f32 %v8175, %v8308
    %v8373 = vadd.f32 %v8176, %v8309
    %v8374 = vadd.f32 %v8177, %v8310
    %v8375 = vadd.f32 %v8178, %v8311
    %v8376 = vadd.f32 %v8179, %v8312
    %v8377 = vadd.f32 %v8180, %v8313
    %v8378 = vadd.f32 %v8181, %v8314
    %v8379 = vadd.f32 %v8182, %v8315
    %v8380 = vadd.f32 %v8183, %v8316
    %v8381 = vadd.f32 %v8184, %v8317
    %v8382 = vadd.f32 %v8185, %v8318
    %v8383 = vadd.f32 %v8186, %v8319
    %v8384 = vadd.f32 %v8187, %v8320
    %v8385 = vadd.f32 %v8188, %v8321
    %v8386 = vadd.f32 %v8189, %v8322
    %v8387 = vadd.f32 %v8190, %v8323
    %v8388 = vadd.f32 %v8191, %v8324
    %v8389 = vadd.f32 %v8192, %v8325
    %v8390 = vadd.f32 %v8193, %v8326
    %v8391 = vadd.f32 %v8194, %v8327
    %v8392 = vadd.f32 %v8195, %v8328
    %v8393 = vadd.f32 %v8196, %v8329
    %v8394 = vadd.f32 %v8197, %v8330
    %v8395 = vadd.f32 %v8198, %v8331
    %v8396 = vadd.f32 %v8199, %v8332
    %v8397 = vadd.f32 %v8200, %v8333
    %v8398 = vadd.f32 %v8201, %v8334
    %v8399 = vadd.f32 %v8202, %v8335
    %v8400 = vadd.f32 %v8203, %v8336
    %v8401 = vadd.f32 %v8204, %v8337
    %v8402 = vadd.f32 %v8205, %v8338
    %v8403 = vadd.f32 %v8206, %v8339
    %v8404 = vadd.f32 %v8207, %v8340
    %v8405 = vadd.f32 %v8208, %v8341
    %v8406 = vadd.f32 %v8209, %v8342
    %v8407 = vadd.f32 %v8210, %v8343
    %v8408 = vadd.f32 %v8211, %v8344
    %v8409 = vadd.f32 %v8212, %v8345
    %v8410 = vadd.f32 %v8213, %v8346
    %v8411 = vadd.f32 %v8214, %v8347
    %v8412 = vadd.f32 %v8215, %v8348
    %v8413 = vadd.f32 %v8216, %v8349
    %v8414 = vadd.f32 %v8217, %v8350
    %v8415 = vadd.f32 %v8218, %v8351
    %v8416 = vadd.f32 %v8219, %v8352
    %v8417 = vadd.f32 %v8220, %v8353
    %v8418 = vadd.f32 %v8221, %v8354
    %v8419 = vadd.f32 %v8222, %v8355
    %v8420 = vadd.f32 %v8223, %v8356
    %v8421 = vadd.f32 %v8224, %v8357
    %v8422 = vadd.f32 %v8225, %v8358
    %v8423 = vadd.f32 %v8226, %v8359
    %v8424 = vadd.f32 %v8227, %v8360
    %v8425 = vadd.f32 %v8228, %v8361
    %v8426 = vadd.f32 %v8229, %v8362
    %v8427 = vadd.f32 %v8230, %v8363
    %v8428 = vadd.f32 %v8231, %v8364
    %v8429 = vadd.f32 %v8232, %v8365
    %v8430 = vadd.f32 %v8233, %v8366
    %v8431 = vadd.f32 %v8234, %v8367
    %v8432 = vadd.f32 %v8235, %v8368
    %v8433 = vadd.f32 %v8236, %v8369
    %v8434 = vadd.f32 %v8237, %v8370
    %v8435 = vadd.f32 %v8238, %v8371
    %v8436 = vld [vmem:[#allocation4 + $0x2] sm:$0xff]
    %v8437 = vld [vmem:[#allocation4 + $0xa] sm:$0xff]
    %v8438 = vld [vmem:[#allocation4 + $0x1a] sm:$0xff]
    %v8439 = vld [vmem:[#allocation4 + $0x22] sm:$0xff]
    %v8440 = vld [vmem:[#allocation4 + $0x32] sm:$0xff]
    %v8441 = vld [vmem:[#allocation4 + $0x3a] sm:$0xff]
    %v8442 = vld [vmem:[#allocation4 + $0x4a] sm:$0xff]
    %v8443 = vld [vmem:[#allocation4 + $0x52] sm:$0xff]
    %v8444 = vld [vmem:[#allocation4 + $0x62] sm:$0xff]
    %v8445 = vld [vmem:[#allocation4 + $0x6a] sm:$0xff]
    %v8446 = vld [vmem:[#allocation4 + $0x7a] sm:$0xff]
    %v8447 = vld [vmem:[#allocation4 + $0x82] sm:$0xff]
    %v8448 = vld [vmem:[#allocation4 + $0x92] sm:$0xff]
    %v8449 = vld [vmem:[#allocation4 + $0x9a] sm:$0xff]
    %v8450 = vld [vmem:[#allocation4 + $0xaa] sm:$0xff]
    %v8451 = vld [vmem:[#allocation4 + $0xb2] sm:$0xff]
    %v8452 = vld [vmem:[#allocation4 + $0xc2] sm:$0xff]
    %v8453 = vld [vmem:[#allocation4 + $0xca] sm:$0xff]
    %v8454 = vld [vmem:[#allocation4 + $0xda] sm:$0xff]
    %v8455 = vld [vmem:[#allocation4 + $0xe2] sm:$0xff]
    %v8456 = vld [vmem:[#allocation4 + $0xf2] sm:$0xff]
    %v8457 = vld [vmem:[#allocation4 + $0xfa] sm:$0xff]
    %v8458 = vld [vmem:[#allocation4 + $0x10a] sm:$0xff]
    %v8459 = vld [vmem:[#allocation4 + $0x112] sm:$0xff]
    %v8460 = vld [vmem:[#allocation4 + $0x122] sm:$0xff]
    %v8461 = vld [vmem:[#allocation4 + $0x12a] sm:$0xff]
    %v8462 = vld [vmem:[#allocation4 + $0x13a] sm:$0xff]
    %v8463 = vld [vmem:[#allocation4 + $0x142] sm:$0xff]
    %v8464 = vld [vmem:[#allocation4 + $0x152] sm:$0xff]
    %v8465 = vld [vmem:[#allocation4 + $0x15a] sm:$0xff]
    %v8466 = vld [vmem:[#allocation4 + $0x16a] sm:$0xff]
    %v8467 = vld [vmem:[#allocation4 + $0x172] sm:$0xff]
    %v8468 = vld [vmem:[#allocation4 + $0x1b2] sm:$0xff]
    %v8469 = vld [vmem:[#allocation4 + $0x1ba] sm:$0xff]
    %v8470 = vld [vmem:[#allocation4 + $0x1ca] sm:$0xff]
    %v8471 = vld [vmem:[#allocation4 + $0x1d2] sm:$0xff]
    %v8472 = vld [vmem:[#allocation4 + $0x1e2] sm:$0xff]
    %v8473 = vld [vmem:[#allocation4 + $0x1ea] sm:$0xff]
    %v8474 = vld [vmem:[#allocation4 + $0x1fa] sm:$0xff]
    %v8475 = vld [vmem:[#allocation4 + $0x202] sm:$0xff]
    %v8476 = vld [vmem:[#allocation4 + $0x212] sm:$0xff]
    %v8477 = vld [vmem:[#allocation4 + $0x21a] sm:$0xff]
    %v8478 = vld [vmem:[#allocation4 + $0x22a] sm:$0xff]
    %v8479 = vld [vmem:[#allocation4 + $0x232] sm:$0xff]
    %v8480 = vld [vmem:[#allocation4 + $0x242] sm:$0xff]
    %v8481 = vld [vmem:[#allocation4 + $0x24a] sm:$0xff]
    %v8482 = vld [vmem:[#allocation4 + $0x25a] sm:$0xff]
    %v8483 = vld [vmem:[#allocation4 + $0x262] sm:$0xff]
    %v8484 = vld [vmem:[#allocation4 + $0x272] sm:$0xff]
    %v8485 = vld [vmem:[#allocation4 + $0x27a] sm:$0xff]
    %v8486 = vld [vmem:[#allocation4 + $0x28a] sm:$0xff]
    %v8487 = vld [vmem:[#allocation4 + $0x292] sm:$0xff]
    %v8488 = vld [vmem:[#allocation4 + $0x2a2] sm:$0xff]
    %v8489 = vld [vmem:[#allocation4 + $0x2aa] sm:$0xff]
    %v8490 = vld [vmem:[#allocation4 + $0x2ba] sm:$0xff]
    %v8491 = vld [vmem:[#allocation4 + $0x2c2] sm:$0xff]
    %v8492 = vld [vmem:[#allocation4 + $0x2d2] sm:$0xff]
    %v8493 = vld [vmem:[#allocation4 + $0x2da] sm:$0xff]
    %v8494 = vld [vmem:[#allocation4 + $0x2ea] sm:$0xff]
    %v8495 = vld [vmem:[#allocation4 + $0x2f2] sm:$0xff]
    %v8496 = vld [vmem:[#allocation4 + $0x302] sm:$0xff]
    %v8497 = vld [vmem:[#allocation4 + $0x30a] sm:$0xff]
    %v8498 = vld [vmem:[#allocation4 + $0x31a] sm:$0xff]
    %v8499 = vld [vmem:[#allocation4 + $0x322] sm:$0xff]
    %v8500 = vld [vmem:[%s5 + $0x2] sm:$0x1]
    %v8501 = vlaneseq
    %v8502 = vshrl.u32 %v8501, 7
    %v8503 = vsub.s32 0, %v8502
    %v8504 = vrot.slane %v8500, %v8503
    %v8505 = vmul.f32 %v8436, %v8504
    %v8506 = vmul.f32 %v8437, %v8504
    %v8507 = vmul.f32 %v8438, %v8504
    %v8508 = vmul.f32 %v8439, %v8504
    %v8509 = vmul.f32 %v8440, %v8504
    %v8510 = vmul.f32 %v8441, %v8504
    %v8511 = vmul.f32 %v8442, %v8504
    %v8512 = vmul.f32 %v8443, %v8504
    %v8513 = vmul.f32 %v8444, %v8504
    %v8514 = vmul.f32 %v8445, %v8504
    %v8515 = vmul.f32 %v8446, %v8504
    %v8516 = vmul.f32 %v8447, %v8504
    %v8517 = vmul.f32 %v8448, %v8504
    %v8518 = vmul.f32 %v8449, %v8504
    %v8519 = vmul.f32 %v8450, %v8504
    %v8520 = vmul.f32 %v8451, %v8504
    %v8521 = vmul.f32 %v8452, %v8504
    %v8522 = vmul.f32 %v8453, %v8504
    %v8523 = vmul.f32 %v8454, %v8504
    %v8524 = vmul.f32 %v8455, %v8504
    %v8525 = vmul.f32 %v8456, %v8504
    %v8526 = vmul.f32 %v8457, %v8504
    %v8527 = vmul.f32 %v8458, %v8504
    %v8528 = vmul.f32 %v8459, %v8504
    %v8529 = vmul.f32 %v8460, %v8504
    %v8530 = vmul.f32 %v8461, %v8504
    %v8531 = vmul.f32 %v8462, %v8504
    %v8532 = vmul.f32 %v8463, %v8504
    %v8533 = vmul.f32 %v8464, %v8504
    %v8534 = vmul.f32 %v8465, %v8504
    %v8535 = vmul.f32 %v8466, %v8504
    %v8536 = vmul.f32 %v8467, %v8504
    %v8537 = vmul.f32 %v8468, %v8504
    %v8538 = vmul.f32 %v8469, %v8504
    %v8539 = vmul.f32 %v8470, %v8504
    %v8540 = vmul.f32 %v8471, %v8504
    %v8541 = vmul.f32 %v8472, %v8504
    %v8542 = vmul.f32 %v8473, %v8504
    %v8543 = vmul.f32 %v8474, %v8504
    %v8544 = vmul.f32 %v8475, %v8504
    %v8545 = vmul.f32 %v8476, %v8504
    %v8546 = vmul.f32 %v8477, %v8504
    %v8547 = vmul.f32 %v8478, %v8504
    %v8548 = vmul.f32 %v8479, %v8504
    %v8549 = vmul.f32 %v8480, %v8504
    %v8550 = vmul.f32 %v8481, %v8504
    %v8551 = vmul.f32 %v8482, %v8504
    %v8552 = vmul.f32 %v8483, %v8504
    %v8553 = vmul.f32 %v8484, %v8504
    %v8554 = vmul.f32 %v8485, %v8504
    %v8555 = vmul.f32 %v8486, %v8504
    %v8556 = vmul.f32 %v8487, %v8504
    %v8557 = vmul.f32 %v8488, %v8504
    %v8558 = vmul.f32 %v8489, %v8504
    %v8559 = vmul.f32 %v8490, %v8504
    %v8560 = vmul.f32 %v8491, %v8504
    %v8561 = vmul.f32 %v8492, %v8504
    %v8562 = vmul.f32 %v8493, %v8504
    %v8563 = vmul.f32 %v8494, %v8504
    %v8564 = vmul.f32 %v8495, %v8504
    %v8565 = vmul.f32 %v8496, %v8504
    %v8566 = vmul.f32 %v8497, %v8504
    %v8567 = vmul.f32 %v8498, %v8504
    %v8568 = vmul.f32 %v8499, %v8504
    %v8569 = vadd.f32 %v8372, %v8505
    %v8570 = vadd.f32 %v8373, %v8506
    %v8571 = vadd.f32 %v8374, %v8507
    %v8572 = vadd.f32 %v8375, %v8508
    %v8573 = vadd.f32 %v8376, %v8509
    %v8574 = vadd.f32 %v8377, %v8510
    %v8575 = vadd.f32 %v8378, %v8511
    %v8576 = vadd.f32 %v8379, %v8512
    %v8577 = vadd.f32 %v8380, %v8513
    %v8578 = vadd.f32 %v8381, %v8514
    %v8579 = vadd.f32 %v8382, %v8515
    %v8580 = vadd.f32 %v8383, %v8516
    %v8581 = vadd.f32 %v8384, %v8517
    %v8582 = vadd.f32 %v8385, %v8518
    %v8583 = vadd.f32 %v8386, %v8519
    %v8584 = vadd.f32 %v8387, %v8520
    %v8585 = vadd.f32 %v8388, %v8521
    %v8586 = vadd.f32 %v8389, %v8522
    %v8587 = vadd.f32 %v8390, %v8523
    %v8588 = vadd.f32 %v8391, %v8524
    %v8589 = vadd.f32 %v8392, %v8525
    %v8590 = vadd.f32 %v8393, %v8526
    %v8591 = vadd.f32 %v8394, %v8527
    %v8592 = vadd.f32 %v8395, %v8528
    %v8593 = vadd.f32 %v8396, %v8529
    %v8594 = vadd.f32 %v8397, %v8530
    %v8595 = vadd.f32 %v8398, %v8531
    %v8596 = vadd.f32 %v8399, %v8532
    %v8597 = vadd.f32 %v8400, %v8533
    %v8598 = vadd.f32 %v8401, %v8534
    %v8599 = vadd.f32 %v8402, %v8535
    %v8600 = vadd.f32 %v8403, %v8536
    %v8601 = vadd.f32 %v8404, %v8537
    %v8602 = vadd.f32 %v8405, %v8538
    %v8603 = vadd.f32 %v8406, %v8539
    %v8604 = vadd.f32 %v8407, %v8540
    %v8605 = vadd.f32 %v8408, %v8541
    %v8606 = vadd.f32 %v8409, %v8542
    %v8607 = vadd.f32 %v8410, %v8543
    %v8608 = vadd.f32 %v8411, %v8544
    %v8609 = vadd.f32 %v8412, %v8545
    %v8610 = vadd.f32 %v8413, %v8546
    %v8611 = vadd.f32 %v8414, %v8547
    %v8612 = vadd.f32 %v8415, %v8548
    %v8613 = vadd.f32 %v8416, %v8549
    %v8614 = vadd.f32 %v8417, %v8550
    %v8615 = vadd.f32 %v8418, %v8551
    %v8616 = vadd.f32 %v8419, %v8552
    %v8617 = vadd.f32 %v8420, %v8553
    %v8618 = vadd.f32 %v8421, %v8554
    %v8619 = vadd.f32 %v8422, %v8555
    %v8620 = vadd.f32 %v8423, %v8556
    %v8621 = vadd.f32 %v8424, %v8557
    %v8622 = vadd.f32 %v8425, %v8558
    %v8623 = vadd.f32 %v8426, %v8559
    %v8624 = vadd.f32 %v8427, %v8560
    %v8625 = vadd.f32 %v8428, %v8561
    %v8626 = vadd.f32 %v8429, %v8562
    %v8627 = vadd.f32 %v8430, %v8563
    %v8628 = vadd.f32 %v8431, %v8564
    %v8629 = vadd.f32 %v8432, %v8565
    %v8630 = vadd.f32 %v8433, %v8566
    %v8631 = vadd.f32 %v8434, %v8567
    %v8632 = vadd.f32 %v8435, %v8568
    %v8633 = vld [vmem:[%s7977] sm:$0xff]
    %v8634 = vld [vmem:[%s7977 + $0x8] sm:$0xff]
    %v8635 = vld [vmem:[%s7977 + $0x18] sm:$0xff]
    %v8636 = vld [vmem:[%s7977 + $0x20] sm:$0xff]
    %v8637 = vld [vmem:[%s7977 + $0x30] sm:$0xff]
    %v8638 = vld [vmem:[%s7977 + $0x38] sm:$0xff]
    %v8639 = vld [vmem:[%s7977 + $0x48] sm:$0xff]
    %v8640 = vld [vmem:[%s7977 + $0x50] sm:$0xff]
    %v8641 = vld [vmem:[%s7977 + $0x60] sm:$0xff]
    %v8642 = vld [vmem:[%s7977 + $0x68] sm:$0xff]
    %v8643 = vld [vmem:[%s7977 + $0x78] sm:$0xff]
    %v8644 = vld [vmem:[%s7977 + $0x80] sm:$0xff]
    %v8645 = vld [vmem:[%s7977 + $0x90] sm:$0xff]
    %v8646 = vld [vmem:[%s7977 + $0x98] sm:$0xff]
    %v8647 = vld [vmem:[%s7977 + $0xa8] sm:$0xff]
    %v8648 = vld [vmem:[%s7977 + $0xb0] sm:$0xff]
    %v8649 = vld [vmem:[%s7977 + $0xc0] sm:$0xff]
    %v8650 = vld [vmem:[%s7977 + $0xc8] sm:$0xff]
    %v8651 = vld [vmem:[%s7977 + $0xd8] sm:$0xff]
    %v8652 = vld [vmem:[%s7977 + $0xe0] sm:$0xff]
    %v8653 = vld [vmem:[%s7977 + $0xf0] sm:$0xff]
    %v8654 = vld [vmem:[%s7977 + $0xf8] sm:$0xff]
    %v8655 = vld [vmem:[%s7977 + $0x108] sm:$0xff]
    %v8656 = vld [vmem:[%s7977 + $0x110] sm:$0xff]
    %v8657 = vld [vmem:[%s7977 + $0x120] sm:$0xff]
    %v8658 = vld [vmem:[%s7977 + $0x128] sm:$0xff]
    %v8659 = vld [vmem:[%s7977 + $0x138] sm:$0xff]
    %v8660 = vld [vmem:[%s7977 + $0x140] sm:$0xff]
    %v8661 = vld [vmem:[%s7977 + $0x150] sm:$0xff]
    %v8662 = vld [vmem:[%s7977 + $0x158] sm:$0xff]
    %v8663 = vld [vmem:[%s7977 + $0x168] sm:$0xff]
    %v8664 = vld [vmem:[%s7977 + $0x170] sm:$0xff]
    %v8665 = vld [vmem:[%s7977 + $0x1b0] sm:$0xff]
    %v8666 = vld [vmem:[%s7977 + $0x1b8] sm:$0xff]
    %v8667 = vld [vmem:[%s7977 + $0x1c8] sm:$0xff]
    %v8668 = vld [vmem:[%s7977 + $0x1d0] sm:$0xff]
    %v8669 = vld [vmem:[%s7977 + $0x1e0] sm:$0xff]
    %v8670 = vld [vmem:[%s7977 + $0x1e8] sm:$0xff]
    %v8671 = vld [vmem:[%s7977 + $0x1f8] sm:$0xff]
    %v8672 = vld [vmem:[%s7977 + $0x200] sm:$0xff]
    %v8673 = vld [vmem:[%s7977 + $0x210] sm:$0xff]
    %v8674 = vld [vmem:[%s7977 + $0x218] sm:$0xff]
    %v8675 = vld [vmem:[%s7977 + $0x228] sm:$0xff]
    %v8676 = vld [vmem:[%s7977 + $0x230] sm:$0xff]
    %v8677 = vld [vmem:[%s7977 + $0x240] sm:$0xff]
    %v8678 = vld [vmem:[%s7977 + $0x248] sm:$0xff]
    %v8679 = vld [vmem:[%s7977 + $0x258] sm:$0xff]
    %v8680 = vld [vmem:[%s7977 + $0x260] sm:$0xff]
    %v8681 = vld [vmem:[%s7977 + $0x270] sm:$0xff]
    %v8682 = vld [vmem:[%s7977 + $0x278] sm:$0xff]
    %v8683 = vld [vmem:[%s7977 + $0x288] sm:$0xff]
    %v8684 = vld [vmem:[%s7977 + $0x290] sm:$0xff]
    %v8685 = vld [vmem:[%s7977 + $0x2a0] sm:$0xff]
    %v8686 = vld [vmem:[%s7977 + $0x2a8] sm:$0xff]
    %v8687 = vld [vmem:[%s7977 + $0x2b8] sm:$0xff]
    %v8688 = vld [vmem:[%s7977 + $0x2c0] sm:$0xff]
    %v8689 = vld [vmem:[%s7977 + $0x2d0] sm:$0xff]
    %v8690 = vld [vmem:[%s7977 + $0x2d8] sm:$0xff]
    %v8691 = vld [vmem:[%s7977 + $0x2e8] sm:$0xff]
    %v8692 = vld [vmem:[%s7977 + $0x2f0] sm:$0xff]
    %v8693 = vld [vmem:[%s7977 + $0x300] sm:$0xff]
    %v8694 = vld [vmem:[%s7977 + $0x308] sm:$0xff]
    %v8695 = vld [vmem:[%s7977 + $0x318] sm:$0xff]
    %v8696 = vld [vmem:[%s7977 + $0x320] sm:$0xff]
    %v8697 = vld [vmem:[%s5 + $0x3] sm:$0x1]
    %v8698 = vlaneseq
    %v8699 = vshrl.u32 %v8698, 7
    %v8700 = vsub.s32 0, %v8699
    %v8701 = vrot.slane %v8697, %v8700
    %v8702 = vmul.f32 %v8633, %v8701
    %v8703 = vmul.f32 %v8634, %v8701
    %v8704 = vmul.f32 %v8635, %v8701
    %v8705 = vmul.f32 %v8636, %v8701
    %v8706 = vmul.f32 %v8637, %v8701
    %v8707 = vmul.f32 %v8638, %v8701
    %v8708 = vmul.f32 %v8639, %v8701
    %v8709 = vmul.f32 %v8640, %v8701
    %v8710 = vmul.f32 %v8641, %v8701
    %v8711 = vmul.f32 %v8642, %v8701
    %v8712 = vmul.f32 %v8643, %v8701
    %v8713 = vmul.f32 %v8644, %v8701
    %v8714 = vmul.f32 %v8645, %v8701
    %v8715 = vmul.f32 %v8646, %v8701
    %v8716 = vmul.f32 %v8647, %v8701
    %v8717 = vmul.f32 %v8648, %v8701
    %v8718 = vmul.f32 %v8649, %v8701
    %v8719 = vmul.f32 %v8650, %v8701
    %v8720 = vmul.f32 %v8651, %v8701
    %v8721 = vmul.f32 %v8652, %v8701
    %v8722 = vmul.f32 %v8653, %v8701
    %v8723 = vmul.f32 %v8654, %v8701
    %v8724 = vmul.f32 %v8655, %v8701
    %v8725 = vmul.f32 %v8656, %v8701
    %v8726 = vmul.f32 %v8657, %v8701
    %v8727 = vmul.f32 %v8658, %v8701
    %v8728 = vmul.f32 %v8659, %v8701
    %v8729 = vmul.f32 %v8660, %v8701
    %v8730 = vmul.f32 %v8661, %v8701
    %v8731 = vmul.f32 %v8662, %v8701
    %v8732 = vmul.f32 %v8663, %v8701
    %v8733 = vmul.f32 %v8664, %v8701
    %v8734 = vmul.f32 %v8665, %v8701
    %v8735 = vmul.f32 %v8666, %v8701
    %v8736 = vmul.f32 %v8667, %v8701
    %v8737 = vmul.f32 %v8668, %v8701
    %v8738 = vmul.f32 %v8669, %v8701
    %v8739 = vmul.f32 %v8670, %v8701
    %v8740 = vmul.f32 %v8671, %v8701
    %v8741 = vmul.f32 %v8672, %v8701
    %v8742 = vmul.f32 %v8673, %v8701
    %v8743 = vmul.f32 %v8674, %v8701
    %v8744 = vmul.f32 %v8675, %v8701
    %v8745 = vmul.f32 %v8676, %v8701
    %v8746 = vmul.f32 %v8677, %v8701
    %v8747 = vmul.f32 %v8678, %v8701
    %v8748 = vmul.f32 %v8679, %v8701
    %v8749 = vmul.f32 %v8680, %v8701
    %v8750 = vmul.f32 %v8681, %v8701
    %v8751 = vmul.f32 %v8682, %v8701
    %v8752 = vmul.f32 %v8683, %v8701
    %v8753 = vmul.f32 %v8684, %v8701
    %v8754 = vmul.f32 %v8685, %v8701
    %v8755 = vmul.f32 %v8686, %v8701
    %v8756 = vmul.f32 %v8687, %v8701
    %v8757 = vmul.f32 %v8688, %v8701
    %v8758 = vmul.f32 %v8689, %v8701
    %v8759 = vmul.f32 %v8690, %v8701
    %v8760 = vmul.f32 %v8691, %v8701
    %v8761 = vmul.f32 %v8692, %v8701
    %v8762 = vmul.f32 %v8693, %v8701
    %v8763 = vmul.f32 %v8694, %v8701
    %v8764 = vmul.f32 %v8695, %v8701
    %v8765 = vmul.f32 %v8696, %v8701
    %v8766 = vadd.f32 %v8569, %v8702
    %v8767 = vadd.f32 %v8570, %v8703
    %v8768 = vadd.f32 %v8571, %v8704
    %v8769 = vadd.f32 %v8572, %v8705
    %v8770 = vadd.f32 %v8573, %v8706
    %v8771 = vadd.f32 %v8574, %v8707
    %v8772 = vadd.f32 %v8575, %v8708
    %v8773 = vadd.f32 %v8576, %v8709
    %v8774 = vadd.f32 %v8577, %v8710
    %v8775 = vadd.f32 %v8578, %v8711
    %v8776 = vadd.f32 %v8579, %v8712
    %v8777 = vadd.f32 %v8580, %v8713
    %v8778 = vadd.f32 %v8581, %v8714
    %v8779 = vadd.f32 %v8582, %v8715
    %v8780 = vadd.f32 %v8583, %v8716
    %v8781 = vadd.f32 %v8584, %v8717
    %v8782 = vadd.f32 %v8585, %v8718
    %v8783 = vadd.f32 %v8586, %v8719
    %v8784 = vadd.f32 %v8587, %v8720
    %v8785 = vadd.f32 %v8588, %v8721
    %v8786 = vadd.f32 %v8589, %v8722
    %v8787 = vadd.f32 %v8590, %v8723
    %v8788 = vadd.f32 %v8591, %v8724
    %v8789 = vadd.f32 %v8592, %v8725
    %v8790 = vadd.f32 %v8593, %v8726
    %v8791 = vadd.f32 %v8594, %v8727
    %v8792 = vadd.f32 %v8595, %v8728
    %v8793 = vadd.f32 %v8596, %v8729
    %v8794 = vadd.f32 %v8597, %v8730
    %v8795 = vadd.f32 %v8598, %v8731
    %v8796 = vadd.f32 %v8599, %v8732
    %v8797 = vadd.f32 %v8600, %v8733
    %v8798 = vadd.f32 %v8601, %v8734
    %v8799 = vadd.f32 %v8602, %v8735
    %v8800 = vadd.f32 %v8603, %v8736
    %v8801 = vadd.f32 %v8604, %v8737
    %v8802 = vadd.f32 %v8605, %v8738
    %v8803 = vadd.f32 %v8606, %v8739
    %v8804 = vadd.f32 %v8607, %v8740
    %v8805 = vadd.f32 %v8608, %v8741
    %v8806 = vadd.f32 %v8609, %v8742
    %v8807 = vadd.f32 %v8610, %v8743
    %v8808 = vadd.f32 %v8611, %v8744
    %v8809 = vadd.f32 %v8612, %v8745
    %v8810 = vadd.f32 %v8613, %v8746
    %v8811 = vadd.f32 %v8614, %v8747
    %v8812 = vadd.f32 %v8615, %v8748
    %v8813 = vadd.f32 %v8616, %v8749
    %v8814 = vadd.f32 %v8617, %v8750
    %v8815 = vadd.f32 %v8618, %v8751
    %v8816 = vadd.f32 %v8619, %v8752
    %v8817 = vadd.f32 %v8620, %v8753
    %v8818 = vadd.f32 %v8621, %v8754
    %v8819 = vadd.f32 %v8622, %v8755
    %v8820 = vadd.f32 %v8623, %v8756
    %v8821 = vadd.f32 %v8624, %v8757
    %v8822 = vadd.f32 %v8625, %v8758
    %v8823 = vadd.f32 %v8626, %v8759
    %v8824 = vadd.f32 %v8627, %v8760
    %v8825 = vadd.f32 %v8628, %v8761
    %v8826 = vadd.f32 %v8629, %v8762
    %v8827 = vadd.f32 %v8630, %v8763
    %v8828 = vadd.f32 %v8631, %v8764
    %v8829 = vadd.f32 %v8632, %v8765
    %v8830 = vld [vmem:[%s7977 + $0x1] sm:$0xff]
    %v8831 = vld [vmem:[%s7977 + $0x9] sm:$0xff]
    %v8832 = vld [vmem:[%s7977 + $0x19] sm:$0xff]
    %v8833 = vld [vmem:[%s7977 + $0x21] sm:$0xff]
    %v8834 = vld [vmem:[%s7977 + $0x31] sm:$0xff]
    %v8835 = vld [vmem:[%s7977 + $0x39] sm:$0xff]
    %v8836 = vld [vmem:[%s7977 + $0x49] sm:$0xff]
    %v8837 = vld [vmem:[%s7977 + $0x51] sm:$0xff]
    %v8838 = vld [vmem:[%s7977 + $0x61] sm:$0xff]
    %v8839 = vld [vmem:[%s7977 + $0x69] sm:$0xff]
    %v8840 = vld [vmem:[%s7977 + $0x79] sm:$0xff]
    %v8841 = vld [vmem:[%s7977 + $0x81] sm:$0xff]
    %v8842 = vld [vmem:[%s7977 + $0x91] sm:$0xff]
    %v8843 = vld [vmem:[%s7977 + $0x99] sm:$0xff]
    %v8844 = vld [vmem:[%s7977 + $0xa9] sm:$0xff]
    %v8845 = vld [vmem:[%s7977 + $0xb1] sm:$0xff]
    %v8846 = vld [vmem:[%s7977 + $0xc1] sm:$0xff]
    %v8847 = vld [vmem:[%s7977 + $0xc9] sm:$0xff]
    %v8848 = vld [vmem:[%s7977 + $0xd9] sm:$0xff]
    %v8849 = vld [vmem:[%s7977 + $0xe1] sm:$0xff]
    %v8850 = vld [vmem:[%s7977 + $0xf1] sm:$0xff]
    %v8851 = vld [vmem:[%s7977 + $0xf9] sm:$0xff]
    %v8852 = vld [vmem:[%s7977 + $0x109] sm:$0xff]
    %v8853 = vld [vmem:[%s7977 + $0x111] sm:$0xff]
    %v8854 = vld [vmem:[%s7977 + $0x121] sm:$0xff]
    %v8855 = vld [vmem:[%s7977 + $0x129] sm:$0xff]
    %v8856 = vld [vmem:[%s7977 + $0x139] sm:$0xff]
    %v8857 = vld [vmem:[%s7977 + $0x141] sm:$0xff]
    %v8858 = vld [vmem:[%s7977 + $0x151] sm:$0xff]
    %v8859 = vld [vmem:[%s7977 + $0x159] sm:$0xff]
    %v8860 = vld [vmem:[%s7977 + $0x169] sm:$0xff]
    %v8861 = vld [vmem:[%s7977 + $0x171] sm:$0xff]
    %v8862 = vld [vmem:[%s7977 + $0x1b1] sm:$0xff]
    %v8863 = vld [vmem:[%s7977 + $0x1b9] sm:$0xff]
    %v8864 = vld [vmem:[%s7977 + $0x1c9] sm:$0xff]
    %v8865 = vld [vmem:[%s7977 + $0x1d1] sm:$0xff]
    %v8866 = vld [vmem:[%s7977 + $0x1e1] sm:$0xff]
    %v8867 = vld [vmem:[%s7977 + $0x1e9] sm:$0xff]
    %v8868 = vld [vmem:[%s7977 + $0x1f9] sm:$0xff]
    %v8869 = vld [vmem:[%s7977 + $0x201] sm:$0xff]
    %v8870 = vld [vmem:[%s7977 + $0x211] sm:$0xff]
    %v8871 = vld [vmem:[%s7977 + $0x219] sm:$0xff]
    %v8872 = vld [vmem:[%s7977 + $0x229] sm:$0xff]
    %v8873 = vld [vmem:[%s7977 + $0x231] sm:$0xff]
    %v8874 = vld [vmem:[%s7977 + $0x241] sm:$0xff]
    %v8875 = vld [vmem:[%s7977 + $0x249] sm:$0xff]
    %v8876 = vld [vmem:[%s7977 + $0x259] sm:$0xff]
    %v8877 = vld [vmem:[%s7977 + $0x261] sm:$0xff]
    %v8878 = vld [vmem:[%s7977 + $0x271] sm:$0xff]
    %v8879 = vld [vmem:[%s7977 + $0x279] sm:$0xff]
    %v8880 = vld [vmem:[%s7977 + $0x289] sm:$0xff]
    %v8881 = vld [vmem:[%s7977 + $0x291] sm:$0xff]
    %v8882 = vld [vmem:[%s7977 + $0x2a1] sm:$0xff]
    %v8883 = vld [vmem:[%s7977 + $0x2a9] sm:$0xff]
    %v8884 = vld [vmem:[%s7977 + $0x2b9] sm:$0xff]
    %v8885 = vld [vmem:[%s7977 + $0x2c1] sm:$0xff]
    %v8886 = vld [vmem:[%s7977 + $0x2d1] sm:$0xff]
    %v8887 = vld [vmem:[%s7977 + $0x2d9] sm:$0xff]
    %v8888 = vld [vmem:[%s7977 + $0x2e9] sm:$0xff]
    %v8889 = vld [vmem:[%s7977 + $0x2f1] sm:$0xff]
    %v8890 = vld [vmem:[%s7977 + $0x301] sm:$0xff]
    %v8891 = vld [vmem:[%s7977 + $0x309] sm:$0xff]
    %v8892 = vld [vmem:[%s7977 + $0x319] sm:$0xff]
    %v8893 = vld [vmem:[%s7977 + $0x321] sm:$0xff]
    %v8894 = vld [vmem:[%s5 + $0x4] sm:$0x1]
    %v8895 = vlaneseq
    %v8896 = vshrl.u32 %v8895, 7
    %v8897 = vsub.s32 0, %v8896
    %v8898 = vrot.slane %v8894, %v8897
    %v8899 = vmul.f32 %v8830, %v8898
    %v8900 = vmul.f32 %v8831, %v8898
    %v8901 = vmul.f32 %v8832, %v8898
    %v8902 = vmul.f32 %v8833, %v8898
    %v8903 = vmul.f32 %v8834, %v8898
    %v8904 = vmul.f32 %v8835, %v8898
    %v8905 = vmul.f32 %v8836, %v8898
    %v8906 = vmul.f32 %v8837, %v8898
    %v8907 = vmul.f32 %v8838, %v8898
    %v8908 = vmul.f32 %v8839, %v8898
    %v8909 = vmul.f32 %v8840, %v8898
    %v8910 = vmul.f32 %v8841, %v8898
    %v8911 = vmul.f32 %v8842, %v8898
    %v8912 = vmul.f32 %v8843, %v8898
    %v8913 = vmul.f32 %v8844, %v8898
    %v8914 = vmul.f32 %v8845, %v8898
    %v8915 = vmul.f32 %v8846, %v8898
    %v8916 = vmul.f32 %v8847, %v8898
    %v8917 = vmul.f32 %v8848, %v8898
    %v8918 = vmul.f32 %v8849, %v8898
    %v8919 = vmul.f32 %v8850, %v8898
    %v8920 = vmul.f32 %v8851, %v8898
    %v8921 = vmul.f32 %v8852, %v8898
    %v8922 = vmul.f32 %v8853, %v8898
    %v8923 = vmul.f32 %v8854, %v8898
    %v8924 = vmul.f32 %v8855, %v8898
    %v8925 = vmul.f32 %v8856, %v8898
    %v8926 = vmul.f32 %v8857, %v8898
    %v8927 = vmul.f32 %v8858, %v8898
    %v8928 = vmul.f32 %v8859, %v8898
    %v8929 = vmul.f32 %v8860, %v8898
    %v8930 = vmul.f32 %v8861, %v8898
    %v8931 = vmul.f32 %v8862, %v8898
    %v8932 = vmul.f32 %v8863, %v8898
    %v8933 = vmul.f32 %v8864, %v8898
    %v8934 = vmul.f32 %v8865, %v8898
    %v8935 = vmul.f32 %v8866, %v8898
    %v8936 = vmul.f32 %v8867, %v8898
    %v8937 = vmul.f32 %v8868, %v8898
    %v8938 = vmul.f32 %v8869, %v8898
    %v8939 = vmul.f32 %v8870, %v8898
    %v8940 = vmul.f32 %v8871, %v8898
    %v8941 = vmul.f32 %v8872, %v8898
    %v8942 = vmul.f32 %v8873, %v8898
    %v8943 = vmul.f32 %v8874, %v8898
    %v8944 = vmul.f32 %v8875, %v8898
    %v8945 = vmul.f32 %v8876, %v8898
    %v8946 = vmul.f32 %v8877, %v8898
    %v8947 = vmul.f32 %v8878, %v8898
    %v8948 = vmul.f32 %v8879, %v8898
    %v8949 = vmul.f32 %v8880, %v8898
    %v8950 = vmul.f32 %v8881, %v8898
    %v8951 = vmul.f32 %v8882, %v8898
    %v8952 = vmul.f32 %v8883, %v8898
    %v8953 = vmul.f32 %v8884, %v8898
    %v8954 = vmul.f32 %v8885, %v8898
    %v8955 = vmul.f32 %v8886, %v8898
    %v8956 = vmul.f32 %v8887, %v8898
    %v8957 = vmul.f32 %v8888, %v8898
    %v8958 = vmul.f32 %v8889, %v8898
    %v8959 = vmul.f32 %v8890, %v8898
    %v8960 = vmul.f32 %v8891, %v8898
    %v8961 = vmul.f32 %v8892, %v8898
    %v8962 = vmul.f32 %v8893, %v8898
    %v8963 = vadd.f32 %v8766, %v8899
    %v8964 = vadd.f32 %v8767, %v8900
    %v8965 = vadd.f32 %v8768, %v8901
    %v8966 = vadd.f32 %v8769, %v8902
    %v8967 = vadd.f32 %v8770, %v8903
    %v8968 = vadd.f32 %v8771, %v8904
    %v8969 = vadd.f32 %v8772, %v8905
    %v8970 = vadd.f32 %v8773, %v8906
    %v8971 = vadd.f32 %v8774, %v8907
    %v8972 = vadd.f32 %v8775, %v8908
    %v8973 = vadd.f32 %v8776, %v8909
    %v8974 = vadd.f32 %v8777, %v8910
    %v8975 = vadd.f32 %v8778, %v8911
    %v8976 = vadd.f32 %v8779, %v8912
    %v8977 = vadd.f32 %v8780, %v8913
    %v8978 = vadd.f32 %v8781, %v8914
    %v8979 = vadd.f32 %v8782, %v8915
    %v8980 = vadd.f32 %v8783, %v8916
    %v8981 = vadd.f32 %v8784, %v8917
    %v8982 = vadd.f32 %v8785, %v8918
    %v8983 = vadd.f32 %v8786, %v8919
    %v8984 = vadd.f32 %v8787, %v8920
    %v8985 = vadd.f32 %v8788, %v8921
    %v8986 = vadd.f32 %v8789, %v8922
    %v8987 = vadd.f32 %v8790, %v8923
    %v8988 = vadd.f32 %v8791, %v8924
    %v8989 = vadd.f32 %v8792, %v8925
    %v8990 = vadd.f32 %v8793, %v8926
    %v8991 = vadd.f32 %v8794, %v8927
    %v8992 = vadd.f32 %v8795, %v8928
    %v8993 = vadd.f32 %v8796, %v8929
    %v8994 = vadd.f32 %v8797, %v8930
    %v8995 = vadd.f32 %v8798, %v8931
    %v8996 = vadd.f32 %v8799, %v8932
    %v8997 = vadd.f32 %v8800, %v8933
    %v8998 = vadd.f32 %v8801, %v8934
    %v8999 = vadd.f32 %v8802, %v8935
    %v9000 = vadd.f32 %v8803, %v8936
    %v9001 = vadd.f32 %v8804, %v8937
    %v9002 = vadd.f32 %v8805, %v8938
    %v9003 = vadd.f32 %v8806, %v8939
    %v9004 = vadd.f32 %v8807, %v8940
    %v9005 = vadd.f32 %v8808, %v8941
    %v9006 = vadd.f32 %v8809, %v8942
    %v9007 = vadd.f32 %v8810, %v8943
    %v9008 = vadd.f32 %v8811, %v8944
    %v9009 = vadd.f32 %v8812, %v8945
    %v9010 = vadd.f32 %v8813, %v8946
    %v9011 = vadd.f32 %v8814, %v8947
    %v9012 = vadd.f32 %v8815, %v8948
    %v9013 = vadd.f32 %v8816, %v8949
    %v9014 = vadd.f32 %v8817, %v8950
    %v9015 = vadd.f32 %v8818, %v8951
    %v9016 = vadd.f32 %v8819, %v8952
    %v9017 = vadd.f32 %v8820, %v8953
    %v9018 = vadd.f32 %v8821, %v8954
    %v9019 = vadd.f32 %v8822, %v8955
    %v9020 = vadd.f32 %v8823, %v8956
    %v9021 = vadd.f32 %v8824, %v8957
    %v9022 = vadd.f32 %v8825, %v8958
    %v9023 = vadd.f32 %v8826, %v8959
    %v9024 = vadd.f32 %v8827, %v8960
    %v9025 = vadd.f32 %v8828, %v8961
    %v9026 = vadd.f32 %v8829, %v8962
    %v9027 = vld [vmem:[%s7977 + $0x2] sm:$0xff]
    %v9028 = vld [vmem:[%s7977 + $0xa] sm:$0xff]
    %v9029 = vld [vmem:[%s7977 + $0x1a] sm:$0xff]
    %v9030 = vld [vmem:[%s7977 + $0x22] sm:$0xff]
    %v9031 = vld [vmem:[%s7977 + $0x32] sm:$0xff]
    %v9032 = vld [vmem:[%s7977 + $0x3a] sm:$0xff]
    %v9033 = vld [vmem:[%s7977 + $0x4a] sm:$0xff]
    %v9034 = vld [vmem:[%s7977 + $0x52] sm:$0xff]
    %v9035 = vld [vmem:[%s7977 + $0x62] sm:$0xff]
    %v9036 = vld [vmem:[%s7977 + $0x6a] sm:$0xff]
    %v9037 = vld [vmem:[%s7977 + $0x7a] sm:$0xff]
    %v9038 = vld [vmem:[%s7977 + $0x82] sm:$0xff]
    %v9039 = vld [vmem:[%s7977 + $0x92] sm:$0xff]
    %v9040 = vld [vmem:[%s7977 + $0x9a] sm:$0xff]
    %v9041 = vld [vmem:[%s7977 + $0xaa] sm:$0xff]
    %v9042 = vld [vmem:[%s7977 + $0xb2] sm:$0xff]
    %v9043 = vld [vmem:[%s7977 + $0xc2] sm:$0xff]
    %v9044 = vld [vmem:[%s7977 + $0xca] sm:$0xff]
    %v9045 = vld [vmem:[%s7977 + $0xda] sm:$0xff]
    %v9046 = vld [vmem:[%s7977 + $0xe2] sm:$0xff]
    %v9047 = vld [vmem:[%s7977 + $0xf2] sm:$0xff]
    %v9048 = vld [vmem:[%s7977 + $0xfa] sm:$0xff]
    %v9049 = vld [vmem:[%s7977 + $0x10a] sm:$0xff]
    %v9050 = vld [vmem:[%s7977 + $0x112] sm:$0xff]
    %v9051 = vld [vmem:[%s7977 + $0x122] sm:$0xff]
    %v9052 = vld [vmem:[%s7977 + $0x12a] sm:$0xff]
    %v9053 = vld [vmem:[%s7977 + $0x13a] sm:$0xff]
    %v9054 = vld [vmem:[%s7977 + $0x142] sm:$0xff]
    %v9055 = vld [vmem:[%s7977 + $0x152] sm:$0xff]
    %v9056 = vld [vmem:[%s7977 + $0x15a] sm:$0xff]
    %v9057 = vld [vmem:[%s7977 + $0x16a] sm:$0xff]
    %v9058 = vld [vmem:[%s7977 + $0x172] sm:$0xff]
    %v9059 = vld [vmem:[%s7977 + $0x1b2] sm:$0xff]
    %v9060 = vld [vmem:[%s7977 + $0x1ba] sm:$0xff]
    %v9061 = vld [vmem:[%s7977 + $0x1ca] sm:$0xff]
    %v9062 = vld [vmem:[%s7977 + $0x1d2] sm:$0xff]
    %v9063 = vld [vmem:[%s7977 + $0x1e2] sm:$0xff]
    %v9064 = vld [vmem:[%s7977 + $0x1ea] sm:$0xff]
    %v9065 = vld [vmem:[%s7977 + $0x1fa] sm:$0xff]
    %v9066 = vld [vmem:[%s7977 + $0x202] sm:$0xff]
    %v9067 = vld [vmem:[%s7977 + $0x212] sm:$0xff]
    %v9068 = vld [vmem:[%s7977 + $0x21a] sm:$0xff]
    %v9069 = vld [vmem:[%s7977 + $0x22a] sm:$0xff]
    %v9070 = vld [vmem:[%s7977 + $0x232] sm:$0xff]
    %v9071 = vld [vmem:[%s7977 + $0x242] sm:$0xff]
    %v9072 = vld [vmem:[%s7977 + $0x24a] sm:$0xff]
    %v9073 = vld [vmem:[%s7977 + $0x25a] sm:$0xff]
    %v9074 = vld [vmem:[%s7977 + $0x262] sm:$0xff]
    %v9075 = vld [vmem:[%s7977 + $0x272] sm:$0xff]
    %v9076 = vld [vmem:[%s7977 + $0x27a] sm:$0xff]
    %v9077 = vld [vmem:[%s7977 + $0x28a] sm:$0xff]
    %v9078 = vld [vmem:[%s7977 + $0x292] sm:$0xff]
    %v9079 = vld [vmem:[%s7977 + $0x2a2] sm:$0xff]
    %v9080 = vld [vmem:[%s7977 + $0x2aa] sm:$0xff]
    %v9081 = vld [vmem:[%s7977 + $0x2ba] sm:$0xff]
    %v9082 = vld [vmem:[%s7977 + $0x2c2] sm:$0xff]
    %v9083 = vld [vmem:[%s7977 + $0x2d2] sm:$0xff]
    %v9084 = vld [vmem:[%s7977 + $0x2da] sm:$0xff]
    %v9085 = vld [vmem:[%s7977 + $0x2ea] sm:$0xff]
    %v9086 = vld [vmem:[%s7977 + $0x2f2] sm:$0xff]
    %v9087 = vld [vmem:[%s7977 + $0x302] sm:$0xff]
    %v9088 = vld [vmem:[%s7977 + $0x30a] sm:$0xff]
    %v9089 = vld [vmem:[%s7977 + $0x31a] sm:$0xff]
    %v9090 = vld [vmem:[%s7977 + $0x322] sm:$0xff]
    %v9091 = vld [vmem:[%s5 + $0x5] sm:$0x1]
    %v9092 = vlaneseq
    %v9093 = vshrl.u32 %v9092, 7
    %v9094 = vsub.s32 0, %v9093
    %v9095 = vrot.slane %v9091, %v9094
    %v9096 = vmul.f32 %v9027, %v9095
    %v9097 = vmul.f32 %v9028, %v9095
    %v9098 = vmul.f32 %v9029, %v9095
    %v9099 = vmul.f32 %v9030, %v9095
    %v9100 = vmul.f32 %v9031, %v9095
    %v9101 = vmul.f32 %v9032, %v9095
    %v9102 = vmul.f32 %v9033, %v9095
    %v9103 = vmul.f32 %v9034, %v9095
    %v9104 = vmul.f32 %v9035, %v9095
    %v9105 = vmul.f32 %v9036, %v9095
    %v9106 = vmul.f32 %v9037, %v9095
    %v9107 = vmul.f32 %v9038, %v9095
    %v9108 = vmul.f32 %v9039, %v9095
    %v9109 = vmul.f32 %v9040, %v9095
    %v9110 = vmul.f32 %v9041, %v9095
    %v9111 = vmul.f32 %v9042, %v9095
    %v9112 = vmul.f32 %v9043, %v9095
    %v9113 = vmul.f32 %v9044, %v9095
    %v9114 = vmul.f32 %v9045, %v9095
    %v9115 = vmul.f32 %v9046, %v9095
    %v9116 = vmul.f32 %v9047, %v9095
    %v9117 = vmul.f32 %v9048, %v9095
    %v9118 = vmul.f32 %v9049, %v9095
    %v9119 = vmul.f32 %v9050, %v9095
    %v9120 = vmul.f32 %v9051, %v9095
    %v9121 = vmul.f32 %v9052, %v9095
    %v9122 = vmul.f32 %v9053, %v9095
    %v9123 = vmul.f32 %v9054, %v9095
    %v9124 = vmul.f32 %v9055, %v9095
    %v9125 = vmul.f32 %v9056, %v9095
    %v9126 = vmul.f32 %v9057, %v9095
    %v9127 = vmul.f32 %v9058, %v9095
    %v9128 = vmul.f32 %v9059, %v9095
    %v9129 = vmul.f32 %v9060, %v9095
    %v9130 = vmul.f32 %v9061, %v9095
    %v9131 = vmul.f32 %v9062, %v9095
    %v9132 = vmul.f32 %v9063, %v9095
    %v9133 = vmul.f32 %v9064, %v9095
    %v9134 = vmul.f32 %v9065, %v9095
    %v9135 = vmul.f32 %v9066, %v9095
    %v9136 = vmul.f32 %v9067, %v9095
    %v9137 = vmul.f32 %v9068, %v9095
    %v9138 = vmul.f32 %v9069, %v9095
    %v9139 = vmul.f32 %v9070, %v9095
    %v9140 = vmul.f32 %v9071, %v9095
    %v9141 = vmul.f32 %v9072, %v9095
    %v9142 = vmul.f32 %v9073, %v9095
    %v9143 = vmul.f32 %v9074, %v9095
    %v9144 = vmul.f32 %v9075, %v9095
    %v9145 = vmul.f32 %v9076, %v9095
    %v9146 = vmul.f32 %v9077, %v9095
    %v9147 = vmul.f32 %v9078, %v9095
    %v9148 = vmul.f32 %v9079, %v9095
    %v9149 = vmul.f32 %v9080, %v9095
    %v9150 = vmul.f32 %v9081, %v9095
    %v9151 = vmul.f32 %v9082, %v9095
    %v9152 = vmul.f32 %v9083, %v9095
    %v9153 = vmul.f32 %v9084, %v9095
    %v9154 = vmul.f32 %v9085, %v9095
    %v9155 = vmul.f32 %v9086, %v9095
    %v9156 = vmul.f32 %v9087, %v9095
    %v9157 = vmul.f32 %v9088, %v9095
    %v9158 = vmul.f32 %v9089, %v9095
    %v9159 = vmul.f32 %v9090, %v9095
    %v9160 = vadd.f32 %v8963, %v9096
    %v9161 = vadd.f32 %v8964, %v9097
    %v9162 = vadd.f32 %v8965, %v9098
    %v9163 = vadd.f32 %v8966, %v9099
    %v9164 = vadd.f32 %v8967, %v9100
    %v9165 = vadd.f32 %v8968, %v9101
    %v9166 = vadd.f32 %v8969, %v9102
    %v9167 = vadd.f32 %v8970, %v9103
    %v9168 = vadd.f32 %v8971, %v9104
    %v9169 = vadd.f32 %v8972, %v9105
    %v9170 = vadd.f32 %v8973, %v9106
    %v9171 = vadd.f32 %v8974, %v9107
    %v9172 = vadd.f32 %v8975, %v9108
    %v9173 = vadd.f32 %v8976, %v9109
    %v9174 = vadd.f32 %v8977, %v9110
    %v9175 = vadd.f32 %v8978, %v9111
    %v9176 = vadd.f32 %v8979, %v9112
    %v9177 = vadd.f32 %v8980, %v9113
    %v9178 = vadd.f32 %v8981, %v9114
    %v9179 = vadd.f32 %v8982, %v9115
    %v9180 = vadd.f32 %v8983, %v9116
    %v9181 = vadd.f32 %v8984, %v9117
    %v9182 = vadd.f32 %v8985, %v9118
    %v9183 = vadd.f32 %v8986, %v9119
    %v9184 = vadd.f32 %v8987, %v9120
    %v9185 = vadd.f32 %v8988, %v9121
    %v9186 = vadd.f32 %v8989, %v9122
    %v9187 = vadd.f32 %v8990, %v9123
    %v9188 = vadd.f32 %v8991, %v9124
    %v9189 = vadd.f32 %v8992, %v9125
    %v9190 = vadd.f32 %v8993, %v9126
    %v9191 = vadd.f32 %v8994, %v9127
    %v9192 = vadd.f32 %v8995, %v9128
    %v9193 = vadd.f32 %v8996, %v9129
    %v9194 = vadd.f32 %v8997, %v9130
    %v9195 = vadd.f32 %v8998, %v9131
    %v9196 = vadd.f32 %v8999, %v9132
    %v9197 = vadd.f32 %v9000, %v9133
    %v9198 = vadd.f32 %v9001, %v9134
    %v9199 = vadd.f32 %v9002, %v9135
    %v9200 = vadd.f32 %v9003, %v9136
    %v9201 = vadd.f32 %v9004, %v9137
    %v9202 = vadd.f32 %v9005, %v9138
    %v9203 = vadd.f32 %v9006, %v9139
    %v9204 = vadd.f32 %v9007, %v9140
    %v9205 = vadd.f32 %v9008, %v9141
    %v9206 = vadd.f32 %v9009, %v9142
    %v9207 = vadd.f32 %v9010, %v9143
    %v9208 = vadd.f32 %v9011, %v9144
    %v9209 = vadd.f32 %v9012, %v9145
    %v9210 = vadd.f32 %v9013, %v9146
    %v9211 = vadd.f32 %v9014, %v9147
    %v9212 = vadd.f32 %v9015, %v9148
    %v9213 = vadd.f32 %v9016, %v9149
    %v9214 = vadd.f32 %v9017, %v9150
    %v9215 = vadd.f32 %v9018, %v9151
    %v9216 = vadd.f32 %v9019, %v9152
    %v9217 = vadd.f32 %v9020, %v9153
    %v9218 = vadd.f32 %v9021, %v9154
    %v9219 = vadd.f32 %v9022, %v9155
    %v9220 = vadd.f32 %v9023, %v9156
    %v9221 = vadd.f32 %v9024, %v9157
    %v9222 = vadd.f32 %v9025, %v9158
    %v9223 = vadd.f32 %v9026, %v9159
    %s9224 = scalar_lea.vmem [#allocation4], 48
    %v9225 = vld [vmem:[%s9224] sm:$0xff]
    %v9226 = vld [vmem:[%s9224 + $0x8] sm:$0xff]
    %v9227 = vld [vmem:[%s9224 + $0x18] sm:$0xff]
    %v9228 = vld [vmem:[%s9224 + $0x20] sm:$0xff]
    %v9229 = vld [vmem:[%s9224 + $0x30] sm:$0xff]
    %v9230 = vld [vmem:[%s9224 + $0x38] sm:$0xff]
    %v9231 = vld [vmem:[%s9224 + $0x48] sm:$0xff]
    %v9232 = vld [vmem:[%s9224 + $0x50] sm:$0xff]
    %v9233 = vld [vmem:[%s9224 + $0x60] sm:$0xff]
    %v9234 = vld [vmem:[%s9224 + $0x68] sm:$0xff]
    %v9235 = vld [vmem:[%s9224 + $0x78] sm:$0xff]
    %v9236 = vld [vmem:[%s9224 + $0x80] sm:$0xff]
    %v9237 = vld [vmem:[%s9224 + $0x90] sm:$0xff]
    %v9238 = vld [vmem:[%s9224 + $0x98] sm:$0xff]
    %v9239 = vld [vmem:[%s9224 + $0xa8] sm:$0xff]
    %v9240 = vld [vmem:[%s9224 + $0xb0] sm:$0xff]
    %v9241 = vld [vmem:[%s9224 + $0xc0] sm:$0xff]
    %v9242 = vld [vmem:[%s9224 + $0xc8] sm:$0xff]
    %v9243 = vld [vmem:[%s9224 + $0xd8] sm:$0xff]
    %v9244 = vld [vmem:[%s9224 + $0xe0] sm:$0xff]
    %v9245 = vld [vmem:[%s9224 + $0xf0] sm:$0xff]
    %v9246 = vld [vmem:[%s9224 + $0xf8] sm:$0xff]
    %v9247 = vld [vmem:[%s9224 + $0x108] sm:$0xff]
    %v9248 = vld [vmem:[%s9224 + $0x110] sm:$0xff]
    %v9249 = vld [vmem:[%s9224 + $0x120] sm:$0xff]
    %v9250 = vld [vmem:[%s9224 + $0x128] sm:$0xff]
    %v9251 = vld [vmem:[%s9224 + $0x138] sm:$0xff]
    %v9252 = vld [vmem:[%s9224 + $0x140] sm:$0xff]
    %v9253 = vld [vmem:[%s9224 + $0x150] sm:$0xff]
    %v9254 = vld [vmem:[%s9224 + $0x158] sm:$0xff]
    %v9255 = vld [vmem:[%s9224 + $0x168] sm:$0xff]
    %v9256 = vld [vmem:[%s9224 + $0x170] sm:$0xff]
    %v9257 = vld [vmem:[%s9224 + $0x1b0] sm:$0xff]
    %v9258 = vld [vmem:[%s9224 + $0x1b8] sm:$0xff]
    %v9259 = vld [vmem:[%s9224 + $0x1c8] sm:$0xff]
    %v9260 = vld [vmem:[%s9224 + $0x1d0] sm:$0xff]
    %v9261 = vld [vmem:[%s9224 + $0x1e0] sm:$0xff]
    %v9262 = vld [vmem:[%s9224 + $0x1e8] sm:$0xff]
    %v9263 = vld [vmem:[%s9224 + $0x1f8] sm:$0xff]
    %v9264 = vld [vmem:[%s9224 + $0x200] sm:$0xff]
    %v9265 = vld [vmem:[%s9224 + $0x210] sm:$0xff]
    %v9266 = vld [vmem:[%s9224 + $0x218] sm:$0xff]
    %v9267 = vld [vmem:[%s9224 + $0x228] sm:$0xff]
    %v9268 = vld [vmem:[%s9224 + $0x230] sm:$0xff]
    %v9269 = vld [vmem:[%s9224 + $0x240] sm:$0xff]
    %v9270 = vld [vmem:[%s9224 + $0x248] sm:$0xff]
    %v9271 = vld [vmem:[%s9224 + $0x258] sm:$0xff]
    %v9272 = vld [vmem:[%s9224 + $0x260] sm:$0xff]
    %v9273 = vld [vmem:[%s9224 + $0x270] sm:$0xff]
    %v9274 = vld [vmem:[%s9224 + $0x278] sm:$0xff]
    %v9275 = vld [vmem:[%s9224 + $0x288] sm:$0xff]
    %v9276 = vld [vmem:[%s9224 + $0x290] sm:$0xff]
    %v9277 = vld [vmem:[%s9224 + $0x2a0] sm:$0xff]
    %v9278 = vld [vmem:[%s9224 + $0x2a8] sm:$0xff]
    %v9279 = vld [vmem:[%s9224 + $0x2b8] sm:$0xff]
    %v9280 = vld [vmem:[%s9224 + $0x2c0] sm:$0xff]
    %v9281 = vld [vmem:[%s9224 + $0x2d0] sm:$0xff]
    %v9282 = vld [vmem:[%s9224 + $0x2d8] sm:$0xff]
    %v9283 = vld [vmem:[%s9224 + $0x2e8] sm:$0xff]
    %v9284 = vld [vmem:[%s9224 + $0x2f0] sm:$0xff]
    %v9285 = vld [vmem:[%s9224 + $0x300] sm:$0xff]
    %v9286 = vld [vmem:[%s9224 + $0x308] sm:$0xff]
    %v9287 = vld [vmem:[%s9224 + $0x318] sm:$0xff]
    %v9288 = vld [vmem:[%s9224 + $0x320] sm:$0xff]
    %v9289 = vld [vmem:[%s5 + $0x6] sm:$0x1]
    %v9290 = vlaneseq
    %v9291 = vshrl.u32 %v9290, 7
    %v9292 = vsub.s32 0, %v9291
    %v9293 = vrot.slane %v9289, %v9292
    %v9294 = vmul.f32 %v9225, %v9293
    %v9295 = vmul.f32 %v9226, %v9293
    %v9296 = vmul.f32 %v9227, %v9293
    %v9297 = vmul.f32 %v9228, %v9293
    %v9298 = vmul.f32 %v9229, %v9293
    %v9299 = vmul.f32 %v9230, %v9293
    %v9300 = vmul.f32 %v9231, %v9293
    %v9301 = vmul.f32 %v9232, %v9293
    %v9302 = vmul.f32 %v9233, %v9293
    %v9303 = vmul.f32 %v9234, %v9293
    %v9304 = vmul.f32 %v9235, %v9293
    %v9305 = vmul.f32 %v9236, %v9293
    %v9306 = vmul.f32 %v9237, %v9293
    %v9307 = vmul.f32 %v9238, %v9293
    %v9308 = vmul.f32 %v9239, %v9293
    %v9309 = vmul.f32 %v9240, %v9293
    %v9310 = vmul.f32 %v9241, %v9293
    %v9311 = vmul.f32 %v9242, %v9293
    %v9312 = vmul.f32 %v9243, %v9293
    %v9313 = vmul.f32 %v9244, %v9293
    %v9314 = vmul.f32 %v9245, %v9293
    %v9315 = vmul.f32 %v9246, %v9293
    %v9316 = vmul.f32 %v9247, %v9293
    %v9317 = vmul.f32 %v9248, %v9293
    %v9318 = vmul.f32 %v9249, %v9293
    %v9319 = vmul.f32 %v9250, %v9293
    %v9320 = vmul.f32 %v9251, %v9293
    %v9321 = vmul.f32 %v9252, %v9293
    %v9322 = vmul.f32 %v9253, %v9293
    %v9323 = vmul.f32 %v9254, %v9293
    %v9324 = vmul.f32 %v9255, %v9293
    %v9325 = vmul.f32 %v9256, %v9293
    %v9326 = vmul.f32 %v9257, %v9293
    %v9327 = vmul.f32 %v9258, %v9293
    %v9328 = vmul.f32 %v9259, %v9293
    %v9329 = vmul.f32 %v9260, %v9293
    %v9330 = vmul.f32 %v9261, %v9293
    %v9331 = vmul.f32 %v9262, %v9293
    %v9332 = vmul.f32 %v9263, %v9293
    %v9333 = vmul.f32 %v9264, %v9293
    %v9334 = vmul.f32 %v9265, %v9293
    %v9335 = vmul.f32 %v9266, %v9293
    %v9336 = vmul.f32 %v9267, %v9293
    %v9337 = vmul.f32 %v9268, %v9293
    %v9338 = vmul.f32 %v9269, %v9293
    %v9339 = vmul.f32 %v9270, %v9293
    %v9340 = vmul.f32 %v9271, %v9293
    %v9341 = vmul.f32 %v9272, %v9293
    %v9342 = vmul.f32 %v9273, %v9293
    %v9343 = vmul.f32 %v9274, %v9293
    %v9344 = vmul.f32 %v9275, %v9293
    %v9345 = vmul.f32 %v9276, %v9293
    %v9346 = vmul.f32 %v9277, %v9293
    %v9347 = vmul.f32 %v9278, %v9293
    %v9348 = vmul.f32 %v9279, %v9293
    %v9349 = vmul.f32 %v9280, %v9293
    %v9350 = vmul.f32 %v9281, %v9293
    %v9351 = vmul.f32 %v9282, %v9293
    %v9352 = vmul.f32 %v9283, %v9293
    %v9353 = vmul.f32 %v9284, %v9293
    %v9354 = vmul.f32 %v9285, %v9293
    %v9355 = vmul.f32 %v9286, %v9293
    %v9356 = vmul.f32 %v9287, %v9293
    %v9357 = vmul.f32 %v9288, %v9293
    %v9358 = vadd.f32 %v9160, %v9294
    %v9359 = vadd.f32 %v9161, %v9295
    %v9360 = vadd.f32 %v9162, %v9296
    %v9361 = vadd.f32 %v9163, %v9297
    %v9362 = vadd.f32 %v9164, %v9298
    %v9363 = vadd.f32 %v9165, %v9299
    %v9364 = vadd.f32 %v9166, %v9300
    %v9365 = vadd.f32 %v9167, %v9301
    %v9366 = vadd.f32 %v9168, %v9302
    %v9367 = vadd.f32 %v9169, %v9303
    %v9368 = vadd.f32 %v9170, %v9304
    %v9369 = vadd.f32 %v9171, %v9305
    %v9370 = vadd.f32 %v9172, %v9306
    %v9371 = vadd.f32 %v9173, %v9307
    %v9372 = vadd.f32 %v9174, %v9308
    %v9373 = vadd.f32 %v9175, %v9309
    %v9374 = vadd.f32 %v9176, %v9310
    %v9375 = vadd.f32 %v9177, %v9311
    %v9376 = vadd.f32 %v9178, %v9312
    %v9377 = vadd.f32 %v9179, %v9313
    %v9378 = vadd.f32 %v9180, %v9314
    %v9379 = vadd.f32 %v9181, %v9315
    %v9380 = vadd.f32 %v9182, %v9316
    %v9381 = vadd.f32 %v9183, %v9317
    %v9382 = vadd.f32 %v9184, %v9318
    %v9383 = vadd.f32 %v9185, %v9319
    %v9384 = vadd.f32 %v9186, %v9320
    %v9385 = vadd.f32 %v9187, %v9321
    %v9386 = vadd.f32 %v9188, %v9322
    %v9387 = vadd.f32 %v9189, %v9323
    %v9388 = vadd.f32 %v9190, %v9324
    %v9389 = vadd.f32 %v9191, %v9325
    %v9390 = vadd.f32 %v9192, %v9326
    %v9391 = vadd.f32 %v9193, %v9327
    %v9392 = vadd.f32 %v9194, %v9328
    %v9393 = vadd.f32 %v9195, %v9329
    %v9394 = vadd.f32 %v9196, %v9330
    %v9395 = vadd.f32 %v9197, %v9331
    %v9396 = vadd.f32 %v9198, %v9332
    %v9397 = vadd.f32 %v9199, %v9333
    %v9398 = vadd.f32 %v9200, %v9334
    %v9399 = vadd.f32 %v9201, %v9335
    %v9400 = vadd.f32 %v9202, %v9336
    %v9401 = vadd.f32 %v9203, %v9337
    %v9402 = vadd.f32 %v9204, %v9338
    %v9403 = vadd.f32 %v9205, %v9339
    %v9404 = vadd.f32 %v9206, %v9340
    %v9405 = vadd.f32 %v9207, %v9341
    %v9406 = vadd.f32 %v9208, %v9342
    %v9407 = vadd.f32 %v9209, %v9343
    %v9408 = vadd.f32 %v9210, %v9344
    %v9409 = vadd.f32 %v9211, %v9345
    %v9410 = vadd.f32 %v9212, %v9346
    %v9411 = vadd.f32 %v9213, %v9347
    %v9412 = vadd.f32 %v9214, %v9348
    %v9413 = vadd.f32 %v9215, %v9349
    %v9414 = vadd.f32 %v9216, %v9350
    %v9415 = vadd.f32 %v9217, %v9351
    %v9416 = vadd.f32 %v9218, %v9352
    %v9417 = vadd.f32 %v9219, %v9353
    %v9418 = vadd.f32 %v9220, %v9354
    %v9419 = vadd.f32 %v9221, %v9355
    %v9420 = vadd.f32 %v9222, %v9356
    %v9421 = vadd.f32 %v9223, %v9357
    %v9422 = vld [vmem:[%s9224 + $0x1] sm:$0xff]
    %v9423 = vld [vmem:[%s9224 + $0x9] sm:$0xff]
    %v9424 = vld [vmem:[%s9224 + $0x19] sm:$0xff]
    %v9425 = vld [vmem:[%s9224 + $0x21] sm:$0xff]
    %v9426 = vld [vmem:[%s9224 + $0x31] sm:$0xff]
    %v9427 = vld [vmem:[%s9224 + $0x39] sm:$0xff]
    %v9428 = vld [vmem:[%s9224 + $0x49] sm:$0xff]
    %v9429 = vld [vmem:[%s9224 + $0x51] sm:$0xff]
    %v9430 = vld [vmem:[%s9224 + $0x61] sm:$0xff]
    %v9431 = vld [vmem:[%s9224 + $0x69] sm:$0xff]
    %v9432 = vld [vmem:[%s9224 + $0x79] sm:$0xff]
    %v9433 = vld [vmem:[%s9224 + $0x81] sm:$0xff]
    %v9434 = vld [vmem:[%s9224 + $0x91] sm:$0xff]
    %v9435 = vld [vmem:[%s9224 + $0x99] sm:$0xff]
    %v9436 = vld [vmem:[%s9224 + $0xa9] sm:$0xff]
    %v9437 = vld [vmem:[%s9224 + $0xb1] sm:$0xff]
    %v9438 = vld [vmem:[%s9224 + $0xc1] sm:$0xff]
    %v9439 = vld [vmem:[%s9224 + $0xc9] sm:$0xff]
    %v9440 = vld [vmem:[%s9224 + $0xd9] sm:$0xff]
    %v9441 = vld [vmem:[%s9224 + $0xe1] sm:$0xff]
    %v9442 = vld [vmem:[%s9224 + $0xf1] sm:$0xff]
    %v9443 = vld [vmem:[%s9224 + $0xf9] sm:$0xff]
    %v9444 = vld [vmem:[%s9224 + $0x109] sm:$0xff]
    %v9445 = vld [vmem:[%s9224 + $0x111] sm:$0xff]
    %v9446 = vld [vmem:[%s9224 + $0x121] sm:$0xff]
    %v9447 = vld [vmem:[%s9224 + $0x129] sm:$0xff]
    %v9448 = vld [vmem:[%s9224 + $0x139] sm:$0xff]
    %v9449 = vld [vmem:[%s9224 + $0x141] sm:$0xff]
    %v9450 = vld [vmem:[%s9224 + $0x151] sm:$0xff]
    %v9451 = vld [vmem:[%s9224 + $0x159] sm:$0xff]
    %v9452 = vld [vmem:[%s9224 + $0x169] sm:$0xff]
    %v9453 = vld [vmem:[%s9224 + $0x171] sm:$0xff]
    %v9454 = vld [vmem:[%s9224 + $0x1b1] sm:$0xff]
    %v9455 = vld [vmem:[%s9224 + $0x1b9] sm:$0xff]
    %v9456 = vld [vmem:[%s9224 + $0x1c9] sm:$0xff]
    %v9457 = vld [vmem:[%s9224 + $0x1d1] sm:$0xff]
    %v9458 = vld [vmem:[%s9224 + $0x1e1] sm:$0xff]
    %v9459 = vld [vmem:[%s9224 + $0x1e9] sm:$0xff]
    %v9460 = vld [vmem:[%s9224 + $0x1f9] sm:$0xff]
    %v9461 = vld [vmem:[%s9224 + $0x201] sm:$0xff]
    %v9462 = vld [vmem:[%s9224 + $0x211] sm:$0xff]
    %v9463 = vld [vmem:[%s9224 + $0x219] sm:$0xff]
    %v9464 = vld [vmem:[%s9224 + $0x229] sm:$0xff]
    %v9465 = vld [vmem:[%s9224 + $0x231] sm:$0xff]
    %v9466 = vld [vmem:[%s9224 + $0x241] sm:$0xff]
    %v9467 = vld [vmem:[%s9224 + $0x249] sm:$0xff]
    %v9468 = vld [vmem:[%s9224 + $0x259] sm:$0xff]
    %v9469 = vld [vmem:[%s9224 + $0x261] sm:$0xff]
    %v9470 = vld [vmem:[%s9224 + $0x271] sm:$0xff]
    %v9471 = vld [vmem:[%s9224 + $0x279] sm:$0xff]
    %v9472 = vld [vmem:[%s9224 + $0x289] sm:$0xff]
    %v9473 = vld [vmem:[%s9224 + $0x291] sm:$0xff]
    %v9474 = vld [vmem:[%s9224 + $0x2a1] sm:$0xff]
    %v9475 = vld [vmem:[%s9224 + $0x2a9] sm:$0xff]
    %v9476 = vld [vmem:[%s9224 + $0x2b9] sm:$0xff]
    %v9477 = vld [vmem:[%s9224 + $0x2c1] sm:$0xff]
    %v9478 = vld [vmem:[%s9224 + $0x2d1] sm:$0xff]
    %v9479 = vld [vmem:[%s9224 + $0x2d9] sm:$0xff]
    %v9480 = vld [vmem:[%s9224 + $0x2e9] sm:$0xff]
    %v9481 = vld [vmem:[%s9224 + $0x2f1] sm:$0xff]
    %v9482 = vld [vmem:[%s9224 + $0x301] sm:$0xff]
    %v9483 = vld [vmem:[%s9224 + $0x309] sm:$0xff]
    %v9484 = vld [vmem:[%s9224 + $0x319] sm:$0xff]
    %v9485 = vld [vmem:[%s9224 + $0x321] sm:$0xff]
    %v9486 = vld [vmem:[%s5 + $0x7] sm:$0x1]
    %v9487 = vlaneseq
    %v9488 = vshrl.u32 %v9487, 7
    %v9489 = vsub.s32 0, %v9488
    %v9490 = vrot.slane %v9486, %v9489
    %v9491 = vmul.f32 %v9422, %v9490
    %v9492 = vmul.f32 %v9423, %v9490
    %v9493 = vmul.f32 %v9424, %v9490
    %v9494 = vmul.f32 %v9425, %v9490
    %v9495 = vmul.f32 %v9426, %v9490
    %v9496 = vmul.f32 %v9427, %v9490
    %v9497 = vmul.f32 %v9428, %v9490
    %v9498 = vmul.f32 %v9429, %v9490
    %v9499 = vmul.f32 %v9430, %v9490
    %v9500 = vmul.f32 %v9431, %v9490
    %v9501 = vmul.f32 %v9432, %v9490
    %v9502 = vmul.f32 %v9433, %v9490
    %v9503 = vmul.f32 %v9434, %v9490
    %v9504 = vmul.f32 %v9435, %v9490
    %v9505 = vmul.f32 %v9436, %v9490
    %v9506 = vmul.f32 %v9437, %v9490
    %v9507 = vmul.f32 %v9438, %v9490
    %v9508 = vmul.f32 %v9439, %v9490
    %v9509 = vmul.f32 %v9440, %v9490
    %v9510 = vmul.f32 %v9441, %v9490
    %v9511 = vmul.f32 %v9442, %v9490
    %v9512 = vmul.f32 %v9443, %v9490
    %v9513 = vmul.f32 %v9444, %v9490
    %v9514 = vmul.f32 %v9445, %v9490
    %v9515 = vmul.f32 %v9446, %v9490
    %v9516 = vmul.f32 %v9447, %v9490
    %v9517 = vmul.f32 %v9448, %v9490
    %v9518 = vmul.f32 %v9449, %v9490
    %v9519 = vmul.f32 %v9450, %v9490
    %v9520 = vmul.f32 %v9451, %v9490
    %v9521 = vmul.f32 %v9452, %v9490
    %v9522 = vmul.f32 %v9453, %v9490
    %v9523 = vmul.f32 %v9454, %v9490
    %v9524 = vmul.f32 %v9455, %v9490
    %v9525 = vmul.f32 %v9456, %v9490
    %v9526 = vmul.f32 %v9457, %v9490
    %v9527 = vmul.f32 %v9458, %v9490
    %v9528 = vmul.f32 %v9459, %v9490
    %v9529 = vmul.f32 %v9460, %v9490
    %v9530 = vmul.f32 %v9461, %v9490
    %v9531 = vmul.f32 %v9462, %v9490
    %v9532 = vmul.f32 %v9463, %v9490
    %v9533 = vmul.f32 %v9464, %v9490
    %v9534 = vmul.f32 %v9465, %v9490
    %v9535 = vmul.f32 %v9466, %v9490
    %v9536 = vmul.f32 %v9467, %v9490
    %v9537 = vmul.f32 %v9468, %v9490
    %v9538 = vmul.f32 %v9469, %v9490
    %v9539 = vmul.f32 %v9470, %v9490
    %v9540 = vmul.f32 %v9471, %v9490
    %v9541 = vmul.f32 %v9472, %v9490
    %v9542 = vmul.f32 %v9473, %v9490
    %v9543 = vmul.f32 %v9474, %v9490
    %v9544 = vmul.f32 %v9475, %v9490
    %v9545 = vmul.f32 %v9476, %v9490
    %v9546 = vmul.f32 %v9477, %v9490
    %v9547 = vmul.f32 %v9478, %v9490
    %v9548 = vmul.f32 %v9479, %v9490
    %v9549 = vmul.f32 %v9480, %v9490
    %v9550 = vmul.f32 %v9481, %v9490
    %v9551 = vmul.f32 %v9482, %v9490
    %v9552 = vmul.f32 %v9483, %v9490
    %v9553 = vmul.f32 %v9484, %v9490
    %v9554 = vmul.f32 %v9485, %v9490
    %v9555 = vadd.f32 %v9358, %v9491
    %v9556 = vadd.f32 %v9359, %v9492
    %v9557 = vadd.f32 %v9360, %v9493
    %v9558 = vadd.f32 %v9361, %v9494
    %v9559 = vadd.f32 %v9362, %v9495
    %v9560 = vadd.f32 %v9363, %v9496
    %v9561 = vadd.f32 %v9364, %v9497
    %v9562 = vadd.f32 %v9365, %v9498
    %v9563 = vadd.f32 %v9366, %v9499
    %v9564 = vadd.f32 %v9367, %v9500
    %v9565 = vadd.f32 %v9368, %v9501
    %v9566 = vadd.f32 %v9369, %v9502
    %v9567 = vadd.f32 %v9370, %v9503
    %v9568 = vadd.f32 %v9371, %v9504
    %v9569 = vadd.f32 %v9372, %v9505
    %v9570 = vadd.f32 %v9373, %v9506
    %v9571 = vadd.f32 %v9374, %v9507
    %v9572 = vadd.f32 %v9375, %v9508
    %v9573 = vadd.f32 %v9376, %v9509
    %v9574 = vadd.f32 %v9377, %v9510
    %v9575 = vadd.f32 %v9378, %v9511
    %v9576 = vadd.f32 %v9379, %v9512
    %v9577 = vadd.f32 %v9380, %v9513
    %v9578 = vadd.f32 %v9381, %v9514
    %v9579 = vadd.f32 %v9382, %v9515
    %v9580 = vadd.f32 %v9383, %v9516
    %v9581 = vadd.f32 %v9384, %v9517
    %v9582 = vadd.f32 %v9385, %v9518
    %v9583 = vadd.f32 %v9386, %v9519
    %v9584 = vadd.f32 %v9387, %v9520
    %v9585 = vadd.f32 %v9388, %v9521
    %v9586 = vadd.f32 %v9389, %v9522
    %v9587 = vadd.f32 %v9390, %v9523
    %v9588 = vadd.f32 %v9391, %v9524
    %v9589 = vadd.f32 %v9392, %v9525
    %v9590 = vadd.f32 %v9393, %v9526
    %v9591 = vadd.f32 %v9394, %v9527
    %v9592 = vadd.f32 %v9395, %v9528
    %v9593 = vadd.f32 %v9396, %v9529
    %v9594 = vadd.f32 %v9397, %v9530
    %v9595 = vadd.f32 %v9398, %v9531
    %v9596 = vadd.f32 %v9399, %v9532
    %v9597 = vadd.f32 %v9400, %v9533
    %v9598 = vadd.f32 %v9401, %v9534
    %v9599 = vadd.f32 %v9402, %v9535
    %v9600 = vadd.f32 %v9403, %v9536
    %v9601 = vadd.f32 %v9404, %v9537
    %v9602 = vadd.f32 %v9405, %v9538
    %v9603 = vadd.f32 %v9406, %v9539
    %v9604 = vadd.f32 %v9407, %v9540
    %v9605 = vadd.f32 %v9408, %v9541
    %v9606 = vadd.f32 %v9409, %v9542
    %v9607 = vadd.f32 %v9410, %v9543
    %v9608 = vadd.f32 %v9411, %v9544
    %v9609 = vadd.f32 %v9412, %v9545
    %v9610 = vadd.f32 %v9413, %v9546
    %v9611 = vadd.f32 %v9414, %v9547
    %v9612 = vadd.f32 %v9415, %v9548
    %v9613 = vadd.f32 %v9416, %v9549
    %v9614 = vadd.f32 %v9417, %v9550
    %v9615 = vadd.f32 %v9418, %v9551
    %v9616 = vadd.f32 %v9419, %v9552
    %v9617 = vadd.f32 %v9420, %v9553
    %v9618 = vadd.f32 %v9421, %v9554
    %v9619 = vld [vmem:[%s9224 + $0x2] sm:$0xff]
    %v9620 = vld [vmem:[%s9224 + $0xa] sm:$0xff]
    %v9621 = vld [vmem:[%s9224 + $0x1a] sm:$0xff]
    %v9622 = vld [vmem:[%s9224 + $0x22] sm:$0xff]
    %v9623 = vld [vmem:[%s9224 + $0x32] sm:$0xff]
    %v9624 = vld [vmem:[%s9224 + $0x3a] sm:$0xff]
    %v9625 = vld [vmem:[%s9224 + $0x4a] sm:$0xff]
    %v9626 = vld [vmem:[%s9224 + $0x52] sm:$0xff]
    %v9627 = vld [vmem:[%s9224 + $0x62] sm:$0xff]
    %v9628 = vld [vmem:[%s9224 + $0x6a] sm:$0xff]
    %v9629 = vld [vmem:[%s9224 + $0x7a] sm:$0xff]
    %v9630 = vld [vmem:[%s9224 + $0x82] sm:$0xff]
    %v9631 = vld [vmem:[%s9224 + $0x92] sm:$0xff]
    %v9632 = vld [vmem:[%s9224 + $0x9a] sm:$0xff]
    %v9633 = vld [vmem:[%s9224 + $0xaa] sm:$0xff]
    %v9634 = vld [vmem:[%s9224 + $0xb2] sm:$0xff]
    %v9635 = vld [vmem:[%s9224 + $0xc2] sm:$0xff]
    %v9636 = vld [vmem:[%s9224 + $0xca] sm:$0xff]
    %v9637 = vld [vmem:[%s9224 + $0xda] sm:$0xff]
    %v9638 = vld [vmem:[%s9224 + $0xe2] sm:$0xff]
    %v9639 = vld [vmem:[%s9224 + $0xf2] sm:$0xff]
    %v9640 = vld [vmem:[%s9224 + $0xfa] sm:$0xff]
    %v9641 = vld [vmem:[%s9224 + $0x10a] sm:$0xff]
    %v9642 = vld [vmem:[%s9224 + $0x112] sm:$0xff]
    %v9643 = vld [vmem:[%s9224 + $0x122] sm:$0xff]
    %v9644 = vld [vmem:[%s9224 + $0x12a] sm:$0xff]
    %v9645 = vld [vmem:[%s9224 + $0x13a] sm:$0xff]
    %v9646 = vld [vmem:[%s9224 + $0x142] sm:$0xff]
    %v9647 = vld [vmem:[%s9224 + $0x152] sm:$0xff]
    %v9648 = vld [vmem:[%s9224 + $0x15a] sm:$0xff]
    %v9649 = vld [vmem:[%s9224 + $0x16a] sm:$0xff]
    %v9650 = vld [vmem:[%s9224 + $0x172] sm:$0xff]
    %v9651 = vld [vmem:[%s9224 + $0x1b2] sm:$0xff]
    %v9652 = vld [vmem:[%s9224 + $0x1ba] sm:$0xff]
    %v9653 = vld [vmem:[%s9224 + $0x1ca] sm:$0xff]
    %v9654 = vld [vmem:[%s9224 + $0x1d2] sm:$0xff]
    %v9655 = vld [vmem:[%s9224 + $0x1e2] sm:$0xff]
    %v9656 = vld [vmem:[%s9224 + $0x1ea] sm:$0xff]
    %v9657 = vld [vmem:[%s9224 + $0x1fa] sm:$0xff]
    %v9658 = vld [vmem:[%s9224 + $0x202] sm:$0xff]
    %v9659 = vld [vmem:[%s9224 + $0x212] sm:$0xff]
    %v9660 = vld [vmem:[%s9224 + $0x21a] sm:$0xff]
    %v9661 = vld [vmem:[%s9224 + $0x22a] sm:$0xff]
    %v9662 = vld [vmem:[%s9224 + $0x232] sm:$0xff]
    %v9663 = vld [vmem:[%s9224 + $0x242] sm:$0xff]
    %v9664 = vld [vmem:[%s9224 + $0x24a] sm:$0xff]
    %v9665 = vld [vmem:[%s9224 + $0x25a] sm:$0xff]
    %v9666 = vld [vmem:[%s9224 + $0x262] sm:$0xff]
    %v9667 = vld [vmem:[%s9224 + $0x272] sm:$0xff]
    %v9668 = vld [vmem:[%s9224 + $0x27a] sm:$0xff]
    %v9669 = vld [vmem:[%s9224 + $0x28a] sm:$0xff]
    %v9670 = vld [vmem:[%s9224 + $0x292] sm:$0xff]
    %v9671 = vld [vmem:[%s9224 + $0x2a2] sm:$0xff]
    %v9672 = vld [vmem:[%s9224 + $0x2aa] sm:$0xff]
    %v9673 = vld [vmem:[%s9224 + $0x2ba] sm:$0xff]
    %v9674 = vld [vmem:[%s9224 + $0x2c2] sm:$0xff]
    %v9675 = vld [vmem:[%s9224 + $0x2d2] sm:$0xff]
    %v9676 = vld [vmem:[%s9224 + $0x2da] sm:$0xff]
    %v9677 = vld [vmem:[%s9224 + $0x2ea] sm:$0xff]
    %v9678 = vld [vmem:[%s9224 + $0x2f2] sm:$0xff]
    %v9679 = vld [vmem:[%s9224 + $0x302] sm:$0xff]
    %v9680 = vld [vmem:[%s9224 + $0x30a] sm:$0xff]
    %v9681 = vld [vmem:[%s9224 + $0x31a] sm:$0xff]
    %v9682 = vld [vmem:[%s9224 + $0x322] sm:$0xff]
    %v9683 = vld [vmem:[%s5 + $0x8] sm:$0x1]
    %v9684 = vlaneseq
    %v9685 = vshrl.u32 %v9684, 7
    %v9686 = vsub.s32 0, %v9685
    %v9687 = vrot.slane %v9683, %v9686
    %v9688 = vmul.f32 %v9619, %v9687
    %v9689 = vmul.f32 %v9620, %v9687
    %v9690 = vmul.f32 %v9621, %v9687
    %v9691 = vmul.f32 %v9622, %v9687
    %v9692 = vmul.f32 %v9623, %v9687
    %v9693 = vmul.f32 %v9624, %v9687
    %v9694 = vmul.f32 %v9625, %v9687
    %v9695 = vmul.f32 %v9626, %v9687
    %v9696 = vmul.f32 %v9627, %v9687
    %v9697 = vmul.f32 %v9628, %v9687
    %v9698 = vmul.f32 %v9629, %v9687
    %v9699 = vmul.f32 %v9630, %v9687
    %v9700 = vmul.f32 %v9631, %v9687
    %v9701 = vmul.f32 %v9632, %v9687
    %v9702 = vmul.f32 %v9633, %v9687
    %v9703 = vmul.f32 %v9634, %v9687
    %v9704 = vmul.f32 %v9635, %v9687
    %v9705 = vmul.f32 %v9636, %v9687
    %v9706 = vmul.f32 %v9637, %v9687
    %v9707 = vmul.f32 %v9638, %v9687
    %v9708 = vmul.f32 %v9639, %v9687
    %v9709 = vmul.f32 %v9640, %v9687
    %v9710 = vmul.f32 %v9641, %v9687
    %v9711 = vmul.f32 %v9642, %v9687
    %v9712 = vmul.f32 %v9643, %v9687
    %v9713 = vmul.f32 %v9644, %v9687
    %v9714 = vmul.f32 %v9645, %v9687
    %v9715 = vmul.f32 %v9646, %v9687
    %v9716 = vmul.f32 %v9647, %v9687
    %v9717 = vmul.f32 %v9648, %v9687
    %v9718 = vmul.f32 %v9649, %v9687
    %v9719 = vmul.f32 %v9650, %v9687
    %v9720 = vmul.f32 %v9651, %v9687
    %v9721 = vmul.f32 %v9652, %v9687
    %v9722 = vmul.f32 %v9653, %v9687
    %v9723 = vmul.f32 %v9654, %v9687
    %v9724 = vmul.f32 %v9655, %v9687
    %v9725 = vmul.f32 %v9656, %v9687
    %v9726 = vmul.f32 %v9657, %v9687
    %v9727 = vmul.f32 %v9658, %v9687
    %v9728 = vmul.f32 %v9659, %v9687
    %v9729 = vmul.f32 %v9660, %v9687
    %v9730 = vmul.f32 %v9661, %v9687
    %v9731 = vmul.f32 %v9662, %v9687
    %v9732 = vmul.f32 %v9663, %v9687
    %v9733 = vmul.f32 %v9664, %v9687
    %v9734 = vmul.f32 %v9665, %v9687
    %v9735 = vmul.f32 %v9666, %v9687
    %v9736 = vmul.f32 %v9667, %v9687
    %v9737 = vmul.f32 %v9668, %v9687
    %v9738 = vmul.f32 %v9669, %v9687
    %v9739 = vmul.f32 %v9670, %v9687
    %v9740 = vmul.f32 %v9671, %v9687
    %v9741 = vmul.f32 %v9672, %v9687
    %v9742 = vmul.f32 %v9673, %v9687
    %v9743 = vmul.f32 %v9674, %v9687
    %v9744 = vmul.f32 %v9675, %v9687
    %v9745 = vmul.f32 %v9676, %v9687
    %v9746 = vmul.f32 %v9677, %v9687
    %v9747 = vmul.f32 %v9678, %v9687
    %v9748 = vmul.f32 %v9679, %v9687
    %v9749 = vmul.f32 %v9680, %v9687
    %v9750 = vmul.f32 %v9681, %v9687
    %v9751 = vmul.f32 %v9682, %v9687
    %v9752 = vadd.f32 %v9555, %v9688
    %v9753 = vadd.f32 %v9556, %v9689
    %v9754 = vadd.f32 %v9557, %v9690
    %v9755 = vadd.f32 %v9558, %v9691
    %v9756 = vadd.f32 %v9559, %v9692
    %v9757 = vadd.f32 %v9560, %v9693
    %v9758 = vadd.f32 %v9561, %v9694
    %v9759 = vadd.f32 %v9562, %v9695
    %v9760 = vadd.f32 %v9563, %v9696
    %v9761 = vadd.f32 %v9564, %v9697
    %v9762 = vadd.f32 %v9565, %v9698
    %v9763 = vadd.f32 %v9566, %v9699
    %v9764 = vadd.f32 %v9567, %v9700
    %v9765 = vadd.f32 %v9568, %v9701
    %v9766 = vadd.f32 %v9569, %v9702
    %v9767 = vadd.f32 %v9570, %v9703
    %v9768 = vadd.f32 %v9571, %v9704
    %v9769 = vadd.f32 %v9572, %v9705
    %v9770 = vadd.f32 %v9573, %v9706
    %v9771 = vadd.f32 %v9574, %v9707
    %v9772 = vadd.f32 %v9575, %v9708
    %v9773 = vadd.f32 %v9576, %v9709
    %v9774 = vadd.f32 %v9577, %v9710
    %v9775 = vadd.f32 %v9578, %v9711
    %v9776 = vadd.f32 %v9579, %v9712
    %v9777 = vadd.f32 %v9580, %v9713
    %v9778 = vadd.f32 %v9581, %v9714
    %v9779 = vadd.f32 %v9582, %v9715
    %v9780 = vadd.f32 %v9583, %v9716
    %v9781 = vadd.f32 %v9584, %v9717
    %v9782 = vadd.f32 %v9585, %v9718
    %v9783 = vadd.f32 %v9586, %v9719
    %v9784 = vadd.f32 %v9587, %v9720
    %v9785 = vadd.f32 %v9588, %v9721
    %v9786 = vadd.f32 %v9589, %v9722
    %v9787 = vadd.f32 %v9590, %v9723
    %v9788 = vadd.f32 %v9591, %v9724
    %v9789 = vadd.f32 %v9592, %v9725
    %v9790 = vadd.f32 %v9593, %v9726
    %v9791 = vadd.f32 %v9594, %v9727
    %v9792 = vadd.f32 %v9595, %v9728
    %v9793 = vadd.f32 %v9596, %v9729
    %v9794 = vadd.f32 %v9597, %v9730
    %v9795 = vadd.f32 %v9598, %v9731
    %v9796 = vadd.f32 %v9599, %v9732
    %v9797 = vadd.f32 %v9600, %v9733
    %v9798 = vadd.f32 %v9601, %v9734
    %v9799 = vadd.f32 %v9602, %v9735
    %v9800 = vadd.f32 %v9603, %v9736
    %v9801 = vadd.f32 %v9604, %v9737
    %v9802 = vadd.f32 %v9605, %v9738
    %v9803 = vadd.f32 %v9606, %v9739
    %v9804 = vadd.f32 %v9607, %v9740
    %v9805 = vadd.f32 %v9608, %v9741
    %v9806 = vadd.f32 %v9609, %v9742
    %v9807 = vadd.f32 %v9610, %v9743
    %v9808 = vadd.f32 %v9611, %v9744
    %v9809 = vadd.f32 %v9612, %v9745
    %v9810 = vadd.f32 %v9613, %v9746
    %v9811 = vadd.f32 %v9614, %v9747
    %v9812 = vadd.f32 %v9615, %v9748
    %v9813 = vadd.f32 %v9616, %v9749
    %v9814 = vadd.f32 %v9617, %v9750
    %v9815 = vadd.f32 %v9618, %v9751
    %v9816 = vsel %vm4128, %v9752, 0.0
    %9817 = vadd.xlane.f32.xlu0 %v9816
    %v9818 = vpop.xlane.xlu0 %9817
    %v9819 = vsel %vm4128, %v9753, 0.0
    %9820 = vadd.xlane.f32.xlu0 %v9819
    %v9821 = vpop.xlane.xlu0 %9820
    %v9822 = vsel %vm4128, %v9754, 0.0
    %9823 = vadd.xlane.f32.xlu0 %v9822
    %v9824 = vpop.xlane.xlu0 %9823
    %v9825 = vsel %vm4128, %v9755, 0.0
    %9826 = vadd.xlane.f32.xlu0 %v9825
    %v9827 = vpop.xlane.xlu0 %9826
    %v9828 = vsel %vm4128, %v9756, 0.0
    %9829 = vadd.xlane.f32.xlu0 %v9828
    %v9830 = vpop.xlane.xlu0 %9829
    %v9831 = vsel %vm4128, %v9757, 0.0
    %9832 = vadd.xlane.f32.xlu0 %v9831
    %v9833 = vpop.xlane.xlu0 %9832
    %v9834 = vsel %vm4128, %v9758, 0.0
    %9835 = vadd.xlane.f32.xlu0 %v9834
    %v9836 = vpop.xlane.xlu0 %9835
    %v9837 = vsel %vm4128, %v9759, 0.0
    %9838 = vadd.xlane.f32.xlu0 %v9837
    %v9839 = vpop.xlane.xlu0 %9838
    %v9840 = vsel %vm4128, %v9760, 0.0
    %9841 = vadd.xlane.f32.xlu0 %v9840
    %v9842 = vpop.xlane.xlu0 %9841
    %v9843 = vsel %vm4128, %v9761, 0.0
    %9844 = vadd.xlane.f32.xlu0 %v9843
    %v9845 = vpop.xlane.xlu0 %9844
    %v9846 = vsel %vm4128, %v9762, 0.0
    %9847 = vadd.xlane.f32.xlu0 %v9846
    %v9848 = vpop.xlane.xlu0 %9847
    %v9849 = vsel %vm4128, %v9763, 0.0
    %9850 = vadd.xlane.f32.xlu0 %v9849
    %v9851 = vpop.xlane.xlu0 %9850
    %v9852 = vsel %vm4128, %v9764, 0.0
    %9853 = vadd.xlane.f32.xlu0 %v9852
    %v9854 = vpop.xlane.xlu0 %9853
    %v9855 = vsel %vm4128, %v9765, 0.0
    %9856 = vadd.xlane.f32.xlu0 %v9855
    %v9857 = vpop.xlane.xlu0 %9856
    %v9858 = vsel %vm4128, %v9766, 0.0
    %9859 = vadd.xlane.f32.xlu0 %v9858
    %v9860 = vpop.xlane.xlu0 %9859
    %v9861 = vsel %vm4128, %v9767, 0.0
    %9862 = vadd.xlane.f32.xlu0 %v9861
    %v9863 = vpop.xlane.xlu0 %9862
    %v9864 = vsel %vm4128, %v9768, 0.0
    %9865 = vadd.xlane.f32.xlu0 %v9864
    %v9866 = vpop.xlane.xlu0 %9865
    %v9867 = vsel %vm4128, %v9769, 0.0
    %9868 = vadd.xlane.f32.xlu0 %v9867
    %v9869 = vpop.xlane.xlu0 %9868
    %v9870 = vsel %vm4128, %v9770, 0.0
    %9871 = vadd.xlane.f32.xlu0 %v9870
    %v9872 = vpop.xlane.xlu0 %9871
    %v9873 = vsel %vm4128, %v9771, 0.0
    %9874 = vadd.xlane.f32.xlu0 %v9873
    %v9875 = vpop.xlane.xlu0 %9874
    %v9876 = vsel %vm4128, %v9772, 0.0
    %9877 = vadd.xlane.f32.xlu0 %v9876
    %v9878 = vpop.xlane.xlu0 %9877
    %v9879 = vsel %vm4128, %v9773, 0.0
    %9880 = vadd.xlane.f32.xlu0 %v9879
    %v9881 = vpop.xlane.xlu0 %9880
    %v9882 = vsel %vm4128, %v9774, 0.0
    %9883 = vadd.xlane.f32.xlu0 %v9882
    %v9884 = vpop.xlane.xlu0 %9883
    %v9885 = vsel %vm4128, %v9775, 0.0
    %9886 = vadd.xlane.f32.xlu0 %v9885
    %v9887 = vpop.xlane.xlu0 %9886
    %v9888 = vsel %vm4128, %v9776, 0.0
    %9889 = vadd.xlane.f32.xlu0 %v9888
    %v9890 = vpop.xlane.xlu0 %9889
    %v9891 = vsel %vm4128, %v9777, 0.0
    %9892 = vadd.xlane.f32.xlu0 %v9891
    %v9893 = vpop.xlane.xlu0 %9892
    %v9894 = vsel %vm4128, %v9778, 0.0
    %9895 = vadd.xlane.f32.xlu0 %v9894
    %v9896 = vpop.xlane.xlu0 %9895
    %v9897 = vsel %vm4128, %v9779, 0.0
    %9898 = vadd.xlane.f32.xlu0 %v9897
    %v9899 = vpop.xlane.xlu0 %9898
    %v9900 = vsel %vm4128, %v9780, 0.0
    %9901 = vadd.xlane.f32.xlu0 %v9900
    %v9902 = vpop.xlane.xlu0 %9901
    %v9903 = vsel %vm4128, %v9781, 0.0
    %9904 = vadd.xlane.f32.xlu0 %v9903
    %v9905 = vpop.xlane.xlu0 %9904
    %v9906 = vsel %vm4128, %v9782, 0.0
    %9907 = vadd.xlane.f32.xlu0 %v9906
    %v9908 = vpop.xlane.xlu0 %9907
    %v9909 = vsel %vm4128, %v9783, 0.0
    %9910 = vadd.xlane.f32.xlu0 %v9909
    %v9911 = vpop.xlane.xlu0 %9910
    %v9912 = vsel %vm4128, %v9784, 0.0
    %9913 = vadd.xlane.f32.xlu0 %v9912
    %v9914 = vpop.xlane.xlu0 %9913
    %v9915 = vsel %vm4128, %v9785, 0.0
    %9916 = vadd.xlane.f32.xlu0 %v9915
    %v9917 = vpop.xlane.xlu0 %9916
    %v9918 = vsel %vm4128, %v9786, 0.0
    %9919 = vadd.xlane.f32.xlu0 %v9918
    %v9920 = vpop.xlane.xlu0 %9919
    %v9921 = vsel %vm4128, %v9787, 0.0
    %9922 = vadd.xlane.f32.xlu0 %v9921
    %v9923 = vpop.xlane.xlu0 %9922
    %v9924 = vsel %vm4128, %v9788, 0.0
    %9925 = vadd.xlane.f32.xlu0 %v9924
    %v9926 = vpop.xlane.xlu0 %9925
    %v9927 = vsel %vm4128, %v9789, 0.0
    %9928 = vadd.xlane.f32.xlu0 %v9927
    %v9929 = vpop.xlane.xlu0 %9928
    %v9930 = vsel %vm4128, %v9790, 0.0
    %9931 = vadd.xlane.f32.xlu0 %v9930
    %v9932 = vpop.xlane.xlu0 %9931
    %v9933 = vsel %vm4128, %v9791, 0.0
    %9934 = vadd.xlane.f32.xlu0 %v9933
    %v9935 = vpop.xlane.xlu0 %9934
    %v9936 = vsel %vm4128, %v9792, 0.0
    %9937 = vadd.xlane.f32.xlu0 %v9936
    %v9938 = vpop.xlane.xlu0 %9937
    %v9939 = vsel %vm4128, %v9793, 0.0
    %9940 = vadd.xlane.f32.xlu0 %v9939
    %v9941 = vpop.xlane.xlu0 %9940
    %v9942 = vsel %vm4128, %v9794, 0.0
    %9943 = vadd.xlane.f32.xlu0 %v9942
    %v9944 = vpop.xlane.xlu0 %9943
    %v9945 = vsel %vm4128, %v9795, 0.0
    %9946 = vadd.xlane.f32.xlu0 %v9945
    %v9947 = vpop.xlane.xlu0 %9946
    %v9948 = vsel %vm4128, %v9796, 0.0
    %9949 = vadd.xlane.f32.xlu0 %v9948
    %v9950 = vpop.xlane.xlu0 %9949
    %v9951 = vsel %vm4128, %v9797, 0.0
    %9952 = vadd.xlane.f32.xlu0 %v9951
    %v9953 = vpop.xlane.xlu0 %9952
    %v9954 = vsel %vm4128, %v9798, 0.0
    %9955 = vadd.xlane.f32.xlu0 %v9954
    %v9956 = vpop.xlane.xlu0 %9955
    %v9957 = vsel %vm4128, %v9799, 0.0
    %9958 = vadd.xlane.f32.xlu0 %v9957
    %v9959 = vpop.xlane.xlu0 %9958
    %v9960 = vsel %vm4128, %v9800, 0.0
    %9961 = vadd.xlane.f32.xlu0 %v9960
    %v9962 = vpop.xlane.xlu0 %9961
    %v9963 = vsel %vm4128, %v9801, 0.0
    %9964 = vadd.xlane.f32.xlu0 %v9963
    %v9965 = vpop.xlane.xlu0 %9964
    %v9966 = vsel %vm4128, %v9802, 0.0
    %9967 = vadd.xlane.f32.xlu0 %v9966
    %v9968 = vpop.xlane.xlu0 %9967
    %v9969 = vsel %vm4128, %v9803, 0.0
    %9970 = vadd.xlane.f32.xlu0 %v9969
    %v9971 = vpop.xlane.xlu0 %9970
    %v9972 = vsel %vm4128, %v9804, 0.0
    %9973 = vadd.xlane.f32.xlu0 %v9972
    %v9974 = vpop.xlane.xlu0 %9973
    %v9975 = vsel %vm4128, %v9805, 0.0
    %9976 = vadd.xlane.f32.xlu0 %v9975
    %v9977 = vpop.xlane.xlu0 %9976
    %v9978 = vsel %vm4128, %v9806, 0.0
    %9979 = vadd.xlane.f32.xlu0 %v9978
    %v9980 = vpop.xlane.xlu0 %9979
    %v9981 = vsel %vm4128, %v9807, 0.0
    %9982 = vadd.xlane.f32.xlu0 %v9981
    %v9983 = vpop.xlane.xlu0 %9982
    %v9984 = vsel %vm4128, %v9808, 0.0
    %9985 = vadd.xlane.f32.xlu0 %v9984
    %v9986 = vpop.xlane.xlu0 %9985
    %v9987 = vsel %vm4128, %v9809, 0.0
    %9988 = vadd.xlane.f32.xlu0 %v9987
    %v9989 = vpop.xlane.xlu0 %9988
    %v9990 = vsel %vm4128, %v9810, 0.0
    %9991 = vadd.xlane.f32.xlu0 %v9990
    %v9992 = vpop.xlane.xlu0 %9991
    %v9993 = vsel %vm4128, %v9811, 0.0
    %9994 = vadd.xlane.f32.xlu0 %v9993
    %v9995 = vpop.xlane.xlu0 %9994
    %v9996 = vsel %vm4128, %v9812, 0.0
    %9997 = vadd.xlane.f32.xlu0 %v9996
    %v9998 = vpop.xlane.xlu0 %9997
    %v9999 = vsel %vm4128, %v9813, 0.0
    %10000 = vadd.xlane.f32.xlu0 %v9999
    %v10001 = vpop.xlane.xlu0 %10000
    %v10002 = vsel %vm4128, %v9814, 0.0
    %10003 = vadd.xlane.f32.xlu0 %v10002
    %v10004 = vpop.xlane.xlu0 %10003
    %v10005 = vsel %vm4128, %v9815, 0.0
    %10006 = vadd.xlane.f32.xlu0 %v10005
    %v10007 = vpop.xlane.xlu0 %10006
    %v10008 = vld [vmem:[#allocation5] sm:$0x1]
    %v10010 = vlaneseq
    %v10011 = vshrl.u32 %v10010, 7
    %v10012 = vsub.s32 0, %v10011
    %v10013 = vrot.slane %v10008, %v10012
    %v10015 = vadd.f32 %v9818, %v10013
    %v10016 = vadd.f32 %v9821, %v10013
    %v10017 = vadd.f32 %v9824, %v10013
    %v10018 = vadd.f32 %v9827, %v10013
    %v10019 = vadd.f32 %v9830, %v10013
    %v10020 = vadd.f32 %v9833, %v10013
    %v10021 = vadd.f32 %v9836, %v10013
    %v10022 = vadd.f32 %v9839, %v10013
    %v10023 = vadd.f32 %v9842, %v10013
    %v10024 = vadd.f32 %v9845, %v10013
    %v10025 = vadd.f32 %v9848, %v10013
    %v10026 = vadd.f32 %v9851, %v10013
    %v10027 = vadd.f32 %v9854, %v10013
    %v10028 = vadd.f32 %v9857, %v10013
    %v10029 = vadd.f32 %v9860, %v10013
    %v10030 = vadd.f32 %v9863, %v10013
    %v10031 = vadd.f32 %v9866, %v10013
    %v10032 = vadd.f32 %v9869, %v10013
    %v10033 = vadd.f32 %v9872, %v10013
    %v10034 = vadd.f32 %v9875, %v10013
    %v10035 = vadd.f32 %v9878, %v10013
    %v10036 = vadd.f32 %v9881, %v10013
    %v10037 = vadd.f32 %v9884, %v10013
    %v10038 = vadd.f32 %v9887, %v10013
    %v10039 = vadd.f32 %v9890, %v10013
    %v10040 = vadd.f32 %v9893, %v10013
    %v10041 = vadd.f32 %v9896, %v10013
    %v10042 = vadd.f32 %v9899, %v10013
    %v10043 = vadd.f32 %v9902, %v10013
    %v10044 = vadd.f32 %v9905, %v10013
    %v10045 = vadd.f32 %v9908, %v10013
    %v10046 = vadd.f32 %v9911, %v10013
    %v10047 = vadd.f32 %v9914, %v10013
    %v10048 = vadd.f32 %v9917, %v10013
    %v10049 = vadd.f32 %v9920, %v10013
    %v10050 = vadd.f32 %v9923, %v10013
    %v10051 = vadd.f32 %v9926, %v10013
    %v10052 = vadd.f32 %v9929, %v10013
    %v10053 = vadd.f32 %v9932, %v10013
    %v10054 = vadd.f32 %v9935, %v10013
    %v10055 = vadd.f32 %v9938, %v10013
    %v10056 = vadd.f32 %v9941, %v10013
    %v10057 = vadd.f32 %v9944, %v10013
    %v10058 = vadd.f32 %v9947, %v10013
    %v10059 = vadd.f32 %v9950, %v10013
    %v10060 = vadd.f32 %v9953, %v10013
    %v10061 = vadd.f32 %v9956, %v10013
    %v10062 = vadd.f32 %v9959, %v10013
    %v10063 = vadd.f32 %v9962, %v10013
    %v10064 = vadd.f32 %v9965, %v10013
    %v10065 = vadd.f32 %v9968, %v10013
    %v10066 = vadd.f32 %v9971, %v10013
    %v10067 = vadd.f32 %v9974, %v10013
    %v10068 = vadd.f32 %v9977, %v10013
    %v10069 = vadd.f32 %v9980, %v10013
    %v10070 = vadd.f32 %v9983, %v10013
    %v10071 = vadd.f32 %v9986, %v10013
    %v10072 = vadd.f32 %v9989, %v10013
    %v10073 = vadd.f32 %v9992, %v10013
    %v10074 = vadd.f32 %v9995, %v10013
    %v10075 = vadd.f32 %v9998, %v10013
    %v10076 = vadd.f32 %v10001, %v10013
    %v10077 = vadd.f32 %v10004, %v10013
    %v10078 = vadd.f32 %v10007, %v10013
    %v10079 = vxor.u32 %v10015, 2147483648
    %v10080 = vxor.u32 %v10016, 2147483648
    %v10081 = vxor.u32 %v10017, 2147483648
    %v10082 = vxor.u32 %v10018, 2147483648
    %v10083 = vxor.u32 %v10019, 2147483648
    %v10084 = vxor.u32 %v10020, 2147483648
    %v10085 = vxor.u32 %v10021, 2147483648
    %v10086 = vxor.u32 %v10022, 2147483648
    %v10087 = vxor.u32 %v10023, 2147483648
    %v10088 = vxor.u32 %v10024, 2147483648
    %v10089 = vxor.u32 %v10025, 2147483648
    %v10090 = vxor.u32 %v10026, 2147483648
    %v10091 = vxor.u32 %v10027, 2147483648
    %v10092 = vxor.u32 %v10028, 2147483648
    %v10093 = vxor.u32 %v10029, 2147483648
    %v10094 = vxor.u32 %v10030, 2147483648
    %v10095 = vxor.u32 %v10031, 2147483648
    %v10096 = vxor.u32 %v10032, 2147483648
    %v10097 = vxor.u32 %v10033, 2147483648
    %v10098 = vxor.u32 %v10034, 2147483648
    %v10099 = vxor.u32 %v10035, 2147483648
    %v10100 = vxor.u32 %v10036, 2147483648
    %v10101 = vxor.u32 %v10037, 2147483648
    %v10102 = vxor.u32 %v10038, 2147483648
    %v10103 = vxor.u32 %v10039, 2147483648
    %v10104 = vxor.u32 %v10040, 2147483648
    %v10105 = vxor.u32 %v10041, 2147483648
    %v10106 = vxor.u32 %v10042, 2147483648
    %v10107 = vxor.u32 %v10043, 2147483648
    %v10108 = vxor.u32 %v10044, 2147483648
    %v10109 = vxor.u32 %v10045, 2147483648
    %v10110 = vxor.u32 %v10046, 2147483648
    %v10111 = vxor.u32 %v10047, 2147483648
    %v10112 = vxor.u32 %v10048, 2147483648
    %v10113 = vxor.u32 %v10049, 2147483648
    %v10114 = vxor.u32 %v10050, 2147483648
    %v10115 = vxor.u32 %v10051, 2147483648
    %v10116 = vxor.u32 %v10052, 2147483648
    %v10117 = vxor.u32 %v10053, 2147483648
    %v10118 = vxor.u32 %v10054, 2147483648
    %v10119 = vxor.u32 %v10055, 2147483648
    %v10120 = vxor.u32 %v10056, 2147483648
    %v10121 = vxor.u32 %v10057, 2147483648
    %v10122 = vxor.u32 %v10058, 2147483648
    %v10123 = vxor.u32 %v10059, 2147483648
    %v10124 = vxor.u32 %v10060, 2147483648
    %v10125 = vxor.u32 %v10061, 2147483648
    %v10126 = vxor.u32 %v10062, 2147483648
    %v10127 = vxor.u32 %v10063, 2147483648
    %v10128 = vxor.u32 %v10064, 2147483648
    %v10129 = vxor.u32 %v10065, 2147483648
    %v10130 = vxor.u32 %v10066, 2147483648
    %v10131 = vxor.u32 %v10067, 2147483648
    %v10132 = vxor.u32 %v10068, 2147483648
    %v10133 = vxor.u32 %v10069, 2147483648
    %v10134 = vxor.u32 %v10070, 2147483648
    %v10135 = vxor.u32 %v10071, 2147483648
    %v10136 = vxor.u32 %v10072, 2147483648
    %v10137 = vxor.u32 %v10073, 2147483648
    %v10138 = vxor.u32 %v10074, 2147483648
    %v10139 = vxor.u32 %v10075, 2147483648
    %v10140 = vxor.u32 %v10076, 2147483648
    %v10141 = vxor.u32 %v10077, 2147483648
    %v10142 = vxor.u32 %v10078, 2147483648
    %v10143 = vmul.f32 %v10079, 1.442695
    %v10144 = vpow.pop %v10143
    %v10145 = vmul.f32 %v10080, 1.442695
    %v10146 = vpow.pop %v10145
    %v10147 = vmul.f32 %v10081, 1.442695
    %v10148 = vpow.pop %v10147
    %v10149 = vmul.f32 %v10082, 1.442695
    %v10150 = vpow.pop %v10149
    %v10151 = vmul.f32 %v10083, 1.442695
    %v10152 = vpow.pop %v10151
    %v10153 = vmul.f32 %v10084, 1.442695
    %v10154 = vpow.pop %v10153
    %v10155 = vmul.f32 %v10085, 1.442695
    %v10156 = vpow.pop %v10155
    %v10157 = vmul.f32 %v10086, 1.442695
    %v10158 = vpow.pop %v10157
    %v10159 = vmul.f32 %v10087, 1.442695
    %v10160 = vpow.pop %v10159
    %v10161 = vmul.f32 %v10088, 1.442695
    %v10162 = vpow.pop %v10161
    %v10163 = vmul.f32 %v10089, 1.442695
    %v10164 = vpow.pop %v10163
    %v10165 = vmul.f32 %v10090, 1.442695
    %v10166 = vpow.pop %v10165
    %v10167 = vmul.f32 %v10091, 1.442695
    %v10168 = vpow.pop %v10167
    %v10169 = vmul.f32 %v10092, 1.442695
    %v10170 = vpow.pop %v10169
    %v10171 = vmul.f32 %v10093, 1.442695
    %v10172 = vpow.pop %v10171
    %v10173 = vmul.f32 %v10094, 1.442695
    %v10174 = vpow.pop %v10173
    %v10175 = vmul.f32 %v10095, 1.442695
    %v10176 = vpow.pop %v10175
    %v10177 = vmul.f32 %v10096, 1.442695
    %v10178 = vpow.pop %v10177
    %v10179 = vmul.f32 %v10097, 1.442695
    %v10180 = vpow.pop %v10179
    %v10181 = vmul.f32 %v10098, 1.442695
    %v10182 = vpow.pop %v10181
    %v10183 = vmul.f32 %v10099, 1.442695
    %v10184 = vpow.pop %v10183
    %v10185 = vmul.f32 %v10100, 1.442695
    %v10186 = vpow.pop %v10185
    %v10187 = vmul.f32 %v10101, 1.442695
    %v10188 = vpow.pop %v10187
    %v10189 = vmul.f32 %v10102, 1.442695
    %v10190 = vpow.pop %v10189
    %v10191 = vmul.f32 %v10103, 1.442695
    %v10192 = vpow.pop %v10191
    %v10193 = vmul.f32 %v10104, 1.442695
    %v10194 = vpow.pop %v10193
    %v10195 = vmul.f32 %v10105, 1.442695
    %v10196 = vpow.pop %v10195
    %v10197 = vmul.f32 %v10106, 1.442695
    %v10198 = vpow.pop %v10197
    %v10199 = vmul.f32 %v10107, 1.442695
    %v10200 = vpow.pop %v10199
    %v10201 = vmul.f32 %v10108, 1.442695
    %v10202 = vpow.pop %v10201
    %v10203 = vmul.f32 %v10109, 1.442695
    %v10204 = vpow.pop %v10203
    %v10205 = vmul.f32 %v10110, 1.442695
    %v10206 = vpow.pop %v10205
    %v10207 = vmul.f32 %v10111, 1.442695
    %v10208 = vpow.pop %v10207
    %v10209 = vmul.f32 %v10112, 1.442695
    %v10210 = vpow.pop %v10209
    %v10211 = vmul.f32 %v10113, 1.442695
    %v10212 = vpow.pop %v10211
    %v10213 = vmul.f32 %v10114, 1.442695
    %v10214 = vpow.pop %v10213
    %v10215 = vmul.f32 %v10115, 1.442695
    %v10216 = vpow.pop %v10215
    %v10217 = vmul.f32 %v10116, 1.442695
    %v10218 = vpow.pop %v10217
    %v10219 = vmul.f32 %v10117, 1.442695
    %v10220 = vpow.pop %v10219
    %v10221 = vmul.f32 %v10118, 1.442695
    %v10222 = vpow.pop %v10221
    %v10223 = vmul.f32 %v10119, 1.442695
    %v10224 = vpow.pop %v10223
    %v10225 = vmul.f32 %v10120, 1.442695
    %v10226 = vpow.pop %v10225
    %v10227 = vmul.f32 %v10121, 1.442695
    %v10228 = vpow.pop %v10227
    %v10229 = vmul.f32 %v10122, 1.442695
    %v10230 = vpow.pop %v10229
    %v10231 = vmul.f32 %v10123, 1.442695
    %v10232 = vpow.pop %v10231
    %v10233 = vmul.f32 %v10124, 1.442695
    %v10234 = vpow.pop %v10233
    %v10235 = vmul.f32 %v10125, 1.442695
    %v10236 = vpow.pop %v10235
    %v10237 = vmul.f32 %v10126, 1.442695
    %v10238 = vpow.pop %v10237
    %v10239 = vmul.f32 %v10127, 1.442695
    %v10240 = vpow.pop %v10239
    %v10241 = vmul.f32 %v10128, 1.442695
    %v10242 = vpow.pop %v10241
    %v10243 = vmul.f32 %v10129, 1.442695
    %v10244 = vpow.pop %v10243
    %v10245 = vmul.f32 %v10130, 1.442695
    %v10246 = vpow.pop %v10245
    %v10247 = vmul.f32 %v10131, 1.442695
    %v10248 = vpow.pop %v10247
    %v10249 = vmul.f32 %v10132, 1.442695
    %v10250 = vpow.pop %v10249
    %v10251 = vmul.f32 %v10133, 1.442695
    %v10252 = vpow.pop %v10251
    %v10253 = vmul.f32 %v10134, 1.442695
    %v10254 = vpow.pop %v10253
    %v10255 = vmul.f32 %v10135, 1.442695
    %v10256 = vpow.pop %v10255
    %v10257 = vmul.f32 %v10136, 1.442695
    %v10258 = vpow.pop %v10257
    %v10259 = vmul.f32 %v10137, 1.442695
    %v10260 = vpow.pop %v10259
    %v10261 = vmul.f32 %v10138, 1.442695
    %v10262 = vpow.pop %v10261
    %v10263 = vmul.f32 %v10139, 1.442695
    %v10264 = vpow.pop %v10263
    %v10265 = vmul.f32 %v10140, 1.442695
    %v10266 = vpow.pop %v10265
    %v10267 = vmul.f32 %v10141, 1.442695
    %v10268 = vpow.pop %v10267
    %v10269 = vmul.f32 %v10142, 1.442695
    %v10270 = vpow.pop %v10269
    %v10271 = vadd.f32 %v10144, 1.0
    %v10272 = vadd.f32 %v10146, 1.0
    %v10273 = vadd.f32 %v10148, 1.0
    %v10274 = vadd.f32 %v10150, 1.0
    %v10275 = vadd.f32 %v10152, 1.0
    %v10276 = vadd.f32 %v10154, 1.0
    %v10277 = vadd.f32 %v10156, 1.0
    %v10278 = vadd.f32 %v10158, 1.0
    %v10279 = vadd.f32 %v10160, 1.0
    %v10280 = vadd.f32 %v10162, 1.0
    %v10281 = vadd.f32 %v10164, 1.0
    %v10282 = vadd.f32 %v10166, 1.0
    %v10283 = vadd.f32 %v10168, 1.0
    %v10284 = vadd.f32 %v10170, 1.0
    %v10285 = vadd.f32 %v10172, 1.0
    %v10286 = vadd.f32 %v10174, 1.0
    %v10287 = vadd.f32 %v10176, 1.0
    %v10288 = vadd.f32 %v10178, 1.0
    %v10289 = vadd.f32 %v10180, 1.0
    %v10290 = vadd.f32 %v10182, 1.0
    %v10291 = vadd.f32 %v10184, 1.0
    %v10292 = vadd.f32 %v10186, 1.0
    %v10293 = vadd.f32 %v10188, 1.0
    %v10294 = vadd.f32 %v10190, 1.0
    %v10295 = vadd.f32 %v10192, 1.0
    %v10296 = vadd.f32 %v10194, 1.0
    %v10297 = vadd.f32 %v10196, 1.0
    %v10298 = vadd.f32 %v10198, 1.0
    %v10299 = vadd.f32 %v10200, 1.0
    %v10300 = vadd.f32 %v10202, 1.0
    %v10301 = vadd.f32 %v10204, 1.0
    %v10302 = vadd.f32 %v10206, 1.0
    %v10303 = vadd.f32 %v10208, 1.0
    %v10304 = vadd.f32 %v10210, 1.0
    %v10305 = vadd.f32 %v10212, 1.0
    %v10306 = vadd.f32 %v10214, 1.0
    %v10307 = vadd.f32 %v10216, 1.0
    %v10308 = vadd.f32 %v10218, 1.0
    %v10309 = vadd.f32 %v10220, 1.0
    %v10310 = vadd.f32 %v10222, 1.0
    %v10311 = vadd.f32 %v10224, 1.0
    %v10312 = vadd.f32 %v10226, 1.0
    %v10313 = vadd.f32 %v10228, 1.0
    %v10314 = vadd.f32 %v10230, 1.0
    %v10315 = vadd.f32 %v10232, 1.0
    %v10316 = vadd.f32 %v10234, 1.0
    %v10317 = vadd.f32 %v10236, 1.0
    %v10318 = vadd.f32 %v10238, 1.0
    %v10319 = vadd.f32 %v10240, 1.0
    %v10320 = vadd.f32 %v10242, 1.0
    %v10321 = vadd.f32 %v10244, 1.0
    %v10322 = vadd.f32 %v10246, 1.0
    %v10323 = vadd.f32 %v10248, 1.0
    %v10324 = vadd.f32 %v10250, 1.0
    %v10325 = vadd.f32 %v10252, 1.0
    %v10326 = vadd.f32 %v10254, 1.0
    %v10327 = vadd.f32 %v10256, 1.0
    %v10328 = vadd.f32 %v10258, 1.0
    %v10329 = vadd.f32 %v10260, 1.0
    %v10330 = vadd.f32 %v10262, 1.0
    %v10331 = vadd.f32 %v10264, 1.0
    %v10332 = vadd.f32 %v10266, 1.0
    %v10333 = vadd.f32 %v10268, 1.0
    %v10334 = vadd.f32 %v10270, 1.0
    %v10335 = vrcp.pop %v10271
    %v10336 = vmul.f32 1.0, %v10335
    %v10337 = vrcp.pop %v10272
    %v10338 = vmul.f32 1.0, %v10337
    %v10339 = vrcp.pop %v10273
    %v10340 = vmul.f32 1.0, %v10339
    %v10341 = vrcp.pop %v10274
    %v10342 = vmul.f32 1.0, %v10341
    %v10343 = vrcp.pop %v10275
    %v10344 = vmul.f32 1.0, %v10343
    %v10345 = vrcp.pop %v10276
    %v10346 = vmul.f32 1.0, %v10345
    %v10347 = vrcp.pop %v10277
    %v10348 = vmul.f32 1.0, %v10347
    %v10349 = vrcp.pop %v10278
    %v10350 = vmul.f32 1.0, %v10349
    %v10351 = vrcp.pop %v10279
    %v10352 = vmul.f32 1.0, %v10351
    %v10353 = vrcp.pop %v10280
    %v10354 = vmul.f32 1.0, %v10353
    %v10355 = vrcp.pop %v10281
    %v10356 = vmul.f32 1.0, %v10355
    %v10357 = vrcp.pop %v10282
    %v10358 = vmul.f32 1.0, %v10357
    %v10359 = vrcp.pop %v10283
    %v10360 = vmul.f32 1.0, %v10359
    %v10361 = vrcp.pop %v10284
    %v10362 = vmul.f32 1.0, %v10361
    %v10363 = vrcp.pop %v10285
    %v10364 = vmul.f32 1.0, %v10363
    %v10365 = vrcp.pop %v10286
    %v10366 = vmul.f32 1.0, %v10365
    %v10367 = vrcp.pop %v10287
    %v10368 = vmul.f32 1.0, %v10367
    %v10369 = vrcp.pop %v10288
    %v10370 = vmul.f32 1.0, %v10369
    %v10371 = vrcp.pop %v10289
    %v10372 = vmul.f32 1.0, %v10371
    %v10373 = vrcp.pop %v10290
    %v10374 = vmul.f32 1.0, %v10373
    %v10375 = vrcp.pop %v10291
    %v10376 = vmul.f32 1.0, %v10375
    %v10377 = vrcp.pop %v10292
    %v10378 = vmul.f32 1.0, %v10377
    %v10379 = vrcp.pop %v10293
    %v10380 = vmul.f32 1.0, %v10379
    %v10381 = vrcp.pop %v10294
    %v10382 = vmul.f32 1.0, %v10381
    %v10383 = vrcp.pop %v10295
    %v10384 = vmul.f32 1.0, %v10383
    %v10385 = vrcp.pop %v10296
    %v10386 = vmul.f32 1.0, %v10385
    %v10387 = vrcp.pop %v10297
    %v10388 = vmul.f32 1.0, %v10387
    %v10389 = vrcp.pop %v10298
    %v10390 = vmul.f32 1.0, %v10389
    %v10391 = vrcp.pop %v10299
    %v10392 = vmul.f32 1.0, %v10391
    %v10393 = vrcp.pop %v10300
    %v10394 = vmul.f32 1.0, %v10393
    %v10395 = vrcp.pop %v10301
    %v10396 = vmul.f32 1.0, %v10395
    %v10397 = vrcp.pop %v10302
    %v10398 = vmul.f32 1.0, %v10397
    %v10399 = vrcp.pop %v10303
    %v10400 = vmul.f32 1.0, %v10399
    %v10401 = vrcp.pop %v10304
    %v10402 = vmul.f32 1.0, %v10401
    %v10403 = vrcp.pop %v10305
    %v10404 = vmul.f32 1.0, %v10403
    %v10405 = vrcp.pop %v10306
    %v10406 = vmul.f32 1.0, %v10405
    %v10407 = vrcp.pop %v10307
    %v10408 = vmul.f32 1.0, %v10407
    %v10409 = vrcp.pop %v10308
    %v10410 = vmul.f32 1.0, %v10409
    %v10411 = vrcp.pop %v10309
    %v10412 = vmul.f32 1.0, %v10411
    %v10413 = vrcp.pop %v10310
    %v10414 = vmul.f32 1.0, %v10413
    %v10415 = vrcp.pop %v10311
    %v10416 = vmul.f32 1.0, %v10415
    %v10417 = vrcp.pop %v10312
    %v10418 = vmul.f32 1.0, %v10417
    %v10419 = vrcp.pop %v10313
    %v10420 = vmul.f32 1.0, %v10419
    %v10421 = vrcp.pop %v10314
    %v10422 = vmul.f32 1.0, %v10421
    %v10423 = vrcp.pop %v10315
    %v10424 = vmul.f32 1.0, %v10423
    %v10425 = vrcp.pop %v10316
    %v10426 = vmul.f32 1.0, %v10425
    %v10427 = vrcp.pop %v10317
    %v10428 = vmul.f32 1.0, %v10427
    %v10429 = vrcp.pop %v10318
    %v10430 = vmul.f32 1.0, %v10429
    %v10431 = vrcp.pop %v10319
    %v10432 = vmul.f32 1.0, %v10431
    %v10433 = vrcp.pop %v10320
    %v10434 = vmul.f32 1.0, %v10433
    %v10435 = vrcp.pop %v10321
    %v10436 = vmul.f32 1.0, %v10435
    %v10437 = vrcp.pop %v10322
    %v10438 = vmul.f32 1.0, %v10437
    %v10439 = vrcp.pop %v10323
    %v10440 = vmul.f32 1.0, %v10439
    %v10441 = vrcp.pop %v10324
    %v10442 = vmul.f32 1.0, %v10441
    %v10443 = vrcp.pop %v10325
    %v10444 = vmul.f32 1.0, %v10443
    %v10445 = vrcp.pop %v10326
    %v10446 = vmul.f32 1.0, %v10445
    %v10447 = vrcp.pop %v10327
    %v10448 = vmul.f32 1.0, %v10447
    %v10449 = vrcp.pop %v10328
    %v10450 = vmul.f32 1.0, %v10449
    %v10451 = vrcp.pop %v10329
    %v10452 = vmul.f32 1.0, %v10451
    %v10453 = vrcp.pop %v10330
    %v10454 = vmul.f32 1.0, %v10453
    %v10455 = vrcp.pop %v10331
    %v10456 = vmul.f32 1.0, %v10455
    %v10457 = vrcp.pop %v10332
    %v10458 = vmul.f32 1.0, %v10457
    %v10459 = vrcp.pop %v10333
    %v10460 = vmul.f32 1.0, %v10459
    %v10461 = vrcp.pop %v10334
    %v10462 = vmul.f32 1.0, %v10461
    %vm10463 = vcmask 7168
    %10464 = vst.msk [vmem:[%s7] sm:$0xff] %vm10463, %v10336
    %10465 = vst.msk [vmem:[%s7 + $0x8] sm:$0xff] %vm10463, %v10338
    %10466 = vst.msk [vmem:[%s7 + $0x10] sm:$0xff] %vm10463, %v10340
    %10467 = vst.msk [vmem:[%s7 + $0x18] sm:$0xff] %vm10463, %v10342
    %10468 = vst.msk [vmem:[%s7 + $0x20] sm:$0xff] %vm10463, %v10344
    %10469 = vst.msk [vmem:[%s7 + $0x28] sm:$0xff] %vm10463, %v10346
    %10470 = vst.msk [vmem:[%s7 + $0x30] sm:$0xff] %vm10463, %v10348
    %10471 = vst.msk [vmem:[%s7 + $0x38] sm:$0xff] %vm10463, %v10350
    %10472 = vst.msk [vmem:[%s7 + $0x40] sm:$0xff] %vm10463, %v10352
    %10473 = vst.msk [vmem:[%s7 + $0x48] sm:$0xff] %vm10463, %v10354
    %10474 = vst.msk [vmem:[%s7 + $0x50] sm:$0xff] %vm10463, %v10356
    %10475 = vst.msk [vmem:[%s7 + $0x58] sm:$0xff] %vm10463, %v10358
    %10476 = vst.msk [vmem:[%s7 + $0x60] sm:$0xff] %vm10463, %v10360
    %10477 = vst.msk [vmem:[%s7 + $0x68] sm:$0xff] %vm10463, %v10362
    %10478 = vst.msk [vmem:[%s7 + $0x70] sm:$0xff] %vm10463, %v10364
    %10479 = vst.msk [vmem:[%s7 + $0x78] sm:$0xff] %vm10463, %v10366
    %10480 = vst.msk [vmem:[%s7 + $0x80] sm:$0xff] %vm10463, %v10368
    %10481 = vst.msk [vmem:[%s7 + $0x88] sm:$0xff] %vm10463, %v10370
    %10482 = vst.msk [vmem:[%s7 + $0x90] sm:$0xff] %vm10463, %v10372
    %10483 = vst.msk [vmem:[%s7 + $0x98] sm:$0xff] %vm10463, %v10374
    %10484 = vst.msk [vmem:[%s7 + $0xa0] sm:$0xff] %vm10463, %v10376
    %10485 = vst.msk [vmem:[%s7 + $0xa8] sm:$0xff] %vm10463, %v10378
    %10486 = vst.msk [vmem:[%s7 + $0xb0] sm:$0xff] %vm10463, %v10380
    %10487 = vst.msk [vmem:[%s7 + $0xb8] sm:$0xff] %vm10463, %v10382
    %10488 = vst.msk [vmem:[%s7 + $0xc0] sm:$0xff] %vm10463, %v10384
    %10489 = vst.msk [vmem:[%s7 + $0xc8] sm:$0xff] %vm10463, %v10386
    %10490 = vst.msk [vmem:[%s7 + $0xd0] sm:$0xff] %vm10463, %v10388
    %10491 = vst.msk [vmem:[%s7 + $0xd8] sm:$0xff] %vm10463, %v10390
    %10492 = vst.msk [vmem:[%s7 + $0xe0] sm:$0xff] %vm10463, %v10392
    %10493 = vst.msk [vmem:[%s7 + $0xe8] sm:$0xff] %vm10463, %v10394
    %10494 = vst.msk [vmem:[%s7 + $0xf0] sm:$0xff] %vm10463, %v10396
    %10495 = vst.msk [vmem:[%s7 + $0xf8] sm:$0xff] %vm10463, %v10398
    %10496 = vst.msk [vmem:[%s7 + $0x100] sm:$0xff] %vm10463, %v10400
    %10497 = vst.msk [vmem:[%s7 + $0x108] sm:$0xff] %vm10463, %v10402
    %10498 = vst.msk [vmem:[%s7 + $0x110] sm:$0xff] %vm10463, %v10404
    %10499 = vst.msk [vmem:[%s7 + $0x118] sm:$0xff] %vm10463, %v10406
    %10500 = vst.msk [vmem:[%s7 + $0x120] sm:$0xff] %vm10463, %v10408
    %10501 = vst.msk [vmem:[%s7 + $0x128] sm:$0xff] %vm10463, %v10410
    %10502 = vst.msk [vmem:[%s7 + $0x130] sm:$0xff] %vm10463, %v10412
    %10503 = vst.msk [vmem:[%s7 + $0x138] sm:$0xff] %vm10463, %v10414
    %10504 = vst.msk [vmem:[%s7 + $0x140] sm:$0xff] %vm10463, %v10416
    %10505 = vst.msk [vmem:[%s7 + $0x148] sm:$0xff] %vm10463, %v10418
    %10506 = vst.msk [vmem:[%s7 + $0x150] sm:$0xff] %vm10463, %v10420
    %10507 = vst.msk [vmem:[%s7 + $0x158] sm:$0xff] %vm10463, %v10422
    %10508 = vst.msk [vmem:[%s7 + $0x160] sm:$0xff] %vm10463, %v10424
    %10509 = vst.msk [vmem:[%s7 + $0x168] sm:$0xff] %vm10463, %v10426
    %10510 = vst.msk [vmem:[%s7 + $0x170] sm:$0xff] %vm10463, %v10428
    %10511 = vst.msk [vmem:[%s7 + $0x178] sm:$0xff] %vm10463, %v10430
    %10512 = vst.msk [vmem:[%s7 + $0x180] sm:$0xff] %vm10463, %v10432
    %10513 = vst.msk [vmem:[%s7 + $0x188] sm:$0xff] %vm10463, %v10434
    %10514 = vst.msk [vmem:[%s7 + $0x190] sm:$0xff] %vm10463, %v10436
    %10515 = vst.msk [vmem:[%s7 + $0x198] sm:$0xff] %vm10463, %v10438
    %10516 = vst.msk [vmem:[%s7 + $0x1a0] sm:$0xff] %vm10463, %v10440
    %10517 = vst.msk [vmem:[%s7 + $0x1a8] sm:$0xff] %vm10463, %v10442
    %10518 = vst.msk [vmem:[%s7 + $0x1b0] sm:$0xff] %vm10463, %v10444
    %10519 = vst.msk [vmem:[%s7 + $0x1b8] sm:$0xff] %vm10463, %v10446
    %10520 = vst.msk [vmem:[%s7 + $0x1c0] sm:$0xff] %vm10463, %v10448
    %10521 = vst.msk [vmem:[%s7 + $0x1c8] sm:$0xff] %vm10463, %v10450
    %10522 = vst.msk [vmem:[%s7 + $0x1d0] sm:$0xff] %vm10463, %v10452
    %10523 = vst.msk [vmem:[%s7 + $0x1d8] sm:$0xff] %vm10463, %v10454
    %10524 = vst.msk [vmem:[%s7 + $0x1e0] sm:$0xff] %vm10463, %v10456
    %10525 = vst.msk [vmem:[%s7 + $0x1e8] sm:$0xff] %vm10463, %v10458
    %10526 = vst.msk [vmem:[%s7 + $0x1f0] sm:$0xff] %vm10463, %v10460
    %10527 = vst.msk [vmem:[%s7 + $0x1f8] sm:$0xff] %vm10463, %v10462
    // Predicated region
    $region42: #{refine_forward.1} parent=1 // pred_check
      _
    $region43: #{refine_forward.1} parent=1 // pred_check_branch
      %10529 = sbr.rel (0) target = $region45
    $region44: #{refine_forward.1} parent=1 // pred_region
      _
    $region45: #{refine_forward.1} parent=1 // pred_fallthru
      _
    // Predicated region
    $region46: #{refine_forward.1} parent=1 // pred_check
      _
    $region47: #{refine_forward.1} parent=1 // pred_check_branch
      %10531 = sbr.rel (0) target = $region49
    $region48: #{refine_forward.1} parent=1 // pred_region
      _
    $region49: #{refine_forward.1} parent=1 // pred_fallthru
      _
    %10532 = vsyncpa [#allocation7], 1
    %10533 = vsyncpa [#allocation9], 1

</llo_original>
